<compile_context>
chip_gen: v7x
topology: tpu7x:2x2x1
jax: 0.10.0
libtpu: 0.0.40
codegen_flags: <defaults>
</compile_context>

<pallas_src>
import jax
import jax.numpy as jnp
from jax.experimental import pallas as pl
from jax.experimental.pallas import tpu as pltpu

IN_FEATURES = 75648      # fc1 fan-in (fixed by the module)
HIDDEN = 256             # fc1 fan-out
OUT_FEATURES = 8         # fc2 fan-out

NUM_SPLITS = 2           # leading "parallel" grid axis (maps to 2 TCs on v7x)
TK = 9472                # K tile (multiple of 128); bf16 tile = 4.85 MB
K_STEPS = 4              # K tiles per split
K_PAD = NUM_SPLITS * K_STEPS * TK        # 75776 >= IN_FEATURES, multiple of 128
OUT_ROWS = 8             # sublane padding of each partial-output block

assert K_PAD >= IN_FEATURES and K_PAD % 128 == 0


def _fc1_kernel(x_ref, w1_ref, part_ref, acc_ref):
    """K-tiled fc1 partial: (1, TK) @ (TK, 256) bf16 on the MXU, f32 accum."""
    k = pl.program_id(1)

    @pl.when(k == 0)
    def _():
        acc_ref[...] = jnp.zeros_like(acc_ref)

    acc_ref[...] += jnp.dot(
        x_ref[...], w1_ref[...], preferred_element_type=jnp.float32
    )

    @pl.when(k == pl.num_programs(1) - 1)
    def _():
        # Sublane-broadcast the (1, 256) partial into the (8, 256) output block
        # so the store is a full, unmasked block write.
        part_ref[...] = jnp.broadcast_to(acc_ref[...], part_ref.shape)


def prepare_params(w1_t, b1, w2_t, b2):
    """One-time weight prep (call OUTSIDE the per-step forward path).

    Pads W1^T (IN_FEATURES, 256) to (K_PAD, 256) and casts it to bf16 so the
    kernel streams half the bytes; biases / W2 stay f32 (they are tiny).
    """
    w1_pad = jnp.zeros((K_PAD, HIDDEN), jnp.bfloat16)
    w1_pad = w1_pad.at[:IN_FEATURES, :].set(w1_t.astype(jnp.bfloat16))
    return (w1_pad,
            b1.astype(jnp.float32),
            w2_t.astype(jnp.float32),
            b2.astype(jnp.float32))


@jax.jit
def finetune_forward(x, w1_pad, b1, w2_t, b2):
    """x: any shape with IN_FEATURES elements. Returns (OUT_FEATURES,) f32."""
    x_flat = x.reshape(-1).astype(jnp.bfloat16)              # torch: x.view(-1)
    x_row = jnp.pad(x_flat, (0, K_PAD - IN_FEATURES)).reshape(1, K_PAD)

    cost = pl.CostEstimate(
        flops=2 * K_PAD * HIDDEN,
        transcendentals=0,
        bytes_accessed=K_PAD * HIDDEN * 2            # bf16 W1 stream (dominant)
        + K_PAD * 2                                  # bf16 x row
        + NUM_SPLITS * OUT_ROWS * HIDDEN * 4,        # f32 partial outputs
    )

    partials = pl.pallas_call(
        _fc1_kernel,
        out_shape=jax.ShapeDtypeStruct((NUM_SPLITS * OUT_ROWS, HIDDEN),
                                       jnp.float32),
        grid_spec=pltpu.PrefetchScalarGridSpec(
            num_scalar_prefetch=0,
            grid=(NUM_SPLITS, K_STEPS),              # (parallel, reduction)
            in_specs=[
                # x row: (1, TK) slice of the single (1, K_PAD) activation row.
                pl.BlockSpec((1, TK), lambda c, k: (0, c * K_STEPS + k)),
                # W1^T tile: (TK, 256), indexed by split * K_STEPS + k.
                pl.BlockSpec((TK, HIDDEN), lambda c, k: (c * K_STEPS + k, 0)),
            ],
            # One (8, 256) partial block per split (row 0 holds the result).
            out_specs=pl.BlockSpec((OUT_ROWS, HIDDEN), lambda c, k: (c, 0)),
            scratch_shapes=[pltpu.VMEM((1, HIDDEN), jnp.float32)],
        ),
        compiler_params=pltpu.CompilerParams(
            dimension_semantics=("parallel", "arbitrary"),
        ),
        cost_estimate=cost,
    )(x_row, w1_pad)

    # Sum the per-split fc1 partials, then the tiny bias + fc2 epilogue in
    # plain JAX: a (256,) add and a (256, 8) matmul — not worth a kernel.
    h = partials.reshape(NUM_SPLITS, OUT_ROWS, HIDDEN)[:, 0, :].sum(axis=0) + b1
    y = jnp.dot(h, w2_t, precision=jax.lax.Precision.HIGHEST) + b2
    return y


def init_params(key):
    """Deterministic init mirroring torch Linear shapes (stored transposed)."""
    k1, k2, k3, k4 = jax.random.split(key, 4)
    lim1 = 1.0 / jnp.sqrt(float(IN_FEATURES))
    lim2 = 1.0 / jnp.sqrt(float(HIDDEN))
    w1_t = jax.random.uniform(k1, (IN_FEATURES, HIDDEN), jnp.float32, -lim1, lim1)
    b1 = jax.random.uniform(k2, (HIDDEN,), jnp.float32, -lim1, lim1)
    w2_t = jax.random.uniform(k3, (HIDDEN, OUT_FEATURES), jnp.float32, -lim2, lim2)
    b2 = jax.random.uniform(k4, (OUT_FEATURES,), jnp.float32, -lim2, lim2)
    return w1_t, b1, w2_t, b2


if __name__ == "__main__":
    key = jax.random.PRNGKey(0)
    k_x, k_p = jax.random.split(key)

    # fc1's fan-in pins the input to exactly 75648 elements: NCHW (1,3,128,197).
    x = jax.random.normal(k_x, (1, 3, 128, 197), jnp.float32)
    w1_t, b1, w2_t, b2 = init_params(k_p)
    w1_pad, b1_p, w2_p, b2_p = prepare_params(w1_t, b1, w2_t, b2)

    y = finetune_forward(x, w1_pad, b1_p, w2_p, b2_p)
    y = jax.block_until_ready(y)
    assert y.shape == (OUT_FEATURES,)

    # Reference 1: same bf16-cast operands, f32 math -> should match tightly
    # (only accumulation order differs).
    x_bf = x.reshape(-1).astype(jnp.bfloat16).astype(jnp.float32)
    w1_bf = w1_t.astype(jnp.bfloat16).astype(jnp.float32)
    h_ref = jnp.dot(x_bf, w1_bf, precision=jax.lax.Precision.HIGHEST) + b1
    ref_bf16 = jnp.dot(h_ref, w2_t, precision=jax.lax.Precision.HIGHEST) + b2
    assert jnp.allclose(y, ref_bf16, atol=2e-3, rtol=2e-3), (y, ref_bf16)

    # Reference 2: full-f32 module semantics -> loose check (bf16 W1 storage).
    h32 = jnp.dot(x.reshape(-1), w1_t, precision=jax.lax.Precision.HIGHEST) + b1
    ref_f32 = jnp.dot(h32, w2_t, precision=jax.lax.Precision.HIGHEST) + b2
    assert jnp.allclose(y, ref_f32, atol=3e-2, rtol=3e-2), (y, ref_f32)

    print("KERNEL_OK")
</pallas_src>

<mosaic_0001>
module attributes {stable_mosaic.version = 11 : i64} {
  func.func @_fc1_kernel(%arg0: i32, %arg1: i32, %arg2: memref<1x9472xbf16, #tpu.memory_space<vmem>>, %arg3: memref<9472x256xbf16, #tpu.memory_space<vmem>>, %arg4: memref<8x256xf32, #tpu.memory_space<vmem>>, %arg5: memref<1x256xf32, #tpu.memory_space<vmem>>) attributes {dimension_semantics = [#tpu.dimension_semantics<parallel>, #tpu.dimension_semantics<arbitrary>], iteration_bounds = array<i64: 2, 4>, scalar_prefetch = 0 : i64, scratch_operands = 1 : i64, tpu.core_type = #tpu.core_type<tc>, window_params = [{transform_indices = @transform_0, window_bounds = array<i64: 1, 9472>}, {transform_indices = @transform_1, window_bounds = array<i64: 9472, 256>}, {transform_indices = @transform_2, window_bounds = array<i64: 8, 256>}]} {
    %c0_i32 = arith.constant 0 : i32
    %0 = arith.cmpi eq, %arg1, %c0_i32 : i32
    %1 = arith.extui %0 : i1 to i32
    %c0_i32_0 = arith.constant 0 : i32
    %2 = arith.cmpi ne, %1, %c0_i32_0 : i32
    scf.if %2 {
      %cst_9 = arith.constant 0.000000e+00 : f32
      %12 = vector.broadcast %cst_9 : f32 to vector<1x256xf32>
      %c0_10 = arith.constant 0 : index
      %c0_11 = arith.constant 0 : index
      %13 = vector.load %arg5[%c0_10, %c0_11] : memref<1x256xf32, #tpu.memory_space<vmem>>, vector<1x256xf32>
      tpu.vector_store %arg5[%c0_10, %c0_11], %12 {strides = array<i32>} : memref<1x256xf32, #tpu.memory_space<vmem>>, vector<1x256xf32>,
    } else {
    }
    %c0 = arith.constant 0 : index
    %c0_1 = arith.constant 0 : index
    %3 = vector.load %arg5[%c0, %c0_1] : memref<1x256xf32, #tpu.memory_space<vmem>>, vector<1x256xf32>
    %c0_2 = arith.constant 0 : index
    %c0_3 = arith.constant 0 : index
    %4 = vector.load %arg2[%c0_2, %c0_3] : memref<1x9472xbf16, #tpu.memory_space<vmem>>, vector<1x9472xbf16>
    %c0_4 = arith.constant 0 : index
    %c0_5 = arith.constant 0 : index
    %5 = vector.load %arg3[%c0_4, %c0_5] : memref<9472x256xbf16, #tpu.memory_space<vmem>>, vector<9472x256xbf16>
    %cst = arith.constant dense<0.000000e+00> : vector<1x256xf32>
    %6 = tpu.matmul %4, %5, %cst {dimension_numbers = #tpu.dot_dimension_numbers<[1], [0], [0], [1], [0, 0, 1, 1], [], []>} : vector<1x9472xbf16>, vector<9472x256xbf16>, vector<1x256xf32> -> vector<1x256xf32>
    %7 = arith.addf %3, %6 : vector<1x256xf32>
    %c0_6 = arith.constant 0 : index
    %c0_7 = arith.constant 0 : index
    %8 = vector.load %arg5[%c0_6, %c0_7] : memref<1x256xf32, #tpu.memory_space<vmem>>, vector<1x256xf32>
    tpu.vector_store %arg5[%c0_6, %c0_7], %7 {strides = array<i32>} : memref<1x256xf32, #tpu.memory_space<vmem>>, vector<1x256xf32>,
    %c3_i32 = arith.constant 3 : i32
    %9 = arith.cmpi eq, %arg1, %c3_i32 : i32
    %10 = arith.extui %9 : i1 to i32
    %c0_i32_8 = arith.constant 0 : i32
    %11 = arith.cmpi ne, %10, %c0_i32_8 : i32
    scf.if %11 {
      %c0_9 = arith.constant 0 : index
      %c0_10 = arith.constant 0 : index
      %12 = vector.load %arg5[%c0_9, %c0_10] : memref<1x256xf32, #tpu.memory_space<vmem>>, vector<1x256xf32>
      %13 = vector.shape_cast %12 : vector<1x256xf32> to vector<1x256xf32>
      %14 = vector.broadcast %13 : vector<1x256xf32> to vector<8x256xf32>
      %c0_11 = arith.constant 0 : index
      %c0_12 = arith.constant 0 : index
      %15 = vector.load %arg4[%c0_11, %c0_12] : memref<8x256xf32, #tpu.memory_space<vmem>>, vector<8x256xf32>
      tpu.vector_store %arg4[%c0_11, %c0_12], %14 {strides = array<i32>} : memref<8x256xf32, #tpu.memory_space<vmem>>, vector<8x256xf32>,
    } else {
    }
    return
  }
  func.func @transform_0(%arg0: i32, %arg1: i32) -> (i32, i32) {
    %c4_i32 = arith.constant 4 : i32
    %0 = arith.muli %arg0, %c4_i32 : i32
    %1 = arith.addi %0, %arg1 : i32
    %c0_i32 = arith.constant 0 : i32
    %c0_i32_0 = arith.constant 0 : i32
    return %c0_i32, %1 : i32, i32
  }
  func.func @transform_1(%arg0: i32, %arg1: i32) -> (i32, i32) {
    %c4_i32 = arith.constant 4 : i32
    %0 = arith.muli %arg0, %c4_i32 : i32
    %1 = arith.addi %0, %arg1 : i32
    %c0_i32 = arith.constant 0 : i32
    %c0_i32_0 = arith.constant 0 : i32
    return %1, %c0_i32 : i32, i32
  }
  func.func @transform_2(%arg0: i32, %arg1: i32) -> (i32, i32) {
    %c0_i32 = arith.constant 0 : i32
    %c0_i32_0 = arith.constant 0 : i32
    return %arg0, %c0_i32 : i32, i32
  }
}

</mosaic_0001>

<llo_original>
// kernel: finetune_forward.1
$region0: #{finetune_forward.1}
  #allocation0 [shape = 'u32[]', space=smem, size = 0x4, offset = 0x4, fixed_abs, tag = 'smem constant byte address 0x4 - core index']
  #allocation1 [shape = 'u32[144,128]{1,0:T(1,128)}', space=vmem, size = 0x12000, scoped, tag = 'internal scratch']
  #allocation2 [shape = 'f32[1,256]{1,0:T(1,128)}', space=vmem, size = 0x400, scoped, tag = 'scratch operand']
  %s0 = inlined_call_operand.vmem [shape: bf16[1,75776], index: 0, kind: input, shape index: {}]
  %s1 = inlined_call_operand.hbm [shape: bf16[75776,256], index: 1, kind: input, shape index: {}]
  %s2 = inlined_call_operand.vmem [shape: f32[16,256], index: 2, kind: output, shape index: {}]
  %s3 = sld [smem:[#allocation0]]
  $region53: #{finetune_forward.1} parent=0
    _
  %s5 = ssub.s32 1, %s3
  %s6 = scalar_select 0, %s5, %s3
  $region1: #{finetune_forward.1} parent=0
    #allocation3 [shape = 'u8[9699328]{0}', space=vmem, size = 0x940000, scoped, tag = 'input window, operand 1']
    #allocation4 [shape = 's32[2]{0}', space=sflag, size = 0x8, scoped, tag = 'scoped memory for finetune_forward.1']
    %7 = vsyncpa [#allocation4], 0
    %s8 = scalar_lea.sflag [#allocation4], 1
    %9 = vsyncpa %s8, 0
    loop: start=0, step=1, limit=10
    $region2: #{finetune_forward.1} parent=1 // loop_pre_header
      _
    $region3: #{finetune_forward.1} parent=1 // loop_header
      %s11 = sphi 0, %s15
      %p12 = scmp.ge.s32.totalorder %s11, 10
      %s18 = sphi 0, %s30
      %s19 = sphi 0, %s26
      %s20 = sphi 0, %s18
      %s21 = sphi 0, %s19
      %s22 = sphi 0, %s20
      %s23 = sphi 0, %s21
      %s37 = sphi 0, %s39
      %s40 = sphi 0, %s37
      %s41 = sphi 0, %s40
      %s57 = sphi 0, %s41
      %s67 = sphi 0, %s69
      %s70 = sphi 0, %s67
      %s71 = sphi 0, %s70
      %s87 = sphi 0, %s71
      %s93 = sphi 0, %s95
      %s96 = sphi 0, %s93
      %s97 = sphi 0, %s96
      %s113 = sphi 0, %s97
    $region4: #{finetune_forward.1} parent=1 // loop_header_branch
      %14 = sbr.rel (%p12) target = $region8
    $region5: #{finetune_forward.1} parent=1 // loop_body
      %s16 = ssub.s32 %s11, 1
      %s17 = ssub.s32 %s11, 2
      %s24 = sadd.s32 1, %s19
      %p25 = scmp.ge.s32.totalorder %s24, 4
      %s26 = scalar_select %p25, 0, %s24
      %s27 = sadd.s32 1, %s18
      %s28 = scalar_select %p25, %s27, %s18
      %p29 = scmp.ge.s32.totalorder %s28, 2
      %s30 = scalar_select %p29, 0, %s28
      %s31 = smul.u32 %s18, 4
      %s32 = sadd.s32 %s31, %s19
      %s33 = smul.u32 %s30, 4
      %s34 = sadd.s32 %s33, %s26
      %s35 = ssub.s32 %s32, %s34
      %p36 = scmp.eq.s32.totalorder %s35, 0
      %s38 = sadd.s32 %s37, 1
      %s39 = scalar_select %p36, %s37, %s38
      %p42 = pneg %p36
      %p43 = scmp.eq.s32.totalorder %s11, 7
      %p44 = por %p42, %p43
      %p45 = scmp.ne.s32.totalorder %s37, %s40
      %p46 = scmp.eq.s32.totalorder %s11, 0
      %p47 = por %p45, %p46
      %p48 = scmp.ne.s32.totalorder %s37, %s40
      %p49 = scmp.eq.s32.totalorder %s16, 7
      %p50 = por %p48, %p49
      %p51 = scmp.ne.s32.totalorder %s40, %s41
      %p52 = scmp.eq.s32.totalorder %s16, 0
      %p53 = por %p51, %p52
      %p54 = scmp.ne.s32.totalorder %s40, %s41
      %p55 = scmp.eq.s32.totalorder %s17, 7
      %p56 = por %p54, %p55
      %p58 = scmp.ne.s32.totalorder %s41, %s57
      %p59 = scmp.eq.s32.totalorder %s17, 0
      %p60 = por %p58, %p59
      %s61 = smul.u32 %s18, 4
      %s62 = sadd.s32 %s61, %s19
      %s63 = smul.u32 %s30, 4
      %s64 = sadd.s32 %s63, %s26
      %s65 = ssub.s32 %s62, %s64
      %p66 = scmp.eq.s32.totalorder %s65, 0
      %s68 = sadd.s32 %s67, 1
      %s69 = scalar_select %p66, %s67, %s68
      %p72 = pneg %p66
      %p73 = scmp.eq.s32.totalorder %s11, 7
      %p74 = por %p72, %p73
      %p75 = scmp.ne.s32.totalorder %s67, %s70
      %p76 = scmp.eq.s32.totalorder %s11, 0
      %p77 = por %p75, %p76
      %p78 = scmp.ne.s32.totalorder %s67, %s70
      %p79 = scmp.eq.s32.totalorder %s16, 7
      %p80 = por %p78, %p79
      %p81 = scmp.ne.s32.totalorder %s70, %s71
      %p82 = scmp.eq.s32.totalorder %s16, 0
      %p83 = por %p81, %p82
      %p84 = scmp.ne.s32.totalorder %s70, %s71
      %p85 = scmp.eq.s32.totalorder %s17, 7
      %p86 = por %p84, %p85
      %p88 = scmp.ne.s32.totalorder %s71, %s87
      %p89 = scmp.eq.s32.totalorder %s17, 0
      %p90 = por %p88, %p89
      %s91 = ssub.s32 %s18, %s30
      %p92 = scmp.eq.s32.totalorder %s91, 0
      %s94 = sadd.s32 %s93, 1
      %s95 = scalar_select %p92, %s93, %s94
      %p98 = pneg %p92
      %p99 = scmp.eq.s32.totalorder %s11, 7
      %p100 = por %p98, %p99
      %p101 = scmp.ne.s32.totalorder %s93, %s96
      %p102 = scmp.eq.s32.totalorder %s11, 0
      %p103 = por %p101, %p102
      %p104 = scmp.ne.s32.totalorder %s93, %s96
      %p105 = scmp.eq.s32.totalorder %s16, 7
      %p106 = por %p104, %p105
      %p107 = scmp.ne.s32.totalorder %s96, %s97
      %p108 = scmp.eq.s32.totalorder %s16, 0
      %p109 = por %p107, %p108
      %p110 = scmp.ne.s32.totalorder %s96, %s97
      %p111 = scmp.eq.s32.totalorder %s17, 7
      %p112 = por %p110, %p111
      %p114 = scmp.ne.s32.totalorder %s97, %s113
      %p115 = scmp.eq.s32.totalorder %s17, 0
      %p116 = por %p114, %p115
      %p117 = scmp.le.s32.totalorder 1, %s11
      %p118 = scmp.lt.s32.totalorder %s11, 9
      %p119 = pnand %p117, %p118
      %p120 = pneg %p119
      // Predicated region
      $region9: #{finetune_forward.1} parent=5 // pred_check
        _
      $region10: #{finetune_forward.1} parent=5 // pred_check_branch
        %122 = sbr.rel (%p119) target = $region12
      $region11: #{finetune_forward.1} parent=5 // pred_region
        %s123 = ssub.s32 %s11, 1
      $region12: #{finetune_forward.1} parent=5 // pred_fallthru
        _
      %p124 = scmp.lt.s32.totalorder %s11, 8
      // Predicated region
      $region13: #{finetune_forward.1} parent=5 // pred_check
        %p125 = pneg %p124
      $region14: #{finetune_forward.1} parent=5 // pred_check_branch
        %127 = sbr.rel (%p125) target = $region16
      $region15: #{finetune_forward.1} parent=5 // pred_region
        // Predicated region
        $region17: #{finetune_forward.1} parent=15 // pred_check
          %p128 = pneg %p47
        $region18: #{finetune_forward.1} parent=15 // pred_check_branch
          %130 = sbr.rel (%p128) target = $region20
        $region19: #{finetune_forward.1} parent=15 // pred_region
          %s131 = smul.u32 %s18, 4
          %s132 = sadd.s32 %s131, %s19
          %s133 = smul.u32 74, %s132
          %p134 = scmp.lt.s32.totalorder %s133, 591
          %s135 = scalar_select %p134, %s133, 591
          %s136 = scalar_lea.vmem %s0, %s135
          %s137 = smul.u32 %s18, 4
          %s138 = sadd.s32 %s137, %s19
          %s139 = smul.u32 74, %s138
        $region20: #{finetune_forward.1} parent=15 // pred_fallthru
          _
        // Predicated region
        $region21: #{finetune_forward.1} parent=15 // pred_check
          %p140 = pneg %p77
        $region22: #{finetune_forward.1} parent=15 // pred_check_branch
          %142 = sbr.rel (%p140) target = $region24
        $region23: #{finetune_forward.1} parent=15 // pred_region
          %s143 = sand.u32 %s67, 1
          %s144 = scalar_lea.sflag [#allocation4], %s143
          %s145 = sand.u32 %s67, 1
          %s146 = smul.addr %s145, 9472
          %s147 = scalar_lea.vmem [#allocation3], %s146
          %s148 = smul.u32 %s18, 4
          %s149 = sadd.s32 %s148, %s19
          %s150 = smul.u32 1184, %s149
          %s152 = ssub.s32 151552, 151552
          %153 = vsyncadd %s144, %s152
          %s154 = smul.addr %s150, 2
          %s155 = smul.addr %s154, 64
          %s156 = scalar_lea.hbm %s1, %s155
          %s157 = sshll.u32 %s147, 4
          %s158 = int_to_ptr.vmem [resolvable:$true] %s157
          %163 = dma.hbm_to_vmem [thread:$0]  %s156, 151552, %s158, %s144, 128, 128, 8
        $region24: #{finetune_forward.1} parent=15 // pred_fallthru
          _
      $region16: #{finetune_forward.1} parent=5 // pred_fallthru
        _
      %p164 = scmp.le.s32.totalorder 1, %s11
      %p165 = scmp.lt.s32.totalorder %s11, 9
      %p166 = pnand %p164, %p165
      %p167 = pneg %p166
      // Predicated region
      $region25: #{finetune_forward.1} parent=5 // pred_check
        _
      $region26: #{finetune_forward.1} parent=5 // pred_check_branch
        %169 = sbr.rel (%p166) target = $region28
      $region27: #{finetune_forward.1} parent=5 // pred_region
        %s170 = ssub.s32 %s11, 1
        %s171 = sand.u32 %s70, 1
        %s172 = scalar_lea.sflag [#allocation4], %s171
        %s173 = sand.u32 %s70, 1
        %s174 = smul.addr %s173, 9472
        %s175 = scalar_lea.vmem [#allocation3], %s174
        // Predicated region
        $region29: #{finetune_forward.1} parent=27 // pred_check
          %p176 = pneg %p83
        $region30: #{finetune_forward.1} parent=27 // pred_check_branch
          %178 = sbr.rel (%p176) target = $region32
        $region31: #{finetune_forward.1} parent=27 // pred_region
          %179 = dma.done %s172, 151552
        $region32: #{finetune_forward.1} parent=27 // pred_fallthru
          _
        %s180 = smul.u32 %s20, 4
        %s181 = sadd.s32 %s180, %s21
        %s182 = smul.u32 74, %s181
        %p183 = scmp.lt.s32.totalorder %s182, 591
        %s184 = scalar_select %p183, %s182, 591
        %s185 = scalar_lea.vmem %s0, %s184
        %p186 = pneg %p53
        %p187 = pneg %p50
        %s188 = sand.u32 %s70, 1
        %s189 = scalar_lea.sflag [#allocation4], %s188
        %s190 = sand.u32 %s70, 1
        %s191 = smul.addr %s190, 9472
        %s192 = scalar_lea.vmem [#allocation3], %s191
        %p193 = pneg %p83
        %p194 = pneg %p80
        %p195 = pneg %p109
        %p196 = pneg %p106
        %p197 = scmp.lt.s32.totalorder %s20, 1
        %s198 = scalar_select %p197, %s20, 1
        %s199 = smul.addr %s198, 2
        %s200 = smul.addr %s199, 8
        %s201 = scalar_lea.vmem %s2, %s200
        %s202 = smul.u32 %s20, 4
        %s203 = sadd.s32 %s202, %s21
        %s204 = smul.u32 74, %s203
        %p205 = scmp.lt.s32.totalorder %s204, 591
        %s206 = scalar_select %p205, %s204, 591
        %s207 = scalar_lea.vmem %s0, %s206
        %s208 = smul.u32 %s20, 4
        %s209 = sadd.s32 %s208, %s21
        %s210 = smul.u32 74, %s209
        %s211 = smul.u32 %s20, 4
        %s212 = sadd.s32 %s211, %s21
        %s213 = smul.u32 1184, %s212
        %p214 = scmp.lt.s32.totalorder %s20, 1
        %s215 = scalar_select %p214, %s20, 1
        %s216 = smul.addr %s215, 2
        %s217 = smul.addr %s216, 8
        %s218 = scalar_lea.vmem %s2, %s217
        %p219 = scmp.eq.s32.totalorder %s21, 0
        // Predicated region
        $region33: #{finetune_forward.1} parent=27 // pred_check
          %p220 = pneg %p219
        $region34: #{finetune_forward.1} parent=27 // pred_check_branch
          %222 = sbr.rel (%p220) target = $region36
        $region35: #{finetune_forward.1} parent=27 // pred_region
          %v223 = vlaneseq
          %vm224 = vcmp.ge.s32.totalorder %v223, 0
          %vm225 = vcmp.lt.s32.totalorder %v223, 256
          %vm226 = vmand %vm224, %vm225
          %227 = vst.msk [vmem:[#allocation2] sm:$0x3] %vm226, 0.0
        $region36: #{finetune_forward.1} parent=27 // pred_fallthru
          _
        %v228 = vld [vmem:[#allocation2] sm:$0x3]
        %v229 = vld [vmem:[%s207] sm:$0xff]
        %v230 = vld [vmem:[%s207 + $0x8] sm:$0xff]
        %v231 = vld [vmem:[%s207 + $0x10] sm:$0xff]
        %v232 = vld [vmem:[%s207 + $0x18] sm:$0xff]
        %v233 = vld [vmem:[%s207 + $0x20] sm:$0xff]
        %v234 = vld [vmem:[%s207 + $0x28] sm:$0xff]
        %v235 = vld [vmem:[%s207 + $0x30] sm:$0xff]
        %v236 = vld [vmem:[%s207 + $0x38] sm:$0xff]
        %v237 = vld [vmem:[%s207 + $0x40] sm:$0xff]
        %v238 = vld [vmem:[%s207 + $0x48] sm:$0x3]
        %v239 = vld [vmem:[%s175] sm:$0xff]
        %v240 = vld [vmem:[%s175 + $0x8] sm:$0xff]
        %v241 = vld [vmem:[%s175 + $0x10] sm:$0xff]
        %v242 = vld [vmem:[%s175 + $0x18] sm:$0xff]
        %v243 = vld [vmem:[%s175 + $0x20] sm:$0xff]
        %v244 = vld [vmem:[%s175 + $0x28] sm:$0xff]
        %v245 = vld [vmem:[%s175 + $0x30] sm:$0xff]
        %v246 = vld [vmem:[%s175 + $0x38] sm:$0xff]
        %v247 = vld [vmem:[%s175 + $0x40] sm:$0xff]
        %v248 = vld [vmem:[%s175 + $0x48] sm:$0xff]
        %v249 = vld [vmem:[%s175 + $0x50] sm:$0xff]
        %v250 = vld [vmem:[%s175 + $0x58] sm:$0xff]
        %v251 = vld [vmem:[%s175 + $0x60] sm:$0xff]
        %v252 = vld [vmem:[%s175 + $0x68] sm:$0xff]
        %v253 = vld [vmem:[%s175 + $0x70] sm:$0xff]
        %v254 = vld [vmem:[%s175 + $0x78] sm:$0xff]
        %v255 = vld [vmem:[%s175 + $0x80] sm:$0xff]
        %v256 = vld [vmem:[%s175 + $0x88] sm:$0xff]
        %v257 = vld [vmem:[%s175 + $0x90] sm:$0xff]
        %v258 = vld [vmem:[%s175 + $0x98] sm:$0xff]
        %v259 = vld [vmem:[%s175 + $0xa0] sm:$0xff]
        %v260 = vld [vmem:[%s175 + $0xa8] sm:$0xff]
        %v261 = vld [vmem:[%s175 + $0xb0] sm:$0xff]
        %v262 = vld [vmem:[%s175 + $0xb8] sm:$0xff]
        %v263 = vld [vmem:[%s175 + $0xc0] sm:$0xff]
        %v264 = vld [vmem:[%s175 + $0xc8] sm:$0xff]
        %v265 = vld [vmem:[%s175 + $0xd0] sm:$0xff]
        %v266 = vld [vmem:[%s175 + $0xd8] sm:$0xff]
        %v267 = vld [vmem:[%s175 + $0xe0] sm:$0xff]
        %v268 = vld [vmem:[%s175 + $0xe8] sm:$0xff]
        %v269 = vld [vmem:[%s175 + $0xf0] sm:$0xff]
        %v270 = vld [vmem:[%s175 + $0xf8] sm:$0xff]
        %v271 = vld [vmem:[%s175 + $0x100] sm:$0xff]
        %v272 = vld [vmem:[%s175 + $0x108] sm:$0xff]
        %v273 = vld [vmem:[%s175 + $0x110] sm:$0xff]
        %v274 = vld [vmem:[%s175 + $0x118] sm:$0xff]
        %v275 = vld [vmem:[%s175 + $0x120] sm:$0xff]
        %v276 = vld [vmem:[%s175 + $0x128] sm:$0xff]
        %v277 = vld [vmem:[%s175 + $0x130] sm:$0xff]
        %v278 = vld [vmem:[%s175 + $0x138] sm:$0xff]
        %v279 = vld [vmem:[%s175 + $0x140] sm:$0xff]
        %v280 = vld [vmem:[%s175 + $0x148] sm:$0xff]
        %v281 = vld [vmem:[%s175 + $0x150] sm:$0xff]
        %v282 = vld [vmem:[%s175 + $0x158] sm:$0xff]
        %v283 = vld [vmem:[%s175 + $0x160] sm:$0xff]
        %v284 = vld [vmem:[%s175 + $0x168] sm:$0xff]
        %v285 = vld [vmem:[%s175 + $0x170] sm:$0xff]
        %v286 = vld [vmem:[%s175 + $0x178] sm:$0xff]
        %v287 = vld [vmem:[%s175 + $0x180] sm:$0xff]
        %v288 = vld [vmem:[%s175 + $0x188] sm:$0xff]
        %v289 = vld [vmem:[%s175 + $0x190] sm:$0xff]
        %v290 = vld [vmem:[%s175 + $0x198] sm:$0xff]
        %v291 = vld [vmem:[%s175 + $0x1a0] sm:$0xff]
        %v292 = vld [vmem:[%s175 + $0x1a8] sm:$0xff]
        %v293 = vld [vmem:[%s175 + $0x1b0] sm:$0xff]
        %v294 = vld [vmem:[%s175 + $0x1b8] sm:$0xff]
        %v295 = vld [vmem:[%s175 + $0x1c0] sm:$0xff]
        %v296 = vld [vmem:[%s175 + $0x1c8] sm:$0xff]
        %v297 = vld [vmem:[%s175 + $0x1d0] sm:$0xff]
        %v298 = vld [vmem:[%s175 + $0x1d8] sm:$0xff]
        %v299 = vld [vmem:[%s175 + $0x1e0] sm:$0xff]
        %v300 = vld [vmem:[%s175 + $0x1e8] sm:$0xff]
        %v301 = vld [vmem:[%s175 + $0x1f0] sm:$0xff]
        %v302 = vld [vmem:[%s175 + $0x1f8] sm:$0xff]
        %v303 = vld [vmem:[%s175 + $0x200] sm:$0xff]
        %v304 = vld [vmem:[%s175 + $0x208] sm:$0xff]
        %v305 = vld [vmem:[%s175 + $0x210] sm:$0xff]
        %v306 = vld [vmem:[%s175 + $0x218] sm:$0xff]
        %v307 = vld [vmem:[%s175 + $0x220] sm:$0xff]
        %v308 = vld [vmem:[%s175 + $0x228] sm:$0xff]
        %v309 = vld [vmem:[%s175 + $0x230] sm:$0xff]
        %v310 = vld [vmem:[%s175 + $0x238] sm:$0xff]
        %v311 = vld [vmem:[%s175 + $0x240] sm:$0xff]
        %v312 = vld [vmem:[%s175 + $0x248] sm:$0xff]
        %v313 = vld [vmem:[%s175 + $0x250] sm:$0xff]
        %v314 = vld [vmem:[%s175 + $0x258] sm:$0xff]
        %v315 = vld [vmem:[%s175 + $0x260] sm:$0xff]
        %v316 = vld [vmem:[%s175 + $0x268] sm:$0xff]
        %v317 = vld [vmem:[%s175 + $0x270] sm:$0xff]
        %v318 = vld [vmem:[%s175 + $0x278] sm:$0xff]
        %v319 = vld [vmem:[%s175 + $0x280] sm:$0xff]
        %v320 = vld [vmem:[%s175 + $0x288] sm:$0xff]
        %v321 = vld [vmem:[%s175 + $0x290] sm:$0xff]
        %v322 = vld [vmem:[%s175 + $0x298] sm:$0xff]
        %v323 = vld [vmem:[%s175 + $0x2a0] sm:$0xff]
        %v324 = vld [vmem:[%s175 + $0x2a8] sm:$0xff]
        %v325 = vld [vmem:[%s175 + $0x2b0] sm:$0xff]
        %v326 = vld [vmem:[%s175 + $0x2b8] sm:$0xff]
        %v327 = vld [vmem:[%s175 + $0x2c0] sm:$0xff]
        %v328 = vld [vmem:[%s175 + $0x2c8] sm:$0xff]
        %v329 = vld [vmem:[%s175 + $0x2d0] sm:$0xff]
        %v330 = vld [vmem:[%s175 + $0x2d8] sm:$0xff]
        %v331 = vld [vmem:[%s175 + $0x2e0] sm:$0xff]
        %v332 = vld [vmem:[%s175 + $0x2e8] sm:$0xff]
        %v333 = vld [vmem:[%s175 + $0x2f0] sm:$0xff]
        %v334 = vld [vmem:[%s175 + $0x2f8] sm:$0xff]
        %v335 = vld [vmem:[%s175 + $0x300] sm:$0xff]
        %v336 = vld [vmem:[%s175 + $0x308] sm:$0xff]
        %v337 = vld [vmem:[%s175 + $0x310] sm:$0xff]
        %v338 = vld [vmem:[%s175 + $0x318] sm:$0xff]
        %v339 = vld [vmem:[%s175 + $0x320] sm:$0xff]
        %v340 = vld [vmem:[%s175 + $0x328] sm:$0xff]
        %v341 = vld [vmem:[%s175 + $0x330] sm:$0xff]
        %v342 = vld [vmem:[%s175 + $0x338] sm:$0xff]
        %v343 = vld [vmem:[%s175 + $0x340] sm:$0xff]
        %v344 = vld [vmem:[%s175 + $0x348] sm:$0xff]
        %v345 = vld [vmem:[%s175 + $0x350] sm:$0xff]
        %v346 = vld [vmem:[%s175 + $0x358] sm:$0xff]
        %v347 = vld [vmem:[%s175 + $0x360] sm:$0xff]
        %v348 = vld [vmem:[%s175 + $0x368] sm:$0xff]
        %v349 = vld [vmem:[%s175 + $0x370] sm:$0xff]
        %v350 = vld [vmem:[%s175 + $0x378] sm:$0xff]
        %v351 = vld [vmem:[%s175 + $0x380] sm:$0xff]
        %v352 = vld [vmem:[%s175 + $0x388] sm:$0xff]
        %v353 = vld [vmem:[%s175 + $0x390] sm:$0xff]
        %v354 = vld [vmem:[%s175 + $0x398] sm:$0xff]
        %v355 = vld [vmem:[%s175 + $0x3a0] sm:$0xff]
        %v356 = vld [vmem:[%s175 + $0x3a8] sm:$0xff]
        %v357 = vld [vmem:[%s175 + $0x3b0] sm:$0xff]
        %v358 = vld [vmem:[%s175 + $0x3b8] sm:$0xff]
        %v359 = vld [vmem:[%s175 + $0x3c0] sm:$0xff]
        %v360 = vld [vmem:[%s175 + $0x3c8] sm:$0xff]
        %v361 = vld [vmem:[%s175 + $0x3d0] sm:$0xff]
        %v362 = vld [vmem:[%s175 + $0x3d8] sm:$0xff]
        %v363 = vld [vmem:[%s175 + $0x3e0] sm:$0xff]
        %v364 = vld [vmem:[%s175 + $0x3e8] sm:$0xff]
        %v365 = vld [vmem:[%s175 + $0x3f0] sm:$0xff]
        %v366 = vld [vmem:[%s175 + $0x3f8] sm:$0xff]
        %v367 = vld [vmem:[%s175 + $0x400] sm:$0xff]
        %v368 = vld [vmem:[%s175 + $0x408] sm:$0xff]
        %v369 = vld [vmem:[%s175 + $0x410] sm:$0xff]
        %v370 = vld [vmem:[%s175 + $0x418] sm:$0xff]
        %v371 = vld [vmem:[%s175 + $0x420] sm:$0xff]
        %v372 = vld [vmem:[%s175 + $0x428] sm:$0xff]
        %v373 = vld [vmem:[%s175 + $0x430] sm:$0xff]
        %v374 = vld [vmem:[%s175 + $0x438] sm:$0xff]
        %v375 = vld [vmem:[%s175 + $0x440] sm:$0xff]
        %v376 = vld [vmem:[%s175 + $0x448] sm:$0xff]
        %v377 = vld [vmem:[%s175 + $0x450] sm:$0xff]
        %v378 = vld [vmem:[%s175 + $0x458] sm:$0xff]
        %v379 = vld [vmem:[%s175 + $0x460] sm:$0xff]
        %v380 = vld [vmem:[%s175 + $0x468] sm:$0xff]
        %v381 = vld [vmem:[%s175 + $0x470] sm:$0xff]
        %v382 = vld [vmem:[%s175 + $0x478] sm:$0xff]
        %v383 = vld [vmem:[%s175 + $0x480] sm:$0xff]
        %v384 = vld [vmem:[%s175 + $0x488] sm:$0xff]
        %v385 = vld [vmem:[%s175 + $0x490] sm:$0xff]
        %v386 = vld [vmem:[%s175 + $0x498] sm:$0xff]
        %v387 = vld [vmem:[%s175 + $0x4a0] sm:$0xff]
        %v388 = vld [vmem:[%s175 + $0x4a8] sm:$0xff]
        %v389 = vld [vmem:[%s175 + $0x4b0] sm:$0xff]
        %v390 = vld [vmem:[%s175 + $0x4b8] sm:$0xff]
        %v391 = vld [vmem:[%s175 + $0x4c0] sm:$0xff]
        %v392 = vld [vmem:[%s175 + $0x4c8] sm:$0xff]
        %v393 = vld [vmem:[%s175 + $0x4d0] sm:$0xff]
        %v394 = vld [vmem:[%s175 + $0x4d8] sm:$0xff]
        %v395 = vld [vmem:[%s175 + $0x4e0] sm:$0xff]
        %v396 = vld [vmem:[%s175 + $0x4e8] sm:$0xff]
        %v397 = vld [vmem:[%s175 + $0x4f0] sm:$0xff]
        %v398 = vld [vmem:[%s175 + $0x4f8] sm:$0xff]
        %v399 = vld [vmem:[%s175 + $0x500] sm:$0xff]
        %v400 = vld [vmem:[%s175 + $0x508] sm:$0xff]
        %v401 = vld [vmem:[%s175 + $0x510] sm:$0xff]
        %v402 = vld [vmem:[%s175 + $0x518] sm:$0xff]
        %v403 = vld [vmem:[%s175 + $0x520] sm:$0xff]
        %v404 = vld [vmem:[%s175 + $0x528] sm:$0xff]
        %v405 = vld [vmem:[%s175 + $0x530] sm:$0xff]
        %v406 = vld [vmem:[%s175 + $0x538] sm:$0xff]
        %v407 = vld [vmem:[%s175 + $0x540] sm:$0xff]
        %v408 = vld [vmem:[%s175 + $0x548] sm:$0xff]
        %v409 = vld [vmem:[%s175 + $0x550] sm:$0xff]
        %v410 = vld [vmem:[%s175 + $0x558] sm:$0xff]
        %v411 = vld [vmem:[%s175 + $0x560] sm:$0xff]
        %v412 = vld [vmem:[%s175 + $0x568] sm:$0xff]
        %v413 = vld [vmem:[%s175 + $0x570] sm:$0xff]
        %v414 = vld [vmem:[%s175 + $0x578] sm:$0xff]
        %v415 = vld [vmem:[%s175 + $0x580] sm:$0xff]
        %v416 = vld [vmem:[%s175 + $0x588] sm:$0xff]
        %v417 = vld [vmem:[%s175 + $0x590] sm:$0xff]
        %v418 = vld [vmem:[%s175 + $0x598] sm:$0xff]
        %v419 = vld [vmem:[%s175 + $0x5a0] sm:$0xff]
        %v420 = vld [vmem:[%s175 + $0x5a8] sm:$0xff]
        %v421 = vld [vmem:[%s175 + $0x5b0] sm:$0xff]
        %v422 = vld [vmem:[%s175 + $0x5b8] sm:$0xff]
        %v423 = vld [vmem:[%s175 + $0x5c0] sm:$0xff]
        %v424 = vld [vmem:[%s175 + $0x5c8] sm:$0xff]
        %v425 = vld [vmem:[%s175 + $0x5d0] sm:$0xff]
        %v426 = vld [vmem:[%s175 + $0x5d8] sm:$0xff]
        %v427 = vld [vmem:[%s175 + $0x5e0] sm:$0xff]
        %v428 = vld [vmem:[%s175 + $0x5e8] sm:$0xff]
        %v429 = vld [vmem:[%s175 + $0x5f0] sm:$0xff]
        %v430 = vld [vmem:[%s175 + $0x5f8] sm:$0xff]
        %v431 = vld [vmem:[%s175 + $0x600] sm:$0xff]
        %v432 = vld [vmem:[%s175 + $0x608] sm:$0xff]
        %v433 = vld [vmem:[%s175 + $0x610] sm:$0xff]
        %v434 = vld [vmem:[%s175 + $0x618] sm:$0xff]
        %v435 = vld [vmem:[%s175 + $0x620] sm:$0xff]
        %v436 = vld [vmem:[%s175 + $0x628] sm:$0xff]
        %v437 = vld [vmem:[%s175 + $0x630] sm:$0xff]
        %v438 = vld [vmem:[%s175 + $0x638] sm:$0xff]
        %v439 = vld [vmem:[%s175 + $0x640] sm:$0xff]
        %v440 = vld [vmem:[%s175 + $0x648] sm:$0xff]
        %v441 = vld [vmem:[%s175 + $0x650] sm:$0xff]
        %v442 = vld [vmem:[%s175 + $0x658] sm:$0xff]
        %v443 = vld [vmem:[%s175 + $0x660] sm:$0xff]
        %v444 = vld [vmem:[%s175 + $0x668] sm:$0xff]
        %v445 = vld [vmem:[%s175 + $0x670] sm:$0xff]
        %v446 = vld [vmem:[%s175 + $0x678] sm:$0xff]
        %v447 = vld [vmem:[%s175 + $0x680] sm:$0xff]
        %v448 = vld [vmem:[%s175 + $0x688] sm:$0xff]
        %v449 = vld [vmem:[%s175 + $0x690] sm:$0xff]
        %v450 = vld [vmem:[%s175 + $0x698] sm:$0xff]
        %v451 = vld [vmem:[%s175 + $0x6a0] sm:$0xff]
        %v452 = vld [vmem:[%s175 + $0x6a8] sm:$0xff]
        %v453 = vld [vmem:[%s175 + $0x6b0] sm:$0xff]
        %v454 = vld [vmem:[%s175 + $0x6b8] sm:$0xff]
        %v455 = vld [vmem:[%s175 + $0x6c0] sm:$0xff]
        %v456 = vld [vmem:[%s175 + $0x6c8] sm:$0xff]
        %v457 = vld [vmem:[%s175 + $0x6d0] sm:$0xff]
        %v458 = vld [vmem:[%s175 + $0x6d8] sm:$0xff]
        %v459 = vld [vmem:[%s175 + $0x6e0] sm:$0xff]
        %v460 = vld [vmem:[%s175 + $0x6e8] sm:$0xff]
        %v461 = vld [vmem:[%s175 + $0x6f0] sm:$0xff]
        %v462 = vld [vmem:[%s175 + $0x6f8] sm:$0xff]
        %v463 = vld [vmem:[%s175 + $0x700] sm:$0xff]
        %v464 = vld [vmem:[%s175 + $0x708] sm:$0xff]
        %v465 = vld [vmem:[%s175 + $0x710] sm:$0xff]
        %v466 = vld [vmem:[%s175 + $0x718] sm:$0xff]
        %v467 = vld [vmem:[%s175 + $0x720] sm:$0xff]
        %v468 = vld [vmem:[%s175 + $0x728] sm:$0xff]
        %v469 = vld [vmem:[%s175 + $0x730] sm:$0xff]
        %v470 = vld [vmem:[%s175 + $0x738] sm:$0xff]
        %v471 = vld [vmem:[%s175 + $0x740] sm:$0xff]
        %v472 = vld [vmem:[%s175 + $0x748] sm:$0xff]
        %v473 = vld [vmem:[%s175 + $0x750] sm:$0xff]
        %v474 = vld [vmem:[%s175 + $0x758] sm:$0xff]
        %v475 = vld [vmem:[%s175 + $0x760] sm:$0xff]
        %v476 = vld [vmem:[%s175 + $0x768] sm:$0xff]
        %v477 = vld [vmem:[%s175 + $0x770] sm:$0xff]
        %v478 = vld [vmem:[%s175 + $0x778] sm:$0xff]
        %v479 = vld [vmem:[%s175 + $0x780] sm:$0xff]
        %v480 = vld [vmem:[%s175 + $0x788] sm:$0xff]
        %v481 = vld [vmem:[%s175 + $0x790] sm:$0xff]
        %v482 = vld [vmem:[%s175 + $0x798] sm:$0xff]
        %v483 = vld [vmem:[%s175 + $0x7a0] sm:$0xff]
        %v484 = vld [vmem:[%s175 + $0x7a8] sm:$0xff]
        %v485 = vld [vmem:[%s175 + $0x7b0] sm:$0xff]
        %v486 = vld [vmem:[%s175 + $0x7b8] sm:$0xff]
        %v487 = vld [vmem:[%s175 + $0x7c0] sm:$0xff]
        %v488 = vld [vmem:[%s175 + $0x7c8] sm:$0xff]
        %v489 = vld [vmem:[%s175 + $0x7d0] sm:$0xff]
        %v490 = vld [vmem:[%s175 + $0x7d8] sm:$0xff]
        %v491 = vld [vmem:[%s175 + $0x7e0] sm:$0xff]
        %v492 = vld [vmem:[%s175 + $0x7e8] sm:$0xff]
        %v493 = vld [vmem:[%s175 + $0x7f0] sm:$0xff]
        %v494 = vld [vmem:[%s175 + $0x7f8] sm:$0xff]
        %v495 = vld [vmem:[%s175 + $0x800] sm:$0xff]
        %v496 = vld [vmem:[%s175 + $0x808] sm:$0xff]
        %v497 = vld [vmem:[%s175 + $0x810] sm:$0xff]
        %v498 = vld [vmem:[%s175 + $0x818] sm:$0xff]
        %v499 = vld [vmem:[%s175 + $0x820] sm:$0xff]
        %v500 = vld [vmem:[%s175 + $0x828] sm:$0xff]
        %v501 = vld [vmem:[%s175 + $0x830] sm:$0xff]
        %v502 = vld [vmem:[%s175 + $0x838] sm:$0xff]
        %v503 = vld [vmem:[%s175 + $0x840] sm:$0xff]
        %v504 = vld [vmem:[%s175 + $0x848] sm:$0xff]
        %v505 = vld [vmem:[%s175 + $0x850] sm:$0xff]
        %v506 = vld [vmem:[%s175 + $0x858] sm:$0xff]
        %v507 = vld [vmem:[%s175 + $0x860] sm:$0xff]
        %v508 = vld [vmem:[%s175 + $0x868] sm:$0xff]
        %v509 = vld [vmem:[%s175 + $0x870] sm:$0xff]
        %v510 = vld [vmem:[%s175 + $0x878] sm:$0xff]
        %v511 = vld [vmem:[%s175 + $0x880] sm:$0xff]
        %v512 = vld [vmem:[%s175 + $0x888] sm:$0xff]
        %v513 = vld [vmem:[%s175 + $0x890] sm:$0xff]
        %v514 = vld [vmem:[%s175 + $0x898] sm:$0xff]
        %v515 = vld [vmem:[%s175 + $0x8a0] sm:$0xff]
        %v516 = vld [vmem:[%s175 + $0x8a8] sm:$0xff]
        %v517 = vld [vmem:[%s175 + $0x8b0] sm:$0xff]
        %v518 = vld [vmem:[%s175 + $0x8b8] sm:$0xff]
        %v519 = vld [vmem:[%s175 + $0x8c0] sm:$0xff]
        %v520 = vld [vmem:[%s175 + $0x8c8] sm:$0xff]
        %v521 = vld [vmem:[%s175 + $0x8d0] sm:$0xff]
        %v522 = vld [vmem:[%s175 + $0x8d8] sm:$0xff]
        %v523 = vld [vmem:[%s175 + $0x8e0] sm:$0xff]
        %v524 = vld [vmem:[%s175 + $0x8e8] sm:$0xff]
        %v525 = vld [vmem:[%s175 + $0x8f0] sm:$0xff]
        %v526 = vld [vmem:[%s175 + $0x8f8] sm:$0xff]
        %v527 = vld [vmem:[%s175 + $0x900] sm:$0xff]
        %v528 = vld [vmem:[%s175 + $0x908] sm:$0xff]
        %v529 = vld [vmem:[%s175 + $0x910] sm:$0xff]
        %v530 = vld [vmem:[%s175 + $0x918] sm:$0xff]
        %v531 = vld [vmem:[%s175 + $0x920] sm:$0xff]
        %v532 = vld [vmem:[%s175 + $0x928] sm:$0xff]
        %v533 = vld [vmem:[%s175 + $0x930] sm:$0xff]
        %v534 = vld [vmem:[%s175 + $0x938] sm:$0xff]
        %v535 = vld [vmem:[%s175 + $0x940] sm:$0xff]
        %v536 = vld [vmem:[%s175 + $0x948] sm:$0xff]
        %v537 = vld [vmem:[%s175 + $0x950] sm:$0xff]
        %v538 = vld [vmem:[%s175 + $0x958] sm:$0xff]
        %v539 = vld [vmem:[%s175 + $0x960] sm:$0xff]
        %v540 = vld [vmem:[%s175 + $0x968] sm:$0xff]
        %v541 = vld [vmem:[%s175 + $0x970] sm:$0xff]
        %v542 = vld [vmem:[%s175 + $0x978] sm:$0xff]
        %v543 = vld [vmem:[%s175 + $0x980] sm:$0xff]
        %v544 = vld [vmem:[%s175 + $0x988] sm:$0xff]
        %v545 = vld [vmem:[%s175 + $0x990] sm:$0xff]
        %v546 = vld [vmem:[%s175 + $0x998] sm:$0xff]
        %v547 = vld [vmem:[%s175 + $0x9a0] sm:$0xff]
        %v548 = vld [vmem:[%s175 + $0x9a8] sm:$0xff]
        %v549 = vld [vmem:[%s175 + $0x9b0] sm:$0xff]
        %v550 = vld [vmem:[%s175 + $0x9b8] sm:$0xff]
        %v551 = vld [vmem:[%s175 + $0x9c0] sm:$0xff]
        %v552 = vld [vmem:[%s175 + $0x9c8] sm:$0xff]
        %v553 = vld [vmem:[%s175 + $0x9d0] sm:$0xff]
        %v554 = vld [vmem:[%s175 + $0x9d8] sm:$0xff]
        %v555 = vld [vmem:[%s175 + $0x9e0] sm:$0xff]
        %v556 = vld [vmem:[%s175 + $0x9e8] sm:$0xff]
        %v557 = vld [vmem:[%s175 + $0x9f0] sm:$0xff]
        %v558 = vld [vmem:[%s175 + $0x9f8] sm:$0xff]
        %v559 = vld [vmem:[%s175 + $0xa00] sm:$0xff]
        %v560 = vld [vmem:[%s175 + $0xa08] sm:$0xff]
        %v561 = vld [vmem:[%s175 + $0xa10] sm:$0xff]
        %v562 = vld [vmem:[%s175 + $0xa18] sm:$0xff]
        %v563 = vld [vmem:[%s175 + $0xa20] sm:$0xff]
        %v564 = vld [vmem:[%s175 + $0xa28] sm:$0xff]
        %v565 = vld [vmem:[%s175 + $0xa30] sm:$0xff]
        %v566 = vld [vmem:[%s175 + $0xa38] sm:$0xff]
        %v567 = vld [vmem:[%s175 + $0xa40] sm:$0xff]
        %v568 = vld [vmem:[%s175 + $0xa48] sm:$0xff]
        %v569 = vld [vmem:[%s175 + $0xa50] sm:$0xff]
        %v570 = vld [vmem:[%s175 + $0xa58] sm:$0xff]
        %v571 = vld [vmem:[%s175 + $0xa60] sm:$0xff]
        %v572 = vld [vmem:[%s175 + $0xa68] sm:$0xff]
        %v573 = vld [vmem:[%s175 + $0xa70] sm:$0xff]
        %v574 = vld [vmem:[%s175 + $0xa78] sm:$0xff]
        %v575 = vld [vmem:[%s175 + $0xa80] sm:$0xff]
        %v576 = vld [vmem:[%s175 + $0xa88] sm:$0xff]
        %v577 = vld [vmem:[%s175 + $0xa90] sm:$0xff]
        %v578 = vld [vmem:[%s175 + $0xa98] sm:$0xff]
        %v579 = vld [vmem:[%s175 + $0xaa0] sm:$0xff]
        %v580 = vld [vmem:[%s175 + $0xaa8] sm:$0xff]
        %v581 = vld [vmem:[%s175 + $0xab0] sm:$0xff]
        %v582 = vld [vmem:[%s175 + $0xab8] sm:$0xff]
        %v583 = vld [vmem:[%s175 + $0xac0] sm:$0xff]
        %v584 = vld [vmem:[%s175 + $0xac8] sm:$0xff]
        %v585 = vld [vmem:[%s175 + $0xad0] sm:$0xff]
        %v586 = vld [vmem:[%s175 + $0xad8] sm:$0xff]
        %v587 = vld [vmem:[%s175 + $0xae0] sm:$0xff]
        %v588 = vld [vmem:[%s175 + $0xae8] sm:$0xff]
        %v589 = vld [vmem:[%s175 + $0xaf0] sm:$0xff]
        %v590 = vld [vmem:[%s175 + $0xaf8] sm:$0xff]
        %v591 = vld [vmem:[%s175 + $0xb00] sm:$0xff]
        %v592 = vld [vmem:[%s175 + $0xb08] sm:$0xff]
        %v593 = vld [vmem:[%s175 + $0xb10] sm:$0xff]
        %v594 = vld [vmem:[%s175 + $0xb18] sm:$0xff]
        %v595 = vld [vmem:[%s175 + $0xb20] sm:$0xff]
        %v596 = vld [vmem:[%s175 + $0xb28] sm:$0xff]
        %v597 = vld [vmem:[%s175 + $0xb30] sm:$0xff]
        %v598 = vld [vmem:[%s175 + $0xb38] sm:$0xff]
        %v599 = vld [vmem:[%s175 + $0xb40] sm:$0xff]
        %v600 = vld [vmem:[%s175 + $0xb48] sm:$0xff]
        %v601 = vld [vmem:[%s175 + $0xb50] sm:$0xff]
        %v602 = vld [vmem:[%s175 + $0xb58] sm:$0xff]
        %v603 = vld [vmem:[%s175 + $0xb60] sm:$0xff]
        %v604 = vld [vmem:[%s175 + $0xb68] sm:$0xff]
        %v605 = vld [vmem:[%s175 + $0xb70] sm:$0xff]
        %v606 = vld [vmem:[%s175 + $0xb78] sm:$0xff]
        %v607 = vld [vmem:[%s175 + $0xb80] sm:$0xff]
        %v608 = vld [vmem:[%s175 + $0xb88] sm:$0xff]
        %v609 = vld [vmem:[%s175 + $0xb90] sm:$0xff]
        %v610 = vld [vmem:[%s175 + $0xb98] sm:$0xff]
        %v611 = vld [vmem:[%s175 + $0xba0] sm:$0xff]
        %v612 = vld [vmem:[%s175 + $0xba8] sm:$0xff]
        %v613 = vld [vmem:[%s175 + $0xbb0] sm:$0xff]
        %v614 = vld [vmem:[%s175 + $0xbb8] sm:$0xff]
        %v615 = vld [vmem:[%s175 + $0xbc0] sm:$0xff]
        %v616 = vld [vmem:[%s175 + $0xbc8] sm:$0xff]
        %v617 = vld [vmem:[%s175 + $0xbd0] sm:$0xff]
        %v618 = vld [vmem:[%s175 + $0xbd8] sm:$0xff]
        %v619 = vld [vmem:[%s175 + $0xbe0] sm:$0xff]
        %v620 = vld [vmem:[%s175 + $0xbe8] sm:$0xff]
        %v621 = vld [vmem:[%s175 + $0xbf0] sm:$0xff]
        %v622 = vld [vmem:[%s175 + $0xbf8] sm:$0xff]
        %v623 = vld [vmem:[%s175 + $0xc00] sm:$0xff]
        %v624 = vld [vmem:[%s175 + $0xc08] sm:$0xff]
        %v625 = vld [vmem:[%s175 + $0xc10] sm:$0xff]
        %v626 = vld [vmem:[%s175 + $0xc18] sm:$0xff]
        %v627 = vld [vmem:[%s175 + $0xc20] sm:$0xff]
        %v628 = vld [vmem:[%s175 + $0xc28] sm:$0xff]
        %v629 = vld [vmem:[%s175 + $0xc30] sm:$0xff]
        %v630 = vld [vmem:[%s175 + $0xc38] sm:$0xff]
        %v631 = vld [vmem:[%s175 + $0xc40] sm:$0xff]
        %v632 = vld [vmem:[%s175 + $0xc48] sm:$0xff]
        %v633 = vld [vmem:[%s175 + $0xc50] sm:$0xff]
        %v634 = vld [vmem:[%s175 + $0xc58] sm:$0xff]
        %v635 = vld [vmem:[%s175 + $0xc60] sm:$0xff]
        %v636 = vld [vmem:[%s175 + $0xc68] sm:$0xff]
        %v637 = vld [vmem:[%s175 + $0xc70] sm:$0xff]
        %v638 = vld [vmem:[%s175 + $0xc78] sm:$0xff]
        %v639 = vld [vmem:[%s175 + $0xc80] sm:$0xff]
        %v640 = vld [vmem:[%s175 + $0xc88] sm:$0xff]
        %v641 = vld [vmem:[%s175 + $0xc90] sm:$0xff]
        %v642 = vld [vmem:[%s175 + $0xc98] sm:$0xff]
        %v643 = vld [vmem:[%s175 + $0xca0] sm:$0xff]
        %v644 = vld [vmem:[%s175 + $0xca8] sm:$0xff]
        %v645 = vld [vmem:[%s175 + $0xcb0] sm:$0xff]
        %v646 = vld [vmem:[%s175 + $0xcb8] sm:$0xff]
        %v647 = vld [vmem:[%s175 + $0xcc0] sm:$0xff]
        %v648 = vld [vmem:[%s175 + $0xcc8] sm:$0xff]
        %v649 = vld [vmem:[%s175 + $0xcd0] sm:$0xff]
        %v650 = vld [vmem:[%s175 + $0xcd8] sm:$0xff]
        %v651 = vld [vmem:[%s175 + $0xce0] sm:$0xff]
        %v652 = vld [vmem:[%s175 + $0xce8] sm:$0xff]
        %v653 = vld [vmem:[%s175 + $0xcf0] sm:$0xff]
        %v654 = vld [vmem:[%s175 + $0xcf8] sm:$0xff]
        %v655 = vld [vmem:[%s175 + $0xd00] sm:$0xff]
        %v656 = vld [vmem:[%s175 + $0xd08] sm:$0xff]
        %v657 = vld [vmem:[%s175 + $0xd10] sm:$0xff]
        %v658 = vld [vmem:[%s175 + $0xd18] sm:$0xff]
        %v659 = vld [vmem:[%s175 + $0xd20] sm:$0xff]
        %v660 = vld [vmem:[%s175 + $0xd28] sm:$0xff]
        %v661 = vld [vmem:[%s175 + $0xd30] sm:$0xff]
        %v662 = vld [vmem:[%s175 + $0xd38] sm:$0xff]
        %v663 = vld [vmem:[%s175 + $0xd40] sm:$0xff]
        %v664 = vld [vmem:[%s175 + $0xd48] sm:$0xff]
        %v665 = vld [vmem:[%s175 + $0xd50] sm:$0xff]
        %v666 = vld [vmem:[%s175 + $0xd58] sm:$0xff]
        %v667 = vld [vmem:[%s175 + $0xd60] sm:$0xff]
        %v668 = vld [vmem:[%s175 + $0xd68] sm:$0xff]
        %v669 = vld [vmem:[%s175 + $0xd70] sm:$0xff]
        %v670 = vld [vmem:[%s175 + $0xd78] sm:$0xff]
        %v671 = vld [vmem:[%s175 + $0xd80] sm:$0xff]
        %v672 = vld [vmem:[%s175 + $0xd88] sm:$0xff]
        %v673 = vld [vmem:[%s175 + $0xd90] sm:$0xff]
        %v674 = vld [vmem:[%s175 + $0xd98] sm:$0xff]
        %v675 = vld [vmem:[%s175 + $0xda0] sm:$0xff]
        %v676 = vld [vmem:[%s175 + $0xda8] sm:$0xff]
        %v677 = vld [vmem:[%s175 + $0xdb0] sm:$0xff]
        %v678 = vld [vmem:[%s175 + $0xdb8] sm:$0xff]
        %v679 = vld [vmem:[%s175 + $0xdc0] sm:$0xff]
        %v680 = vld [vmem:[%s175 + $0xdc8] sm:$0xff]
        %v681 = vld [vmem:[%s175 + $0xdd0] sm:$0xff]
        %v682 = vld [vmem:[%s175 + $0xdd8] sm:$0xff]
        %v683 = vld [vmem:[%s175 + $0xde0] sm:$0xff]
        %v684 = vld [vmem:[%s175 + $0xde8] sm:$0xff]
        %v685 = vld [vmem:[%s175 + $0xdf0] sm:$0xff]
        %v686 = vld [vmem:[%s175 + $0xdf8] sm:$0xff]
        %v687 = vld [vmem:[%s175 + $0xe00] sm:$0xff]
        %v688 = vld [vmem:[%s175 + $0xe08] sm:$0xff]
        %v689 = vld [vmem:[%s175 + $0xe10] sm:$0xff]
        %v690 = vld [vmem:[%s175 + $0xe18] sm:$0xff]
        %v691 = vld [vmem:[%s175 + $0xe20] sm:$0xff]
        %v692 = vld [vmem:[%s175 + $0xe28] sm:$0xff]
        %v693 = vld [vmem:[%s175 + $0xe30] sm:$0xff]
        %v694 = vld [vmem:[%s175 + $0xe38] sm:$0xff]
        %v695 = vld [vmem:[%s175 + $0xe40] sm:$0xff]
        %v696 = vld [vmem:[%s175 + $0xe48] sm:$0xff]
        %v697 = vld [vmem:[%s175 + $0xe50] sm:$0xff]
        %v698 = vld [vmem:[%s175 + $0xe58] sm:$0xff]
        %v699 = vld [vmem:[%s175 + $0xe60] sm:$0xff]
        %v700 = vld [vmem:[%s175 + $0xe68] sm:$0xff]
        %v701 = vld [vmem:[%s175 + $0xe70] sm:$0xff]
        %v702 = vld [vmem:[%s175 + $0xe78] sm:$0xff]
        %v703 = vld [vmem:[%s175 + $0xe80] sm:$0xff]
        %v704 = vld [vmem:[%s175 + $0xe88] sm:$0xff]
        %v705 = vld [vmem:[%s175 + $0xe90] sm:$0xff]
        %v706 = vld [vmem:[%s175 + $0xe98] sm:$0xff]
        %v707 = vld [vmem:[%s175 + $0xea0] sm:$0xff]
        %v708 = vld [vmem:[%s175 + $0xea8] sm:$0xff]
        %v709 = vld [vmem:[%s175 + $0xeb0] sm:$0xff]
        %v710 = vld [vmem:[%s175 + $0xeb8] sm:$0xff]
        %v711 = vld [vmem:[%s175 + $0xec0] sm:$0xff]
        %v712 = vld [vmem:[%s175 + $0xec8] sm:$0xff]
        %v713 = vld [vmem:[%s175 + $0xed0] sm:$0xff]
        %v714 = vld [vmem:[%s175 + $0xed8] sm:$0xff]
        %v715 = vld [vmem:[%s175 + $0xee0] sm:$0xff]
        %v716 = vld [vmem:[%s175 + $0xee8] sm:$0xff]
        %v717 = vld [vmem:[%s175 + $0xef0] sm:$0xff]
        %v718 = vld [vmem:[%s175 + $0xef8] sm:$0xff]
        %v719 = vld [vmem:[%s175 + $0xf00] sm:$0xff]
        %v720 = vld [vmem:[%s175 + $0xf08] sm:$0xff]
        %v721 = vld [vmem:[%s175 + $0xf10] sm:$0xff]
        %v722 = vld [vmem:[%s175 + $0xf18] sm:$0xff]
        %v723 = vld [vmem:[%s175 + $0xf20] sm:$0xff]
        %v724 = vld [vmem:[%s175 + $0xf28] sm:$0xff]
        %v725 = vld [vmem:[%s175 + $0xf30] sm:$0xff]
        %v726 = vld [vmem:[%s175 + $0xf38] sm:$0xff]
        %v727 = vld [vmem:[%s175 + $0xf40] sm:$0xff]
        %v728 = vld [vmem:[%s175 + $0xf48] sm:$0xff]
        %v729 = vld [vmem:[%s175 + $0xf50] sm:$0xff]
        %v730 = vld [vmem:[%s175 + $0xf58] sm:$0xff]
        %v731 = vld [vmem:[%s175 + $0xf60] sm:$0xff]
        %v732 = vld [vmem:[%s175 + $0xf68] sm:$0xff]
        %v733 = vld [vmem:[%s175 + $0xf70] sm:$0xff]
        %v734 = vld [vmem:[%s175 + $0xf78] sm:$0xff]
        %v735 = vld [vmem:[%s175 + $0xf80] sm:$0xff]
        %v736 = vld [vmem:[%s175 + $0xf88] sm:$0xff]
        %v737 = vld [vmem:[%s175 + $0xf90] sm:$0xff]
        %v738 = vld [vmem:[%s175 + $0xf98] sm:$0xff]
        %v739 = vld [vmem:[%s175 + $0xfa0] sm:$0xff]
        %v740 = vld [vmem:[%s175 + $0xfa8] sm:$0xff]
        %v741 = vld [vmem:[%s175 + $0xfb0] sm:$0xff]
        %v742 = vld [vmem:[%s175 + $0xfb8] sm:$0xff]
        %v743 = vld [vmem:[%s175 + $0xfc0] sm:$0xff]
        %v744 = vld [vmem:[%s175 + $0xfc8] sm:$0xff]
        %v745 = vld [vmem:[%s175 + $0xfd0] sm:$0xff]
        %v746 = vld [vmem:[%s175 + $0xfd8] sm:$0xff]
        %v747 = vld [vmem:[%s175 + $0xfe0] sm:$0xff]
        %v748 = vld [vmem:[%s175 + $0xfe8] sm:$0xff]
        %v749 = vld [vmem:[%s175 + $0xff0] sm:$0xff]
        %v750 = vld [vmem:[%s175 + $0xff8] sm:$0xff]
        %v751 = vld [vmem:[%s175 + $0x1000] sm:$0xff]
        %v752 = vld [vmem:[%s175 + $0x1008] sm:$0xff]
        %v753 = vld [vmem:[%s175 + $0x1010] sm:$0xff]
        %v754 = vld [vmem:[%s175 + $0x1018] sm:$0xff]
        %v755 = vld [vmem:[%s175 + $0x1020] sm:$0xff]
        %v756 = vld [vmem:[%s175 + $0x1028] sm:$0xff]
        %v757 = vld [vmem:[%s175 + $0x1030] sm:$0xff]
        %v758 = vld [vmem:[%s175 + $0x1038] sm:$0xff]
        %v759 = vld [vmem:[%s175 + $0x1040] sm:$0xff]
        %v760 = vld [vmem:[%s175 + $0x1048] sm:$0xff]
        %v761 = vld [vmem:[%s175 + $0x1050] sm:$0xff]
        %v762 = vld [vmem:[%s175 + $0x1058] sm:$0xff]
        %v763 = vld [vmem:[%s175 + $0x1060] sm:$0xff]
        %v764 = vld [vmem:[%s175 + $0x1068] sm:$0xff]
        %v765 = vld [vmem:[%s175 + $0x1070] sm:$0xff]
        %v766 = vld [vmem:[%s175 + $0x1078] sm:$0xff]
        %v767 = vld [vmem:[%s175 + $0x1080] sm:$0xff]
        %v768 = vld [vmem:[%s175 + $0x1088] sm:$0xff]
        %v769 = vld [vmem:[%s175 + $0x1090] sm:$0xff]
        %v770 = vld [vmem:[%s175 + $0x1098] sm:$0xff]
        %v771 = vld [vmem:[%s175 + $0x10a0] sm:$0xff]
        %v772 = vld [vmem:[%s175 + $0x10a8] sm:$0xff]
        %v773 = vld [vmem:[%s175 + $0x10b0] sm:$0xff]
        %v774 = vld [vmem:[%s175 + $0x10b8] sm:$0xff]
        %v775 = vld [vmem:[%s175 + $0x10c0] sm:$0xff]
        %v776 = vld [vmem:[%s175 + $0x10c8] sm:$0xff]
        %v777 = vld [vmem:[%s175 + $0x10d0] sm:$0xff]
        %v778 = vld [vmem:[%s175 + $0x10d8] sm:$0xff]
        %v779 = vld [vmem:[%s175 + $0x10e0] sm:$0xff]
        %v780 = vld [vmem:[%s175 + $0x10e8] sm:$0xff]
        %v781 = vld [vmem:[%s175 + $0x10f0] sm:$0xff]
        %v782 = vld [vmem:[%s175 + $0x10f8] sm:$0xff]
        %v783 = vld [vmem:[%s175 + $0x1100] sm:$0xff]
        %v784 = vld [vmem:[%s175 + $0x1108] sm:$0xff]
        %v785 = vld [vmem:[%s175 + $0x1110] sm:$0xff]
        %v786 = vld [vmem:[%s175 + $0x1118] sm:$0xff]
        %v787 = vld [vmem:[%s175 + $0x1120] sm:$0xff]
        %v788 = vld [vmem:[%s175 + $0x1128] sm:$0xff]
        %v789 = vld [vmem:[%s175 + $0x1130] sm:$0xff]
        %v790 = vld [vmem:[%s175 + $0x1138] sm:$0xff]
        %v791 = vld [vmem:[%s175 + $0x1140] sm:$0xff]
        %v792 = vld [vmem:[%s175 + $0x1148] sm:$0xff]
        %v793 = vld [vmem:[%s175 + $0x1150] sm:$0xff]
        %v794 = vld [vmem:[%s175 + $0x1158] sm:$0xff]
        %v795 = vld [vmem:[%s175 + $0x1160] sm:$0xff]
        %v796 = vld [vmem:[%s175 + $0x1168] sm:$0xff]
        %v797 = vld [vmem:[%s175 + $0x1170] sm:$0xff]
        %v798 = vld [vmem:[%s175 + $0x1178] sm:$0xff]
        %v799 = vld [vmem:[%s175 + $0x1180] sm:$0xff]
        %v800 = vld [vmem:[%s175 + $0x1188] sm:$0xff]
        %v801 = vld [vmem:[%s175 + $0x1190] sm:$0xff]
        %v802 = vld [vmem:[%s175 + $0x1198] sm:$0xff]
        %v803 = vld [vmem:[%s175 + $0x11a0] sm:$0xff]
        %v804 = vld [vmem:[%s175 + $0x11a8] sm:$0xff]
        %v805 = vld [vmem:[%s175 + $0x11b0] sm:$0xff]
        %v806 = vld [vmem:[%s175 + $0x11b8] sm:$0xff]
        %v807 = vld [vmem:[%s175 + $0x11c0] sm:$0xff]
        %v808 = vld [vmem:[%s175 + $0x11c8] sm:$0xff]
        %v809 = vld [vmem:[%s175 + $0x11d0] sm:$0xff]
        %v810 = vld [vmem:[%s175 + $0x11d8] sm:$0xff]
        %v811 = vld [vmem:[%s175 + $0x11e0] sm:$0xff]
        %v812 = vld [vmem:[%s175 + $0x11e8] sm:$0xff]
        %v813 = vld [vmem:[%s175 + $0x11f0] sm:$0xff]
        %v814 = vld [vmem:[%s175 + $0x11f8] sm:$0xff]
        %v815 = vld [vmem:[%s175 + $0x1200] sm:$0xff]
        %v816 = vld [vmem:[%s175 + $0x1208] sm:$0xff]
        %v817 = vld [vmem:[%s175 + $0x1210] sm:$0xff]
        %v818 = vld [vmem:[%s175 + $0x1218] sm:$0xff]
        %v819 = vld [vmem:[%s175 + $0x1220] sm:$0xff]
        %v820 = vld [vmem:[%s175 + $0x1228] sm:$0xff]
        %v821 = vld [vmem:[%s175 + $0x1230] sm:$0xff]
        %v822 = vld [vmem:[%s175 + $0x1238] sm:$0xff]
        %v823 = vld [vmem:[%s175 + $0x1240] sm:$0xff]
        %v824 = vld [vmem:[%s175 + $0x1248] sm:$0xff]
        %v825 = vld [vmem:[%s175 + $0x1250] sm:$0xff]
        %v826 = vld [vmem:[%s175 + $0x1258] sm:$0xff]
        %v827 = vld [vmem:[%s175 + $0x1260] sm:$0xff]
        %v828 = vld [vmem:[%s175 + $0x1268] sm:$0xff]
        %v829 = vld [vmem:[%s175 + $0x1270] sm:$0xff]
        %v830 = vld [vmem:[%s175 + $0x1278] sm:$0xff]
        %v831 = vld [vmem:[%s175 + $0x1280] sm:$0xff]
        %v832 = vld [vmem:[%s175 + $0x1288] sm:$0xff]
        %v833 = vld [vmem:[%s175 + $0x1290] sm:$0xff]
        %v834 = vld [vmem:[%s175 + $0x1298] sm:$0xff]
        %v835 = vld [vmem:[%s175 + $0x12a0] sm:$0xff]
        %v836 = vld [vmem:[%s175 + $0x12a8] sm:$0xff]
        %v837 = vld [vmem:[%s175 + $0x12b0] sm:$0xff]
        %v838 = vld [vmem:[%s175 + $0x12b8] sm:$0xff]
        %v839 = vld [vmem:[%s175 + $0x12c0] sm:$0xff]
        %v840 = vld [vmem:[%s175 + $0x12c8] sm:$0xff]
        %v841 = vld [vmem:[%s175 + $0x12d0] sm:$0xff]
        %v842 = vld [vmem:[%s175 + $0x12d8] sm:$0xff]
        %v843 = vld [vmem:[%s175 + $0x12e0] sm:$0xff]
        %v844 = vld [vmem:[%s175 + $0x12e8] sm:$0xff]
        %v845 = vld [vmem:[%s175 + $0x12f0] sm:$0xff]
        %v846 = vld [vmem:[%s175 + $0x12f8] sm:$0xff]
        %v847 = vld [vmem:[%s175 + $0x1300] sm:$0xff]
        %v848 = vld [vmem:[%s175 + $0x1308] sm:$0xff]
        %v849 = vld [vmem:[%s175 + $0x1310] sm:$0xff]
        %v850 = vld [vmem:[%s175 + $0x1318] sm:$0xff]
        %v851 = vld [vmem:[%s175 + $0x1320] sm:$0xff]
        %v852 = vld [vmem:[%s175 + $0x1328] sm:$0xff]
        %v853 = vld [vmem:[%s175 + $0x1330] sm:$0xff]
        %v854 = vld [vmem:[%s175 + $0x1338] sm:$0xff]
        %v855 = vld [vmem:[%s175 + $0x1340] sm:$0xff]
        %v856 = vld [vmem:[%s175 + $0x1348] sm:$0xff]
        %v857 = vld [vmem:[%s175 + $0x1350] sm:$0xff]
        %v858 = vld [vmem:[%s175 + $0x1358] sm:$0xff]
        %v859 = vld [vmem:[%s175 + $0x1360] sm:$0xff]
        %v860 = vld [vmem:[%s175 + $0x1368] sm:$0xff]
        %v861 = vld [vmem:[%s175 + $0x1370] sm:$0xff]
        %v862 = vld [vmem:[%s175 + $0x1378] sm:$0xff]
        %v863 = vld [vmem:[%s175 + $0x1380] sm:$0xff]
        %v864 = vld [vmem:[%s175 + $0x1388] sm:$0xff]
        %v865 = vld [vmem:[%s175 + $0x1390] sm:$0xff]
        %v866 = vld [vmem:[%s175 + $0x1398] sm:$0xff]
        %v867 = vld [vmem:[%s175 + $0x13a0] sm:$0xff]
        %v868 = vld [vmem:[%s175 + $0x13a8] sm:$0xff]
        %v869 = vld [vmem:[%s175 + $0x13b0] sm:$0xff]
        %v870 = vld [vmem:[%s175 + $0x13b8] sm:$0xff]
        %v871 = vld [vmem:[%s175 + $0x13c0] sm:$0xff]
        %v872 = vld [vmem:[%s175 + $0x13c8] sm:$0xff]
        %v873 = vld [vmem:[%s175 + $0x13d0] sm:$0xff]
        %v874 = vld [vmem:[%s175 + $0x13d8] sm:$0xff]
        %v875 = vld [vmem:[%s175 + $0x13e0] sm:$0xff]
        %v876 = vld [vmem:[%s175 + $0x13e8] sm:$0xff]
        %v877 = vld [vmem:[%s175 + $0x13f0] sm:$0xff]
        %v878 = vld [vmem:[%s175 + $0x13f8] sm:$0xff]
        %v879 = vld [vmem:[%s175 + $0x1400] sm:$0xff]
        %v880 = vld [vmem:[%s175 + $0x1408] sm:$0xff]
        %v881 = vld [vmem:[%s175 + $0x1410] sm:$0xff]
        %v882 = vld [vmem:[%s175 + $0x1418] sm:$0xff]
        %v883 = vld [vmem:[%s175 + $0x1420] sm:$0xff]
        %v884 = vld [vmem:[%s175 + $0x1428] sm:$0xff]
        %v885 = vld [vmem:[%s175 + $0x1430] sm:$0xff]
        %v886 = vld [vmem:[%s175 + $0x1438] sm:$0xff]
        %v887 = vld [vmem:[%s175 + $0x1440] sm:$0xff]
        %v888 = vld [vmem:[%s175 + $0x1448] sm:$0xff]
        %v889 = vld [vmem:[%s175 + $0x1450] sm:$0xff]
        %v890 = vld [vmem:[%s175 + $0x1458] sm:$0xff]
        %v891 = vld [vmem:[%s175 + $0x1460] sm:$0xff]
        %v892 = vld [vmem:[%s175 + $0x1468] sm:$0xff]
        %v893 = vld [vmem:[%s175 + $0x1470] sm:$0xff]
        %v894 = vld [vmem:[%s175 + $0x1478] sm:$0xff]
        %v895 = vld [vmem:[%s175 + $0x1480] sm:$0xff]
        %v896 = vld [vmem:[%s175 + $0x1488] sm:$0xff]
        %v897 = vld [vmem:[%s175 + $0x1490] sm:$0xff]
        %v898 = vld [vmem:[%s175 + $0x1498] sm:$0xff]
        %v899 = vld [vmem:[%s175 + $0x14a0] sm:$0xff]
        %v900 = vld [vmem:[%s175 + $0x14a8] sm:$0xff]
        %v901 = vld [vmem:[%s175 + $0x14b0] sm:$0xff]
        %v902 = vld [vmem:[%s175 + $0x14b8] sm:$0xff]
        %v903 = vld [vmem:[%s175 + $0x14c0] sm:$0xff]
        %v904 = vld [vmem:[%s175 + $0x14c8] sm:$0xff]
        %v905 = vld [vmem:[%s175 + $0x14d0] sm:$0xff]
        %v906 = vld [vmem:[%s175 + $0x14d8] sm:$0xff]
        %v907 = vld [vmem:[%s175 + $0x14e0] sm:$0xff]
        %v908 = vld [vmem:[%s175 + $0x14e8] sm:$0xff]
        %v909 = vld [vmem:[%s175 + $0x14f0] sm:$0xff]
        %v910 = vld [vmem:[%s175 + $0x14f8] sm:$0xff]
        %v911 = vld [vmem:[%s175 + $0x1500] sm:$0xff]
        %v912 = vld [vmem:[%s175 + $0x1508] sm:$0xff]
        %v913 = vld [vmem:[%s175 + $0x1510] sm:$0xff]
        %v914 = vld [vmem:[%s175 + $0x1518] sm:$0xff]
        %v915 = vld [vmem:[%s175 + $0x1520] sm:$0xff]
        %v916 = vld [vmem:[%s175 + $0x1528] sm:$0xff]
        %v917 = vld [vmem:[%s175 + $0x1530] sm:$0xff]
        %v918 = vld [vmem:[%s175 + $0x1538] sm:$0xff]
        %v919 = vld [vmem:[%s175 + $0x1540] sm:$0xff]
        %v920 = vld [vmem:[%s175 + $0x1548] sm:$0xff]
        %v921 = vld [vmem:[%s175 + $0x1550] sm:$0xff]
        %v922 = vld [vmem:[%s175 + $0x1558] sm:$0xff]
        %v923 = vld [vmem:[%s175 + $0x1560] sm:$0xff]
        %v924 = vld [vmem:[%s175 + $0x1568] sm:$0xff]
        %v925 = vld [vmem:[%s175 + $0x1570] sm:$0xff]
        %v926 = vld [vmem:[%s175 + $0x1578] sm:$0xff]
        %v927 = vld [vmem:[%s175 + $0x1580] sm:$0xff]
        %v928 = vld [vmem:[%s175 + $0x1588] sm:$0xff]
        %v929 = vld [vmem:[%s175 + $0x1590] sm:$0xff]
        %v930 = vld [vmem:[%s175 + $0x1598] sm:$0xff]
        %v931 = vld [vmem:[%s175 + $0x15a0] sm:$0xff]
        %v932 = vld [vmem:[%s175 + $0x15a8] sm:$0xff]
        %v933 = vld [vmem:[%s175 + $0x15b0] sm:$0xff]
        %v934 = vld [vmem:[%s175 + $0x15b8] sm:$0xff]
        %v935 = vld [vmem:[%s175 + $0x15c0] sm:$0xff]
        %v936 = vld [vmem:[%s175 + $0x15c8] sm:$0xff]
        %v937 = vld [vmem:[%s175 + $0x15d0] sm:$0xff]
        %v938 = vld [vmem:[%s175 + $0x15d8] sm:$0xff]
        %v939 = vld [vmem:[%s175 + $0x15e0] sm:$0xff]
        %v940 = vld [vmem:[%s175 + $0x15e8] sm:$0xff]
        %v941 = vld [vmem:[%s175 + $0x15f0] sm:$0xff]
        %v942 = vld [vmem:[%s175 + $0x15f8] sm:$0xff]
        %v943 = vld [vmem:[%s175 + $0x1600] sm:$0xff]
        %v944 = vld [vmem:[%s175 + $0x1608] sm:$0xff]
        %v945 = vld [vmem:[%s175 + $0x1610] sm:$0xff]
        %v946 = vld [vmem:[%s175 + $0x1618] sm:$0xff]
        %v947 = vld [vmem:[%s175 + $0x1620] sm:$0xff]
        %v948 = vld [vmem:[%s175 + $0x1628] sm:$0xff]
        %v949 = vld [vmem:[%s175 + $0x1630] sm:$0xff]
        %v950 = vld [vmem:[%s175 + $0x1638] sm:$0xff]
        %v951 = vld [vmem:[%s175 + $0x1640] sm:$0xff]
        %v952 = vld [vmem:[%s175 + $0x1648] sm:$0xff]
        %v953 = vld [vmem:[%s175 + $0x1650] sm:$0xff]
        %v954 = vld [vmem:[%s175 + $0x1658] sm:$0xff]
        %v955 = vld [vmem:[%s175 + $0x1660] sm:$0xff]
        %v956 = vld [vmem:[%s175 + $0x1668] sm:$0xff]
        %v957 = vld [vmem:[%s175 + $0x1670] sm:$0xff]
        %v958 = vld [vmem:[%s175 + $0x1678] sm:$0xff]
        %v959 = vld [vmem:[%s175 + $0x1680] sm:$0xff]
        %v960 = vld [vmem:[%s175 + $0x1688] sm:$0xff]
        %v961 = vld [vmem:[%s175 + $0x1690] sm:$0xff]
        %v962 = vld [vmem:[%s175 + $0x1698] sm:$0xff]
        %v963 = vld [vmem:[%s175 + $0x16a0] sm:$0xff]
        %v964 = vld [vmem:[%s175 + $0x16a8] sm:$0xff]
        %v965 = vld [vmem:[%s175 + $0x16b0] sm:$0xff]
        %v966 = vld [vmem:[%s175 + $0x16b8] sm:$0xff]
        %v967 = vld [vmem:[%s175 + $0x16c0] sm:$0xff]
        %v968 = vld [vmem:[%s175 + $0x16c8] sm:$0xff]
        %v969 = vld [vmem:[%s175 + $0x16d0] sm:$0xff]
        %v970 = vld [vmem:[%s175 + $0x16d8] sm:$0xff]
        %v971 = vld [vmem:[%s175 + $0x16e0] sm:$0xff]
        %v972 = vld [vmem:[%s175 + $0x16e8] sm:$0xff]
        %v973 = vld [vmem:[%s175 + $0x16f0] sm:$0xff]
        %v974 = vld [vmem:[%s175 + $0x16f8] sm:$0xff]
        %v975 = vld [vmem:[%s175 + $0x1700] sm:$0xff]
        %v976 = vld [vmem:[%s175 + $0x1708] sm:$0xff]
        %v977 = vld [vmem:[%s175 + $0x1710] sm:$0xff]
        %v978 = vld [vmem:[%s175 + $0x1718] sm:$0xff]
        %v979 = vld [vmem:[%s175 + $0x1720] sm:$0xff]
        %v980 = vld [vmem:[%s175 + $0x1728] sm:$0xff]
        %v981 = vld [vmem:[%s175 + $0x1730] sm:$0xff]
        %v982 = vld [vmem:[%s175 + $0x1738] sm:$0xff]
        %v983 = vld [vmem:[%s175 + $0x1740] sm:$0xff]
        %v984 = vld [vmem:[%s175 + $0x1748] sm:$0xff]
        %v985 = vld [vmem:[%s175 + $0x1750] sm:$0xff]
        %v986 = vld [vmem:[%s175 + $0x1758] sm:$0xff]
        %v987 = vld [vmem:[%s175 + $0x1760] sm:$0xff]
        %v988 = vld [vmem:[%s175 + $0x1768] sm:$0xff]
        %v989 = vld [vmem:[%s175 + $0x1770] sm:$0xff]
        %v990 = vld [vmem:[%s175 + $0x1778] sm:$0xff]
        %v991 = vld [vmem:[%s175 + $0x1780] sm:$0xff]
        %v992 = vld [vmem:[%s175 + $0x1788] sm:$0xff]
        %v993 = vld [vmem:[%s175 + $0x1790] sm:$0xff]
        %v994 = vld [vmem:[%s175 + $0x1798] sm:$0xff]
        %v995 = vld [vmem:[%s175 + $0x17a0] sm:$0xff]
        %v996 = vld [vmem:[%s175 + $0x17a8] sm:$0xff]
        %v997 = vld [vmem:[%s175 + $0x17b0] sm:$0xff]
        %v998 = vld [vmem:[%s175 + $0x17b8] sm:$0xff]
        %v999 = vld [vmem:[%s175 + $0x17c0] sm:$0xff]
        %v1000 = vld [vmem:[%s175 + $0x17c8] sm:$0xff]
        %v1001 = vld [vmem:[%s175 + $0x17d0] sm:$0xff]
        %v1002 = vld [vmem:[%s175 + $0x17d8] sm:$0xff]
        %v1003 = vld [vmem:[%s175 + $0x17e0] sm:$0xff]
        %v1004 = vld [vmem:[%s175 + $0x17e8] sm:$0xff]
        %v1005 = vld [vmem:[%s175 + $0x17f0] sm:$0xff]
        %v1006 = vld [vmem:[%s175 + $0x17f8] sm:$0xff]
        %v1007 = vld [vmem:[%s175 + $0x1800] sm:$0xff]
        %v1008 = vld [vmem:[%s175 + $0x1808] sm:$0xff]
        %v1009 = vld [vmem:[%s175 + $0x1810] sm:$0xff]
        %v1010 = vld [vmem:[%s175 + $0x1818] sm:$0xff]
        %v1011 = vld [vmem:[%s175 + $0x1820] sm:$0xff]
        %v1012 = vld [vmem:[%s175 + $0x1828] sm:$0xff]
        %v1013 = vld [vmem:[%s175 + $0x1830] sm:$0xff]
        %v1014 = vld [vmem:[%s175 + $0x1838] sm:$0xff]
        %v1015 = vld [vmem:[%s175 + $0x1840] sm:$0xff]
        %v1016 = vld [vmem:[%s175 + $0x1848] sm:$0xff]
        %v1017 = vld [vmem:[%s175 + $0x1850] sm:$0xff]
        %v1018 = vld [vmem:[%s175 + $0x1858] sm:$0xff]
        %v1019 = vld [vmem:[%s175 + $0x1860] sm:$0xff]
        %v1020 = vld [vmem:[%s175 + $0x1868] sm:$0xff]
        %v1021 = vld [vmem:[%s175 + $0x1870] sm:$0xff]
        %v1022 = vld [vmem:[%s175 + $0x1878] sm:$0xff]
        %v1023 = vld [vmem:[%s175 + $0x1880] sm:$0xff]
        %v1024 = vld [vmem:[%s175 + $0x1888] sm:$0xff]
        %v1025 = vld [vmem:[%s175 + $0x1890] sm:$0xff]
        %v1026 = vld [vmem:[%s175 + $0x1898] sm:$0xff]
        %v1027 = vld [vmem:[%s175 + $0x18a0] sm:$0xff]
        %v1028 = vld [vmem:[%s175 + $0x18a8] sm:$0xff]
        %v1029 = vld [vmem:[%s175 + $0x18b0] sm:$0xff]
        %v1030 = vld [vmem:[%s175 + $0x18b8] sm:$0xff]
        %v1031 = vld [vmem:[%s175 + $0x18c0] sm:$0xff]
        %v1032 = vld [vmem:[%s175 + $0x18c8] sm:$0xff]
        %v1033 = vld [vmem:[%s175 + $0x18d0] sm:$0xff]
        %v1034 = vld [vmem:[%s175 + $0x18d8] sm:$0xff]
        %v1035 = vld [vmem:[%s175 + $0x18e0] sm:$0xff]
        %v1036 = vld [vmem:[%s175 + $0x18e8] sm:$0xff]
        %v1037 = vld [vmem:[%s175 + $0x18f0] sm:$0xff]
        %v1038 = vld [vmem:[%s175 + $0x18f8] sm:$0xff]
        %v1039 = vld [vmem:[%s175 + $0x1900] sm:$0xff]
        %v1040 = vld [vmem:[%s175 + $0x1908] sm:$0xff]
        %v1041 = vld [vmem:[%s175 + $0x1910] sm:$0xff]
        %v1042 = vld [vmem:[%s175 + $0x1918] sm:$0xff]
        %v1043 = vld [vmem:[%s175 + $0x1920] sm:$0xff]
        %v1044 = vld [vmem:[%s175 + $0x1928] sm:$0xff]
        %v1045 = vld [vmem:[%s175 + $0x1930] sm:$0xff]
        %v1046 = vld [vmem:[%s175 + $0x1938] sm:$0xff]
        %v1047 = vld [vmem:[%s175 + $0x1940] sm:$0xff]
        %v1048 = vld [vmem:[%s175 + $0x1948] sm:$0xff]
        %v1049 = vld [vmem:[%s175 + $0x1950] sm:$0xff]
        %v1050 = vld [vmem:[%s175 + $0x1958] sm:$0xff]
        %v1051 = vld [vmem:[%s175 + $0x1960] sm:$0xff]
        %v1052 = vld [vmem:[%s175 + $0x1968] sm:$0xff]
        %v1053 = vld [vmem:[%s175 + $0x1970] sm:$0xff]
        %v1054 = vld [vmem:[%s175 + $0x1978] sm:$0xff]
        %v1055 = vld [vmem:[%s175 + $0x1980] sm:$0xff]
        %v1056 = vld [vmem:[%s175 + $0x1988] sm:$0xff]
        %v1057 = vld [vmem:[%s175 + $0x1990] sm:$0xff]
        %v1058 = vld [vmem:[%s175 + $0x1998] sm:$0xff]
        %v1059 = vld [vmem:[%s175 + $0x19a0] sm:$0xff]
        %v1060 = vld [vmem:[%s175 + $0x19a8] sm:$0xff]
        %v1061 = vld [vmem:[%s175 + $0x19b0] sm:$0xff]
        %v1062 = vld [vmem:[%s175 + $0x19b8] sm:$0xff]
        %v1063 = vld [vmem:[%s175 + $0x19c0] sm:$0xff]
        %v1064 = vld [vmem:[%s175 + $0x19c8] sm:$0xff]
        %v1065 = vld [vmem:[%s175 + $0x19d0] sm:$0xff]
        %v1066 = vld [vmem:[%s175 + $0x19d8] sm:$0xff]
        %v1067 = vld [vmem:[%s175 + $0x19e0] sm:$0xff]
        %v1068 = vld [vmem:[%s175 + $0x19e8] sm:$0xff]
        %v1069 = vld [vmem:[%s175 + $0x19f0] sm:$0xff]
        %v1070 = vld [vmem:[%s175 + $0x19f8] sm:$0xff]
        %v1071 = vld [vmem:[%s175 + $0x1a00] sm:$0xff]
        %v1072 = vld [vmem:[%s175 + $0x1a08] sm:$0xff]
        %v1073 = vld [vmem:[%s175 + $0x1a10] sm:$0xff]
        %v1074 = vld [vmem:[%s175 + $0x1a18] sm:$0xff]
        %v1075 = vld [vmem:[%s175 + $0x1a20] sm:$0xff]
        %v1076 = vld [vmem:[%s175 + $0x1a28] sm:$0xff]
        %v1077 = vld [vmem:[%s175 + $0x1a30] sm:$0xff]
        %v1078 = vld [vmem:[%s175 + $0x1a38] sm:$0xff]
        %v1079 = vld [vmem:[%s175 + $0x1a40] sm:$0xff]
        %v1080 = vld [vmem:[%s175 + $0x1a48] sm:$0xff]
        %v1081 = vld [vmem:[%s175 + $0x1a50] sm:$0xff]
        %v1082 = vld [vmem:[%s175 + $0x1a58] sm:$0xff]
        %v1083 = vld [vmem:[%s175 + $0x1a60] sm:$0xff]
        %v1084 = vld [vmem:[%s175 + $0x1a68] sm:$0xff]
        %v1085 = vld [vmem:[%s175 + $0x1a70] sm:$0xff]
        %v1086 = vld [vmem:[%s175 + $0x1a78] sm:$0xff]
        %v1087 = vld [vmem:[%s175 + $0x1a80] sm:$0xff]
        %v1088 = vld [vmem:[%s175 + $0x1a88] sm:$0xff]
        %v1089 = vld [vmem:[%s175 + $0x1a90] sm:$0xff]
        %v1090 = vld [vmem:[%s175 + $0x1a98] sm:$0xff]
        %v1091 = vld [vmem:[%s175 + $0x1aa0] sm:$0xff]
        %v1092 = vld [vmem:[%s175 + $0x1aa8] sm:$0xff]
        %v1093 = vld [vmem:[%s175 + $0x1ab0] sm:$0xff]
        %v1094 = vld [vmem:[%s175 + $0x1ab8] sm:$0xff]
        %v1095 = vld [vmem:[%s175 + $0x1ac0] sm:$0xff]
        %v1096 = vld [vmem:[%s175 + $0x1ac8] sm:$0xff]
        %v1097 = vld [vmem:[%s175 + $0x1ad0] sm:$0xff]
        %v1098 = vld [vmem:[%s175 + $0x1ad8] sm:$0xff]
        %v1099 = vld [vmem:[%s175 + $0x1ae0] sm:$0xff]
        %v1100 = vld [vmem:[%s175 + $0x1ae8] sm:$0xff]
        %v1101 = vld [vmem:[%s175 + $0x1af0] sm:$0xff]
        %v1102 = vld [vmem:[%s175 + $0x1af8] sm:$0xff]
        %v1103 = vld [vmem:[%s175 + $0x1b00] sm:$0xff]
        %v1104 = vld [vmem:[%s175 + $0x1b08] sm:$0xff]
        %v1105 = vld [vmem:[%s175 + $0x1b10] sm:$0xff]
        %v1106 = vld [vmem:[%s175 + $0x1b18] sm:$0xff]
        %v1107 = vld [vmem:[%s175 + $0x1b20] sm:$0xff]
        %v1108 = vld [vmem:[%s175 + $0x1b28] sm:$0xff]
        %v1109 = vld [vmem:[%s175 + $0x1b30] sm:$0xff]
        %v1110 = vld [vmem:[%s175 + $0x1b38] sm:$0xff]
        %v1111 = vld [vmem:[%s175 + $0x1b40] sm:$0xff]
        %v1112 = vld [vmem:[%s175 + $0x1b48] sm:$0xff]
        %v1113 = vld [vmem:[%s175 + $0x1b50] sm:$0xff]
        %v1114 = vld [vmem:[%s175 + $0x1b58] sm:$0xff]
        %v1115 = vld [vmem:[%s175 + $0x1b60] sm:$0xff]
        %v1116 = vld [vmem:[%s175 + $0x1b68] sm:$0xff]
        %v1117 = vld [vmem:[%s175 + $0x1b70] sm:$0xff]
        %v1118 = vld [vmem:[%s175 + $0x1b78] sm:$0xff]
        %v1119 = vld [vmem:[%s175 + $0x1b80] sm:$0xff]
        %v1120 = vld [vmem:[%s175 + $0x1b88] sm:$0xff]
        %v1121 = vld [vmem:[%s175 + $0x1b90] sm:$0xff]
        %v1122 = vld [vmem:[%s175 + $0x1b98] sm:$0xff]
        %v1123 = vld [vmem:[%s175 + $0x1ba0] sm:$0xff]
        %v1124 = vld [vmem:[%s175 + $0x1ba8] sm:$0xff]
        %v1125 = vld [vmem:[%s175 + $0x1bb0] sm:$0xff]
        %v1126 = vld [vmem:[%s175 + $0x1bb8] sm:$0xff]
        %v1127 = vld [vmem:[%s175 + $0x1bc0] sm:$0xff]
        %v1128 = vld [vmem:[%s175 + $0x1bc8] sm:$0xff]
        %v1129 = vld [vmem:[%s175 + $0x1bd0] sm:$0xff]
        %v1130 = vld [vmem:[%s175 + $0x1bd8] sm:$0xff]
        %v1131 = vld [vmem:[%s175 + $0x1be0] sm:$0xff]
        %v1132 = vld [vmem:[%s175 + $0x1be8] sm:$0xff]
        %v1133 = vld [vmem:[%s175 + $0x1bf0] sm:$0xff]
        %v1134 = vld [vmem:[%s175 + $0x1bf8] sm:$0xff]
        %v1135 = vld [vmem:[%s175 + $0x1c00] sm:$0xff]
        %v1136 = vld [vmem:[%s175 + $0x1c08] sm:$0xff]
        %v1137 = vld [vmem:[%s175 + $0x1c10] sm:$0xff]
        %v1138 = vld [vmem:[%s175 + $0x1c18] sm:$0xff]
        %v1139 = vld [vmem:[%s175 + $0x1c20] sm:$0xff]
        %v1140 = vld [vmem:[%s175 + $0x1c28] sm:$0xff]
        %v1141 = vld [vmem:[%s175 + $0x1c30] sm:$0xff]
        %v1142 = vld [vmem:[%s175 + $0x1c38] sm:$0xff]
        %v1143 = vld [vmem:[%s175 + $0x1c40] sm:$0xff]
        %v1144 = vld [vmem:[%s175 + $0x1c48] sm:$0xff]
        %v1145 = vld [vmem:[%s175 + $0x1c50] sm:$0xff]
        %v1146 = vld [vmem:[%s175 + $0x1c58] sm:$0xff]
        %v1147 = vld [vmem:[%s175 + $0x1c60] sm:$0xff]
        %v1148 = vld [vmem:[%s175 + $0x1c68] sm:$0xff]
        %v1149 = vld [vmem:[%s175 + $0x1c70] sm:$0xff]
        %v1150 = vld [vmem:[%s175 + $0x1c78] sm:$0xff]
        %v1151 = vld [vmem:[%s175 + $0x1c80] sm:$0xff]
        %v1152 = vld [vmem:[%s175 + $0x1c88] sm:$0xff]
        %v1153 = vld [vmem:[%s175 + $0x1c90] sm:$0xff]
        %v1154 = vld [vmem:[%s175 + $0x1c98] sm:$0xff]
        %v1155 = vld [vmem:[%s175 + $0x1ca0] sm:$0xff]
        %v1156 = vld [vmem:[%s175 + $0x1ca8] sm:$0xff]
        %v1157 = vld [vmem:[%s175 + $0x1cb0] sm:$0xff]
        %v1158 = vld [vmem:[%s175 + $0x1cb8] sm:$0xff]
        %v1159 = vld [vmem:[%s175 + $0x1cc0] sm:$0xff]
        %v1160 = vld [vmem:[%s175 + $0x1cc8] sm:$0xff]
        %v1161 = vld [vmem:[%s175 + $0x1cd0] sm:$0xff]
        %v1162 = vld [vmem:[%s175 + $0x1cd8] sm:$0xff]
        %v1163 = vld [vmem:[%s175 + $0x1ce0] sm:$0xff]
        %v1164 = vld [vmem:[%s175 + $0x1ce8] sm:$0xff]
        %v1165 = vld [vmem:[%s175 + $0x1cf0] sm:$0xff]
        %v1166 = vld [vmem:[%s175 + $0x1cf8] sm:$0xff]
        %v1167 = vld [vmem:[%s175 + $0x1d00] sm:$0xff]
        %v1168 = vld [vmem:[%s175 + $0x1d08] sm:$0xff]
        %v1169 = vld [vmem:[%s175 + $0x1d10] sm:$0xff]
        %v1170 = vld [vmem:[%s175 + $0x1d18] sm:$0xff]
        %v1171 = vld [vmem:[%s175 + $0x1d20] sm:$0xff]
        %v1172 = vld [vmem:[%s175 + $0x1d28] sm:$0xff]
        %v1173 = vld [vmem:[%s175 + $0x1d30] sm:$0xff]
        %v1174 = vld [vmem:[%s175 + $0x1d38] sm:$0xff]
        %v1175 = vld [vmem:[%s175 + $0x1d40] sm:$0xff]
        %v1176 = vld [vmem:[%s175 + $0x1d48] sm:$0xff]
        %v1177 = vld [vmem:[%s175 + $0x1d50] sm:$0xff]
        %v1178 = vld [vmem:[%s175 + $0x1d58] sm:$0xff]
        %v1179 = vld [vmem:[%s175 + $0x1d60] sm:$0xff]
        %v1180 = vld [vmem:[%s175 + $0x1d68] sm:$0xff]
        %v1181 = vld [vmem:[%s175 + $0x1d70] sm:$0xff]
        %v1182 = vld [vmem:[%s175 + $0x1d78] sm:$0xff]
        %v1183 = vld [vmem:[%s175 + $0x1d80] sm:$0xff]
        %v1184 = vld [vmem:[%s175 + $0x1d88] sm:$0xff]
        %v1185 = vld [vmem:[%s175 + $0x1d90] sm:$0xff]
        %v1186 = vld [vmem:[%s175 + $0x1d98] sm:$0xff]
        %v1187 = vld [vmem:[%s175 + $0x1da0] sm:$0xff]
        %v1188 = vld [vmem:[%s175 + $0x1da8] sm:$0xff]
        %v1189 = vld [vmem:[%s175 + $0x1db0] sm:$0xff]
        %v1190 = vld [vmem:[%s175 + $0x1db8] sm:$0xff]
        %v1191 = vld [vmem:[%s175 + $0x1dc0] sm:$0xff]
        %v1192 = vld [vmem:[%s175 + $0x1dc8] sm:$0xff]
        %v1193 = vld [vmem:[%s175 + $0x1dd0] sm:$0xff]
        %v1194 = vld [vmem:[%s175 + $0x1dd8] sm:$0xff]
        %v1195 = vld [vmem:[%s175 + $0x1de0] sm:$0xff]
        %v1196 = vld [vmem:[%s175 + $0x1de8] sm:$0xff]
        %v1197 = vld [vmem:[%s175 + $0x1df0] sm:$0xff]
        %v1198 = vld [vmem:[%s175 + $0x1df8] sm:$0xff]
        %v1199 = vld [vmem:[%s175 + $0x1e00] sm:$0xff]
        %v1200 = vld [vmem:[%s175 + $0x1e08] sm:$0xff]
        %v1201 = vld [vmem:[%s175 + $0x1e10] sm:$0xff]
        %v1202 = vld [vmem:[%s175 + $0x1e18] sm:$0xff]
        %v1203 = vld [vmem:[%s175 + $0x1e20] sm:$0xff]
        %v1204 = vld [vmem:[%s175 + $0x1e28] sm:$0xff]
        %v1205 = vld [vmem:[%s175 + $0x1e30] sm:$0xff]
        %v1206 = vld [vmem:[%s175 + $0x1e38] sm:$0xff]
        %v1207 = vld [vmem:[%s175 + $0x1e40] sm:$0xff]
        %v1208 = vld [vmem:[%s175 + $0x1e48] sm:$0xff]
        %v1209 = vld [vmem:[%s175 + $0x1e50] sm:$0xff]
        %v1210 = vld [vmem:[%s175 + $0x1e58] sm:$0xff]
        %v1211 = vld [vmem:[%s175 + $0x1e60] sm:$0xff]
        %v1212 = vld [vmem:[%s175 + $0x1e68] sm:$0xff]
        %v1213 = vld [vmem:[%s175 + $0x1e70] sm:$0xff]
        %v1214 = vld [vmem:[%s175 + $0x1e78] sm:$0xff]
        %v1215 = vld [vmem:[%s175 + $0x1e80] sm:$0xff]
        %v1216 = vld [vmem:[%s175 + $0x1e88] sm:$0xff]
        %v1217 = vld [vmem:[%s175 + $0x1e90] sm:$0xff]
        %v1218 = vld [vmem:[%s175 + $0x1e98] sm:$0xff]
        %v1219 = vld [vmem:[%s175 + $0x1ea0] sm:$0xff]
        %v1220 = vld [vmem:[%s175 + $0x1ea8] sm:$0xff]
        %v1221 = vld [vmem:[%s175 + $0x1eb0] sm:$0xff]
        %v1222 = vld [vmem:[%s175 + $0x1eb8] sm:$0xff]
        %v1223 = vld [vmem:[%s175 + $0x1ec0] sm:$0xff]
        %v1224 = vld [vmem:[%s175 + $0x1ec8] sm:$0xff]
        %v1225 = vld [vmem:[%s175 + $0x1ed0] sm:$0xff]
        %v1226 = vld [vmem:[%s175 + $0x1ed8] sm:$0xff]
        %v1227 = vld [vmem:[%s175 + $0x1ee0] sm:$0xff]
        %v1228 = vld [vmem:[%s175 + $0x1ee8] sm:$0xff]
        %v1229 = vld [vmem:[%s175 + $0x1ef0] sm:$0xff]
        %v1230 = vld [vmem:[%s175 + $0x1ef8] sm:$0xff]
        %v1231 = vld [vmem:[%s175 + $0x1f00] sm:$0xff]
        %v1232 = vld [vmem:[%s175 + $0x1f08] sm:$0xff]
        %v1233 = vld [vmem:[%s175 + $0x1f10] sm:$0xff]
        %v1234 = vld [vmem:[%s175 + $0x1f18] sm:$0xff]
        %v1235 = vld [vmem:[%s175 + $0x1f20] sm:$0xff]
        %v1236 = vld [vmem:[%s175 + $0x1f28] sm:$0xff]
        %v1237 = vld [vmem:[%s175 + $0x1f30] sm:$0xff]
        %v1238 = vld [vmem:[%s175 + $0x1f38] sm:$0xff]
        %v1239 = vld [vmem:[%s175 + $0x1f40] sm:$0xff]
        %v1240 = vld [vmem:[%s175 + $0x1f48] sm:$0xff]
        %v1241 = vld [vmem:[%s175 + $0x1f50] sm:$0xff]
        %v1242 = vld [vmem:[%s175 + $0x1f58] sm:$0xff]
        %v1243 = vld [vmem:[%s175 + $0x1f60] sm:$0xff]
        %v1244 = vld [vmem:[%s175 + $0x1f68] sm:$0xff]
        %v1245 = vld [vmem:[%s175 + $0x1f70] sm:$0xff]
        %v1246 = vld [vmem:[%s175 + $0x1f78] sm:$0xff]
        %v1247 = vld [vmem:[%s175 + $0x1f80] sm:$0xff]
        %v1248 = vld [vmem:[%s175 + $0x1f88] sm:$0xff]
        %v1249 = vld [vmem:[%s175 + $0x1f90] sm:$0xff]
        %v1250 = vld [vmem:[%s175 + $0x1f98] sm:$0xff]
        %v1251 = vld [vmem:[%s175 + $0x1fa0] sm:$0xff]
        %v1252 = vld [vmem:[%s175 + $0x1fa8] sm:$0xff]
        %v1253 = vld [vmem:[%s175 + $0x1fb0] sm:$0xff]
        %v1254 = vld [vmem:[%s175 + $0x1fb8] sm:$0xff]
        %v1255 = vld [vmem:[%s175 + $0x1fc0] sm:$0xff]
        %v1256 = vld [vmem:[%s175 + $0x1fc8] sm:$0xff]
        %v1257 = vld [vmem:[%s175 + $0x1fd0] sm:$0xff]
        %v1258 = vld [vmem:[%s175 + $0x1fd8] sm:$0xff]
        %v1259 = vld [vmem:[%s175 + $0x1fe0] sm:$0xff]
        %v1260 = vld [vmem:[%s175 + $0x1fe8] sm:$0xff]
        %v1261 = vld [vmem:[%s175 + $0x1ff0] sm:$0xff]
        %v1262 = vld [vmem:[%s175 + $0x1ff8] sm:$0xff]
        %v1263 = vld [vmem:[%s175 + $0x2000] sm:$0xff]
        %v1264 = vld [vmem:[%s175 + $0x2008] sm:$0xff]
        %v1265 = vld [vmem:[%s175 + $0x2010] sm:$0xff]
        %v1266 = vld [vmem:[%s175 + $0x2018] sm:$0xff]
        %v1267 = vld [vmem:[%s175 + $0x2020] sm:$0xff]
        %v1268 = vld [vmem:[%s175 + $0x2028] sm:$0xff]
        %v1269 = vld [vmem:[%s175 + $0x2030] sm:$0xff]
        %v1270 = vld [vmem:[%s175 + $0x2038] sm:$0xff]
        %v1271 = vld [vmem:[%s175 + $0x2040] sm:$0xff]
        %v1272 = vld [vmem:[%s175 + $0x2048] sm:$0xff]
        %v1273 = vld [vmem:[%s175 + $0x2050] sm:$0xff]
        %v1274 = vld [vmem:[%s175 + $0x2058] sm:$0xff]
        %v1275 = vld [vmem:[%s175 + $0x2060] sm:$0xff]
        %v1276 = vld [vmem:[%s175 + $0x2068] sm:$0xff]
        %v1277 = vld [vmem:[%s175 + $0x2070] sm:$0xff]
        %v1278 = vld [vmem:[%s175 + $0x2078] sm:$0xff]
        %v1279 = vld [vmem:[%s175 + $0x2080] sm:$0xff]
        %v1280 = vld [vmem:[%s175 + $0x2088] sm:$0xff]
        %v1281 = vld [vmem:[%s175 + $0x2090] sm:$0xff]
        %v1282 = vld [vmem:[%s175 + $0x2098] sm:$0xff]
        %v1283 = vld [vmem:[%s175 + $0x20a0] sm:$0xff]
        %v1284 = vld [vmem:[%s175 + $0x20a8] sm:$0xff]
        %v1285 = vld [vmem:[%s175 + $0x20b0] sm:$0xff]
        %v1286 = vld [vmem:[%s175 + $0x20b8] sm:$0xff]
        %v1287 = vld [vmem:[%s175 + $0x20c0] sm:$0xff]
        %v1288 = vld [vmem:[%s175 + $0x20c8] sm:$0xff]
        %v1289 = vld [vmem:[%s175 + $0x20d0] sm:$0xff]
        %v1290 = vld [vmem:[%s175 + $0x20d8] sm:$0xff]
        %v1291 = vld [vmem:[%s175 + $0x20e0] sm:$0xff]
        %v1292 = vld [vmem:[%s175 + $0x20e8] sm:$0xff]
        %v1293 = vld [vmem:[%s175 + $0x20f0] sm:$0xff]
        %v1294 = vld [vmem:[%s175 + $0x20f8] sm:$0xff]
        %v1295 = vld [vmem:[%s175 + $0x2100] sm:$0xff]
        %v1296 = vld [vmem:[%s175 + $0x2108] sm:$0xff]
        %v1297 = vld [vmem:[%s175 + $0x2110] sm:$0xff]
        %v1298 = vld [vmem:[%s175 + $0x2118] sm:$0xff]
        %v1299 = vld [vmem:[%s175 + $0x2120] sm:$0xff]
        %v1300 = vld [vmem:[%s175 + $0x2128] sm:$0xff]
        %v1301 = vld [vmem:[%s175 + $0x2130] sm:$0xff]
        %v1302 = vld [vmem:[%s175 + $0x2138] sm:$0xff]
        %v1303 = vld [vmem:[%s175 + $0x2140] sm:$0xff]
        %v1304 = vld [vmem:[%s175 + $0x2148] sm:$0xff]
        %v1305 = vld [vmem:[%s175 + $0x2150] sm:$0xff]
        %v1306 = vld [vmem:[%s175 + $0x2158] sm:$0xff]
        %v1307 = vld [vmem:[%s175 + $0x2160] sm:$0xff]
        %v1308 = vld [vmem:[%s175 + $0x2168] sm:$0xff]
        %v1309 = vld [vmem:[%s175 + $0x2170] sm:$0xff]
        %v1310 = vld [vmem:[%s175 + $0x2178] sm:$0xff]
        %v1311 = vld [vmem:[%s175 + $0x2180] sm:$0xff]
        %v1312 = vld [vmem:[%s175 + $0x2188] sm:$0xff]
        %v1313 = vld [vmem:[%s175 + $0x2190] sm:$0xff]
        %v1314 = vld [vmem:[%s175 + $0x2198] sm:$0xff]
        %v1315 = vld [vmem:[%s175 + $0x21a0] sm:$0xff]
        %v1316 = vld [vmem:[%s175 + $0x21a8] sm:$0xff]
        %v1317 = vld [vmem:[%s175 + $0x21b0] sm:$0xff]
        %v1318 = vld [vmem:[%s175 + $0x21b8] sm:$0xff]
        %v1319 = vld [vmem:[%s175 + $0x21c0] sm:$0xff]
        %v1320 = vld [vmem:[%s175 + $0x21c8] sm:$0xff]
        %v1321 = vld [vmem:[%s175 + $0x21d0] sm:$0xff]
        %v1322 = vld [vmem:[%s175 + $0x21d8] sm:$0xff]
        %v1323 = vld [vmem:[%s175 + $0x21e0] sm:$0xff]
        %v1324 = vld [vmem:[%s175 + $0x21e8] sm:$0xff]
        %v1325 = vld [vmem:[%s175 + $0x21f0] sm:$0xff]
        %v1326 = vld [vmem:[%s175 + $0x21f8] sm:$0xff]
        %v1327 = vld [vmem:[%s175 + $0x2200] sm:$0xff]
        %v1328 = vld [vmem:[%s175 + $0x2208] sm:$0xff]
        %v1329 = vld [vmem:[%s175 + $0x2210] sm:$0xff]
        %v1330 = vld [vmem:[%s175 + $0x2218] sm:$0xff]
        %v1331 = vld [vmem:[%s175 + $0x2220] sm:$0xff]
        %v1332 = vld [vmem:[%s175 + $0x2228] sm:$0xff]
        %v1333 = vld [vmem:[%s175 + $0x2230] sm:$0xff]
        %v1334 = vld [vmem:[%s175 + $0x2238] sm:$0xff]
        %v1335 = vld [vmem:[%s175 + $0x2240] sm:$0xff]
        %v1336 = vld [vmem:[%s175 + $0x2248] sm:$0xff]
        %v1337 = vld [vmem:[%s175 + $0x2250] sm:$0xff]
        %v1338 = vld [vmem:[%s175 + $0x2258] sm:$0xff]
        %v1339 = vld [vmem:[%s175 + $0x2260] sm:$0xff]
        %v1340 = vld [vmem:[%s175 + $0x2268] sm:$0xff]
        %v1341 = vld [vmem:[%s175 + $0x2270] sm:$0xff]
        %v1342 = vld [vmem:[%s175 + $0x2278] sm:$0xff]
        %v1343 = vld [vmem:[%s175 + $0x2280] sm:$0xff]
        %v1344 = vld [vmem:[%s175 + $0x2288] sm:$0xff]
        %v1345 = vld [vmem:[%s175 + $0x2290] sm:$0xff]
        %v1346 = vld [vmem:[%s175 + $0x2298] sm:$0xff]
        %v1347 = vld [vmem:[%s175 + $0x22a0] sm:$0xff]
        %v1348 = vld [vmem:[%s175 + $0x22a8] sm:$0xff]
        %v1349 = vld [vmem:[%s175 + $0x22b0] sm:$0xff]
        %v1350 = vld [vmem:[%s175 + $0x22b8] sm:$0xff]
        %v1351 = vld [vmem:[%s175 + $0x22c0] sm:$0xff]
        %v1352 = vld [vmem:[%s175 + $0x22c8] sm:$0xff]
        %v1353 = vld [vmem:[%s175 + $0x22d0] sm:$0xff]
        %v1354 = vld [vmem:[%s175 + $0x22d8] sm:$0xff]
        %v1355 = vld [vmem:[%s175 + $0x22e0] sm:$0xff]
        %v1356 = vld [vmem:[%s175 + $0x22e8] sm:$0xff]
        %v1357 = vld [vmem:[%s175 + $0x22f0] sm:$0xff]
        %v1358 = vld [vmem:[%s175 + $0x22f8] sm:$0xff]
        %v1359 = vld [vmem:[%s175 + $0x2300] sm:$0xff]
        %v1360 = vld [vmem:[%s175 + $0x2308] sm:$0xff]
        %v1361 = vld [vmem:[%s175 + $0x2310] sm:$0xff]
        %v1362 = vld [vmem:[%s175 + $0x2318] sm:$0xff]
        %v1363 = vld [vmem:[%s175 + $0x2320] sm:$0xff]
        %v1364 = vld [vmem:[%s175 + $0x2328] sm:$0xff]
        %v1365 = vld [vmem:[%s175 + $0x2330] sm:$0xff]
        %v1366 = vld [vmem:[%s175 + $0x2338] sm:$0xff]
        %v1367 = vld [vmem:[%s175 + $0x2340] sm:$0xff]
        %v1368 = vld [vmem:[%s175 + $0x2348] sm:$0xff]
        %v1369 = vld [vmem:[%s175 + $0x2350] sm:$0xff]
        %v1370 = vld [vmem:[%s175 + $0x2358] sm:$0xff]
        %v1371 = vld [vmem:[%s175 + $0x2360] sm:$0xff]
        %v1372 = vld [vmem:[%s175 + $0x2368] sm:$0xff]
        %v1373 = vld [vmem:[%s175 + $0x2370] sm:$0xff]
        %v1374 = vld [vmem:[%s175 + $0x2378] sm:$0xff]
        %v1375 = vld [vmem:[%s175 + $0x2380] sm:$0xff]
        %v1376 = vld [vmem:[%s175 + $0x2388] sm:$0xff]
        %v1377 = vld [vmem:[%s175 + $0x2390] sm:$0xff]
        %v1378 = vld [vmem:[%s175 + $0x2398] sm:$0xff]
        %v1379 = vld [vmem:[%s175 + $0x23a0] sm:$0xff]
        %v1380 = vld [vmem:[%s175 + $0x23a8] sm:$0xff]
        %v1381 = vld [vmem:[%s175 + $0x23b0] sm:$0xff]
        %v1382 = vld [vmem:[%s175 + $0x23b8] sm:$0xff]
        %v1383 = vld [vmem:[%s175 + $0x23c0] sm:$0xff]
        %v1384 = vld [vmem:[%s175 + $0x23c8] sm:$0xff]
        %v1385 = vld [vmem:[%s175 + $0x23d0] sm:$0xff]
        %v1386 = vld [vmem:[%s175 + $0x23d8] sm:$0xff]
        %v1387 = vld [vmem:[%s175 + $0x23e0] sm:$0xff]
        %v1388 = vld [vmem:[%s175 + $0x23e8] sm:$0xff]
        %v1389 = vld [vmem:[%s175 + $0x23f0] sm:$0xff]
        %v1390 = vld [vmem:[%s175 + $0x23f8] sm:$0xff]
        %v1391 = vld [vmem:[%s175 + $0x2400] sm:$0xff]
        %v1392 = vld [vmem:[%s175 + $0x2408] sm:$0xff]
        %v1393 = vld [vmem:[%s175 + $0x2410] sm:$0xff]
        %v1394 = vld [vmem:[%s175 + $0x2418] sm:$0xff]
        %v1395 = vld [vmem:[%s175 + $0x2420] sm:$0xff]
        %v1396 = vld [vmem:[%s175 + $0x2428] sm:$0xff]
        %v1397 = vld [vmem:[%s175 + $0x2430] sm:$0xff]
        %v1398 = vld [vmem:[%s175 + $0x2438] sm:$0xff]
        %v1399 = vld [vmem:[%s175 + $0x2440] sm:$0xff]
        %v1400 = vld [vmem:[%s175 + $0x2448] sm:$0xff]
        %v1401 = vld [vmem:[%s175 + $0x2450] sm:$0xff]
        %v1402 = vld [vmem:[%s175 + $0x2458] sm:$0xff]
        %v1403 = vld [vmem:[%s175 + $0x2460] sm:$0xff]
        %v1404 = vld [vmem:[%s175 + $0x2468] sm:$0xff]
        %v1405 = vld [vmem:[%s175 + $0x2470] sm:$0xff]
        %v1406 = vld [vmem:[%s175 + $0x2478] sm:$0xff]
        %v1407 = vld [vmem:[%s175 + $0x2480] sm:$0xff]
        %v1408 = vld [vmem:[%s175 + $0x2488] sm:$0xff]
        %v1409 = vld [vmem:[%s175 + $0x2490] sm:$0xff]
        %v1410 = vld [vmem:[%s175 + $0x2498] sm:$0xff]
        %v1411 = vld [vmem:[%s175 + $0x24a0] sm:$0xff]
        %v1412 = vld [vmem:[%s175 + $0x24a8] sm:$0xff]
        %v1413 = vld [vmem:[%s175 + $0x24b0] sm:$0xff]
        %v1414 = vld [vmem:[%s175 + $0x24b8] sm:$0xff]
        %v1415 = vld [vmem:[%s175 + $0x24c0] sm:$0xff]
        %v1416 = vld [vmem:[%s175 + $0x24c8] sm:$0xff]
        %v1417 = vld [vmem:[%s175 + $0x24d0] sm:$0xff]
        %v1418 = vld [vmem:[%s175 + $0x24d8] sm:$0xff]
        %v1419 = vld [vmem:[%s175 + $0x24e0] sm:$0xff]
        %v1420 = vld [vmem:[%s175 + $0x24e8] sm:$0xff]
        %v1421 = vld [vmem:[%s175 + $0x24f0] sm:$0xff]
        %v1422 = vld [vmem:[%s175 + $0x24f8] sm:$0xff]
        %v1433 = vcombine.high %v229, %v229
        %v1435 = vunpack.c.l.s4 1966171168
        %v1436 = vunpack.c.0.s8 %v1435
        %v1437 = vlaneseq
        %v1438 = vshrl.u32 %v1437, 7
        %v1439 = vsub.s32 %v1436, %v1438
        %v1440 = vrot.slane %v229, %v1439
        %v1442 = vunpack.c.l.s4 1966171168
        %v1443 = vunpack.c.0.s8 %v1442
        %v1444 = vlaneseq
        %v1445 = vshrl.u32 %v1444, 7
        %v1446 = vsub.s32 %v1443, %v1445
        %v1447 = vrot.slane %v1433, %v1446
        %v1448 = vcombine.high %v1440, %v1440
        %v1449 = vcombine.high %v1447, %v1447
        %v1451 = vunpack.c.l.s4 1966171168
        %v1452 = vunpack.c.0.s8 %v1451
        %v1453 = vlaneseq
        %v1454 = vshrl.u32 %v1453, 7
        %v1455 = vsub.s32 %v1452, %v1454
        %v1456 = vrot.slane %v1440, %v1455
        %v1458 = vunpack.c.l.s4 1966171168
        %v1459 = vunpack.c.0.s8 %v1458
        %v1460 = vlaneseq
        %v1461 = vshrl.u32 %v1460, 7
        %v1462 = vsub.s32 %v1459, %v1461
        %v1463 = vrot.slane %v1447, %v1462
        %v1465 = vunpack.c.l.s4 1966171168
        %v1466 = vunpack.c.0.s8 %v1465
        %v1467 = vlaneseq
        %v1468 = vshrl.u32 %v1467, 7
        %v1469 = vsub.s32 %v1466, %v1468
        %v1470 = vrot.slane %v1448, %v1469
        %v1472 = vunpack.c.l.s4 1966171168
        %v1473 = vunpack.c.0.s8 %v1472
        %v1474 = vlaneseq
        %v1475 = vshrl.u32 %v1474, 7
        %v1476 = vsub.s32 %v1473, %v1475
        %v1477 = vrot.slane %v1449, %v1476
        %v1478 = vcombine.high %v1456, %v1456
        %v1479 = vcombine.high %v1463, %v1463
        %v1480 = vcombine.high %v1470, %v1470
        %v1481 = vcombine.high %v1477, %v1477
        %v1482 = vcombine.high %v230, %v230
        %v1484 = vunpack.c.l.s4 1966171168
        %v1485 = vunpack.c.0.s8 %v1484
        %v1486 = vlaneseq
        %v1487 = vshrl.u32 %v1486, 7
        %v1488 = vsub.s32 %v1485, %v1487
        %v1489 = vrot.slane %v230, %v1488
        %v1491 = vunpack.c.l.s4 1966171168
        %v1492 = vunpack.c.0.s8 %v1491
        %v1493 = vlaneseq
        %v1494 = vshrl.u32 %v1493, 7
        %v1495 = vsub.s32 %v1492, %v1494
        %v1496 = vrot.slane %v1482, %v1495
        %v1497 = vcombine.high %v1489, %v1489
        %v1498 = vcombine.high %v1496, %v1496
        %v1500 = vunpack.c.l.s4 1966171168
        %v1501 = vunpack.c.0.s8 %v1500
        %v1502 = vlaneseq
        %v1503 = vshrl.u32 %v1502, 7
        %v1504 = vsub.s32 %v1501, %v1503
        %v1505 = vrot.slane %v1489, %v1504
        %v1507 = vunpack.c.l.s4 1966171168
        %v1508 = vunpack.c.0.s8 %v1507
        %v1509 = vlaneseq
        %v1510 = vshrl.u32 %v1509, 7
        %v1511 = vsub.s32 %v1508, %v1510
        %v1512 = vrot.slane %v1496, %v1511
        %v1514 = vunpack.c.l.s4 1966171168
        %v1515 = vunpack.c.0.s8 %v1514
        %v1516 = vlaneseq
        %v1517 = vshrl.u32 %v1516, 7
        %v1518 = vsub.s32 %v1515, %v1517
        %v1519 = vrot.slane %v1497, %v1518
        %v1521 = vunpack.c.l.s4 1966171168
        %v1522 = vunpack.c.0.s8 %v1521
        %v1523 = vlaneseq
        %v1524 = vshrl.u32 %v1523, 7
        %v1525 = vsub.s32 %v1522, %v1524
        %v1526 = vrot.slane %v1498, %v1525
        %v1527 = vcombine.high %v1505, %v1505
        %v1528 = vcombine.high %v1512, %v1512
        %v1529 = vcombine.high %v1519, %v1519
        %v1530 = vcombine.high %v1526, %v1526
        %v1531 = vcombine.high %v231, %v231
        %v1533 = vunpack.c.l.s4 1966171168
        %v1534 = vunpack.c.0.s8 %v1533
        %v1535 = vlaneseq
        %v1536 = vshrl.u32 %v1535, 7
        %v1537 = vsub.s32 %v1534, %v1536
        %v1538 = vrot.slane %v231, %v1537
        %v1540 = vunpack.c.l.s4 1966171168
        %v1541 = vunpack.c.0.s8 %v1540
        %v1542 = vlaneseq
        %v1543 = vshrl.u32 %v1542, 7
        %v1544 = vsub.s32 %v1541, %v1543
        %v1545 = vrot.slane %v1531, %v1544
        %v1546 = vcombine.high %v1538, %v1538
        %v1547 = vcombine.high %v1545, %v1545
        %v1549 = vunpack.c.l.s4 1966171168
        %v1550 = vunpack.c.0.s8 %v1549
        %v1551 = vlaneseq
        %v1552 = vshrl.u32 %v1551, 7
        %v1553 = vsub.s32 %v1550, %v1552
        %v1554 = vrot.slane %v1538, %v1553
        %v1556 = vunpack.c.l.s4 1966171168
        %v1557 = vunpack.c.0.s8 %v1556
        %v1558 = vlaneseq
        %v1559 = vshrl.u32 %v1558, 7
        %v1560 = vsub.s32 %v1557, %v1559
        %v1561 = vrot.slane %v1545, %v1560
        %v1563 = vunpack.c.l.s4 1966171168
        %v1564 = vunpack.c.0.s8 %v1563
        %v1565 = vlaneseq
        %v1566 = vshrl.u32 %v1565, 7
        %v1567 = vsub.s32 %v1564, %v1566
        %v1568 = vrot.slane %v1546, %v1567
        %v1570 = vunpack.c.l.s4 1966171168
        %v1571 = vunpack.c.0.s8 %v1570
        %v1572 = vlaneseq
        %v1573 = vshrl.u32 %v1572, 7
        %v1574 = vsub.s32 %v1571, %v1573
        %v1575 = vrot.slane %v1547, %v1574
        %v1576 = vcombine.high %v1554, %v1554
        %v1577 = vcombine.high %v1561, %v1561
        %v1578 = vcombine.high %v1568, %v1568
        %v1579 = vcombine.high %v1575, %v1575
        %v1580 = vcombine.high %v232, %v232
        %v1582 = vunpack.c.l.s4 1966171168
        %v1583 = vunpack.c.0.s8 %v1582
        %v1584 = vlaneseq
        %v1585 = vshrl.u32 %v1584, 7
        %v1586 = vsub.s32 %v1583, %v1585
        %v1587 = vrot.slane %v232, %v1586
        %v1589 = vunpack.c.l.s4 1966171168
        %v1590 = vunpack.c.0.s8 %v1589
        %v1591 = vlaneseq
        %v1592 = vshrl.u32 %v1591, 7
        %v1593 = vsub.s32 %v1590, %v1592
        %v1594 = vrot.slane %v1580, %v1593
        %v1595 = vcombine.high %v1587, %v1587
        %v1596 = vcombine.high %v1594, %v1594
        %v1598 = vunpack.c.l.s4 1966171168
        %v1599 = vunpack.c.0.s8 %v1598
        %v1600 = vlaneseq
        %v1601 = vshrl.u32 %v1600, 7
        %v1602 = vsub.s32 %v1599, %v1601
        %v1603 = vrot.slane %v1587, %v1602
        %v1605 = vunpack.c.l.s4 1966171168
        %v1606 = vunpack.c.0.s8 %v1605
        %v1607 = vlaneseq
        %v1608 = vshrl.u32 %v1607, 7
        %v1609 = vsub.s32 %v1606, %v1608
        %v1610 = vrot.slane %v1594, %v1609
        %v1612 = vunpack.c.l.s4 1966171168
        %v1613 = vunpack.c.0.s8 %v1612
        %v1614 = vlaneseq
        %v1615 = vshrl.u32 %v1614, 7
        %v1616 = vsub.s32 %v1613, %v1615
        %v1617 = vrot.slane %v1595, %v1616
        %v1619 = vunpack.c.l.s4 1966171168
        %v1620 = vunpack.c.0.s8 %v1619
        %v1621 = vlaneseq
        %v1622 = vshrl.u32 %v1621, 7
        %v1623 = vsub.s32 %v1620, %v1622
        %v1624 = vrot.slane %v1596, %v1623
        %v1625 = vcombine.high %v1603, %v1603
        %v1626 = vcombine.high %v1610, %v1610
        %v1627 = vcombine.high %v1617, %v1617
        %v1628 = vcombine.high %v1624, %v1624
        %v1629 = vcombine.high %v233, %v233
        %v1631 = vunpack.c.l.s4 1966171168
        %v1632 = vunpack.c.0.s8 %v1631
        %v1633 = vlaneseq
        %v1634 = vshrl.u32 %v1633, 7
        %v1635 = vsub.s32 %v1632, %v1634
        %v1636 = vrot.slane %v233, %v1635
        %v1638 = vunpack.c.l.s4 1966171168
        %v1639 = vunpack.c.0.s8 %v1638
        %v1640 = vlaneseq
        %v1641 = vshrl.u32 %v1640, 7
        %v1642 = vsub.s32 %v1639, %v1641
        %v1643 = vrot.slane %v1629, %v1642
        %v1644 = vcombine.high %v1636, %v1636
        %v1645 = vcombine.high %v1643, %v1643
        %v1647 = vunpack.c.l.s4 1966171168
        %v1648 = vunpack.c.0.s8 %v1647
        %v1649 = vlaneseq
        %v1650 = vshrl.u32 %v1649, 7
        %v1651 = vsub.s32 %v1648, %v1650
        %v1652 = vrot.slane %v1636, %v1651
        %v1654 = vunpack.c.l.s4 1966171168
        %v1655 = vunpack.c.0.s8 %v1654
        %v1656 = vlaneseq
        %v1657 = vshrl.u32 %v1656, 7
        %v1658 = vsub.s32 %v1655, %v1657
        %v1659 = vrot.slane %v1643, %v1658
        %v1661 = vunpack.c.l.s4 1966171168
        %v1662 = vunpack.c.0.s8 %v1661
        %v1663 = vlaneseq
        %v1664 = vshrl.u32 %v1663, 7
        %v1665 = vsub.s32 %v1662, %v1664
        %v1666 = vrot.slane %v1644, %v1665
        %v1668 = vunpack.c.l.s4 1966171168
        %v1669 = vunpack.c.0.s8 %v1668
        %v1670 = vlaneseq
        %v1671 = vshrl.u32 %v1670, 7
        %v1672 = vsub.s32 %v1669, %v1671
        %v1673 = vrot.slane %v1645, %v1672
        %v1674 = vcombine.high %v1652, %v1652
        %v1675 = vcombine.high %v1659, %v1659
        %v1676 = vcombine.high %v1666, %v1666
        %v1677 = vcombine.high %v1673, %v1673
        %v1678 = vcombine.high %v234, %v234
        %v1680 = vunpack.c.l.s4 1966171168
        %v1681 = vunpack.c.0.s8 %v1680
        %v1682 = vlaneseq
        %v1683 = vshrl.u32 %v1682, 7
        %v1684 = vsub.s32 %v1681, %v1683
        %v1685 = vrot.slane %v234, %v1684
        %v1687 = vunpack.c.l.s4 1966171168
        %v1688 = vunpack.c.0.s8 %v1687
        %v1689 = vlaneseq
        %v1690 = vshrl.u32 %v1689, 7
        %v1691 = vsub.s32 %v1688, %v1690
        %v1692 = vrot.slane %v1678, %v1691
        %v1693 = vcombine.high %v1685, %v1685
        %v1694 = vcombine.high %v1692, %v1692
        %v1696 = vunpack.c.l.s4 1966171168
        %v1697 = vunpack.c.0.s8 %v1696
        %v1698 = vlaneseq
        %v1699 = vshrl.u32 %v1698, 7
        %v1700 = vsub.s32 %v1697, %v1699
        %v1701 = vrot.slane %v1685, %v1700
        %v1703 = vunpack.c.l.s4 1966171168
        %v1704 = vunpack.c.0.s8 %v1703
        %v1705 = vlaneseq
        %v1706 = vshrl.u32 %v1705, 7
        %v1707 = vsub.s32 %v1704, %v1706
        %v1708 = vrot.slane %v1692, %v1707
        %v1710 = vunpack.c.l.s4 1966171168
        %v1711 = vunpack.c.0.s8 %v1710
        %v1712 = vlaneseq
        %v1713 = vshrl.u32 %v1712, 7
        %v1714 = vsub.s32 %v1711, %v1713
        %v1715 = vrot.slane %v1693, %v1714
        %v1717 = vunpack.c.l.s4 1966171168
        %v1718 = vunpack.c.0.s8 %v1717
        %v1719 = vlaneseq
        %v1720 = vshrl.u32 %v1719, 7
        %v1721 = vsub.s32 %v1718, %v1720
        %v1722 = vrot.slane %v1694, %v1721
        %v1723 = vcombine.high %v1701, %v1701
        %v1724 = vcombine.high %v1708, %v1708
        %v1725 = vcombine.high %v1715, %v1715
        %v1726 = vcombine.high %v1722, %v1722
        %v1727 = vcombine.high %v235, %v235
        %v1729 = vunpack.c.l.s4 1966171168
        %v1730 = vunpack.c.0.s8 %v1729
        %v1731 = vlaneseq
        %v1732 = vshrl.u32 %v1731, 7
        %v1733 = vsub.s32 %v1730, %v1732
        %v1734 = vrot.slane %v235, %v1733
        %v1736 = vunpack.c.l.s4 1966171168
        %v1737 = vunpack.c.0.s8 %v1736
        %v1738 = vlaneseq
        %v1739 = vshrl.u32 %v1738, 7
        %v1740 = vsub.s32 %v1737, %v1739
        %v1741 = vrot.slane %v1727, %v1740
        %v1742 = vcombine.high %v1734, %v1734
        %v1743 = vcombine.high %v1741, %v1741
        %v1745 = vunpack.c.l.s4 1966171168
        %v1746 = vunpack.c.0.s8 %v1745
        %v1747 = vlaneseq
        %v1748 = vshrl.u32 %v1747, 7
        %v1749 = vsub.s32 %v1746, %v1748
        %v1750 = vrot.slane %v1734, %v1749
        %v1752 = vunpack.c.l.s4 1966171168
        %v1753 = vunpack.c.0.s8 %v1752
        %v1754 = vlaneseq
        %v1755 = vshrl.u32 %v1754, 7
        %v1756 = vsub.s32 %v1753, %v1755
        %v1757 = vrot.slane %v1741, %v1756
        %v1759 = vunpack.c.l.s4 1966171168
        %v1760 = vunpack.c.0.s8 %v1759
        %v1761 = vlaneseq
        %v1762 = vshrl.u32 %v1761, 7
        %v1763 = vsub.s32 %v1760, %v1762
        %v1764 = vrot.slane %v1742, %v1763
        %v1766 = vunpack.c.l.s4 1966171168
        %v1767 = vunpack.c.0.s8 %v1766
        %v1768 = vlaneseq
        %v1769 = vshrl.u32 %v1768, 7
        %v1770 = vsub.s32 %v1767, %v1769
        %v1771 = vrot.slane %v1743, %v1770
        %v1772 = vcombine.high %v1750, %v1750
        %v1773 = vcombine.high %v1757, %v1757
        %v1774 = vcombine.high %v1764, %v1764
        %v1775 = vcombine.high %v1771, %v1771
        %v1776 = vcombine.high %v236, %v236
        %v1778 = vunpack.c.l.s4 1966171168
        %v1779 = vunpack.c.0.s8 %v1778
        %v1780 = vlaneseq
        %v1781 = vshrl.u32 %v1780, 7
        %v1782 = vsub.s32 %v1779, %v1781
        %v1783 = vrot.slane %v236, %v1782
        %v1785 = vunpack.c.l.s4 1966171168
        %v1786 = vunpack.c.0.s8 %v1785
        %v1787 = vlaneseq
        %v1788 = vshrl.u32 %v1787, 7
        %v1789 = vsub.s32 %v1786, %v1788
        %v1790 = vrot.slane %v1776, %v1789
        %v1791 = vcombine.high %v1783, %v1783
        %v1792 = vcombine.high %v1790, %v1790
        %v1794 = vunpack.c.l.s4 1966171168
        %v1795 = vunpack.c.0.s8 %v1794
        %v1796 = vlaneseq
        %v1797 = vshrl.u32 %v1796, 7
        %v1798 = vsub.s32 %v1795, %v1797
        %v1799 = vrot.slane %v1783, %v1798
        %v1801 = vunpack.c.l.s4 1966171168
        %v1802 = vunpack.c.0.s8 %v1801
        %v1803 = vlaneseq
        %v1804 = vshrl.u32 %v1803, 7
        %v1805 = vsub.s32 %v1802, %v1804
        %v1806 = vrot.slane %v1790, %v1805
        %v1808 = vunpack.c.l.s4 1966171168
        %v1809 = vunpack.c.0.s8 %v1808
        %v1810 = vlaneseq
        %v1811 = vshrl.u32 %v1810, 7
        %v1812 = vsub.s32 %v1809, %v1811
        %v1813 = vrot.slane %v1791, %v1812
        %v1815 = vunpack.c.l.s4 1966171168
        %v1816 = vunpack.c.0.s8 %v1815
        %v1817 = vlaneseq
        %v1818 = vshrl.u32 %v1817, 7
        %v1819 = vsub.s32 %v1816, %v1818
        %v1820 = vrot.slane %v1792, %v1819
        %v1821 = vcombine.high %v1799, %v1799
        %v1822 = vcombine.high %v1806, %v1806
        %v1823 = vcombine.high %v1813, %v1813
        %v1824 = vcombine.high %v1820, %v1820
        %v1825 = vcombine.high %v237, %v237
        %v1827 = vunpack.c.l.s4 1966171168
        %v1828 = vunpack.c.0.s8 %v1827
        %v1829 = vlaneseq
        %v1830 = vshrl.u32 %v1829, 7
        %v1831 = vsub.s32 %v1828, %v1830
        %v1832 = vrot.slane %v237, %v1831
        %v1834 = vunpack.c.l.s4 1966171168
        %v1835 = vunpack.c.0.s8 %v1834
        %v1836 = vlaneseq
        %v1837 = vshrl.u32 %v1836, 7
        %v1838 = vsub.s32 %v1835, %v1837
        %v1839 = vrot.slane %v1825, %v1838
        %v1840 = vcombine.high %v1832, %v1832
        %v1841 = vcombine.high %v1839, %v1839
        %v1843 = vunpack.c.l.s4 1966171168
        %v1844 = vunpack.c.0.s8 %v1843
        %v1845 = vlaneseq
        %v1846 = vshrl.u32 %v1845, 7
        %v1847 = vsub.s32 %v1844, %v1846
        %v1848 = vrot.slane %v1832, %v1847
        %v1850 = vunpack.c.l.s4 1966171168
        %v1851 = vunpack.c.0.s8 %v1850
        %v1852 = vlaneseq
        %v1853 = vshrl.u32 %v1852, 7
        %v1854 = vsub.s32 %v1851, %v1853
        %v1855 = vrot.slane %v1839, %v1854
        %v1857 = vunpack.c.l.s4 1966171168
        %v1858 = vunpack.c.0.s8 %v1857
        %v1859 = vlaneseq
        %v1860 = vshrl.u32 %v1859, 7
        %v1861 = vsub.s32 %v1858, %v1860
        %v1862 = vrot.slane %v1840, %v1861
        %v1864 = vunpack.c.l.s4 1966171168
        %v1865 = vunpack.c.0.s8 %v1864
        %v1866 = vlaneseq
        %v1867 = vshrl.u32 %v1866, 7
        %v1868 = vsub.s32 %v1865, %v1867
        %v1869 = vrot.slane %v1841, %v1868
        %v1870 = vcombine.high %v1848, %v1848
        %v1871 = vcombine.high %v1855, %v1855
        %v1872 = vcombine.high %v1862, %v1862
        %v1873 = vcombine.high %v1869, %v1869
        %v1875 = vunpack.c.l.s4 1966171168
        %v1876 = vunpack.c.0.s8 %v1875
        %v1877 = vlaneseq
        %v1878 = vshrl.u32 %v1877, 7
        %v1879 = vsub.s32 %v1876, %v1878
        %v1880 = vrot.slane %v238, %v1879
        %v1881 = vcombine.high %v1880, %v1880
        %v1883 = vunpack.c.l.s4 1966171168
        %v1884 = vunpack.c.0.s8 %v1883
        %v1885 = vlaneseq
        %v1886 = vshrl.u32 %v1885, 7
        %v1887 = vsub.s32 %v1884, %v1886
        %v1888 = vrot.slane %v1880, %v1887
        %v1890 = vunpack.c.l.s4 1966171168
        %v1891 = vunpack.c.0.s8 %v1890
        %v1892 = vlaneseq
        %v1893 = vshrl.u32 %v1892, 7
        %v1894 = vsub.s32 %v1891, %v1893
        %v1895 = vrot.slane %v1881, %v1894
        %v3154 = vunpack.c.l.b16 %v239
        %v3155 = vunpack.c.h.b16 %v239
        %v3156 = vunpack.c.l.b16 %v240
        %v3157 = vunpack.c.h.b16 %v240
        %v3158 = vunpack.c.l.b16 %v241
        %v3159 = vunpack.c.h.b16 %v241
        %v3160 = vunpack.c.l.b16 %v242
        %v3161 = vunpack.c.h.b16 %v242
        %v3162 = vunpack.c.l.b16 %v243
        %v3163 = vunpack.c.h.b16 %v243
        %v3164 = vunpack.c.l.b16 %v244
        %v3165 = vunpack.c.h.b16 %v244
        %v3166 = vunpack.c.l.b16 %v245
        %v3167 = vunpack.c.h.b16 %v245
        %v3168 = vunpack.c.l.b16 %v246
        %v3169 = vunpack.c.h.b16 %v246
        %v3170 = vunpack.c.l.b16 %v247
        %v3171 = vunpack.c.h.b16 %v247
        %v3172 = vunpack.c.l.b16 %v248
        %v3173 = vunpack.c.h.b16 %v248
        %v3174 = vunpack.c.l.b16 %v249
        %v3175 = vunpack.c.h.b16 %v249
        %v3176 = vunpack.c.l.b16 %v250
        %v3177 = vunpack.c.h.b16 %v250
        %v3178 = vunpack.c.l.b16 %v251
        %v3179 = vunpack.c.h.b16 %v251
        %v3180 = vunpack.c.l.b16 %v252
        %v3181 = vunpack.c.h.b16 %v252
        %v3182 = vunpack.c.l.b16 %v253
        %v3183 = vunpack.c.h.b16 %v253
        %v3184 = vunpack.c.l.b16 %v254
        %v3185 = vunpack.c.h.b16 %v254
        %v3186 = vunpack.c.l.b16 %v255
        %v3187 = vunpack.c.h.b16 %v255
        %v3188 = vunpack.c.l.b16 %v256
        %v3189 = vunpack.c.h.b16 %v256
        %v3190 = vunpack.c.l.b16 %v257
        %v3191 = vunpack.c.h.b16 %v257
        %v3192 = vunpack.c.l.b16 %v258
        %v3193 = vunpack.c.h.b16 %v258
        %v3194 = vunpack.c.l.b16 %v259
        %v3195 = vunpack.c.h.b16 %v259
        %v3196 = vunpack.c.l.b16 %v260
        %v3197 = vunpack.c.h.b16 %v260
        %v3198 = vunpack.c.l.b16 %v261
        %v3199 = vunpack.c.h.b16 %v261
        %v3200 = vunpack.c.l.b16 %v262
        %v3201 = vunpack.c.h.b16 %v262
        %v3202 = vunpack.c.l.b16 %v263
        %v3203 = vunpack.c.h.b16 %v263
        %v3204 = vunpack.c.l.b16 %v264
        %v3205 = vunpack.c.h.b16 %v264
        %v3206 = vunpack.c.l.b16 %v265
        %v3207 = vunpack.c.h.b16 %v265
        %v3208 = vunpack.c.l.b16 %v266
        %v3209 = vunpack.c.h.b16 %v266
        %v3210 = vunpack.c.l.b16 %v267
        %v3211 = vunpack.c.h.b16 %v267
        %v3212 = vunpack.c.l.b16 %v268
        %v3213 = vunpack.c.h.b16 %v268
        %v3214 = vunpack.c.l.b16 %v269
        %v3215 = vunpack.c.h.b16 %v269
        %v3216 = vunpack.c.l.b16 %v270
        %v3217 = vunpack.c.h.b16 %v270
        %v3218 = vunpack.c.l.b16 %v271
        %v3219 = vunpack.c.h.b16 %v271
        %v3220 = vunpack.c.l.b16 %v272
        %v3221 = vunpack.c.h.b16 %v272
        %v3222 = vunpack.c.l.b16 %v273
        %v3223 = vunpack.c.h.b16 %v273
        %v3224 = vunpack.c.l.b16 %v274
        %v3225 = vunpack.c.h.b16 %v274
        %v3226 = vunpack.c.l.b16 %v275
        %v3227 = vunpack.c.h.b16 %v275
        %v3228 = vunpack.c.l.b16 %v276
        %v3229 = vunpack.c.h.b16 %v276
        %v3230 = vunpack.c.l.b16 %v277
        %v3231 = vunpack.c.h.b16 %v277
        %v3232 = vunpack.c.l.b16 %v278
        %v3233 = vunpack.c.h.b16 %v278
        %v3234 = vunpack.c.l.b16 %v279
        %v3235 = vunpack.c.h.b16 %v279
        %v3236 = vunpack.c.l.b16 %v280
        %v3237 = vunpack.c.h.b16 %v280
        %v3238 = vunpack.c.l.b16 %v281
        %v3239 = vunpack.c.h.b16 %v281
        %v3240 = vunpack.c.l.b16 %v282
        %v3241 = vunpack.c.h.b16 %v282
        %v3242 = vunpack.c.l.b16 %v283
        %v3243 = vunpack.c.h.b16 %v283
        %v3244 = vunpack.c.l.b16 %v284
        %v3245 = vunpack.c.h.b16 %v284
        %v3246 = vunpack.c.l.b16 %v285
        %v3247 = vunpack.c.h.b16 %v285
        %v3248 = vunpack.c.l.b16 %v286
        %v3249 = vunpack.c.h.b16 %v286
        %v3250 = vunpack.c.l.b16 %v287
        %v3251 = vunpack.c.h.b16 %v287
        %v3252 = vunpack.c.l.b16 %v288
        %v3253 = vunpack.c.h.b16 %v288
        %v3254 = vunpack.c.l.b16 %v289
        %v3255 = vunpack.c.h.b16 %v289
        %v3256 = vunpack.c.l.b16 %v290
        %v3257 = vunpack.c.h.b16 %v290
        %v3258 = vunpack.c.l.b16 %v291
        %v3259 = vunpack.c.h.b16 %v291
        %v3260 = vunpack.c.l.b16 %v292
        %v3261 = vunpack.c.h.b16 %v292
        %v3262 = vunpack.c.l.b16 %v293
        %v3263 = vunpack.c.h.b16 %v293
        %v3264 = vunpack.c.l.b16 %v294
        %v3265 = vunpack.c.h.b16 %v294
        %v3266 = vunpack.c.l.b16 %v295
        %v3267 = vunpack.c.h.b16 %v295
        %v3268 = vunpack.c.l.b16 %v296
        %v3269 = vunpack.c.h.b16 %v296
        %v3270 = vunpack.c.l.b16 %v297
        %v3271 = vunpack.c.h.b16 %v297
        %v3272 = vunpack.c.l.b16 %v298
        %v3273 = vunpack.c.h.b16 %v298
        %v3274 = vunpack.c.l.b16 %v299
        %v3275 = vunpack.c.h.b16 %v299
        %v3276 = vunpack.c.l.b16 %v300
        %v3277 = vunpack.c.h.b16 %v300
        %v3278 = vunpack.c.l.b16 %v301
        %v3279 = vunpack.c.h.b16 %v301
        %v3280 = vunpack.c.l.b16 %v302
        %v3281 = vunpack.c.h.b16 %v302
        %v3282 = vunpack.c.l.b16 %v303
        %v3283 = vunpack.c.h.b16 %v303
        %v3284 = vunpack.c.l.b16 %v304
        %v3285 = vunpack.c.h.b16 %v304
        %v3286 = vunpack.c.l.b16 %v305
        %v3287 = vunpack.c.h.b16 %v305
        %v3288 = vunpack.c.l.b16 %v306
        %v3289 = vunpack.c.h.b16 %v306
        %v3290 = vunpack.c.l.b16 %v307
        %v3291 = vunpack.c.h.b16 %v307
        %v3292 = vunpack.c.l.b16 %v308
        %v3293 = vunpack.c.h.b16 %v308
        %v3294 = vunpack.c.l.b16 %v309
        %v3295 = vunpack.c.h.b16 %v309
        %v3296 = vunpack.c.l.b16 %v310
        %v3297 = vunpack.c.h.b16 %v310
        %v3298 = vunpack.c.l.b16 %v311
        %v3299 = vunpack.c.h.b16 %v311
        %v3300 = vunpack.c.l.b16 %v312
        %v3301 = vunpack.c.h.b16 %v312
        %v3302 = vunpack.c.l.b16 %v313
        %v3303 = vunpack.c.h.b16 %v313
        %v3304 = vunpack.c.l.b16 %v314
        %v3305 = vunpack.c.h.b16 %v314
        %v3306 = vunpack.c.l.b16 %v315
        %v3307 = vunpack.c.h.b16 %v315
        %v3308 = vunpack.c.l.b16 %v316
        %v3309 = vunpack.c.h.b16 %v316
        %v3310 = vunpack.c.l.b16 %v317
        %v3311 = vunpack.c.h.b16 %v317
        %v3312 = vunpack.c.l.b16 %v318
        %v3313 = vunpack.c.h.b16 %v318
        %v3314 = vunpack.c.l.b16 %v319
        %v3315 = vunpack.c.h.b16 %v319
        %v3316 = vunpack.c.l.b16 %v320
        %v3317 = vunpack.c.h.b16 %v320
        %v3318 = vunpack.c.l.b16 %v321
        %v3319 = vunpack.c.h.b16 %v321
        %v3320 = vunpack.c.l.b16 %v322
        %v3321 = vunpack.c.h.b16 %v322
        %v3322 = vunpack.c.l.b16 %v323
        %v3323 = vunpack.c.h.b16 %v323
        %v3324 = vunpack.c.l.b16 %v324
        %v3325 = vunpack.c.h.b16 %v324
        %v3326 = vunpack.c.l.b16 %v325
        %v3327 = vunpack.c.h.b16 %v325
        %v3328 = vunpack.c.l.b16 %v326
        %v3329 = vunpack.c.h.b16 %v326
        %v3330 = vunpack.c.l.b16 %v327
        %v3331 = vunpack.c.h.b16 %v327
        %v3332 = vunpack.c.l.b16 %v328
        %v3333 = vunpack.c.h.b16 %v328
        %v3334 = vunpack.c.l.b16 %v329
        %v3335 = vunpack.c.h.b16 %v329
        %v3336 = vunpack.c.l.b16 %v330
        %v3337 = vunpack.c.h.b16 %v330
        %v3338 = vunpack.c.l.b16 %v331
        %v3339 = vunpack.c.h.b16 %v331
        %v3340 = vunpack.c.l.b16 %v332
        %v3341 = vunpack.c.h.b16 %v332
        %v3342 = vunpack.c.l.b16 %v333
        %v3343 = vunpack.c.h.b16 %v333
        %v3344 = vunpack.c.l.b16 %v334
        %v3345 = vunpack.c.h.b16 %v334
        %v3346 = vunpack.c.l.b16 %v335
        %v3347 = vunpack.c.h.b16 %v335
        %v3348 = vunpack.c.l.b16 %v336
        %v3349 = vunpack.c.h.b16 %v336
        %v3350 = vunpack.c.l.b16 %v337
        %v3351 = vunpack.c.h.b16 %v337
        %v3352 = vunpack.c.l.b16 %v338
        %v3353 = vunpack.c.h.b16 %v338
        %v3354 = vunpack.c.l.b16 %v339
        %v3355 = vunpack.c.h.b16 %v339
        %v3356 = vunpack.c.l.b16 %v340
        %v3357 = vunpack.c.h.b16 %v340
        %v3358 = vunpack.c.l.b16 %v341
        %v3359 = vunpack.c.h.b16 %v341
        %v3360 = vunpack.c.l.b16 %v342
        %v3361 = vunpack.c.h.b16 %v342
        %v3362 = vunpack.c.l.b16 %v343
        %v3363 = vunpack.c.h.b16 %v343
        %v3364 = vunpack.c.l.b16 %v344
        %v3365 = vunpack.c.h.b16 %v344
        %v3366 = vunpack.c.l.b16 %v345
        %v3367 = vunpack.c.h.b16 %v345
        %v3368 = vunpack.c.l.b16 %v346
        %v3369 = vunpack.c.h.b16 %v346
        %v3370 = vunpack.c.l.b16 %v347
        %v3371 = vunpack.c.h.b16 %v347
        %v3372 = vunpack.c.l.b16 %v348
        %v3373 = vunpack.c.h.b16 %v348
        %v3374 = vunpack.c.l.b16 %v349
        %v3375 = vunpack.c.h.b16 %v349
        %v3376 = vunpack.c.l.b16 %v350
        %v3377 = vunpack.c.h.b16 %v350
        %v3378 = vunpack.c.l.b16 %v351
        %v3379 = vunpack.c.h.b16 %v351
        %v3380 = vunpack.c.l.b16 %v352
        %v3381 = vunpack.c.h.b16 %v352
        %v3382 = vunpack.c.l.b16 %v353
        %v3383 = vunpack.c.h.b16 %v353
        %v3384 = vunpack.c.l.b16 %v354
        %v3385 = vunpack.c.h.b16 %v354
        %v3386 = vunpack.c.l.b16 %v355
        %v3387 = vunpack.c.h.b16 %v355
        %v3388 = vunpack.c.l.b16 %v356
        %v3389 = vunpack.c.h.b16 %v356
        %v3390 = vunpack.c.l.b16 %v357
        %v3391 = vunpack.c.h.b16 %v357
        %v3392 = vunpack.c.l.b16 %v358
        %v3393 = vunpack.c.h.b16 %v358
        %v3394 = vunpack.c.l.b16 %v359
        %v3395 = vunpack.c.h.b16 %v359
        %v3396 = vunpack.c.l.b16 %v360
        %v3397 = vunpack.c.h.b16 %v360
        %v3398 = vunpack.c.l.b16 %v361
        %v3399 = vunpack.c.h.b16 %v361
        %v3400 = vunpack.c.l.b16 %v362
        %v3401 = vunpack.c.h.b16 %v362
        %v3402 = vunpack.c.l.b16 %v363
        %v3403 = vunpack.c.h.b16 %v363
        %v3404 = vunpack.c.l.b16 %v364
        %v3405 = vunpack.c.h.b16 %v364
        %v3406 = vunpack.c.l.b16 %v365
        %v3407 = vunpack.c.h.b16 %v365
        %v3408 = vunpack.c.l.b16 %v366
        %v3409 = vunpack.c.h.b16 %v366
        %v3410 = vunpack.c.l.b16 %v367
        %v3411 = vunpack.c.h.b16 %v367
        %v3412 = vunpack.c.l.b16 %v368
        %v3413 = vunpack.c.h.b16 %v368
        %v3414 = vunpack.c.l.b16 %v369
        %v3415 = vunpack.c.h.b16 %v369
        %v3416 = vunpack.c.l.b16 %v370
        %v3417 = vunpack.c.h.b16 %v370
        %v3418 = vunpack.c.l.b16 %v371
        %v3419 = vunpack.c.h.b16 %v371
        %v3420 = vunpack.c.l.b16 %v372
        %v3421 = vunpack.c.h.b16 %v372
        %v3422 = vunpack.c.l.b16 %v373
        %v3423 = vunpack.c.h.b16 %v373
        %v3424 = vunpack.c.l.b16 %v374
        %v3425 = vunpack.c.h.b16 %v374
        %v3426 = vunpack.c.l.b16 %v375
        %v3427 = vunpack.c.h.b16 %v375
        %v3428 = vunpack.c.l.b16 %v376
        %v3429 = vunpack.c.h.b16 %v376
        %v3430 = vunpack.c.l.b16 %v377
        %v3431 = vunpack.c.h.b16 %v377
        %v3432 = vunpack.c.l.b16 %v378
        %v3433 = vunpack.c.h.b16 %v378
        %v3434 = vunpack.c.l.b16 %v379
        %v3435 = vunpack.c.h.b16 %v379
        %v3436 = vunpack.c.l.b16 %v380
        %v3437 = vunpack.c.h.b16 %v380
        %v3438 = vunpack.c.l.b16 %v381
        %v3439 = vunpack.c.h.b16 %v381
        %v3440 = vunpack.c.l.b16 %v382
        %v3441 = vunpack.c.h.b16 %v382
        %v3442 = vunpack.c.l.b16 %v383
        %v3443 = vunpack.c.h.b16 %v383
        %v3444 = vunpack.c.l.b16 %v384
        %v3445 = vunpack.c.h.b16 %v384
        %v3446 = vunpack.c.l.b16 %v385
        %v3447 = vunpack.c.h.b16 %v385
        %v3448 = vunpack.c.l.b16 %v386
        %v3449 = vunpack.c.h.b16 %v386
        %v3450 = vunpack.c.l.b16 %v387
        %v3451 = vunpack.c.h.b16 %v387
        %v3452 = vunpack.c.l.b16 %v388
        %v3453 = vunpack.c.h.b16 %v388
        %v3454 = vunpack.c.l.b16 %v389
        %v3455 = vunpack.c.h.b16 %v389
        %v3456 = vunpack.c.l.b16 %v390
        %v3457 = vunpack.c.h.b16 %v390
        %v3458 = vunpack.c.l.b16 %v391
        %v3459 = vunpack.c.h.b16 %v391
        %v3460 = vunpack.c.l.b16 %v392
        %v3461 = vunpack.c.h.b16 %v392
        %v3462 = vunpack.c.l.b16 %v393
        %v3463 = vunpack.c.h.b16 %v393
        %v3464 = vunpack.c.l.b16 %v394
        %v3465 = vunpack.c.h.b16 %v394
        %v3466 = vunpack.c.l.b16 %v395
        %v3467 = vunpack.c.h.b16 %v395
        %v3468 = vunpack.c.l.b16 %v396
        %v3469 = vunpack.c.h.b16 %v396
        %v3470 = vunpack.c.l.b16 %v397
        %v3471 = vunpack.c.h.b16 %v397
        %v3472 = vunpack.c.l.b16 %v398
        %v3473 = vunpack.c.h.b16 %v398
        %v3474 = vunpack.c.l.b16 %v399
        %v3475 = vunpack.c.h.b16 %v399
        %v3476 = vunpack.c.l.b16 %v400
        %v3477 = vunpack.c.h.b16 %v400
        %v3478 = vunpack.c.l.b16 %v401
        %v3479 = vunpack.c.h.b16 %v401
        %v3480 = vunpack.c.l.b16 %v402
        %v3481 = vunpack.c.h.b16 %v402
        %v3482 = vunpack.c.l.b16 %v403
        %v3483 = vunpack.c.h.b16 %v403
        %v3484 = vunpack.c.l.b16 %v404
        %v3485 = vunpack.c.h.b16 %v404
        %v3486 = vunpack.c.l.b16 %v405
        %v3487 = vunpack.c.h.b16 %v405
        %v3488 = vunpack.c.l.b16 %v406
        %v3489 = vunpack.c.h.b16 %v406
        %v3490 = vunpack.c.l.b16 %v407
        %v3491 = vunpack.c.h.b16 %v407
        %v3492 = vunpack.c.l.b16 %v408
        %v3493 = vunpack.c.h.b16 %v408
        %v3494 = vunpack.c.l.b16 %v409
        %v3495 = vunpack.c.h.b16 %v409
        %v3496 = vunpack.c.l.b16 %v410
        %v3497 = vunpack.c.h.b16 %v410
        %v3498 = vunpack.c.l.b16 %v411
        %v3499 = vunpack.c.h.b16 %v411
        %v3500 = vunpack.c.l.b16 %v412
        %v3501 = vunpack.c.h.b16 %v412
        %v3502 = vunpack.c.l.b16 %v413
        %v3503 = vunpack.c.h.b16 %v413
        %v3504 = vunpack.c.l.b16 %v414
        %v3505 = vunpack.c.h.b16 %v414
        %v3506 = vunpack.c.l.b16 %v415
        %v3507 = vunpack.c.h.b16 %v415
        %v3508 = vunpack.c.l.b16 %v416
        %v3509 = vunpack.c.h.b16 %v416
        %v3510 = vunpack.c.l.b16 %v417
        %v3511 = vunpack.c.h.b16 %v417
        %v3512 = vunpack.c.l.b16 %v418
        %v3513 = vunpack.c.h.b16 %v418
        %v3514 = vunpack.c.l.b16 %v419
        %v3515 = vunpack.c.h.b16 %v419
        %v3516 = vunpack.c.l.b16 %v420
        %v3517 = vunpack.c.h.b16 %v420
        %v3518 = vunpack.c.l.b16 %v421
        %v3519 = vunpack.c.h.b16 %v421
        %v3520 = vunpack.c.l.b16 %v422
        %v3521 = vunpack.c.h.b16 %v422
        %v3522 = vunpack.c.l.b16 %v423
        %v3523 = vunpack.c.h.b16 %v423
        %v3524 = vunpack.c.l.b16 %v424
        %v3525 = vunpack.c.h.b16 %v424
        %v3526 = vunpack.c.l.b16 %v425
        %v3527 = vunpack.c.h.b16 %v425
        %v3528 = vunpack.c.l.b16 %v426
        %v3529 = vunpack.c.h.b16 %v426
        %v3530 = vunpack.c.l.b16 %v427
        %v3531 = vunpack.c.h.b16 %v427
        %v3532 = vunpack.c.l.b16 %v428
        %v3533 = vunpack.c.h.b16 %v428
        %v3534 = vunpack.c.l.b16 %v429
        %v3535 = vunpack.c.h.b16 %v429
        %v3536 = vunpack.c.l.b16 %v430
        %v3537 = vunpack.c.h.b16 %v430
        %v3538 = vunpack.c.l.b16 %v431
        %v3539 = vunpack.c.h.b16 %v431
        %v3540 = vunpack.c.l.b16 %v432
        %v3541 = vunpack.c.h.b16 %v432
        %v3542 = vunpack.c.l.b16 %v433
        %v3543 = vunpack.c.h.b16 %v433
        %v3544 = vunpack.c.l.b16 %v434
        %v3545 = vunpack.c.h.b16 %v434
        %v3546 = vunpack.c.l.b16 %v435
        %v3547 = vunpack.c.h.b16 %v435
        %v3548 = vunpack.c.l.b16 %v436
        %v3549 = vunpack.c.h.b16 %v436
        %v3550 = vunpack.c.l.b16 %v437
        %v3551 = vunpack.c.h.b16 %v437
        %v3552 = vunpack.c.l.b16 %v438
        %v3553 = vunpack.c.h.b16 %v438
        %v3554 = vunpack.c.l.b16 %v439
        %v3555 = vunpack.c.h.b16 %v439
        %v3556 = vunpack.c.l.b16 %v440
        %v3557 = vunpack.c.h.b16 %v440
        %v3558 = vunpack.c.l.b16 %v441
        %v3559 = vunpack.c.h.b16 %v441
        %v3560 = vunpack.c.l.b16 %v442
        %v3561 = vunpack.c.h.b16 %v442
        %v3562 = vunpack.c.l.b16 %v443
        %v3563 = vunpack.c.h.b16 %v443
        %v3564 = vunpack.c.l.b16 %v444
        %v3565 = vunpack.c.h.b16 %v444
        %v3566 = vunpack.c.l.b16 %v445
        %v3567 = vunpack.c.h.b16 %v445
        %v3568 = vunpack.c.l.b16 %v446
        %v3569 = vunpack.c.h.b16 %v446
        %v3570 = vunpack.c.l.b16 %v447
        %v3571 = vunpack.c.h.b16 %v447
        %v3572 = vunpack.c.l.b16 %v448
        %v3573 = vunpack.c.h.b16 %v448
        %v3574 = vunpack.c.l.b16 %v449
        %v3575 = vunpack.c.h.b16 %v449
        %v3576 = vunpack.c.l.b16 %v450
        %v3577 = vunpack.c.h.b16 %v450
        %v3578 = vunpack.c.l.b16 %v451
        %v3579 = vunpack.c.h.b16 %v451
        %v3580 = vunpack.c.l.b16 %v452
        %v3581 = vunpack.c.h.b16 %v452
        %v3582 = vunpack.c.l.b16 %v453
        %v3583 = vunpack.c.h.b16 %v453
        %v3584 = vunpack.c.l.b16 %v454
        %v3585 = vunpack.c.h.b16 %v454
        %v3586 = vunpack.c.l.b16 %v455
        %v3587 = vunpack.c.h.b16 %v455
        %v3588 = vunpack.c.l.b16 %v456
        %v3589 = vunpack.c.h.b16 %v456
        %v3590 = vunpack.c.l.b16 %v457
        %v3591 = vunpack.c.h.b16 %v457
        %v3592 = vunpack.c.l.b16 %v458
        %v3593 = vunpack.c.h.b16 %v458
        %v3594 = vunpack.c.l.b16 %v459
        %v3595 = vunpack.c.h.b16 %v459
        %v3596 = vunpack.c.l.b16 %v460
        %v3597 = vunpack.c.h.b16 %v460
        %v3598 = vunpack.c.l.b16 %v461
        %v3599 = vunpack.c.h.b16 %v461
        %v3600 = vunpack.c.l.b16 %v462
        %v3601 = vunpack.c.h.b16 %v462
        %v3602 = vunpack.c.l.b16 %v463
        %v3603 = vunpack.c.h.b16 %v463
        %v3604 = vunpack.c.l.b16 %v464
        %v3605 = vunpack.c.h.b16 %v464
        %v3606 = vunpack.c.l.b16 %v465
        %v3607 = vunpack.c.h.b16 %v465
        %v3608 = vunpack.c.l.b16 %v466
        %v3609 = vunpack.c.h.b16 %v466
        %v3610 = vunpack.c.l.b16 %v467
        %v3611 = vunpack.c.h.b16 %v467
        %v3612 = vunpack.c.l.b16 %v468
        %v3613 = vunpack.c.h.b16 %v468
        %v3614 = vunpack.c.l.b16 %v469
        %v3615 = vunpack.c.h.b16 %v469
        %v3616 = vunpack.c.l.b16 %v470
        %v3617 = vunpack.c.h.b16 %v470
        %v3618 = vunpack.c.l.b16 %v471
        %v3619 = vunpack.c.h.b16 %v471
        %v3620 = vunpack.c.l.b16 %v472
        %v3621 = vunpack.c.h.b16 %v472
        %v3622 = vunpack.c.l.b16 %v473
        %v3623 = vunpack.c.h.b16 %v473
        %v3624 = vunpack.c.l.b16 %v474
        %v3625 = vunpack.c.h.b16 %v474
        %v3626 = vunpack.c.l.b16 %v475
        %v3627 = vunpack.c.h.b16 %v475
        %v3628 = vunpack.c.l.b16 %v476
        %v3629 = vunpack.c.h.b16 %v476
        %v3630 = vunpack.c.l.b16 %v477
        %v3631 = vunpack.c.h.b16 %v477
        %v3632 = vunpack.c.l.b16 %v478
        %v3633 = vunpack.c.h.b16 %v478
        %v3634 = vunpack.c.l.b16 %v479
        %v3635 = vunpack.c.h.b16 %v479
        %v3636 = vunpack.c.l.b16 %v480
        %v3637 = vunpack.c.h.b16 %v480
        %v3638 = vunpack.c.l.b16 %v481
        %v3639 = vunpack.c.h.b16 %v481
        %v3640 = vunpack.c.l.b16 %v482
        %v3641 = vunpack.c.h.b16 %v482
        %v3642 = vunpack.c.l.b16 %v483
        %v3643 = vunpack.c.h.b16 %v483
        %v3644 = vunpack.c.l.b16 %v484
        %v3645 = vunpack.c.h.b16 %v484
        %v3646 = vunpack.c.l.b16 %v485
        %v3647 = vunpack.c.h.b16 %v485
        %v3648 = vunpack.c.l.b16 %v486
        %v3649 = vunpack.c.h.b16 %v486
        %v3650 = vunpack.c.l.b16 %v487
        %v3651 = vunpack.c.h.b16 %v487
        %v3652 = vunpack.c.l.b16 %v488
        %v3653 = vunpack.c.h.b16 %v488
        %v3654 = vunpack.c.l.b16 %v489
        %v3655 = vunpack.c.h.b16 %v489
        %v3656 = vunpack.c.l.b16 %v490
        %v3657 = vunpack.c.h.b16 %v490
        %v3658 = vunpack.c.l.b16 %v491
        %v3659 = vunpack.c.h.b16 %v491
        %v3660 = vunpack.c.l.b16 %v492
        %v3661 = vunpack.c.h.b16 %v492
        %v3662 = vunpack.c.l.b16 %v493
        %v3663 = vunpack.c.h.b16 %v493
        %v3664 = vunpack.c.l.b16 %v494
        %v3665 = vunpack.c.h.b16 %v494
        %v3666 = vunpack.c.l.b16 %v495
        %v3667 = vunpack.c.h.b16 %v495
        %v3668 = vunpack.c.l.b16 %v496
        %v3669 = vunpack.c.h.b16 %v496
        %v3670 = vunpack.c.l.b16 %v497
        %v3671 = vunpack.c.h.b16 %v497
        %v3672 = vunpack.c.l.b16 %v498
        %v3673 = vunpack.c.h.b16 %v498
        %v3674 = vunpack.c.l.b16 %v499
        %v3675 = vunpack.c.h.b16 %v499
        %v3676 = vunpack.c.l.b16 %v500
        %v3677 = vunpack.c.h.b16 %v500
        %v3678 = vunpack.c.l.b16 %v501
        %v3679 = vunpack.c.h.b16 %v501
        %v3680 = vunpack.c.l.b16 %v502
        %v3681 = vunpack.c.h.b16 %v502
        %v3682 = vunpack.c.l.b16 %v503
        %v3683 = vunpack.c.h.b16 %v503
        %v3684 = vunpack.c.l.b16 %v504
        %v3685 = vunpack.c.h.b16 %v504
        %v3686 = vunpack.c.l.b16 %v505
        %v3687 = vunpack.c.h.b16 %v505
        %v3688 = vunpack.c.l.b16 %v506
        %v3689 = vunpack.c.h.b16 %v506
        %v3690 = vunpack.c.l.b16 %v507
        %v3691 = vunpack.c.h.b16 %v507
        %v3692 = vunpack.c.l.b16 %v508
        %v3693 = vunpack.c.h.b16 %v508
        %v3694 = vunpack.c.l.b16 %v509
        %v3695 = vunpack.c.h.b16 %v509
        %v3696 = vunpack.c.l.b16 %v510
        %v3697 = vunpack.c.h.b16 %v510
        %v3698 = vunpack.c.l.b16 %v511
        %v3699 = vunpack.c.h.b16 %v511
        %v3700 = vunpack.c.l.b16 %v512
        %v3701 = vunpack.c.h.b16 %v512
        %v3702 = vunpack.c.l.b16 %v513
        %v3703 = vunpack.c.h.b16 %v513
        %v3704 = vunpack.c.l.b16 %v514
        %v3705 = vunpack.c.h.b16 %v514
        %v3706 = vunpack.c.l.b16 %v515
        %v3707 = vunpack.c.h.b16 %v515
        %v3708 = vunpack.c.l.b16 %v516
        %v3709 = vunpack.c.h.b16 %v516
        %v3710 = vunpack.c.l.b16 %v517
        %v3711 = vunpack.c.h.b16 %v517
        %v3712 = vunpack.c.l.b16 %v518
        %v3713 = vunpack.c.h.b16 %v518
        %v3714 = vunpack.c.l.b16 %v519
        %v3715 = vunpack.c.h.b16 %v519
        %v3716 = vunpack.c.l.b16 %v520
        %v3717 = vunpack.c.h.b16 %v520
        %v3718 = vunpack.c.l.b16 %v521
        %v3719 = vunpack.c.h.b16 %v521
        %v3720 = vunpack.c.l.b16 %v522
        %v3721 = vunpack.c.h.b16 %v522
        %v3722 = vunpack.c.l.b16 %v523
        %v3723 = vunpack.c.h.b16 %v523
        %v3724 = vunpack.c.l.b16 %v524
        %v3725 = vunpack.c.h.b16 %v524
        %v3726 = vunpack.c.l.b16 %v525
        %v3727 = vunpack.c.h.b16 %v525
        %v3728 = vunpack.c.l.b16 %v526
        %v3729 = vunpack.c.h.b16 %v526
        %v3730 = vunpack.c.l.b16 %v527
        %v3731 = vunpack.c.h.b16 %v527
        %v3732 = vunpack.c.l.b16 %v528
        %v3733 = vunpack.c.h.b16 %v528
        %v3734 = vunpack.c.l.b16 %v529
        %v3735 = vunpack.c.h.b16 %v529
        %v3736 = vunpack.c.l.b16 %v530
        %v3737 = vunpack.c.h.b16 %v530
        %v3738 = vunpack.c.l.b16 %v531
        %v3739 = vunpack.c.h.b16 %v531
        %v3740 = vunpack.c.l.b16 %v532
        %v3741 = vunpack.c.h.b16 %v532
        %v3742 = vunpack.c.l.b16 %v533
        %v3743 = vunpack.c.h.b16 %v533
        %v3744 = vunpack.c.l.b16 %v534
        %v3745 = vunpack.c.h.b16 %v534
        %v3746 = vunpack.c.l.b16 %v535
        %v3747 = vunpack.c.h.b16 %v535
        %v3748 = vunpack.c.l.b16 %v536
        %v3749 = vunpack.c.h.b16 %v536
        %v3750 = vunpack.c.l.b16 %v537
        %v3751 = vunpack.c.h.b16 %v537
        %v3752 = vunpack.c.l.b16 %v538
        %v3753 = vunpack.c.h.b16 %v538
        %v3754 = vunpack.c.l.b16 %v539
        %v3755 = vunpack.c.h.b16 %v539
        %v3756 = vunpack.c.l.b16 %v540
        %v3757 = vunpack.c.h.b16 %v540
        %v3758 = vunpack.c.l.b16 %v541
        %v3759 = vunpack.c.h.b16 %v541
        %v3760 = vunpack.c.l.b16 %v542
        %v3761 = vunpack.c.h.b16 %v542
        %v3762 = vunpack.c.l.b16 %v543
        %v3763 = vunpack.c.h.b16 %v543
        %v3764 = vunpack.c.l.b16 %v544
        %v3765 = vunpack.c.h.b16 %v544
        %v3766 = vunpack.c.l.b16 %v545
        %v3767 = vunpack.c.h.b16 %v545
        %v3768 = vunpack.c.l.b16 %v546
        %v3769 = vunpack.c.h.b16 %v546
        %v3770 = vunpack.c.l.b16 %v547
        %v3771 = vunpack.c.h.b16 %v547
        %v3772 = vunpack.c.l.b16 %v548
        %v3773 = vunpack.c.h.b16 %v548
        %v3774 = vunpack.c.l.b16 %v549
        %v3775 = vunpack.c.h.b16 %v549
        %v3776 = vunpack.c.l.b16 %v550
        %v3777 = vunpack.c.h.b16 %v550
        %v3778 = vunpack.c.l.b16 %v551
        %v3779 = vunpack.c.h.b16 %v551
        %v3780 = vunpack.c.l.b16 %v552
        %v3781 = vunpack.c.h.b16 %v552
        %v3782 = vunpack.c.l.b16 %v553
        %v3783 = vunpack.c.h.b16 %v553
        %v3784 = vunpack.c.l.b16 %v554
        %v3785 = vunpack.c.h.b16 %v554
        %v3786 = vunpack.c.l.b16 %v555
        %v3787 = vunpack.c.h.b16 %v555
        %v3788 = vunpack.c.l.b16 %v556
        %v3789 = vunpack.c.h.b16 %v556
        %v3790 = vunpack.c.l.b16 %v557
        %v3791 = vunpack.c.h.b16 %v557
        %v3792 = vunpack.c.l.b16 %v558
        %v3793 = vunpack.c.h.b16 %v558
        %v3794 = vunpack.c.l.b16 %v559
        %v3795 = vunpack.c.h.b16 %v559
        %v3796 = vunpack.c.l.b16 %v560
        %v3797 = vunpack.c.h.b16 %v560
        %v3798 = vunpack.c.l.b16 %v561
        %v3799 = vunpack.c.h.b16 %v561
        %v3800 = vunpack.c.l.b16 %v562
        %v3801 = vunpack.c.h.b16 %v562
        %v3802 = vunpack.c.l.b16 %v563
        %v3803 = vunpack.c.h.b16 %v563
        %v3804 = vunpack.c.l.b16 %v564
        %v3805 = vunpack.c.h.b16 %v564
        %v3806 = vunpack.c.l.b16 %v565
        %v3807 = vunpack.c.h.b16 %v565
        %v3808 = vunpack.c.l.b16 %v566
        %v3809 = vunpack.c.h.b16 %v566
        %v3810 = vunpack.c.l.b16 %v567
        %v3811 = vunpack.c.h.b16 %v567
        %v3812 = vunpack.c.l.b16 %v568
        %v3813 = vunpack.c.h.b16 %v568
        %v3814 = vunpack.c.l.b16 %v569
        %v3815 = vunpack.c.h.b16 %v569
        %v3816 = vunpack.c.l.b16 %v570
        %v3817 = vunpack.c.h.b16 %v570
        %v3818 = vunpack.c.l.b16 %v571
        %v3819 = vunpack.c.h.b16 %v571
        %v3820 = vunpack.c.l.b16 %v572
        %v3821 = vunpack.c.h.b16 %v572
        %v3822 = vunpack.c.l.b16 %v573
        %v3823 = vunpack.c.h.b16 %v573
        %v3824 = vunpack.c.l.b16 %v574
        %v3825 = vunpack.c.h.b16 %v574
        %v3826 = vunpack.c.l.b16 %v575
        %v3827 = vunpack.c.h.b16 %v575
        %v3828 = vunpack.c.l.b16 %v576
        %v3829 = vunpack.c.h.b16 %v576
        %v3830 = vunpack.c.l.b16 %v577
        %v3831 = vunpack.c.h.b16 %v577
        %v3832 = vunpack.c.l.b16 %v578
        %v3833 = vunpack.c.h.b16 %v578
        %v3834 = vunpack.c.l.b16 %v579
        %v3835 = vunpack.c.h.b16 %v579
        %v3836 = vunpack.c.l.b16 %v580
        %v3837 = vunpack.c.h.b16 %v580
        %v3838 = vunpack.c.l.b16 %v581
        %v3839 = vunpack.c.h.b16 %v581
        %v3840 = vunpack.c.l.b16 %v582
        %v3841 = vunpack.c.h.b16 %v582
        %v3842 = vunpack.c.l.b16 %v583
        %v3843 = vunpack.c.h.b16 %v583
        %v3844 = vunpack.c.l.b16 %v584
        %v3845 = vunpack.c.h.b16 %v584
        %v3846 = vunpack.c.l.b16 %v585
        %v3847 = vunpack.c.h.b16 %v585
        %v3848 = vunpack.c.l.b16 %v586
        %v3849 = vunpack.c.h.b16 %v586
        %v3850 = vunpack.c.l.b16 %v587
        %v3851 = vunpack.c.h.b16 %v587
        %v3852 = vunpack.c.l.b16 %v588
        %v3853 = vunpack.c.h.b16 %v588
        %v3854 = vunpack.c.l.b16 %v589
        %v3855 = vunpack.c.h.b16 %v589
        %v3856 = vunpack.c.l.b16 %v590
        %v3857 = vunpack.c.h.b16 %v590
        %v3858 = vunpack.c.l.b16 %v591
        %v3859 = vunpack.c.h.b16 %v591
        %v3860 = vunpack.c.l.b16 %v592
        %v3861 = vunpack.c.h.b16 %v592
        %v3862 = vunpack.c.l.b16 %v593
        %v3863 = vunpack.c.h.b16 %v593
        %v3864 = vunpack.c.l.b16 %v594
        %v3865 = vunpack.c.h.b16 %v594
        %v3866 = vunpack.c.l.b16 %v595
        %v3867 = vunpack.c.h.b16 %v595
        %v3868 = vunpack.c.l.b16 %v596
        %v3869 = vunpack.c.h.b16 %v596
        %v3870 = vunpack.c.l.b16 %v597
        %v3871 = vunpack.c.h.b16 %v597
        %v3872 = vunpack.c.l.b16 %v598
        %v3873 = vunpack.c.h.b16 %v598
        %v3874 = vunpack.c.l.b16 %v599
        %v3875 = vunpack.c.h.b16 %v599
        %v3876 = vunpack.c.l.b16 %v600
        %v3877 = vunpack.c.h.b16 %v600
        %v3878 = vunpack.c.l.b16 %v601
        %v3879 = vunpack.c.h.b16 %v601
        %v3880 = vunpack.c.l.b16 %v602
        %v3881 = vunpack.c.h.b16 %v602
        %v3882 = vunpack.c.l.b16 %v603
        %v3883 = vunpack.c.h.b16 %v603
        %v3884 = vunpack.c.l.b16 %v604
        %v3885 = vunpack.c.h.b16 %v604
        %v3886 = vunpack.c.l.b16 %v605
        %v3887 = vunpack.c.h.b16 %v605
        %v3888 = vunpack.c.l.b16 %v606
        %v3889 = vunpack.c.h.b16 %v606
        %v3890 = vunpack.c.l.b16 %v607
        %v3891 = vunpack.c.h.b16 %v607
        %v3892 = vunpack.c.l.b16 %v608
        %v3893 = vunpack.c.h.b16 %v608
        %v3894 = vunpack.c.l.b16 %v609
        %v3895 = vunpack.c.h.b16 %v609
        %v3896 = vunpack.c.l.b16 %v610
        %v3897 = vunpack.c.h.b16 %v610
        %v3898 = vunpack.c.l.b16 %v611
        %v3899 = vunpack.c.h.b16 %v611
        %v3900 = vunpack.c.l.b16 %v612
        %v3901 = vunpack.c.h.b16 %v612
        %v3902 = vunpack.c.l.b16 %v613
        %v3903 = vunpack.c.h.b16 %v613
        %v3904 = vunpack.c.l.b16 %v614
        %v3905 = vunpack.c.h.b16 %v614
        %v3906 = vunpack.c.l.b16 %v615
        %v3907 = vunpack.c.h.b16 %v615
        %v3908 = vunpack.c.l.b16 %v616
        %v3909 = vunpack.c.h.b16 %v616
        %v3910 = vunpack.c.l.b16 %v617
        %v3911 = vunpack.c.h.b16 %v617
        %v3912 = vunpack.c.l.b16 %v618
        %v3913 = vunpack.c.h.b16 %v618
        %v3914 = vunpack.c.l.b16 %v619
        %v3915 = vunpack.c.h.b16 %v619
        %v3916 = vunpack.c.l.b16 %v620
        %v3917 = vunpack.c.h.b16 %v620
        %v3918 = vunpack.c.l.b16 %v621
        %v3919 = vunpack.c.h.b16 %v621
        %v3920 = vunpack.c.l.b16 %v622
        %v3921 = vunpack.c.h.b16 %v622
        %v3922 = vunpack.c.l.b16 %v623
        %v3923 = vunpack.c.h.b16 %v623
        %v3924 = vunpack.c.l.b16 %v624
        %v3925 = vunpack.c.h.b16 %v624
        %v3926 = vunpack.c.l.b16 %v625
        %v3927 = vunpack.c.h.b16 %v625
        %v3928 = vunpack.c.l.b16 %v626
        %v3929 = vunpack.c.h.b16 %v626
        %v3930 = vunpack.c.l.b16 %v627
        %v3931 = vunpack.c.h.b16 %v627
        %v3932 = vunpack.c.l.b16 %v628
        %v3933 = vunpack.c.h.b16 %v628
        %v3934 = vunpack.c.l.b16 %v629
        %v3935 = vunpack.c.h.b16 %v629
        %v3936 = vunpack.c.l.b16 %v630
        %v3937 = vunpack.c.h.b16 %v630
        %v3938 = vunpack.c.l.b16 %v631
        %v3939 = vunpack.c.h.b16 %v631
        %v3940 = vunpack.c.l.b16 %v632
        %v3941 = vunpack.c.h.b16 %v632
        %v3942 = vunpack.c.l.b16 %v633
        %v3943 = vunpack.c.h.b16 %v633
        %v3944 = vunpack.c.l.b16 %v634
        %v3945 = vunpack.c.h.b16 %v634
        %v3946 = vunpack.c.l.b16 %v635
        %v3947 = vunpack.c.h.b16 %v635
        %v3948 = vunpack.c.l.b16 %v636
        %v3949 = vunpack.c.h.b16 %v636
        %v3950 = vunpack.c.l.b16 %v637
        %v3951 = vunpack.c.h.b16 %v637
        %v3952 = vunpack.c.l.b16 %v638
        %v3953 = vunpack.c.h.b16 %v638
        %v3954 = vunpack.c.l.b16 %v639
        %v3955 = vunpack.c.h.b16 %v639
        %v3956 = vunpack.c.l.b16 %v640
        %v3957 = vunpack.c.h.b16 %v640
        %v3958 = vunpack.c.l.b16 %v641
        %v3959 = vunpack.c.h.b16 %v641
        %v3960 = vunpack.c.l.b16 %v642
        %v3961 = vunpack.c.h.b16 %v642
        %v3962 = vunpack.c.l.b16 %v643
        %v3963 = vunpack.c.h.b16 %v643
        %v3964 = vunpack.c.l.b16 %v644
        %v3965 = vunpack.c.h.b16 %v644
        %v3966 = vunpack.c.l.b16 %v645
        %v3967 = vunpack.c.h.b16 %v645
        %v3968 = vunpack.c.l.b16 %v646
        %v3969 = vunpack.c.h.b16 %v646
        %v3970 = vunpack.c.l.b16 %v647
        %v3971 = vunpack.c.h.b16 %v647
        %v3972 = vunpack.c.l.b16 %v648
        %v3973 = vunpack.c.h.b16 %v648
        %v3974 = vunpack.c.l.b16 %v649
        %v3975 = vunpack.c.h.b16 %v649
        %v3976 = vunpack.c.l.b16 %v650
        %v3977 = vunpack.c.h.b16 %v650
        %v3978 = vunpack.c.l.b16 %v651
        %v3979 = vunpack.c.h.b16 %v651
        %v3980 = vunpack.c.l.b16 %v652
        %v3981 = vunpack.c.h.b16 %v652
        %v3982 = vunpack.c.l.b16 %v653
        %v3983 = vunpack.c.h.b16 %v653
        %v3984 = vunpack.c.l.b16 %v654
        %v3985 = vunpack.c.h.b16 %v654
        %v3986 = vunpack.c.l.b16 %v655
        %v3987 = vunpack.c.h.b16 %v655
        %v3988 = vunpack.c.l.b16 %v656
        %v3989 = vunpack.c.h.b16 %v656
        %v3990 = vunpack.c.l.b16 %v657
        %v3991 = vunpack.c.h.b16 %v657
        %v3992 = vunpack.c.l.b16 %v658
        %v3993 = vunpack.c.h.b16 %v658
        %v3994 = vunpack.c.l.b16 %v659
        %v3995 = vunpack.c.h.b16 %v659
        %v3996 = vunpack.c.l.b16 %v660
        %v3997 = vunpack.c.h.b16 %v660
        %v3998 = vunpack.c.l.b16 %v661
        %v3999 = vunpack.c.h.b16 %v661
        %v4000 = vunpack.c.l.b16 %v662
        %v4001 = vunpack.c.h.b16 %v662
        %v4002 = vunpack.c.l.b16 %v663
        %v4003 = vunpack.c.h.b16 %v663
        %v4004 = vunpack.c.l.b16 %v664
        %v4005 = vunpack.c.h.b16 %v664
        %v4006 = vunpack.c.l.b16 %v665
        %v4007 = vunpack.c.h.b16 %v665
        %v4008 = vunpack.c.l.b16 %v666
        %v4009 = vunpack.c.h.b16 %v666
        %v4010 = vunpack.c.l.b16 %v667
        %v4011 = vunpack.c.h.b16 %v667
        %v4012 = vunpack.c.l.b16 %v668
        %v4013 = vunpack.c.h.b16 %v668
        %v4014 = vunpack.c.l.b16 %v669
        %v4015 = vunpack.c.h.b16 %v669
        %v4016 = vunpack.c.l.b16 %v670
        %v4017 = vunpack.c.h.b16 %v670
        %v4018 = vunpack.c.l.b16 %v671
        %v4019 = vunpack.c.h.b16 %v671
        %v4020 = vunpack.c.l.b16 %v672
        %v4021 = vunpack.c.h.b16 %v672
        %v4022 = vunpack.c.l.b16 %v673
        %v4023 = vunpack.c.h.b16 %v673
        %v4024 = vunpack.c.l.b16 %v674
        %v4025 = vunpack.c.h.b16 %v674
        %v4026 = vunpack.c.l.b16 %v675
        %v4027 = vunpack.c.h.b16 %v675
        %v4028 = vunpack.c.l.b16 %v676
        %v4029 = vunpack.c.h.b16 %v676
        %v4030 = vunpack.c.l.b16 %v677
        %v4031 = vunpack.c.h.b16 %v677
        %v4032 = vunpack.c.l.b16 %v678
        %v4033 = vunpack.c.h.b16 %v678
        %v4034 = vunpack.c.l.b16 %v679
        %v4035 = vunpack.c.h.b16 %v679
        %v4036 = vunpack.c.l.b16 %v680
        %v4037 = vunpack.c.h.b16 %v680
        %v4038 = vunpack.c.l.b16 %v681
        %v4039 = vunpack.c.h.b16 %v681
        %v4040 = vunpack.c.l.b16 %v682
        %v4041 = vunpack.c.h.b16 %v682
        %v4042 = vunpack.c.l.b16 %v683
        %v4043 = vunpack.c.h.b16 %v683
        %v4044 = vunpack.c.l.b16 %v684
        %v4045 = vunpack.c.h.b16 %v684
        %v4046 = vunpack.c.l.b16 %v685
        %v4047 = vunpack.c.h.b16 %v685
        %v4048 = vunpack.c.l.b16 %v686
        %v4049 = vunpack.c.h.b16 %v686
        %v4050 = vunpack.c.l.b16 %v687
        %v4051 = vunpack.c.h.b16 %v687
        %v4052 = vunpack.c.l.b16 %v688
        %v4053 = vunpack.c.h.b16 %v688
        %v4054 = vunpack.c.l.b16 %v689
        %v4055 = vunpack.c.h.b16 %v689
        %v4056 = vunpack.c.l.b16 %v690
        %v4057 = vunpack.c.h.b16 %v690
        %v4058 = vunpack.c.l.b16 %v691
        %v4059 = vunpack.c.h.b16 %v691
        %v4060 = vunpack.c.l.b16 %v692
        %v4061 = vunpack.c.h.b16 %v692
        %v4062 = vunpack.c.l.b16 %v693
        %v4063 = vunpack.c.h.b16 %v693
        %v4064 = vunpack.c.l.b16 %v694
        %v4065 = vunpack.c.h.b16 %v694
        %v4066 = vunpack.c.l.b16 %v695
        %v4067 = vunpack.c.h.b16 %v695
        %v4068 = vunpack.c.l.b16 %v696
        %v4069 = vunpack.c.h.b16 %v696
        %v4070 = vunpack.c.l.b16 %v697
        %v4071 = vunpack.c.h.b16 %v697
        %v4072 = vunpack.c.l.b16 %v698
        %v4073 = vunpack.c.h.b16 %v698
        %v4074 = vunpack.c.l.b16 %v699
        %v4075 = vunpack.c.h.b16 %v699
        %v4076 = vunpack.c.l.b16 %v700
        %v4077 = vunpack.c.h.b16 %v700
        %v4078 = vunpack.c.l.b16 %v701
        %v4079 = vunpack.c.h.b16 %v701
        %v4080 = vunpack.c.l.b16 %v702
        %v4081 = vunpack.c.h.b16 %v702
        %v4082 = vunpack.c.l.b16 %v703
        %v4083 = vunpack.c.h.b16 %v703
        %v4084 = vunpack.c.l.b16 %v704
        %v4085 = vunpack.c.h.b16 %v704
        %v4086 = vunpack.c.l.b16 %v705
        %v4087 = vunpack.c.h.b16 %v705
        %v4088 = vunpack.c.l.b16 %v706
        %v4089 = vunpack.c.h.b16 %v706
        %v4090 = vunpack.c.l.b16 %v707
        %v4091 = vunpack.c.h.b16 %v707
        %v4092 = vunpack.c.l.b16 %v708
        %v4093 = vunpack.c.h.b16 %v708
        %v4094 = vunpack.c.l.b16 %v709
        %v4095 = vunpack.c.h.b16 %v709
        %v4096 = vunpack.c.l.b16 %v710
        %v4097 = vunpack.c.h.b16 %v710
        %v4098 = vunpack.c.l.b16 %v711
        %v4099 = vunpack.c.h.b16 %v711
        %v4100 = vunpack.c.l.b16 %v712
        %v4101 = vunpack.c.h.b16 %v712
        %v4102 = vunpack.c.l.b16 %v713
        %v4103 = vunpack.c.h.b16 %v713
        %v4104 = vunpack.c.l.b16 %v714
        %v4105 = vunpack.c.h.b16 %v714
        %v4106 = vunpack.c.l.b16 %v715
        %v4107 = vunpack.c.h.b16 %v715
        %v4108 = vunpack.c.l.b16 %v716
        %v4109 = vunpack.c.h.b16 %v716
        %v4110 = vunpack.c.l.b16 %v717
        %v4111 = vunpack.c.h.b16 %v717
        %v4112 = vunpack.c.l.b16 %v718
        %v4113 = vunpack.c.h.b16 %v718
        %v4114 = vunpack.c.l.b16 %v719
        %v4115 = vunpack.c.h.b16 %v719
        %v4116 = vunpack.c.l.b16 %v720
        %v4117 = vunpack.c.h.b16 %v720
        %v4118 = vunpack.c.l.b16 %v721
        %v4119 = vunpack.c.h.b16 %v721
        %v4120 = vunpack.c.l.b16 %v722
        %v4121 = vunpack.c.h.b16 %v722
        %v4122 = vunpack.c.l.b16 %v723
        %v4123 = vunpack.c.h.b16 %v723
        %v4124 = vunpack.c.l.b16 %v724
        %v4125 = vunpack.c.h.b16 %v724
        %v4126 = vunpack.c.l.b16 %v725
        %v4127 = vunpack.c.h.b16 %v725
        %v4128 = vunpack.c.l.b16 %v726
        %v4129 = vunpack.c.h.b16 %v726
        %v4130 = vunpack.c.l.b16 %v727
        %v4131 = vunpack.c.h.b16 %v727
        %v4132 = vunpack.c.l.b16 %v728
        %v4133 = vunpack.c.h.b16 %v728
        %v4134 = vunpack.c.l.b16 %v729
        %v4135 = vunpack.c.h.b16 %v729
        %v4136 = vunpack.c.l.b16 %v730
        %v4137 = vunpack.c.h.b16 %v730
        %v4138 = vunpack.c.l.b16 %v731
        %v4139 = vunpack.c.h.b16 %v731
        %v4140 = vunpack.c.l.b16 %v732
        %v4141 = vunpack.c.h.b16 %v732
        %v4142 = vunpack.c.l.b16 %v733
        %v4143 = vunpack.c.h.b16 %v733
        %v4144 = vunpack.c.l.b16 %v734
        %v4145 = vunpack.c.h.b16 %v734
        %v4146 = vunpack.c.l.b16 %v735
        %v4147 = vunpack.c.h.b16 %v735
        %v4148 = vunpack.c.l.b16 %v736
        %v4149 = vunpack.c.h.b16 %v736
        %v4150 = vunpack.c.l.b16 %v737
        %v4151 = vunpack.c.h.b16 %v737
        %v4152 = vunpack.c.l.b16 %v738
        %v4153 = vunpack.c.h.b16 %v738
        %v4154 = vunpack.c.l.b16 %v739
        %v4155 = vunpack.c.h.b16 %v739
        %v4156 = vunpack.c.l.b16 %v740
        %v4157 = vunpack.c.h.b16 %v740
        %v4158 = vunpack.c.l.b16 %v741
        %v4159 = vunpack.c.h.b16 %v741
        %v4160 = vunpack.c.l.b16 %v742
        %v4161 = vunpack.c.h.b16 %v742
        %v4162 = vunpack.c.l.b16 %v743
        %v4163 = vunpack.c.h.b16 %v743
        %v4164 = vunpack.c.l.b16 %v744
        %v4165 = vunpack.c.h.b16 %v744
        %v4166 = vunpack.c.l.b16 %v745
        %v4167 = vunpack.c.h.b16 %v745
        %v4168 = vunpack.c.l.b16 %v746
        %v4169 = vunpack.c.h.b16 %v746
        %v4170 = vunpack.c.l.b16 %v747
        %v4171 = vunpack.c.h.b16 %v747
        %v4172 = vunpack.c.l.b16 %v748
        %v4173 = vunpack.c.h.b16 %v748
        %v4174 = vunpack.c.l.b16 %v749
        %v4175 = vunpack.c.h.b16 %v749
        %v4176 = vunpack.c.l.b16 %v750
        %v4177 = vunpack.c.h.b16 %v750
        %v4178 = vunpack.c.l.b16 %v751
        %v4179 = vunpack.c.h.b16 %v751
        %v4180 = vunpack.c.l.b16 %v752
        %v4181 = vunpack.c.h.b16 %v752
        %v4182 = vunpack.c.l.b16 %v753
        %v4183 = vunpack.c.h.b16 %v753
        %v4184 = vunpack.c.l.b16 %v754
        %v4185 = vunpack.c.h.b16 %v754
        %v4186 = vunpack.c.l.b16 %v755
        %v4187 = vunpack.c.h.b16 %v755
        %v4188 = vunpack.c.l.b16 %v756
        %v4189 = vunpack.c.h.b16 %v756
        %v4190 = vunpack.c.l.b16 %v757
        %v4191 = vunpack.c.h.b16 %v757
        %v4192 = vunpack.c.l.b16 %v758
        %v4193 = vunpack.c.h.b16 %v758
        %v4194 = vunpack.c.l.b16 %v759
        %v4195 = vunpack.c.h.b16 %v759
        %v4196 = vunpack.c.l.b16 %v760
        %v4197 = vunpack.c.h.b16 %v760
        %v4198 = vunpack.c.l.b16 %v761
        %v4199 = vunpack.c.h.b16 %v761
        %v4200 = vunpack.c.l.b16 %v762
        %v4201 = vunpack.c.h.b16 %v762
        %v4202 = vunpack.c.l.b16 %v763
        %v4203 = vunpack.c.h.b16 %v763
        %v4204 = vunpack.c.l.b16 %v764
        %v4205 = vunpack.c.h.b16 %v764
        %v4206 = vunpack.c.l.b16 %v765
        %v4207 = vunpack.c.h.b16 %v765
        %v4208 = vunpack.c.l.b16 %v766
        %v4209 = vunpack.c.h.b16 %v766
        %v4210 = vunpack.c.l.b16 %v767
        %v4211 = vunpack.c.h.b16 %v767
        %v4212 = vunpack.c.l.b16 %v768
        %v4213 = vunpack.c.h.b16 %v768
        %v4214 = vunpack.c.l.b16 %v769
        %v4215 = vunpack.c.h.b16 %v769
        %v4216 = vunpack.c.l.b16 %v770
        %v4217 = vunpack.c.h.b16 %v770
        %v4218 = vunpack.c.l.b16 %v771
        %v4219 = vunpack.c.h.b16 %v771
        %v4220 = vunpack.c.l.b16 %v772
        %v4221 = vunpack.c.h.b16 %v772
        %v4222 = vunpack.c.l.b16 %v773
        %v4223 = vunpack.c.h.b16 %v773
        %v4224 = vunpack.c.l.b16 %v774
        %v4225 = vunpack.c.h.b16 %v774
        %v4226 = vunpack.c.l.b16 %v775
        %v4227 = vunpack.c.h.b16 %v775
        %v4228 = vunpack.c.l.b16 %v776
        %v4229 = vunpack.c.h.b16 %v776
        %v4230 = vunpack.c.l.b16 %v777
        %v4231 = vunpack.c.h.b16 %v777
        %v4232 = vunpack.c.l.b16 %v778
        %v4233 = vunpack.c.h.b16 %v778
        %v4234 = vunpack.c.l.b16 %v779
        %v4235 = vunpack.c.h.b16 %v779
        %v4236 = vunpack.c.l.b16 %v780
        %v4237 = vunpack.c.h.b16 %v780
        %v4238 = vunpack.c.l.b16 %v781
        %v4239 = vunpack.c.h.b16 %v781
        %v4240 = vunpack.c.l.b16 %v782
        %v4241 = vunpack.c.h.b16 %v782
        %v4242 = vunpack.c.l.b16 %v783
        %v4243 = vunpack.c.h.b16 %v783
        %v4244 = vunpack.c.l.b16 %v784
        %v4245 = vunpack.c.h.b16 %v784
        %v4246 = vunpack.c.l.b16 %v785
        %v4247 = vunpack.c.h.b16 %v785
        %v4248 = vunpack.c.l.b16 %v786
        %v4249 = vunpack.c.h.b16 %v786
        %v4250 = vunpack.c.l.b16 %v787
        %v4251 = vunpack.c.h.b16 %v787
        %v4252 = vunpack.c.l.b16 %v788
        %v4253 = vunpack.c.h.b16 %v788
        %v4254 = vunpack.c.l.b16 %v789
        %v4255 = vunpack.c.h.b16 %v789
        %v4256 = vunpack.c.l.b16 %v790
        %v4257 = vunpack.c.h.b16 %v790
        %v4258 = vunpack.c.l.b16 %v791
        %v4259 = vunpack.c.h.b16 %v791
        %v4260 = vunpack.c.l.b16 %v792
        %v4261 = vunpack.c.h.b16 %v792
        %v4262 = vunpack.c.l.b16 %v793
        %v4263 = vunpack.c.h.b16 %v793
        %v4264 = vunpack.c.l.b16 %v794
        %v4265 = vunpack.c.h.b16 %v794
        %v4266 = vunpack.c.l.b16 %v795
        %v4267 = vunpack.c.h.b16 %v795
        %v4268 = vunpack.c.l.b16 %v796
        %v4269 = vunpack.c.h.b16 %v796
        %v4270 = vunpack.c.l.b16 %v797
        %v4271 = vunpack.c.h.b16 %v797
        %v4272 = vunpack.c.l.b16 %v798
        %v4273 = vunpack.c.h.b16 %v798
        %v4274 = vunpack.c.l.b16 %v799
        %v4275 = vunpack.c.h.b16 %v799
        %v4276 = vunpack.c.l.b16 %v800
        %v4277 = vunpack.c.h.b16 %v800
        %v4278 = vunpack.c.l.b16 %v801
        %v4279 = vunpack.c.h.b16 %v801
        %v4280 = vunpack.c.l.b16 %v802
        %v4281 = vunpack.c.h.b16 %v802
        %v4282 = vunpack.c.l.b16 %v803
        %v4283 = vunpack.c.h.b16 %v803
        %v4284 = vunpack.c.l.b16 %v804
        %v4285 = vunpack.c.h.b16 %v804
        %v4286 = vunpack.c.l.b16 %v805
        %v4287 = vunpack.c.h.b16 %v805
        %v4288 = vunpack.c.l.b16 %v806
        %v4289 = vunpack.c.h.b16 %v806
        %v4290 = vunpack.c.l.b16 %v807
        %v4291 = vunpack.c.h.b16 %v807
        %v4292 = vunpack.c.l.b16 %v808
        %v4293 = vunpack.c.h.b16 %v808
        %v4294 = vunpack.c.l.b16 %v809
        %v4295 = vunpack.c.h.b16 %v809
        %v4296 = vunpack.c.l.b16 %v810
        %v4297 = vunpack.c.h.b16 %v810
        %v4298 = vunpack.c.l.b16 %v811
        %v4299 = vunpack.c.h.b16 %v811
        %v4300 = vunpack.c.l.b16 %v812
        %v4301 = vunpack.c.h.b16 %v812
        %v4302 = vunpack.c.l.b16 %v813
        %v4303 = vunpack.c.h.b16 %v813
        %v4304 = vunpack.c.l.b16 %v814
        %v4305 = vunpack.c.h.b16 %v814
        %v4306 = vunpack.c.l.b16 %v815
        %v4307 = vunpack.c.h.b16 %v815
        %v4308 = vunpack.c.l.b16 %v816
        %v4309 = vunpack.c.h.b16 %v816
        %v4310 = vunpack.c.l.b16 %v817
        %v4311 = vunpack.c.h.b16 %v817
        %v4312 = vunpack.c.l.b16 %v818
        %v4313 = vunpack.c.h.b16 %v818
        %v4314 = vunpack.c.l.b16 %v819
        %v4315 = vunpack.c.h.b16 %v819
        %v4316 = vunpack.c.l.b16 %v820
        %v4317 = vunpack.c.h.b16 %v820
        %v4318 = vunpack.c.l.b16 %v821
        %v4319 = vunpack.c.h.b16 %v821
        %v4320 = vunpack.c.l.b16 %v822
        %v4321 = vunpack.c.h.b16 %v822
        %v4322 = vunpack.c.l.b16 %v823
        %v4323 = vunpack.c.h.b16 %v823
        %v4324 = vunpack.c.l.b16 %v824
        %v4325 = vunpack.c.h.b16 %v824
        %v4326 = vunpack.c.l.b16 %v825
        %v4327 = vunpack.c.h.b16 %v825
        %v4328 = vunpack.c.l.b16 %v826
        %v4329 = vunpack.c.h.b16 %v826
        %v4330 = vunpack.c.l.b16 %v827
        %v4331 = vunpack.c.h.b16 %v827
        %v4332 = vunpack.c.l.b16 %v828
        %v4333 = vunpack.c.h.b16 %v828
        %v4334 = vunpack.c.l.b16 %v829
        %v4335 = vunpack.c.h.b16 %v829
        %v4336 = vunpack.c.l.b16 %v830
        %v4337 = vunpack.c.h.b16 %v830
        %v4338 = vunpack.c.l.b16 %v831
        %v4339 = vunpack.c.h.b16 %v831
        %v4340 = vunpack.c.l.b16 %v832
        %v4341 = vunpack.c.h.b16 %v832
        %v4342 = vunpack.c.l.b16 %v833
        %v4343 = vunpack.c.h.b16 %v833
        %v4344 = vunpack.c.l.b16 %v834
        %v4345 = vunpack.c.h.b16 %v834
        %v4346 = vunpack.c.l.b16 %v835
        %v4347 = vunpack.c.h.b16 %v835
        %v4348 = vunpack.c.l.b16 %v836
        %v4349 = vunpack.c.h.b16 %v836
        %v4350 = vunpack.c.l.b16 %v837
        %v4351 = vunpack.c.h.b16 %v837
        %v4352 = vunpack.c.l.b16 %v838
        %v4353 = vunpack.c.h.b16 %v838
        %v4354 = vunpack.c.l.b16 %v839
        %v4355 = vunpack.c.h.b16 %v839
        %v4356 = vunpack.c.l.b16 %v840
        %v4357 = vunpack.c.h.b16 %v840
        %v4358 = vunpack.c.l.b16 %v841
        %v4359 = vunpack.c.h.b16 %v841
        %v4360 = vunpack.c.l.b16 %v842
        %v4361 = vunpack.c.h.b16 %v842
        %v4362 = vunpack.c.l.b16 %v843
        %v4363 = vunpack.c.h.b16 %v843
        %v4364 = vunpack.c.l.b16 %v844
        %v4365 = vunpack.c.h.b16 %v844
        %v4366 = vunpack.c.l.b16 %v845
        %v4367 = vunpack.c.h.b16 %v845
        %v4368 = vunpack.c.l.b16 %v846
        %v4369 = vunpack.c.h.b16 %v846
        %v4370 = vunpack.c.l.b16 %v847
        %v4371 = vunpack.c.h.b16 %v847
        %v4372 = vunpack.c.l.b16 %v848
        %v4373 = vunpack.c.h.b16 %v848
        %v4374 = vunpack.c.l.b16 %v849
        %v4375 = vunpack.c.h.b16 %v849
        %v4376 = vunpack.c.l.b16 %v850
        %v4377 = vunpack.c.h.b16 %v850
        %v4378 = vunpack.c.l.b16 %v851
        %v4379 = vunpack.c.h.b16 %v851
        %v4380 = vunpack.c.l.b16 %v852
        %v4381 = vunpack.c.h.b16 %v852
        %v4382 = vunpack.c.l.b16 %v853
        %v4383 = vunpack.c.h.b16 %v853
        %v4384 = vunpack.c.l.b16 %v854
        %v4385 = vunpack.c.h.b16 %v854
        %v4386 = vunpack.c.l.b16 %v855
        %v4387 = vunpack.c.h.b16 %v855
        %v4388 = vunpack.c.l.b16 %v856
        %v4389 = vunpack.c.h.b16 %v856
        %v4390 = vunpack.c.l.b16 %v857
        %v4391 = vunpack.c.h.b16 %v857
        %v4392 = vunpack.c.l.b16 %v858
        %v4393 = vunpack.c.h.b16 %v858
        %v4394 = vunpack.c.l.b16 %v859
        %v4395 = vunpack.c.h.b16 %v859
        %v4396 = vunpack.c.l.b16 %v860
        %v4397 = vunpack.c.h.b16 %v860
        %v4398 = vunpack.c.l.b16 %v861
        %v4399 = vunpack.c.h.b16 %v861
        %v4400 = vunpack.c.l.b16 %v862
        %v4401 = vunpack.c.h.b16 %v862
        %v4402 = vunpack.c.l.b16 %v863
        %v4403 = vunpack.c.h.b16 %v863
        %v4404 = vunpack.c.l.b16 %v864
        %v4405 = vunpack.c.h.b16 %v864
        %v4406 = vunpack.c.l.b16 %v865
        %v4407 = vunpack.c.h.b16 %v865
        %v4408 = vunpack.c.l.b16 %v866
        %v4409 = vunpack.c.h.b16 %v866
        %v4410 = vunpack.c.l.b16 %v867
        %v4411 = vunpack.c.h.b16 %v867
        %v4412 = vunpack.c.l.b16 %v868
        %v4413 = vunpack.c.h.b16 %v868
        %v4414 = vunpack.c.l.b16 %v869
        %v4415 = vunpack.c.h.b16 %v869
        %v4416 = vunpack.c.l.b16 %v870
        %v4417 = vunpack.c.h.b16 %v870
        %v4418 = vunpack.c.l.b16 %v871
        %v4419 = vunpack.c.h.b16 %v871
        %v4420 = vunpack.c.l.b16 %v872
        %v4421 = vunpack.c.h.b16 %v872
        %v4422 = vunpack.c.l.b16 %v873
        %v4423 = vunpack.c.h.b16 %v873
        %v4424 = vunpack.c.l.b16 %v874
        %v4425 = vunpack.c.h.b16 %v874
        %v4426 = vunpack.c.l.b16 %v875
        %v4427 = vunpack.c.h.b16 %v875
        %v4428 = vunpack.c.l.b16 %v876
        %v4429 = vunpack.c.h.b16 %v876
        %v4430 = vunpack.c.l.b16 %v877
        %v4431 = vunpack.c.h.b16 %v877
        %v4432 = vunpack.c.l.b16 %v878
        %v4433 = vunpack.c.h.b16 %v878
        %v4434 = vunpack.c.l.b16 %v879
        %v4435 = vunpack.c.h.b16 %v879
        %v4436 = vunpack.c.l.b16 %v880
        %v4437 = vunpack.c.h.b16 %v880
        %v4438 = vunpack.c.l.b16 %v881
        %v4439 = vunpack.c.h.b16 %v881
        %v4440 = vunpack.c.l.b16 %v882
        %v4441 = vunpack.c.h.b16 %v882
        %v4442 = vunpack.c.l.b16 %v883
        %v4443 = vunpack.c.h.b16 %v883
        %v4444 = vunpack.c.l.b16 %v884
        %v4445 = vunpack.c.h.b16 %v884
        %v4446 = vunpack.c.l.b16 %v885
        %v4447 = vunpack.c.h.b16 %v885
        %v4448 = vunpack.c.l.b16 %v886
        %v4449 = vunpack.c.h.b16 %v886
        %v4450 = vunpack.c.l.b16 %v887
        %v4451 = vunpack.c.h.b16 %v887
        %v4452 = vunpack.c.l.b16 %v888
        %v4453 = vunpack.c.h.b16 %v888
        %v4454 = vunpack.c.l.b16 %v889
        %v4455 = vunpack.c.h.b16 %v889
        %v4456 = vunpack.c.l.b16 %v890
        %v4457 = vunpack.c.h.b16 %v890
        %v4458 = vunpack.c.l.b16 %v891
        %v4459 = vunpack.c.h.b16 %v891
        %v4460 = vunpack.c.l.b16 %v892
        %v4461 = vunpack.c.h.b16 %v892
        %v4462 = vunpack.c.l.b16 %v893
        %v4463 = vunpack.c.h.b16 %v893
        %v4464 = vunpack.c.l.b16 %v894
        %v4465 = vunpack.c.h.b16 %v894
        %v4466 = vunpack.c.l.b16 %v895
        %v4467 = vunpack.c.h.b16 %v895
        %v4468 = vunpack.c.l.b16 %v896
        %v4469 = vunpack.c.h.b16 %v896
        %v4470 = vunpack.c.l.b16 %v897
        %v4471 = vunpack.c.h.b16 %v897
        %v4472 = vunpack.c.l.b16 %v898
        %v4473 = vunpack.c.h.b16 %v898
        %v4474 = vunpack.c.l.b16 %v899
        %v4475 = vunpack.c.h.b16 %v899
        %v4476 = vunpack.c.l.b16 %v900
        %v4477 = vunpack.c.h.b16 %v900
        %v4478 = vunpack.c.l.b16 %v901
        %v4479 = vunpack.c.h.b16 %v901
        %v4480 = vunpack.c.l.b16 %v902
        %v4481 = vunpack.c.h.b16 %v902
        %v4482 = vunpack.c.l.b16 %v903
        %v4483 = vunpack.c.h.b16 %v903
        %v4484 = vunpack.c.l.b16 %v904
        %v4485 = vunpack.c.h.b16 %v904
        %v4486 = vunpack.c.l.b16 %v905
        %v4487 = vunpack.c.h.b16 %v905
        %v4488 = vunpack.c.l.b16 %v906
        %v4489 = vunpack.c.h.b16 %v906
        %v4490 = vunpack.c.l.b16 %v907
        %v4491 = vunpack.c.h.b16 %v907
        %v4492 = vunpack.c.l.b16 %v908
        %v4493 = vunpack.c.h.b16 %v908
        %v4494 = vunpack.c.l.b16 %v909
        %v4495 = vunpack.c.h.b16 %v909
        %v4496 = vunpack.c.l.b16 %v910
        %v4497 = vunpack.c.h.b16 %v910
        %v4498 = vunpack.c.l.b16 %v911
        %v4499 = vunpack.c.h.b16 %v911
        %v4500 = vunpack.c.l.b16 %v912
        %v4501 = vunpack.c.h.b16 %v912
        %v4502 = vunpack.c.l.b16 %v913
        %v4503 = vunpack.c.h.b16 %v913
        %v4504 = vunpack.c.l.b16 %v914
        %v4505 = vunpack.c.h.b16 %v914
        %v4506 = vunpack.c.l.b16 %v915
        %v4507 = vunpack.c.h.b16 %v915
        %v4508 = vunpack.c.l.b16 %v916
        %v4509 = vunpack.c.h.b16 %v916
        %v4510 = vunpack.c.l.b16 %v917
        %v4511 = vunpack.c.h.b16 %v917
        %v4512 = vunpack.c.l.b16 %v918
        %v4513 = vunpack.c.h.b16 %v918
        %v4514 = vunpack.c.l.b16 %v919
        %v4515 = vunpack.c.h.b16 %v919
        %v4516 = vunpack.c.l.b16 %v920
        %v4517 = vunpack.c.h.b16 %v920
        %v4518 = vunpack.c.l.b16 %v921
        %v4519 = vunpack.c.h.b16 %v921
        %v4520 = vunpack.c.l.b16 %v922
        %v4521 = vunpack.c.h.b16 %v922
        %v4522 = vunpack.c.l.b16 %v923
        %v4523 = vunpack.c.h.b16 %v923
        %v4524 = vunpack.c.l.b16 %v924
        %v4525 = vunpack.c.h.b16 %v924
        %v4526 = vunpack.c.l.b16 %v925
        %v4527 = vunpack.c.h.b16 %v925
        %v4528 = vunpack.c.l.b16 %v926
        %v4529 = vunpack.c.h.b16 %v926
        %v4530 = vunpack.c.l.b16 %v927
        %v4531 = vunpack.c.h.b16 %v927
        %v4532 = vunpack.c.l.b16 %v928
        %v4533 = vunpack.c.h.b16 %v928
        %v4534 = vunpack.c.l.b16 %v929
        %v4535 = vunpack.c.h.b16 %v929
        %v4536 = vunpack.c.l.b16 %v930
        %v4537 = vunpack.c.h.b16 %v930
        %v4538 = vunpack.c.l.b16 %v931
        %v4539 = vunpack.c.h.b16 %v931
        %v4540 = vunpack.c.l.b16 %v932
        %v4541 = vunpack.c.h.b16 %v932
        %v4542 = vunpack.c.l.b16 %v933
        %v4543 = vunpack.c.h.b16 %v933
        %v4544 = vunpack.c.l.b16 %v934
        %v4545 = vunpack.c.h.b16 %v934
        %v4546 = vunpack.c.l.b16 %v935
        %v4547 = vunpack.c.h.b16 %v935
        %v4548 = vunpack.c.l.b16 %v936
        %v4549 = vunpack.c.h.b16 %v936
        %v4550 = vunpack.c.l.b16 %v937
        %v4551 = vunpack.c.h.b16 %v937
        %v4552 = vunpack.c.l.b16 %v938
        %v4553 = vunpack.c.h.b16 %v938
        %v4554 = vunpack.c.l.b16 %v939
        %v4555 = vunpack.c.h.b16 %v939
        %v4556 = vunpack.c.l.b16 %v940
        %v4557 = vunpack.c.h.b16 %v940
        %v4558 = vunpack.c.l.b16 %v941
        %v4559 = vunpack.c.h.b16 %v941
        %v4560 = vunpack.c.l.b16 %v942
        %v4561 = vunpack.c.h.b16 %v942
        %v4562 = vunpack.c.l.b16 %v943
        %v4563 = vunpack.c.h.b16 %v943
        %v4564 = vunpack.c.l.b16 %v944
        %v4565 = vunpack.c.h.b16 %v944
        %v4566 = vunpack.c.l.b16 %v945
        %v4567 = vunpack.c.h.b16 %v945
        %v4568 = vunpack.c.l.b16 %v946
        %v4569 = vunpack.c.h.b16 %v946
        %v4570 = vunpack.c.l.b16 %v947
        %v4571 = vunpack.c.h.b16 %v947
        %v4572 = vunpack.c.l.b16 %v948
        %v4573 = vunpack.c.h.b16 %v948
        %v4574 = vunpack.c.l.b16 %v949
        %v4575 = vunpack.c.h.b16 %v949
        %v4576 = vunpack.c.l.b16 %v950
        %v4577 = vunpack.c.h.b16 %v950
        %v4578 = vunpack.c.l.b16 %v951
        %v4579 = vunpack.c.h.b16 %v951
        %v4580 = vunpack.c.l.b16 %v952
        %v4581 = vunpack.c.h.b16 %v952
        %v4582 = vunpack.c.l.b16 %v953
        %v4583 = vunpack.c.h.b16 %v953
        %v4584 = vunpack.c.l.b16 %v954
        %v4585 = vunpack.c.h.b16 %v954
        %v4586 = vunpack.c.l.b16 %v955
        %v4587 = vunpack.c.h.b16 %v955
        %v4588 = vunpack.c.l.b16 %v956
        %v4589 = vunpack.c.h.b16 %v956
        %v4590 = vunpack.c.l.b16 %v957
        %v4591 = vunpack.c.h.b16 %v957
        %v4592 = vunpack.c.l.b16 %v958
        %v4593 = vunpack.c.h.b16 %v958
        %v4594 = vunpack.c.l.b16 %v959
        %v4595 = vunpack.c.h.b16 %v959
        %v4596 = vunpack.c.l.b16 %v960
        %v4597 = vunpack.c.h.b16 %v960
        %v4598 = vunpack.c.l.b16 %v961
        %v4599 = vunpack.c.h.b16 %v961
        %v4600 = vunpack.c.l.b16 %v962
        %v4601 = vunpack.c.h.b16 %v962
        %v4602 = vunpack.c.l.b16 %v963
        %v4603 = vunpack.c.h.b16 %v963
        %v4604 = vunpack.c.l.b16 %v964
        %v4605 = vunpack.c.h.b16 %v964
        %v4606 = vunpack.c.l.b16 %v965
        %v4607 = vunpack.c.h.b16 %v965
        %v4608 = vunpack.c.l.b16 %v966
        %v4609 = vunpack.c.h.b16 %v966
        %v4610 = vunpack.c.l.b16 %v967
        %v4611 = vunpack.c.h.b16 %v967
        %v4612 = vunpack.c.l.b16 %v968
        %v4613 = vunpack.c.h.b16 %v968
        %v4614 = vunpack.c.l.b16 %v969
        %v4615 = vunpack.c.h.b16 %v969
        %v4616 = vunpack.c.l.b16 %v970
        %v4617 = vunpack.c.h.b16 %v970
        %v4618 = vunpack.c.l.b16 %v971
        %v4619 = vunpack.c.h.b16 %v971
        %v4620 = vunpack.c.l.b16 %v972
        %v4621 = vunpack.c.h.b16 %v972
        %v4622 = vunpack.c.l.b16 %v973
        %v4623 = vunpack.c.h.b16 %v973
        %v4624 = vunpack.c.l.b16 %v974
        %v4625 = vunpack.c.h.b16 %v974
        %v4626 = vunpack.c.l.b16 %v975
        %v4627 = vunpack.c.h.b16 %v975
        %v4628 = vunpack.c.l.b16 %v976
        %v4629 = vunpack.c.h.b16 %v976
        %v4630 = vunpack.c.l.b16 %v977
        %v4631 = vunpack.c.h.b16 %v977
        %v4632 = vunpack.c.l.b16 %v978
        %v4633 = vunpack.c.h.b16 %v978
        %v4634 = vunpack.c.l.b16 %v979
        %v4635 = vunpack.c.h.b16 %v979
        %v4636 = vunpack.c.l.b16 %v980
        %v4637 = vunpack.c.h.b16 %v980
        %v4638 = vunpack.c.l.b16 %v981
        %v4639 = vunpack.c.h.b16 %v981
        %v4640 = vunpack.c.l.b16 %v982
        %v4641 = vunpack.c.h.b16 %v982
        %v4642 = vunpack.c.l.b16 %v983
        %v4643 = vunpack.c.h.b16 %v983
        %v4644 = vunpack.c.l.b16 %v984
        %v4645 = vunpack.c.h.b16 %v984
        %v4646 = vunpack.c.l.b16 %v985
        %v4647 = vunpack.c.h.b16 %v985
        %v4648 = vunpack.c.l.b16 %v986
        %v4649 = vunpack.c.h.b16 %v986
        %v4650 = vunpack.c.l.b16 %v987
        %v4651 = vunpack.c.h.b16 %v987
        %v4652 = vunpack.c.l.b16 %v988
        %v4653 = vunpack.c.h.b16 %v988
        %v4654 = vunpack.c.l.b16 %v989
        %v4655 = vunpack.c.h.b16 %v989
        %v4656 = vunpack.c.l.b16 %v990
        %v4657 = vunpack.c.h.b16 %v990
        %v4658 = vunpack.c.l.b16 %v991
        %v4659 = vunpack.c.h.b16 %v991
        %v4660 = vunpack.c.l.b16 %v992
        %v4661 = vunpack.c.h.b16 %v992
        %v4662 = vunpack.c.l.b16 %v993
        %v4663 = vunpack.c.h.b16 %v993
        %v4664 = vunpack.c.l.b16 %v994
        %v4665 = vunpack.c.h.b16 %v994
        %v4666 = vunpack.c.l.b16 %v995
        %v4667 = vunpack.c.h.b16 %v995
        %v4668 = vunpack.c.l.b16 %v996
        %v4669 = vunpack.c.h.b16 %v996
        %v4670 = vunpack.c.l.b16 %v997
        %v4671 = vunpack.c.h.b16 %v997
        %v4672 = vunpack.c.l.b16 %v998
        %v4673 = vunpack.c.h.b16 %v998
        %v4674 = vunpack.c.l.b16 %v999
        %v4675 = vunpack.c.h.b16 %v999
        %v4676 = vunpack.c.l.b16 %v1000
        %v4677 = vunpack.c.h.b16 %v1000
        %v4678 = vunpack.c.l.b16 %v1001
        %v4679 = vunpack.c.h.b16 %v1001
        %v4680 = vunpack.c.l.b16 %v1002
        %v4681 = vunpack.c.h.b16 %v1002
        %v4682 = vunpack.c.l.b16 %v1003
        %v4683 = vunpack.c.h.b16 %v1003
        %v4684 = vunpack.c.l.b16 %v1004
        %v4685 = vunpack.c.h.b16 %v1004
        %v4686 = vunpack.c.l.b16 %v1005
        %v4687 = vunpack.c.h.b16 %v1005
        %v4688 = vunpack.c.l.b16 %v1006
        %v4689 = vunpack.c.h.b16 %v1006
        %v4690 = vunpack.c.l.b16 %v1007
        %v4691 = vunpack.c.h.b16 %v1007
        %v4692 = vunpack.c.l.b16 %v1008
        %v4693 = vunpack.c.h.b16 %v1008
        %v4694 = vunpack.c.l.b16 %v1009
        %v4695 = vunpack.c.h.b16 %v1009
        %v4696 = vunpack.c.l.b16 %v1010
        %v4697 = vunpack.c.h.b16 %v1010
        %v4698 = vunpack.c.l.b16 %v1011
        %v4699 = vunpack.c.h.b16 %v1011
        %v4700 = vunpack.c.l.b16 %v1012
        %v4701 = vunpack.c.h.b16 %v1012
        %v4702 = vunpack.c.l.b16 %v1013
        %v4703 = vunpack.c.h.b16 %v1013
        %v4704 = vunpack.c.l.b16 %v1014
        %v4705 = vunpack.c.h.b16 %v1014
        %v4706 = vunpack.c.l.b16 %v1015
        %v4707 = vunpack.c.h.b16 %v1015
        %v4708 = vunpack.c.l.b16 %v1016
        %v4709 = vunpack.c.h.b16 %v1016
        %v4710 = vunpack.c.l.b16 %v1017
        %v4711 = vunpack.c.h.b16 %v1017
        %v4712 = vunpack.c.l.b16 %v1018
        %v4713 = vunpack.c.h.b16 %v1018
        %v4714 = vunpack.c.l.b16 %v1019
        %v4715 = vunpack.c.h.b16 %v1019
        %v4716 = vunpack.c.l.b16 %v1020
        %v4717 = vunpack.c.h.b16 %v1020
        %v4718 = vunpack.c.l.b16 %v1021
        %v4719 = vunpack.c.h.b16 %v1021
        %v4720 = vunpack.c.l.b16 %v1022
        %v4721 = vunpack.c.h.b16 %v1022
        %v4722 = vunpack.c.l.b16 %v1023
        %v4723 = vunpack.c.h.b16 %v1023
        %v4724 = vunpack.c.l.b16 %v1024
        %v4725 = vunpack.c.h.b16 %v1024
        %v4726 = vunpack.c.l.b16 %v1025
        %v4727 = vunpack.c.h.b16 %v1025
        %v4728 = vunpack.c.l.b16 %v1026
        %v4729 = vunpack.c.h.b16 %v1026
        %v4730 = vunpack.c.l.b16 %v1027
        %v4731 = vunpack.c.h.b16 %v1027
        %v4732 = vunpack.c.l.b16 %v1028
        %v4733 = vunpack.c.h.b16 %v1028
        %v4734 = vunpack.c.l.b16 %v1029
        %v4735 = vunpack.c.h.b16 %v1029
        %v4736 = vunpack.c.l.b16 %v1030
        %v4737 = vunpack.c.h.b16 %v1030
        %v4738 = vunpack.c.l.b16 %v1031
        %v4739 = vunpack.c.h.b16 %v1031
        %v4740 = vunpack.c.l.b16 %v1032
        %v4741 = vunpack.c.h.b16 %v1032
        %v4742 = vunpack.c.l.b16 %v1033
        %v4743 = vunpack.c.h.b16 %v1033
        %v4744 = vunpack.c.l.b16 %v1034
        %v4745 = vunpack.c.h.b16 %v1034
        %v4746 = vunpack.c.l.b16 %v1035
        %v4747 = vunpack.c.h.b16 %v1035
        %v4748 = vunpack.c.l.b16 %v1036
        %v4749 = vunpack.c.h.b16 %v1036
        %v4750 = vunpack.c.l.b16 %v1037
        %v4751 = vunpack.c.h.b16 %v1037
        %v4752 = vunpack.c.l.b16 %v1038
        %v4753 = vunpack.c.h.b16 %v1038
        %v4754 = vunpack.c.l.b16 %v1039
        %v4755 = vunpack.c.h.b16 %v1039
        %v4756 = vunpack.c.l.b16 %v1040
        %v4757 = vunpack.c.h.b16 %v1040
        %v4758 = vunpack.c.l.b16 %v1041
        %v4759 = vunpack.c.h.b16 %v1041
        %v4760 = vunpack.c.l.b16 %v1042
        %v4761 = vunpack.c.h.b16 %v1042
        %v4762 = vunpack.c.l.b16 %v1043
        %v4763 = vunpack.c.h.b16 %v1043
        %v4764 = vunpack.c.l.b16 %v1044
        %v4765 = vunpack.c.h.b16 %v1044
        %v4766 = vunpack.c.l.b16 %v1045
        %v4767 = vunpack.c.h.b16 %v1045
        %v4768 = vunpack.c.l.b16 %v1046
        %v4769 = vunpack.c.h.b16 %v1046
        %v4770 = vunpack.c.l.b16 %v1047
        %v4771 = vunpack.c.h.b16 %v1047
        %v4772 = vunpack.c.l.b16 %v1048
        %v4773 = vunpack.c.h.b16 %v1048
        %v4774 = vunpack.c.l.b16 %v1049
        %v4775 = vunpack.c.h.b16 %v1049
        %v4776 = vunpack.c.l.b16 %v1050
        %v4777 = vunpack.c.h.b16 %v1050
        %v4778 = vunpack.c.l.b16 %v1051
        %v4779 = vunpack.c.h.b16 %v1051
        %v4780 = vunpack.c.l.b16 %v1052
        %v4781 = vunpack.c.h.b16 %v1052
        %v4782 = vunpack.c.l.b16 %v1053
        %v4783 = vunpack.c.h.b16 %v1053
        %v4784 = vunpack.c.l.b16 %v1054
        %v4785 = vunpack.c.h.b16 %v1054
        %v4786 = vunpack.c.l.b16 %v1055
        %v4787 = vunpack.c.h.b16 %v1055
        %v4788 = vunpack.c.l.b16 %v1056
        %v4789 = vunpack.c.h.b16 %v1056
        %v4790 = vunpack.c.l.b16 %v1057
        %v4791 = vunpack.c.h.b16 %v1057
        %v4792 = vunpack.c.l.b16 %v1058
        %v4793 = vunpack.c.h.b16 %v1058
        %v4794 = vunpack.c.l.b16 %v1059
        %v4795 = vunpack.c.h.b16 %v1059
        %v4796 = vunpack.c.l.b16 %v1060
        %v4797 = vunpack.c.h.b16 %v1060
        %v4798 = vunpack.c.l.b16 %v1061
        %v4799 = vunpack.c.h.b16 %v1061
        %v4800 = vunpack.c.l.b16 %v1062
        %v4801 = vunpack.c.h.b16 %v1062
        %v4802 = vunpack.c.l.b16 %v1063
        %v4803 = vunpack.c.h.b16 %v1063
        %v4804 = vunpack.c.l.b16 %v1064
        %v4805 = vunpack.c.h.b16 %v1064
        %v4806 = vunpack.c.l.b16 %v1065
        %v4807 = vunpack.c.h.b16 %v1065
        %v4808 = vunpack.c.l.b16 %v1066
        %v4809 = vunpack.c.h.b16 %v1066
        %v4810 = vunpack.c.l.b16 %v1067
        %v4811 = vunpack.c.h.b16 %v1067
        %v4812 = vunpack.c.l.b16 %v1068
        %v4813 = vunpack.c.h.b16 %v1068
        %v4814 = vunpack.c.l.b16 %v1069
        %v4815 = vunpack.c.h.b16 %v1069
        %v4816 = vunpack.c.l.b16 %v1070
        %v4817 = vunpack.c.h.b16 %v1070
        %v4818 = vunpack.c.l.b16 %v1071
        %v4819 = vunpack.c.h.b16 %v1071
        %v4820 = vunpack.c.l.b16 %v1072
        %v4821 = vunpack.c.h.b16 %v1072
        %v4822 = vunpack.c.l.b16 %v1073
        %v4823 = vunpack.c.h.b16 %v1073
        %v4824 = vunpack.c.l.b16 %v1074
        %v4825 = vunpack.c.h.b16 %v1074
        %v4826 = vunpack.c.l.b16 %v1075
        %v4827 = vunpack.c.h.b16 %v1075
        %v4828 = vunpack.c.l.b16 %v1076
        %v4829 = vunpack.c.h.b16 %v1076
        %v4830 = vunpack.c.l.b16 %v1077
        %v4831 = vunpack.c.h.b16 %v1077
        %v4832 = vunpack.c.l.b16 %v1078
        %v4833 = vunpack.c.h.b16 %v1078
        %v4834 = vunpack.c.l.b16 %v1079
        %v4835 = vunpack.c.h.b16 %v1079
        %v4836 = vunpack.c.l.b16 %v1080
        %v4837 = vunpack.c.h.b16 %v1080
        %v4838 = vunpack.c.l.b16 %v1081
        %v4839 = vunpack.c.h.b16 %v1081
        %v4840 = vunpack.c.l.b16 %v1082
        %v4841 = vunpack.c.h.b16 %v1082
        %v4842 = vunpack.c.l.b16 %v1083
        %v4843 = vunpack.c.h.b16 %v1083
        %v4844 = vunpack.c.l.b16 %v1084
        %v4845 = vunpack.c.h.b16 %v1084
        %v4846 = vunpack.c.l.b16 %v1085
        %v4847 = vunpack.c.h.b16 %v1085
        %v4848 = vunpack.c.l.b16 %v1086
        %v4849 = vunpack.c.h.b16 %v1086
        %v4850 = vunpack.c.l.b16 %v1087
        %v4851 = vunpack.c.h.b16 %v1087
        %v4852 = vunpack.c.l.b16 %v1088
        %v4853 = vunpack.c.h.b16 %v1088
        %v4854 = vunpack.c.l.b16 %v1089
        %v4855 = vunpack.c.h.b16 %v1089
        %v4856 = vunpack.c.l.b16 %v1090
        %v4857 = vunpack.c.h.b16 %v1090
        %v4858 = vunpack.c.l.b16 %v1091
        %v4859 = vunpack.c.h.b16 %v1091
        %v4860 = vunpack.c.l.b16 %v1092
        %v4861 = vunpack.c.h.b16 %v1092
        %v4862 = vunpack.c.l.b16 %v1093
        %v4863 = vunpack.c.h.b16 %v1093
        %v4864 = vunpack.c.l.b16 %v1094
        %v4865 = vunpack.c.h.b16 %v1094
        %v4866 = vunpack.c.l.b16 %v1095
        %v4867 = vunpack.c.h.b16 %v1095
        %v4868 = vunpack.c.l.b16 %v1096
        %v4869 = vunpack.c.h.b16 %v1096
        %v4870 = vunpack.c.l.b16 %v1097
        %v4871 = vunpack.c.h.b16 %v1097
        %v4872 = vunpack.c.l.b16 %v1098
        %v4873 = vunpack.c.h.b16 %v1098
        %v4874 = vunpack.c.l.b16 %v1099
        %v4875 = vunpack.c.h.b16 %v1099
        %v4876 = vunpack.c.l.b16 %v1100
        %v4877 = vunpack.c.h.b16 %v1100
        %v4878 = vunpack.c.l.b16 %v1101
        %v4879 = vunpack.c.h.b16 %v1101
        %v4880 = vunpack.c.l.b16 %v1102
        %v4881 = vunpack.c.h.b16 %v1102
        %v4882 = vunpack.c.l.b16 %v1103
        %v4883 = vunpack.c.h.b16 %v1103
        %v4884 = vunpack.c.l.b16 %v1104
        %v4885 = vunpack.c.h.b16 %v1104
        %v4886 = vunpack.c.l.b16 %v1105
        %v4887 = vunpack.c.h.b16 %v1105
        %v4888 = vunpack.c.l.b16 %v1106
        %v4889 = vunpack.c.h.b16 %v1106
        %v4890 = vunpack.c.l.b16 %v1107
        %v4891 = vunpack.c.h.b16 %v1107
        %v4892 = vunpack.c.l.b16 %v1108
        %v4893 = vunpack.c.h.b16 %v1108
        %v4894 = vunpack.c.l.b16 %v1109
        %v4895 = vunpack.c.h.b16 %v1109
        %v4896 = vunpack.c.l.b16 %v1110
        %v4897 = vunpack.c.h.b16 %v1110
        %v4898 = vunpack.c.l.b16 %v1111
        %v4899 = vunpack.c.h.b16 %v1111
        %v4900 = vunpack.c.l.b16 %v1112
        %v4901 = vunpack.c.h.b16 %v1112
        %v4902 = vunpack.c.l.b16 %v1113
        %v4903 = vunpack.c.h.b16 %v1113
        %v4904 = vunpack.c.l.b16 %v1114
        %v4905 = vunpack.c.h.b16 %v1114
        %v4906 = vunpack.c.l.b16 %v1115
        %v4907 = vunpack.c.h.b16 %v1115
        %v4908 = vunpack.c.l.b16 %v1116
        %v4909 = vunpack.c.h.b16 %v1116
        %v4910 = vunpack.c.l.b16 %v1117
        %v4911 = vunpack.c.h.b16 %v1117
        %v4912 = vunpack.c.l.b16 %v1118
        %v4913 = vunpack.c.h.b16 %v1118
        %v4914 = vunpack.c.l.b16 %v1119
        %v4915 = vunpack.c.h.b16 %v1119
        %v4916 = vunpack.c.l.b16 %v1120
        %v4917 = vunpack.c.h.b16 %v1120
        %v4918 = vunpack.c.l.b16 %v1121
        %v4919 = vunpack.c.h.b16 %v1121
        %v4920 = vunpack.c.l.b16 %v1122
        %v4921 = vunpack.c.h.b16 %v1122
        %v4922 = vunpack.c.l.b16 %v1123
        %v4923 = vunpack.c.h.b16 %v1123
        %v4924 = vunpack.c.l.b16 %v1124
        %v4925 = vunpack.c.h.b16 %v1124
        %v4926 = vunpack.c.l.b16 %v1125
        %v4927 = vunpack.c.h.b16 %v1125
        %v4928 = vunpack.c.l.b16 %v1126
        %v4929 = vunpack.c.h.b16 %v1126
        %v4930 = vunpack.c.l.b16 %v1127
        %v4931 = vunpack.c.h.b16 %v1127
        %v4932 = vunpack.c.l.b16 %v1128
        %v4933 = vunpack.c.h.b16 %v1128
        %v4934 = vunpack.c.l.b16 %v1129
        %v4935 = vunpack.c.h.b16 %v1129
        %v4936 = vunpack.c.l.b16 %v1130
        %v4937 = vunpack.c.h.b16 %v1130
        %v4938 = vunpack.c.l.b16 %v1131
        %v4939 = vunpack.c.h.b16 %v1131
        %v4940 = vunpack.c.l.b16 %v1132
        %v4941 = vunpack.c.h.b16 %v1132
        %v4942 = vunpack.c.l.b16 %v1133
        %v4943 = vunpack.c.h.b16 %v1133
        %v4944 = vunpack.c.l.b16 %v1134
        %v4945 = vunpack.c.h.b16 %v1134
        %v4946 = vunpack.c.l.b16 %v1135
        %v4947 = vunpack.c.h.b16 %v1135
        %v4948 = vunpack.c.l.b16 %v1136
        %v4949 = vunpack.c.h.b16 %v1136
        %v4950 = vunpack.c.l.b16 %v1137
        %v4951 = vunpack.c.h.b16 %v1137
        %v4952 = vunpack.c.l.b16 %v1138
        %v4953 = vunpack.c.h.b16 %v1138
        %v4954 = vunpack.c.l.b16 %v1139
        %v4955 = vunpack.c.h.b16 %v1139
        %v4956 = vunpack.c.l.b16 %v1140
        %v4957 = vunpack.c.h.b16 %v1140
        %v4958 = vunpack.c.l.b16 %v1141
        %v4959 = vunpack.c.h.b16 %v1141
        %v4960 = vunpack.c.l.b16 %v1142
        %v4961 = vunpack.c.h.b16 %v1142
        %v4962 = vunpack.c.l.b16 %v1143
        %v4963 = vunpack.c.h.b16 %v1143
        %v4964 = vunpack.c.l.b16 %v1144
        %v4965 = vunpack.c.h.b16 %v1144
        %v4966 = vunpack.c.l.b16 %v1145
        %v4967 = vunpack.c.h.b16 %v1145
        %v4968 = vunpack.c.l.b16 %v1146
        %v4969 = vunpack.c.h.b16 %v1146
        %v4970 = vunpack.c.l.b16 %v1147
        %v4971 = vunpack.c.h.b16 %v1147
        %v4972 = vunpack.c.l.b16 %v1148
        %v4973 = vunpack.c.h.b16 %v1148
        %v4974 = vunpack.c.l.b16 %v1149
        %v4975 = vunpack.c.h.b16 %v1149
        %v4976 = vunpack.c.l.b16 %v1150
        %v4977 = vunpack.c.h.b16 %v1150
        %v4978 = vunpack.c.l.b16 %v1151
        %v4979 = vunpack.c.h.b16 %v1151
        %v4980 = vunpack.c.l.b16 %v1152
        %v4981 = vunpack.c.h.b16 %v1152
        %v4982 = vunpack.c.l.b16 %v1153
        %v4983 = vunpack.c.h.b16 %v1153
        %v4984 = vunpack.c.l.b16 %v1154
        %v4985 = vunpack.c.h.b16 %v1154
        %v4986 = vunpack.c.l.b16 %v1155
        %v4987 = vunpack.c.h.b16 %v1155
        %v4988 = vunpack.c.l.b16 %v1156
        %v4989 = vunpack.c.h.b16 %v1156
        %v4990 = vunpack.c.l.b16 %v1157
        %v4991 = vunpack.c.h.b16 %v1157
        %v4992 = vunpack.c.l.b16 %v1158
        %v4993 = vunpack.c.h.b16 %v1158
        %v4994 = vunpack.c.l.b16 %v1159
        %v4995 = vunpack.c.h.b16 %v1159
        %v4996 = vunpack.c.l.b16 %v1160
        %v4997 = vunpack.c.h.b16 %v1160
        %v4998 = vunpack.c.l.b16 %v1161
        %v4999 = vunpack.c.h.b16 %v1161
        %v5000 = vunpack.c.l.b16 %v1162
        %v5001 = vunpack.c.h.b16 %v1162
        %v5002 = vunpack.c.l.b16 %v1163
        %v5003 = vunpack.c.h.b16 %v1163
        %v5004 = vunpack.c.l.b16 %v1164
        %v5005 = vunpack.c.h.b16 %v1164
        %v5006 = vunpack.c.l.b16 %v1165
        %v5007 = vunpack.c.h.b16 %v1165
        %v5008 = vunpack.c.l.b16 %v1166
        %v5009 = vunpack.c.h.b16 %v1166
        %v5010 = vunpack.c.l.b16 %v1167
        %v5011 = vunpack.c.h.b16 %v1167
        %v5012 = vunpack.c.l.b16 %v1168
        %v5013 = vunpack.c.h.b16 %v1168
        %v5014 = vunpack.c.l.b16 %v1169
        %v5015 = vunpack.c.h.b16 %v1169
        %v5016 = vunpack.c.l.b16 %v1170
        %v5017 = vunpack.c.h.b16 %v1170
        %v5018 = vunpack.c.l.b16 %v1171
        %v5019 = vunpack.c.h.b16 %v1171
        %v5020 = vunpack.c.l.b16 %v1172
        %v5021 = vunpack.c.h.b16 %v1172
        %v5022 = vunpack.c.l.b16 %v1173
        %v5023 = vunpack.c.h.b16 %v1173
        %v5024 = vunpack.c.l.b16 %v1174
        %v5025 = vunpack.c.h.b16 %v1174
        %v5026 = vunpack.c.l.b16 %v1175
        %v5027 = vunpack.c.h.b16 %v1175
        %v5028 = vunpack.c.l.b16 %v1176
        %v5029 = vunpack.c.h.b16 %v1176
        %v5030 = vunpack.c.l.b16 %v1177
        %v5031 = vunpack.c.h.b16 %v1177
        %v5032 = vunpack.c.l.b16 %v1178
        %v5033 = vunpack.c.h.b16 %v1178
        %v5034 = vunpack.c.l.b16 %v1179
        %v5035 = vunpack.c.h.b16 %v1179
        %v5036 = vunpack.c.l.b16 %v1180
        %v5037 = vunpack.c.h.b16 %v1180
        %v5038 = vunpack.c.l.b16 %v1181
        %v5039 = vunpack.c.h.b16 %v1181
        %v5040 = vunpack.c.l.b16 %v1182
        %v5041 = vunpack.c.h.b16 %v1182
        %v5042 = vunpack.c.l.b16 %v1183
        %v5043 = vunpack.c.h.b16 %v1183
        %v5044 = vunpack.c.l.b16 %v1184
        %v5045 = vunpack.c.h.b16 %v1184
        %v5046 = vunpack.c.l.b16 %v1185
        %v5047 = vunpack.c.h.b16 %v1185
        %v5048 = vunpack.c.l.b16 %v1186
        %v5049 = vunpack.c.h.b16 %v1186
        %v5050 = vunpack.c.l.b16 %v1187
        %v5051 = vunpack.c.h.b16 %v1187
        %v5052 = vunpack.c.l.b16 %v1188
        %v5053 = vunpack.c.h.b16 %v1188
        %v5054 = vunpack.c.l.b16 %v1189
        %v5055 = vunpack.c.h.b16 %v1189
        %v5056 = vunpack.c.l.b16 %v1190
        %v5057 = vunpack.c.h.b16 %v1190
        %v5058 = vunpack.c.l.b16 %v1191
        %v5059 = vunpack.c.h.b16 %v1191
        %v5060 = vunpack.c.l.b16 %v1192
        %v5061 = vunpack.c.h.b16 %v1192
        %v5062 = vunpack.c.l.b16 %v1193
        %v5063 = vunpack.c.h.b16 %v1193
        %v5064 = vunpack.c.l.b16 %v1194
        %v5065 = vunpack.c.h.b16 %v1194
        %v5066 = vunpack.c.l.b16 %v1195
        %v5067 = vunpack.c.h.b16 %v1195
        %v5068 = vunpack.c.l.b16 %v1196
        %v5069 = vunpack.c.h.b16 %v1196
        %v5070 = vunpack.c.l.b16 %v1197
        %v5071 = vunpack.c.h.b16 %v1197
        %v5072 = vunpack.c.l.b16 %v1198
        %v5073 = vunpack.c.h.b16 %v1198
        %v5074 = vunpack.c.l.b16 %v1199
        %v5075 = vunpack.c.h.b16 %v1199
        %v5076 = vunpack.c.l.b16 %v1200
        %v5077 = vunpack.c.h.b16 %v1200
        %v5078 = vunpack.c.l.b16 %v1201
        %v5079 = vunpack.c.h.b16 %v1201
        %v5080 = vunpack.c.l.b16 %v1202
        %v5081 = vunpack.c.h.b16 %v1202
        %v5082 = vunpack.c.l.b16 %v1203
        %v5083 = vunpack.c.h.b16 %v1203
        %v5084 = vunpack.c.l.b16 %v1204
        %v5085 = vunpack.c.h.b16 %v1204
        %v5086 = vunpack.c.l.b16 %v1205
        %v5087 = vunpack.c.h.b16 %v1205
        %v5088 = vunpack.c.l.b16 %v1206
        %v5089 = vunpack.c.h.b16 %v1206
        %v5090 = vunpack.c.l.b16 %v1207
        %v5091 = vunpack.c.h.b16 %v1207
        %v5092 = vunpack.c.l.b16 %v1208
        %v5093 = vunpack.c.h.b16 %v1208
        %v5094 = vunpack.c.l.b16 %v1209
        %v5095 = vunpack.c.h.b16 %v1209
        %v5096 = vunpack.c.l.b16 %v1210
        %v5097 = vunpack.c.h.b16 %v1210
        %v5098 = vunpack.c.l.b16 %v1211
        %v5099 = vunpack.c.h.b16 %v1211
        %v5100 = vunpack.c.l.b16 %v1212
        %v5101 = vunpack.c.h.b16 %v1212
        %v5102 = vunpack.c.l.b16 %v1213
        %v5103 = vunpack.c.h.b16 %v1213
        %v5104 = vunpack.c.l.b16 %v1214
        %v5105 = vunpack.c.h.b16 %v1214
        %v5106 = vunpack.c.l.b16 %v1215
        %v5107 = vunpack.c.h.b16 %v1215
        %v5108 = vunpack.c.l.b16 %v1216
        %v5109 = vunpack.c.h.b16 %v1216
        %v5110 = vunpack.c.l.b16 %v1217
        %v5111 = vunpack.c.h.b16 %v1217
        %v5112 = vunpack.c.l.b16 %v1218
        %v5113 = vunpack.c.h.b16 %v1218
        %v5114 = vunpack.c.l.b16 %v1219
        %v5115 = vunpack.c.h.b16 %v1219
        %v5116 = vunpack.c.l.b16 %v1220
        %v5117 = vunpack.c.h.b16 %v1220
        %v5118 = vunpack.c.l.b16 %v1221
        %v5119 = vunpack.c.h.b16 %v1221
        %v5120 = vunpack.c.l.b16 %v1222
        %v5121 = vunpack.c.h.b16 %v1222
        %v5122 = vunpack.c.l.b16 %v1223
        %v5123 = vunpack.c.h.b16 %v1223
        %v5124 = vunpack.c.l.b16 %v1224
        %v5125 = vunpack.c.h.b16 %v1224
        %v5126 = vunpack.c.l.b16 %v1225
        %v5127 = vunpack.c.h.b16 %v1225
        %v5128 = vunpack.c.l.b16 %v1226
        %v5129 = vunpack.c.h.b16 %v1226
        %v5130 = vunpack.c.l.b16 %v1227
        %v5131 = vunpack.c.h.b16 %v1227
        %v5132 = vunpack.c.l.b16 %v1228
        %v5133 = vunpack.c.h.b16 %v1228
        %v5134 = vunpack.c.l.b16 %v1229
        %v5135 = vunpack.c.h.b16 %v1229
        %v5136 = vunpack.c.l.b16 %v1230
        %v5137 = vunpack.c.h.b16 %v1230
        %v5138 = vunpack.c.l.b16 %v1231
        %v5139 = vunpack.c.h.b16 %v1231
        %v5140 = vunpack.c.l.b16 %v1232
        %v5141 = vunpack.c.h.b16 %v1232
        %v5142 = vunpack.c.l.b16 %v1233
        %v5143 = vunpack.c.h.b16 %v1233
        %v5144 = vunpack.c.l.b16 %v1234
        %v5145 = vunpack.c.h.b16 %v1234
        %v5146 = vunpack.c.l.b16 %v1235
        %v5147 = vunpack.c.h.b16 %v1235
        %v5148 = vunpack.c.l.b16 %v1236
        %v5149 = vunpack.c.h.b16 %v1236
        %v5150 = vunpack.c.l.b16 %v1237
        %v5151 = vunpack.c.h.b16 %v1237
        %v5152 = vunpack.c.l.b16 %v1238
        %v5153 = vunpack.c.h.b16 %v1238
        %v5154 = vunpack.c.l.b16 %v1239
        %v5155 = vunpack.c.h.b16 %v1239
        %v5156 = vunpack.c.l.b16 %v1240
        %v5157 = vunpack.c.h.b16 %v1240
        %v5158 = vunpack.c.l.b16 %v1241
        %v5159 = vunpack.c.h.b16 %v1241
        %v5160 = vunpack.c.l.b16 %v1242
        %v5161 = vunpack.c.h.b16 %v1242
        %v5162 = vunpack.c.l.b16 %v1243
        %v5163 = vunpack.c.h.b16 %v1243
        %v5164 = vunpack.c.l.b16 %v1244
        %v5165 = vunpack.c.h.b16 %v1244
        %v5166 = vunpack.c.l.b16 %v1245
        %v5167 = vunpack.c.h.b16 %v1245
        %v5168 = vunpack.c.l.b16 %v1246
        %v5169 = vunpack.c.h.b16 %v1246
        %v5170 = vunpack.c.l.b16 %v1247
        %v5171 = vunpack.c.h.b16 %v1247
        %v5172 = vunpack.c.l.b16 %v1248
        %v5173 = vunpack.c.h.b16 %v1248
        %v5174 = vunpack.c.l.b16 %v1249
        %v5175 = vunpack.c.h.b16 %v1249
        %v5176 = vunpack.c.l.b16 %v1250
        %v5177 = vunpack.c.h.b16 %v1250
        %v5178 = vunpack.c.l.b16 %v1251
        %v5179 = vunpack.c.h.b16 %v1251
        %v5180 = vunpack.c.l.b16 %v1252
        %v5181 = vunpack.c.h.b16 %v1252
        %v5182 = vunpack.c.l.b16 %v1253
        %v5183 = vunpack.c.h.b16 %v1253
        %v5184 = vunpack.c.l.b16 %v1254
        %v5185 = vunpack.c.h.b16 %v1254
        %v5186 = vunpack.c.l.b16 %v1255
        %v5187 = vunpack.c.h.b16 %v1255
        %v5188 = vunpack.c.l.b16 %v1256
        %v5189 = vunpack.c.h.b16 %v1256
        %v5190 = vunpack.c.l.b16 %v1257
        %v5191 = vunpack.c.h.b16 %v1257
        %v5192 = vunpack.c.l.b16 %v1258
        %v5193 = vunpack.c.h.b16 %v1258
        %v5194 = vunpack.c.l.b16 %v1259
        %v5195 = vunpack.c.h.b16 %v1259
        %v5196 = vunpack.c.l.b16 %v1260
        %v5197 = vunpack.c.h.b16 %v1260
        %v5198 = vunpack.c.l.b16 %v1261
        %v5199 = vunpack.c.h.b16 %v1261
        %v5200 = vunpack.c.l.b16 %v1262
        %v5201 = vunpack.c.h.b16 %v1262
        %v5202 = vunpack.c.l.b16 %v1263
        %v5203 = vunpack.c.h.b16 %v1263
        %v5204 = vunpack.c.l.b16 %v1264
        %v5205 = vunpack.c.h.b16 %v1264
        %v5206 = vunpack.c.l.b16 %v1265
        %v5207 = vunpack.c.h.b16 %v1265
        %v5208 = vunpack.c.l.b16 %v1266
        %v5209 = vunpack.c.h.b16 %v1266
        %v5210 = vunpack.c.l.b16 %v1267
        %v5211 = vunpack.c.h.b16 %v1267
        %v5212 = vunpack.c.l.b16 %v1268
        %v5213 = vunpack.c.h.b16 %v1268
        %v5214 = vunpack.c.l.b16 %v1269
        %v5215 = vunpack.c.h.b16 %v1269
        %v5216 = vunpack.c.l.b16 %v1270
        %v5217 = vunpack.c.h.b16 %v1270
        %v5218 = vunpack.c.l.b16 %v1271
        %v5219 = vunpack.c.h.b16 %v1271
        %v5220 = vunpack.c.l.b16 %v1272
        %v5221 = vunpack.c.h.b16 %v1272
        %v5222 = vunpack.c.l.b16 %v1273
        %v5223 = vunpack.c.h.b16 %v1273
        %v5224 = vunpack.c.l.b16 %v1274
        %v5225 = vunpack.c.h.b16 %v1274
        %v5226 = vunpack.c.l.b16 %v1275
        %v5227 = vunpack.c.h.b16 %v1275
        %v5228 = vunpack.c.l.b16 %v1276
        %v5229 = vunpack.c.h.b16 %v1276
        %v5230 = vunpack.c.l.b16 %v1277
        %v5231 = vunpack.c.h.b16 %v1277
        %v5232 = vunpack.c.l.b16 %v1278
        %v5233 = vunpack.c.h.b16 %v1278
        %v5234 = vunpack.c.l.b16 %v1279
        %v5235 = vunpack.c.h.b16 %v1279
        %v5236 = vunpack.c.l.b16 %v1280
        %v5237 = vunpack.c.h.b16 %v1280
        %v5238 = vunpack.c.l.b16 %v1281
        %v5239 = vunpack.c.h.b16 %v1281
        %v5240 = vunpack.c.l.b16 %v1282
        %v5241 = vunpack.c.h.b16 %v1282
        %v5242 = vunpack.c.l.b16 %v1283
        %v5243 = vunpack.c.h.b16 %v1283
        %v5244 = vunpack.c.l.b16 %v1284
        %v5245 = vunpack.c.h.b16 %v1284
        %v5246 = vunpack.c.l.b16 %v1285
        %v5247 = vunpack.c.h.b16 %v1285
        %v5248 = vunpack.c.l.b16 %v1286
        %v5249 = vunpack.c.h.b16 %v1286
        %v5250 = vunpack.c.l.b16 %v1287
        %v5251 = vunpack.c.h.b16 %v1287
        %v5252 = vunpack.c.l.b16 %v1288
        %v5253 = vunpack.c.h.b16 %v1288
        %v5254 = vunpack.c.l.b16 %v1289
        %v5255 = vunpack.c.h.b16 %v1289
        %v5256 = vunpack.c.l.b16 %v1290
        %v5257 = vunpack.c.h.b16 %v1290
        %v5258 = vunpack.c.l.b16 %v1291
        %v5259 = vunpack.c.h.b16 %v1291
        %v5260 = vunpack.c.l.b16 %v1292
        %v5261 = vunpack.c.h.b16 %v1292
        %v5262 = vunpack.c.l.b16 %v1293
        %v5263 = vunpack.c.h.b16 %v1293
        %v5264 = vunpack.c.l.b16 %v1294
        %v5265 = vunpack.c.h.b16 %v1294
        %v5266 = vunpack.c.l.b16 %v1295
        %v5267 = vunpack.c.h.b16 %v1295
        %v5268 = vunpack.c.l.b16 %v1296
        %v5269 = vunpack.c.h.b16 %v1296
        %v5270 = vunpack.c.l.b16 %v1297
        %v5271 = vunpack.c.h.b16 %v1297
        %v5272 = vunpack.c.l.b16 %v1298
        %v5273 = vunpack.c.h.b16 %v1298
        %v5274 = vunpack.c.l.b16 %v1299
        %v5275 = vunpack.c.h.b16 %v1299
        %v5276 = vunpack.c.l.b16 %v1300
        %v5277 = vunpack.c.h.b16 %v1300
        %v5278 = vunpack.c.l.b16 %v1301
        %v5279 = vunpack.c.h.b16 %v1301
        %v5280 = vunpack.c.l.b16 %v1302
        %v5281 = vunpack.c.h.b16 %v1302
        %v5282 = vunpack.c.l.b16 %v1303
        %v5283 = vunpack.c.h.b16 %v1303
        %v5284 = vunpack.c.l.b16 %v1304
        %v5285 = vunpack.c.h.b16 %v1304
        %v5286 = vunpack.c.l.b16 %v1305
        %v5287 = vunpack.c.h.b16 %v1305
        %v5288 = vunpack.c.l.b16 %v1306
        %v5289 = vunpack.c.h.b16 %v1306
        %v5290 = vunpack.c.l.b16 %v1307
        %v5291 = vunpack.c.h.b16 %v1307
        %v5292 = vunpack.c.l.b16 %v1308
        %v5293 = vunpack.c.h.b16 %v1308
        %v5294 = vunpack.c.l.b16 %v1309
        %v5295 = vunpack.c.h.b16 %v1309
        %v5296 = vunpack.c.l.b16 %v1310
        %v5297 = vunpack.c.h.b16 %v1310
        %v5298 = vunpack.c.l.b16 %v1311
        %v5299 = vunpack.c.h.b16 %v1311
        %v5300 = vunpack.c.l.b16 %v1312
        %v5301 = vunpack.c.h.b16 %v1312
        %v5302 = vunpack.c.l.b16 %v1313
        %v5303 = vunpack.c.h.b16 %v1313
        %v5304 = vunpack.c.l.b16 %v1314
        %v5305 = vunpack.c.h.b16 %v1314
        %v5306 = vunpack.c.l.b16 %v1315
        %v5307 = vunpack.c.h.b16 %v1315
        %v5308 = vunpack.c.l.b16 %v1316
        %v5309 = vunpack.c.h.b16 %v1316
        %v5310 = vunpack.c.l.b16 %v1317
        %v5311 = vunpack.c.h.b16 %v1317
        %v5312 = vunpack.c.l.b16 %v1318
        %v5313 = vunpack.c.h.b16 %v1318
        %v5314 = vunpack.c.l.b16 %v1319
        %v5315 = vunpack.c.h.b16 %v1319
        %v5316 = vunpack.c.l.b16 %v1320
        %v5317 = vunpack.c.h.b16 %v1320
        %v5318 = vunpack.c.l.b16 %v1321
        %v5319 = vunpack.c.h.b16 %v1321
        %v5320 = vunpack.c.l.b16 %v1322
        %v5321 = vunpack.c.h.b16 %v1322
        %v5322 = vunpack.c.l.b16 %v1323
        %v5323 = vunpack.c.h.b16 %v1323
        %v5324 = vunpack.c.l.b16 %v1324
        %v5325 = vunpack.c.h.b16 %v1324
        %v5326 = vunpack.c.l.b16 %v1325
        %v5327 = vunpack.c.h.b16 %v1325
        %v5328 = vunpack.c.l.b16 %v1326
        %v5329 = vunpack.c.h.b16 %v1326
        %v5330 = vunpack.c.l.b16 %v1327
        %v5331 = vunpack.c.h.b16 %v1327
        %v5332 = vunpack.c.l.b16 %v1328
        %v5333 = vunpack.c.h.b16 %v1328
        %v5334 = vunpack.c.l.b16 %v1329
        %v5335 = vunpack.c.h.b16 %v1329
        %v5336 = vunpack.c.l.b16 %v1330
        %v5337 = vunpack.c.h.b16 %v1330
        %v5338 = vunpack.c.l.b16 %v1331
        %v5339 = vunpack.c.h.b16 %v1331
        %v5340 = vunpack.c.l.b16 %v1332
        %v5341 = vunpack.c.h.b16 %v1332
        %v5342 = vunpack.c.l.b16 %v1333
        %v5343 = vunpack.c.h.b16 %v1333
        %v5344 = vunpack.c.l.b16 %v1334
        %v5345 = vunpack.c.h.b16 %v1334
        %v5346 = vunpack.c.l.b16 %v1335
        %v5347 = vunpack.c.h.b16 %v1335
        %v5348 = vunpack.c.l.b16 %v1336
        %v5349 = vunpack.c.h.b16 %v1336
        %v5350 = vunpack.c.l.b16 %v1337
        %v5351 = vunpack.c.h.b16 %v1337
        %v5352 = vunpack.c.l.b16 %v1338
        %v5353 = vunpack.c.h.b16 %v1338
        %v5354 = vunpack.c.l.b16 %v1339
        %v5355 = vunpack.c.h.b16 %v1339
        %v5356 = vunpack.c.l.b16 %v1340
        %v5357 = vunpack.c.h.b16 %v1340
        %v5358 = vunpack.c.l.b16 %v1341
        %v5359 = vunpack.c.h.b16 %v1341
        %v5360 = vunpack.c.l.b16 %v1342
        %v5361 = vunpack.c.h.b16 %v1342
        %v5362 = vunpack.c.l.b16 %v1343
        %v5363 = vunpack.c.h.b16 %v1343
        %v5364 = vunpack.c.l.b16 %v1344
        %v5365 = vunpack.c.h.b16 %v1344
        %v5366 = vunpack.c.l.b16 %v1345
        %v5367 = vunpack.c.h.b16 %v1345
        %v5368 = vunpack.c.l.b16 %v1346
        %v5369 = vunpack.c.h.b16 %v1346
        %v5370 = vunpack.c.l.b16 %v1347
        %v5371 = vunpack.c.h.b16 %v1347
        %v5372 = vunpack.c.l.b16 %v1348
        %v5373 = vunpack.c.h.b16 %v1348
        %v5374 = vunpack.c.l.b16 %v1349
        %v5375 = vunpack.c.h.b16 %v1349
        %v5376 = vunpack.c.l.b16 %v1350
        %v5377 = vunpack.c.h.b16 %v1350
        %v5378 = vunpack.c.l.b16 %v1351
        %v5379 = vunpack.c.h.b16 %v1351
        %v5380 = vunpack.c.l.b16 %v1352
        %v5381 = vunpack.c.h.b16 %v1352
        %v5382 = vunpack.c.l.b16 %v1353
        %v5383 = vunpack.c.h.b16 %v1353
        %v5384 = vunpack.c.l.b16 %v1354
        %v5385 = vunpack.c.h.b16 %v1354
        %v5386 = vunpack.c.l.b16 %v1355
        %v5387 = vunpack.c.h.b16 %v1355
        %v5388 = vunpack.c.l.b16 %v1356
        %v5389 = vunpack.c.h.b16 %v1356
        %v5390 = vunpack.c.l.b16 %v1357
        %v5391 = vunpack.c.h.b16 %v1357
        %v5392 = vunpack.c.l.b16 %v1358
        %v5393 = vunpack.c.h.b16 %v1358
        %v5394 = vunpack.c.l.b16 %v1359
        %v5395 = vunpack.c.h.b16 %v1359
        %v5396 = vunpack.c.l.b16 %v1360
        %v5397 = vunpack.c.h.b16 %v1360
        %v5398 = vunpack.c.l.b16 %v1361
        %v5399 = vunpack.c.h.b16 %v1361
        %v5400 = vunpack.c.l.b16 %v1362
        %v5401 = vunpack.c.h.b16 %v1362
        %v5402 = vunpack.c.l.b16 %v1363
        %v5403 = vunpack.c.h.b16 %v1363
        %v5404 = vunpack.c.l.b16 %v1364
        %v5405 = vunpack.c.h.b16 %v1364
        %v5406 = vunpack.c.l.b16 %v1365
        %v5407 = vunpack.c.h.b16 %v1365
        %v5408 = vunpack.c.l.b16 %v1366
        %v5409 = vunpack.c.h.b16 %v1366
        %v5410 = vunpack.c.l.b16 %v1367
        %v5411 = vunpack.c.h.b16 %v1367
        %v5412 = vunpack.c.l.b16 %v1368
        %v5413 = vunpack.c.h.b16 %v1368
        %v5414 = vunpack.c.l.b16 %v1369
        %v5415 = vunpack.c.h.b16 %v1369
        %v5416 = vunpack.c.l.b16 %v1370
        %v5417 = vunpack.c.h.b16 %v1370
        %v5418 = vunpack.c.l.b16 %v1371
        %v5419 = vunpack.c.h.b16 %v1371
        %v5420 = vunpack.c.l.b16 %v1372
        %v5421 = vunpack.c.h.b16 %v1372
        %v5422 = vunpack.c.l.b16 %v1373
        %v5423 = vunpack.c.h.b16 %v1373
        %v5424 = vunpack.c.l.b16 %v1374
        %v5425 = vunpack.c.h.b16 %v1374
        %v5426 = vunpack.c.l.b16 %v1375
        %v5427 = vunpack.c.h.b16 %v1375
        %v5428 = vunpack.c.l.b16 %v1376
        %v5429 = vunpack.c.h.b16 %v1376
        %v5430 = vunpack.c.l.b16 %v1377
        %v5431 = vunpack.c.h.b16 %v1377
        %v5432 = vunpack.c.l.b16 %v1378
        %v5433 = vunpack.c.h.b16 %v1378
        %v5434 = vunpack.c.l.b16 %v1379
        %v5435 = vunpack.c.h.b16 %v1379
        %v5436 = vunpack.c.l.b16 %v1380
        %v5437 = vunpack.c.h.b16 %v1380
        %v5438 = vunpack.c.l.b16 %v1381
        %v5439 = vunpack.c.h.b16 %v1381
        %v5440 = vunpack.c.l.b16 %v1382
        %v5441 = vunpack.c.h.b16 %v1382
        %v5442 = vunpack.c.l.b16 %v1383
        %v5443 = vunpack.c.h.b16 %v1383
        %v5444 = vunpack.c.l.b16 %v1384
        %v5445 = vunpack.c.h.b16 %v1384
        %v5446 = vunpack.c.l.b16 %v1385
        %v5447 = vunpack.c.h.b16 %v1385
        %v5448 = vunpack.c.l.b16 %v1386
        %v5449 = vunpack.c.h.b16 %v1386
        %v5450 = vunpack.c.l.b16 %v1387
        %v5451 = vunpack.c.h.b16 %v1387
        %v5452 = vunpack.c.l.b16 %v1388
        %v5453 = vunpack.c.h.b16 %v1388
        %v5454 = vunpack.c.l.b16 %v1389
        %v5455 = vunpack.c.h.b16 %v1389
        %v5456 = vunpack.c.l.b16 %v1390
        %v5457 = vunpack.c.h.b16 %v1390
        %v5458 = vunpack.c.l.b16 %v1391
        %v5459 = vunpack.c.h.b16 %v1391
        %v5460 = vunpack.c.l.b16 %v1392
        %v5461 = vunpack.c.h.b16 %v1392
        %v5462 = vunpack.c.l.b16 %v1393
        %v5463 = vunpack.c.h.b16 %v1393
        %v5464 = vunpack.c.l.b16 %v1394
        %v5465 = vunpack.c.h.b16 %v1394
        %v5466 = vunpack.c.l.b16 %v1395
        %v5467 = vunpack.c.h.b16 %v1395
        %v5468 = vunpack.c.l.b16 %v1396
        %v5469 = vunpack.c.h.b16 %v1396
        %v5470 = vunpack.c.l.b16 %v1397
        %v5471 = vunpack.c.h.b16 %v1397
        %v5472 = vunpack.c.l.b16 %v1398
        %v5473 = vunpack.c.h.b16 %v1398
        %v5474 = vunpack.c.l.b16 %v1399
        %v5475 = vunpack.c.h.b16 %v1399
        %v5476 = vunpack.c.l.b16 %v1400
        %v5477 = vunpack.c.h.b16 %v1400
        %v5478 = vunpack.c.l.b16 %v1401
        %v5479 = vunpack.c.h.b16 %v1401
        %v5480 = vunpack.c.l.b16 %v1402
        %v5481 = vunpack.c.h.b16 %v1402
        %v5482 = vunpack.c.l.b16 %v1403
        %v5483 = vunpack.c.h.b16 %v1403
        %v5484 = vunpack.c.l.b16 %v1404
        %v5485 = vunpack.c.h.b16 %v1404
        %v5486 = vunpack.c.l.b16 %v1405
        %v5487 = vunpack.c.h.b16 %v1405
        %v5488 = vunpack.c.l.b16 %v1406
        %v5489 = vunpack.c.h.b16 %v1406
        %v5490 = vunpack.c.l.b16 %v1407
        %v5491 = vunpack.c.h.b16 %v1407
        %v5492 = vunpack.c.l.b16 %v1408
        %v5493 = vunpack.c.h.b16 %v1408
        %v5494 = vunpack.c.l.b16 %v1409
        %v5495 = vunpack.c.h.b16 %v1409
        %v5496 = vunpack.c.l.b16 %v1410
        %v5497 = vunpack.c.h.b16 %v1410
        %v5498 = vunpack.c.l.b16 %v1411
        %v5499 = vunpack.c.h.b16 %v1411
        %v5500 = vunpack.c.l.b16 %v1412
        %v5501 = vunpack.c.h.b16 %v1412
        %v5502 = vunpack.c.l.b16 %v1413
        %v5503 = vunpack.c.h.b16 %v1413
        %v5504 = vunpack.c.l.b16 %v1414
        %v5505 = vunpack.c.h.b16 %v1414
        %v5506 = vunpack.c.l.b16 %v1415
        %v5507 = vunpack.c.h.b16 %v1415
        %v5508 = vunpack.c.l.b16 %v1416
        %v5509 = vunpack.c.h.b16 %v1416
        %v5510 = vunpack.c.l.b16 %v1417
        %v5511 = vunpack.c.h.b16 %v1417
        %v5512 = vunpack.c.l.b16 %v1418
        %v5513 = vunpack.c.h.b16 %v1418
        %v5514 = vunpack.c.l.b16 %v1419
        %v5515 = vunpack.c.h.b16 %v1419
        %v5516 = vunpack.c.l.b16 %v1420
        %v5517 = vunpack.c.h.b16 %v1420
        %v5518 = vunpack.c.l.b16 %v1421
        %v5519 = vunpack.c.h.b16 %v1421
        %v5520 = vunpack.c.l.b16 %v1422
        %v5521 = vunpack.c.h.b16 %v1422
        %v5522 = vpack.c.b16 %v3156, %v3154
        %v5523 = vpack.c.b16 %v3157, %v3155
        %v5524 = vpack.c.b16 %v3160, %v3158
        %v5525 = vpack.c.b16 %v3161, %v3159
        %v5526 = vpack.c.b16 %v3164, %v3162
        %v5527 = vpack.c.b16 %v3165, %v3163
        %v5528 = vpack.c.b16 %v3168, %v3166
        %v5529 = vpack.c.b16 %v3169, %v3167
        %v5530 = vpack.c.b16 %v3172, %v3170
        %v5531 = vpack.c.b16 %v3173, %v3171
        %v5532 = vpack.c.b16 %v3176, %v3174
        %v5533 = vpack.c.b16 %v3177, %v3175
        %v5534 = vpack.c.b16 %v3180, %v3178
        %v5535 = vpack.c.b16 %v3181, %v3179
        %v5536 = vpack.c.b16 %v3184, %v3182
        %v5537 = vpack.c.b16 %v3185, %v3183
        %v5538 = vpack.c.b16 %v3188, %v3186
        %v5539 = vpack.c.b16 %v3189, %v3187
        %v5540 = vpack.c.b16 %v3192, %v3190
        %v5541 = vpack.c.b16 %v3193, %v3191
        %v5542 = vpack.c.b16 %v3196, %v3194
        %v5543 = vpack.c.b16 %v3197, %v3195
        %v5544 = vpack.c.b16 %v3200, %v3198
        %v5545 = vpack.c.b16 %v3201, %v3199
        %v5546 = vpack.c.b16 %v3204, %v3202
        %v5547 = vpack.c.b16 %v3205, %v3203
        %v5548 = vpack.c.b16 %v3208, %v3206
        %v5549 = vpack.c.b16 %v3209, %v3207
        %v5550 = vpack.c.b16 %v3212, %v3210
        %v5551 = vpack.c.b16 %v3213, %v3211
        %v5552 = vpack.c.b16 %v3216, %v3214
        %v5553 = vpack.c.b16 %v3217, %v3215
        %v5554 = vpack.c.b16 %v3220, %v3218
        %v5555 = vpack.c.b16 %v3221, %v3219
        %v5556 = vpack.c.b16 %v3224, %v3222
        %v5557 = vpack.c.b16 %v3225, %v3223
        %v5558 = vpack.c.b16 %v3228, %v3226
        %v5559 = vpack.c.b16 %v3229, %v3227
        %v5560 = vpack.c.b16 %v3232, %v3230
        %v5561 = vpack.c.b16 %v3233, %v3231
        %v5562 = vpack.c.b16 %v3236, %v3234
        %v5563 = vpack.c.b16 %v3237, %v3235
        %v5564 = vpack.c.b16 %v3240, %v3238
        %v5565 = vpack.c.b16 %v3241, %v3239
        %v5566 = vpack.c.b16 %v3244, %v3242
        %v5567 = vpack.c.b16 %v3245, %v3243
        %v5568 = vpack.c.b16 %v3248, %v3246
        %v5569 = vpack.c.b16 %v3249, %v3247
        %v5570 = vpack.c.b16 %v3252, %v3250
        %v5571 = vpack.c.b16 %v3253, %v3251
        %v5572 = vpack.c.b16 %v3256, %v3254
        %v5573 = vpack.c.b16 %v3257, %v3255
        %v5574 = vpack.c.b16 %v3260, %v3258
        %v5575 = vpack.c.b16 %v3261, %v3259
        %v5576 = vpack.c.b16 %v3264, %v3262
        %v5577 = vpack.c.b16 %v3265, %v3263
        %v5578 = vpack.c.b16 %v3268, %v3266
        %v5579 = vpack.c.b16 %v3269, %v3267
        %v5580 = vpack.c.b16 %v3272, %v3270
        %v5581 = vpack.c.b16 %v3273, %v3271
        %v5582 = vpack.c.b16 %v3276, %v3274
        %v5583 = vpack.c.b16 %v3277, %v3275
        %v5584 = vpack.c.b16 %v3280, %v3278
        %v5585 = vpack.c.b16 %v3281, %v3279
        %v5586 = vpack.c.b16 %v3284, %v3282
        %v5587 = vpack.c.b16 %v3285, %v3283
        %v5588 = vpack.c.b16 %v3288, %v3286
        %v5589 = vpack.c.b16 %v3289, %v3287
        %v5590 = vpack.c.b16 %v3292, %v3290
        %v5591 = vpack.c.b16 %v3293, %v3291
        %v5592 = vpack.c.b16 %v3296, %v3294
        %v5593 = vpack.c.b16 %v3297, %v3295
        %v5594 = vpack.c.b16 %v3300, %v3298
        %v5595 = vpack.c.b16 %v3301, %v3299
        %v5596 = vpack.c.b16 %v3304, %v3302
        %v5597 = vpack.c.b16 %v3305, %v3303
        %v5598 = vpack.c.b16 %v3308, %v3306
        %v5599 = vpack.c.b16 %v3309, %v3307
        %v5600 = vpack.c.b16 %v3312, %v3310
        %v5601 = vpack.c.b16 %v3313, %v3311
        %v5602 = vpack.c.b16 %v3316, %v3314
        %v5603 = vpack.c.b16 %v3317, %v3315
        %v5604 = vpack.c.b16 %v3320, %v3318
        %v5605 = vpack.c.b16 %v3321, %v3319
        %v5606 = vpack.c.b16 %v3324, %v3322
        %v5607 = vpack.c.b16 %v3325, %v3323
        %v5608 = vpack.c.b16 %v3328, %v3326
        %v5609 = vpack.c.b16 %v3329, %v3327
        %v5610 = vpack.c.b16 %v3332, %v3330
        %v5611 = vpack.c.b16 %v3333, %v3331
        %v5612 = vpack.c.b16 %v3336, %v3334
        %v5613 = vpack.c.b16 %v3337, %v3335
        %v5614 = vpack.c.b16 %v3340, %v3338
        %v5615 = vpack.c.b16 %v3341, %v3339
        %v5616 = vpack.c.b16 %v3344, %v3342
        %v5617 = vpack.c.b16 %v3345, %v3343
        %v5618 = vpack.c.b16 %v3348, %v3346
        %v5619 = vpack.c.b16 %v3349, %v3347
        %v5620 = vpack.c.b16 %v3352, %v3350
        %v5621 = vpack.c.b16 %v3353, %v3351
        %v5622 = vpack.c.b16 %v3356, %v3354
        %v5623 = vpack.c.b16 %v3357, %v3355
        %v5624 = vpack.c.b16 %v3360, %v3358
        %v5625 = vpack.c.b16 %v3361, %v3359
        %v5626 = vpack.c.b16 %v3364, %v3362
        %v5627 = vpack.c.b16 %v3365, %v3363
        %v5628 = vpack.c.b16 %v3368, %v3366
        %v5629 = vpack.c.b16 %v3369, %v3367
        %v5630 = vpack.c.b16 %v3372, %v3370
        %v5631 = vpack.c.b16 %v3373, %v3371
        %v5632 = vpack.c.b16 %v3376, %v3374
        %v5633 = vpack.c.b16 %v3377, %v3375
        %v5634 = vpack.c.b16 %v3380, %v3378
        %v5635 = vpack.c.b16 %v3381, %v3379
        %v5636 = vpack.c.b16 %v3384, %v3382
        %v5637 = vpack.c.b16 %v3385, %v3383
        %v5638 = vpack.c.b16 %v3388, %v3386
        %v5639 = vpack.c.b16 %v3389, %v3387
        %v5640 = vpack.c.b16 %v3392, %v3390
        %v5641 = vpack.c.b16 %v3393, %v3391
        %v5642 = vpack.c.b16 %v3396, %v3394
        %v5643 = vpack.c.b16 %v3397, %v3395
        %v5644 = vpack.c.b16 %v3400, %v3398
        %v5645 = vpack.c.b16 %v3401, %v3399
        %v5646 = vpack.c.b16 %v3404, %v3402
        %v5647 = vpack.c.b16 %v3405, %v3403
        %v5648 = vpack.c.b16 %v3408, %v3406
        %v5649 = vpack.c.b16 %v3409, %v3407
        %v5650 = vpack.c.b16 %v3412, %v3410
        %v5651 = vpack.c.b16 %v3413, %v3411
        %v5652 = vpack.c.b16 %v3416, %v3414
        %v5653 = vpack.c.b16 %v3417, %v3415
        %v5654 = vpack.c.b16 %v3420, %v3418
        %v5655 = vpack.c.b16 %v3421, %v3419
        %v5656 = vpack.c.b16 %v3424, %v3422
        %v5657 = vpack.c.b16 %v3425, %v3423
        %v5658 = vpack.c.b16 %v3428, %v3426
        %v5659 = vpack.c.b16 %v3429, %v3427
        %v5660 = vpack.c.b16 %v3432, %v3430
        %v5661 = vpack.c.b16 %v3433, %v3431
        %v5662 = vpack.c.b16 %v3436, %v3434
        %v5663 = vpack.c.b16 %v3437, %v3435
        %v5664 = vpack.c.b16 %v3440, %v3438
        %v5665 = vpack.c.b16 %v3441, %v3439
        %v5666 = vpack.c.b16 %v3444, %v3442
        %v5667 = vpack.c.b16 %v3445, %v3443
        %v5668 = vpack.c.b16 %v3448, %v3446
        %v5669 = vpack.c.b16 %v3449, %v3447
        %v5670 = vpack.c.b16 %v3452, %v3450
        %v5671 = vpack.c.b16 %v3453, %v3451
        %v5672 = vpack.c.b16 %v3456, %v3454
        %v5673 = vpack.c.b16 %v3457, %v3455
        %v5674 = vpack.c.b16 %v3460, %v3458
        %v5675 = vpack.c.b16 %v3461, %v3459
        %v5676 = vpack.c.b16 %v3464, %v3462
        %v5677 = vpack.c.b16 %v3465, %v3463
        %v5678 = vpack.c.b16 %v3468, %v3466
        %v5679 = vpack.c.b16 %v3469, %v3467
        %v5680 = vpack.c.b16 %v3472, %v3470
        %v5681 = vpack.c.b16 %v3473, %v3471
        %v5682 = vpack.c.b16 %v3476, %v3474
        %v5683 = vpack.c.b16 %v3477, %v3475
        %v5684 = vpack.c.b16 %v3480, %v3478
        %v5685 = vpack.c.b16 %v3481, %v3479
        %v5686 = vpack.c.b16 %v3484, %v3482
        %v5687 = vpack.c.b16 %v3485, %v3483
        %v5688 = vpack.c.b16 %v3488, %v3486
        %v5689 = vpack.c.b16 %v3489, %v3487
        %v5690 = vpack.c.b16 %v3492, %v3490
        %v5691 = vpack.c.b16 %v3493, %v3491
        %v5692 = vpack.c.b16 %v3496, %v3494
        %v5693 = vpack.c.b16 %v3497, %v3495
        %v5694 = vpack.c.b16 %v3500, %v3498
        %v5695 = vpack.c.b16 %v3501, %v3499
        %v5696 = vpack.c.b16 %v3504, %v3502
        %v5697 = vpack.c.b16 %v3505, %v3503
        %v5698 = vpack.c.b16 %v3508, %v3506
        %v5699 = vpack.c.b16 %v3509, %v3507
        %v5700 = vpack.c.b16 %v3512, %v3510
        %v5701 = vpack.c.b16 %v3513, %v3511
        %v5702 = vpack.c.b16 %v3516, %v3514
        %v5703 = vpack.c.b16 %v3517, %v3515
        %v5704 = vpack.c.b16 %v3520, %v3518
        %v5705 = vpack.c.b16 %v3521, %v3519
        %v5706 = vpack.c.b16 %v3524, %v3522
        %v5707 = vpack.c.b16 %v3525, %v3523
        %v5708 = vpack.c.b16 %v3528, %v3526
        %v5709 = vpack.c.b16 %v3529, %v3527
        %v5710 = vpack.c.b16 %v3532, %v3530
        %v5711 = vpack.c.b16 %v3533, %v3531
        %v5712 = vpack.c.b16 %v3536, %v3534
        %v5713 = vpack.c.b16 %v3537, %v3535
        %v5714 = vpack.c.b16 %v3540, %v3538
        %v5715 = vpack.c.b16 %v3541, %v3539
        %v5716 = vpack.c.b16 %v3544, %v3542
        %v5717 = vpack.c.b16 %v3545, %v3543
        %v5718 = vpack.c.b16 %v3548, %v3546
        %v5719 = vpack.c.b16 %v3549, %v3547
        %v5720 = vpack.c.b16 %v3552, %v3550
        %v5721 = vpack.c.b16 %v3553, %v3551
        %v5722 = vpack.c.b16 %v3556, %v3554
        %v5723 = vpack.c.b16 %v3557, %v3555
        %v5724 = vpack.c.b16 %v3560, %v3558
        %v5725 = vpack.c.b16 %v3561, %v3559
        %v5726 = vpack.c.b16 %v3564, %v3562
        %v5727 = vpack.c.b16 %v3565, %v3563
        %v5728 = vpack.c.b16 %v3568, %v3566
        %v5729 = vpack.c.b16 %v3569, %v3567
        %v5730 = vpack.c.b16 %v3572, %v3570
        %v5731 = vpack.c.b16 %v3573, %v3571
        %v5732 = vpack.c.b16 %v3576, %v3574
        %v5733 = vpack.c.b16 %v3577, %v3575
        %v5734 = vpack.c.b16 %v3580, %v3578
        %v5735 = vpack.c.b16 %v3581, %v3579
        %v5736 = vpack.c.b16 %v3584, %v3582
        %v5737 = vpack.c.b16 %v3585, %v3583
        %v5738 = vpack.c.b16 %v3588, %v3586
        %v5739 = vpack.c.b16 %v3589, %v3587
        %v5740 = vpack.c.b16 %v3592, %v3590
        %v5741 = vpack.c.b16 %v3593, %v3591
        %v5742 = vpack.c.b16 %v3596, %v3594
        %v5743 = vpack.c.b16 %v3597, %v3595
        %v5744 = vpack.c.b16 %v3600, %v3598
        %v5745 = vpack.c.b16 %v3601, %v3599
        %v5746 = vpack.c.b16 %v3604, %v3602
        %v5747 = vpack.c.b16 %v3605, %v3603
        %v5748 = vpack.c.b16 %v3608, %v3606
        %v5749 = vpack.c.b16 %v3609, %v3607
        %v5750 = vpack.c.b16 %v3612, %v3610
        %v5751 = vpack.c.b16 %v3613, %v3611
        %v5752 = vpack.c.b16 %v3616, %v3614
        %v5753 = vpack.c.b16 %v3617, %v3615
        %v5754 = vpack.c.b16 %v3620, %v3618
        %v5755 = vpack.c.b16 %v3621, %v3619
        %v5756 = vpack.c.b16 %v3624, %v3622
        %v5757 = vpack.c.b16 %v3625, %v3623
        %v5758 = vpack.c.b16 %v3628, %v3626
        %v5759 = vpack.c.b16 %v3629, %v3627
        %v5760 = vpack.c.b16 %v3632, %v3630
        %v5761 = vpack.c.b16 %v3633, %v3631
        %v5762 = vpack.c.b16 %v3636, %v3634
        %v5763 = vpack.c.b16 %v3637, %v3635
        %v5764 = vpack.c.b16 %v3640, %v3638
        %v5765 = vpack.c.b16 %v3641, %v3639
        %v5766 = vpack.c.b16 %v3644, %v3642
        %v5767 = vpack.c.b16 %v3645, %v3643
        %v5768 = vpack.c.b16 %v3648, %v3646
        %v5769 = vpack.c.b16 %v3649, %v3647
        %v5770 = vpack.c.b16 %v3652, %v3650
        %v5771 = vpack.c.b16 %v3653, %v3651
        %v5772 = vpack.c.b16 %v3656, %v3654
        %v5773 = vpack.c.b16 %v3657, %v3655
        %v5774 = vpack.c.b16 %v3660, %v3658
        %v5775 = vpack.c.b16 %v3661, %v3659
        %v5776 = vpack.c.b16 %v3664, %v3662
        %v5777 = vpack.c.b16 %v3665, %v3663
        %v5778 = vpack.c.b16 %v3668, %v3666
        %v5779 = vpack.c.b16 %v3669, %v3667
        %v5780 = vpack.c.b16 %v3672, %v3670
        %v5781 = vpack.c.b16 %v3673, %v3671
        %v5782 = vpack.c.b16 %v3676, %v3674
        %v5783 = vpack.c.b16 %v3677, %v3675
        %v5784 = vpack.c.b16 %v3680, %v3678
        %v5785 = vpack.c.b16 %v3681, %v3679
        %v5786 = vpack.c.b16 %v3684, %v3682
        %v5787 = vpack.c.b16 %v3685, %v3683
        %v5788 = vpack.c.b16 %v3688, %v3686
        %v5789 = vpack.c.b16 %v3689, %v3687
        %v5790 = vpack.c.b16 %v3692, %v3690
        %v5791 = vpack.c.b16 %v3693, %v3691
        %v5792 = vpack.c.b16 %v3696, %v3694
        %v5793 = vpack.c.b16 %v3697, %v3695
        %v5794 = vpack.c.b16 %v3700, %v3698
        %v5795 = vpack.c.b16 %v3701, %v3699
        %v5796 = vpack.c.b16 %v3704, %v3702
        %v5797 = vpack.c.b16 %v3705, %v3703
        %v5798 = vpack.c.b16 %v3708, %v3706
        %v5799 = vpack.c.b16 %v3709, %v3707
        %v5800 = vpack.c.b16 %v3712, %v3710
        %v5801 = vpack.c.b16 %v3713, %v3711
        %v5802 = vpack.c.b16 %v3716, %v3714
        %v5803 = vpack.c.b16 %v3717, %v3715
        %v5804 = vpack.c.b16 %v3720, %v3718
        %v5805 = vpack.c.b16 %v3721, %v3719
        %v5806 = vpack.c.b16 %v3724, %v3722
        %v5807 = vpack.c.b16 %v3725, %v3723
        %v5808 = vpack.c.b16 %v3728, %v3726
        %v5809 = vpack.c.b16 %v3729, %v3727
        %v5810 = vpack.c.b16 %v3732, %v3730
        %v5811 = vpack.c.b16 %v3733, %v3731
        %v5812 = vpack.c.b16 %v3736, %v3734
        %v5813 = vpack.c.b16 %v3737, %v3735
        %v5814 = vpack.c.b16 %v3740, %v3738
        %v5815 = vpack.c.b16 %v3741, %v3739
        %v5816 = vpack.c.b16 %v3744, %v3742
        %v5817 = vpack.c.b16 %v3745, %v3743
        %v5818 = vpack.c.b16 %v3748, %v3746
        %v5819 = vpack.c.b16 %v3749, %v3747
        %v5820 = vpack.c.b16 %v3752, %v3750
        %v5821 = vpack.c.b16 %v3753, %v3751
        %v5822 = vpack.c.b16 %v3756, %v3754
        %v5823 = vpack.c.b16 %v3757, %v3755
        %v5824 = vpack.c.b16 %v3760, %v3758
        %v5825 = vpack.c.b16 %v3761, %v3759
        %v5826 = vpack.c.b16 %v3764, %v3762
        %v5827 = vpack.c.b16 %v3765, %v3763
        %v5828 = vpack.c.b16 %v3768, %v3766
        %v5829 = vpack.c.b16 %v3769, %v3767
        %v5830 = vpack.c.b16 %v3772, %v3770
        %v5831 = vpack.c.b16 %v3773, %v3771
        %v5832 = vpack.c.b16 %v3776, %v3774
        %v5833 = vpack.c.b16 %v3777, %v3775
        %v5834 = vpack.c.b16 %v3780, %v3778
        %v5835 = vpack.c.b16 %v3781, %v3779
        %v5836 = vpack.c.b16 %v3784, %v3782
        %v5837 = vpack.c.b16 %v3785, %v3783
        %v5838 = vpack.c.b16 %v3788, %v3786
        %v5839 = vpack.c.b16 %v3789, %v3787
        %v5840 = vpack.c.b16 %v3792, %v3790
        %v5841 = vpack.c.b16 %v3793, %v3791
        %v5842 = vpack.c.b16 %v3796, %v3794
        %v5843 = vpack.c.b16 %v3797, %v3795
        %v5844 = vpack.c.b16 %v3800, %v3798
        %v5845 = vpack.c.b16 %v3801, %v3799
        %v5846 = vpack.c.b16 %v3804, %v3802
        %v5847 = vpack.c.b16 %v3805, %v3803
        %v5848 = vpack.c.b16 %v3808, %v3806
        %v5849 = vpack.c.b16 %v3809, %v3807
        %v5850 = vpack.c.b16 %v3812, %v3810
        %v5851 = vpack.c.b16 %v3813, %v3811
        %v5852 = vpack.c.b16 %v3816, %v3814
        %v5853 = vpack.c.b16 %v3817, %v3815
        %v5854 = vpack.c.b16 %v3820, %v3818
        %v5855 = vpack.c.b16 %v3821, %v3819
        %v5856 = vpack.c.b16 %v3824, %v3822
        %v5857 = vpack.c.b16 %v3825, %v3823
        %v5858 = vpack.c.b16 %v3828, %v3826
        %v5859 = vpack.c.b16 %v3829, %v3827
        %v5860 = vpack.c.b16 %v3832, %v3830
        %v5861 = vpack.c.b16 %v3833, %v3831
        %v5862 = vpack.c.b16 %v3836, %v3834
        %v5863 = vpack.c.b16 %v3837, %v3835
        %v5864 = vpack.c.b16 %v3840, %v3838
        %v5865 = vpack.c.b16 %v3841, %v3839
        %v5866 = vpack.c.b16 %v3844, %v3842
        %v5867 = vpack.c.b16 %v3845, %v3843
        %v5868 = vpack.c.b16 %v3848, %v3846
        %v5869 = vpack.c.b16 %v3849, %v3847
        %v5870 = vpack.c.b16 %v3852, %v3850
        %v5871 = vpack.c.b16 %v3853, %v3851
        %v5872 = vpack.c.b16 %v3856, %v3854
        %v5873 = vpack.c.b16 %v3857, %v3855
        %v5874 = vpack.c.b16 %v3860, %v3858
        %v5875 = vpack.c.b16 %v3861, %v3859
        %v5876 = vpack.c.b16 %v3864, %v3862
        %v5877 = vpack.c.b16 %v3865, %v3863
        %v5878 = vpack.c.b16 %v3868, %v3866
        %v5879 = vpack.c.b16 %v3869, %v3867
        %v5880 = vpack.c.b16 %v3872, %v3870
        %v5881 = vpack.c.b16 %v3873, %v3871
        %v5882 = vpack.c.b16 %v3876, %v3874
        %v5883 = vpack.c.b16 %v3877, %v3875
        %v5884 = vpack.c.b16 %v3880, %v3878
        %v5885 = vpack.c.b16 %v3881, %v3879
        %v5886 = vpack.c.b16 %v3884, %v3882
        %v5887 = vpack.c.b16 %v3885, %v3883
        %v5888 = vpack.c.b16 %v3888, %v3886
        %v5889 = vpack.c.b16 %v3889, %v3887
        %v5890 = vpack.c.b16 %v3892, %v3890
        %v5891 = vpack.c.b16 %v3893, %v3891
        %v5892 = vpack.c.b16 %v3896, %v3894
        %v5893 = vpack.c.b16 %v3897, %v3895
        %v5894 = vpack.c.b16 %v3900, %v3898
        %v5895 = vpack.c.b16 %v3901, %v3899
        %v5896 = vpack.c.b16 %v3904, %v3902
        %v5897 = vpack.c.b16 %v3905, %v3903
        %v5898 = vpack.c.b16 %v3908, %v3906
        %v5899 = vpack.c.b16 %v3909, %v3907
        %v5900 = vpack.c.b16 %v3912, %v3910
        %v5901 = vpack.c.b16 %v3913, %v3911
        %v5902 = vpack.c.b16 %v3916, %v3914
        %v5903 = vpack.c.b16 %v3917, %v3915
        %v5904 = vpack.c.b16 %v3920, %v3918
        %v5905 = vpack.c.b16 %v3921, %v3919
        %v5906 = vpack.c.b16 %v3924, %v3922
        %v5907 = vpack.c.b16 %v3925, %v3923
        %v5908 = vpack.c.b16 %v3928, %v3926
        %v5909 = vpack.c.b16 %v3929, %v3927
        %v5910 = vpack.c.b16 %v3932, %v3930
        %v5911 = vpack.c.b16 %v3933, %v3931
        %v5912 = vpack.c.b16 %v3936, %v3934
        %v5913 = vpack.c.b16 %v3937, %v3935
        %v5914 = vpack.c.b16 %v3940, %v3938
        %v5915 = vpack.c.b16 %v3941, %v3939
        %v5916 = vpack.c.b16 %v3944, %v3942
        %v5917 = vpack.c.b16 %v3945, %v3943
        %v5918 = vpack.c.b16 %v3948, %v3946
        %v5919 = vpack.c.b16 %v3949, %v3947
        %v5920 = vpack.c.b16 %v3952, %v3950
        %v5921 = vpack.c.b16 %v3953, %v3951
        %v5922 = vpack.c.b16 %v3956, %v3954
        %v5923 = vpack.c.b16 %v3957, %v3955
        %v5924 = vpack.c.b16 %v3960, %v3958
        %v5925 = vpack.c.b16 %v3961, %v3959
        %v5926 = vpack.c.b16 %v3964, %v3962
        %v5927 = vpack.c.b16 %v3965, %v3963
        %v5928 = vpack.c.b16 %v3968, %v3966
        %v5929 = vpack.c.b16 %v3969, %v3967
        %v5930 = vpack.c.b16 %v3972, %v3970
        %v5931 = vpack.c.b16 %v3973, %v3971
        %v5932 = vpack.c.b16 %v3976, %v3974
        %v5933 = vpack.c.b16 %v3977, %v3975
        %v5934 = vpack.c.b16 %v3980, %v3978
        %v5935 = vpack.c.b16 %v3981, %v3979
        %v5936 = vpack.c.b16 %v3984, %v3982
        %v5937 = vpack.c.b16 %v3985, %v3983
        %v5938 = vpack.c.b16 %v3988, %v3986
        %v5939 = vpack.c.b16 %v3989, %v3987
        %v5940 = vpack.c.b16 %v3992, %v3990
        %v5941 = vpack.c.b16 %v3993, %v3991
        %v5942 = vpack.c.b16 %v3996, %v3994
        %v5943 = vpack.c.b16 %v3997, %v3995
        %v5944 = vpack.c.b16 %v4000, %v3998
        %v5945 = vpack.c.b16 %v4001, %v3999
        %v5946 = vpack.c.b16 %v4004, %v4002
        %v5947 = vpack.c.b16 %v4005, %v4003
        %v5948 = vpack.c.b16 %v4008, %v4006
        %v5949 = vpack.c.b16 %v4009, %v4007
        %v5950 = vpack.c.b16 %v4012, %v4010
        %v5951 = vpack.c.b16 %v4013, %v4011
        %v5952 = vpack.c.b16 %v4016, %v4014
        %v5953 = vpack.c.b16 %v4017, %v4015
        %v5954 = vpack.c.b16 %v4020, %v4018
        %v5955 = vpack.c.b16 %v4021, %v4019
        %v5956 = vpack.c.b16 %v4024, %v4022
        %v5957 = vpack.c.b16 %v4025, %v4023
        %v5958 = vpack.c.b16 %v4028, %v4026
        %v5959 = vpack.c.b16 %v4029, %v4027
        %v5960 = vpack.c.b16 %v4032, %v4030
        %v5961 = vpack.c.b16 %v4033, %v4031
        %v5962 = vpack.c.b16 %v4036, %v4034
        %v5963 = vpack.c.b16 %v4037, %v4035
        %v5964 = vpack.c.b16 %v4040, %v4038
        %v5965 = vpack.c.b16 %v4041, %v4039
        %v5966 = vpack.c.b16 %v4044, %v4042
        %v5967 = vpack.c.b16 %v4045, %v4043
        %v5968 = vpack.c.b16 %v4048, %v4046
        %v5969 = vpack.c.b16 %v4049, %v4047
        %v5970 = vpack.c.b16 %v4052, %v4050
        %v5971 = vpack.c.b16 %v4053, %v4051
        %v5972 = vpack.c.b16 %v4056, %v4054
        %v5973 = vpack.c.b16 %v4057, %v4055
        %v5974 = vpack.c.b16 %v4060, %v4058
        %v5975 = vpack.c.b16 %v4061, %v4059
        %v5976 = vpack.c.b16 %v4064, %v4062
        %v5977 = vpack.c.b16 %v4065, %v4063
        %v5978 = vpack.c.b16 %v4068, %v4066
        %v5979 = vpack.c.b16 %v4069, %v4067
        %v5980 = vpack.c.b16 %v4072, %v4070
        %v5981 = vpack.c.b16 %v4073, %v4071
        %v5982 = vpack.c.b16 %v4076, %v4074
        %v5983 = vpack.c.b16 %v4077, %v4075
        %v5984 = vpack.c.b16 %v4080, %v4078
        %v5985 = vpack.c.b16 %v4081, %v4079
        %v5986 = vpack.c.b16 %v4084, %v4082
        %v5987 = vpack.c.b16 %v4085, %v4083
        %v5988 = vpack.c.b16 %v4088, %v4086
        %v5989 = vpack.c.b16 %v4089, %v4087
        %v5990 = vpack.c.b16 %v4092, %v4090
        %v5991 = vpack.c.b16 %v4093, %v4091
        %v5992 = vpack.c.b16 %v4096, %v4094
        %v5993 = vpack.c.b16 %v4097, %v4095
        %v5994 = vpack.c.b16 %v4100, %v4098
        %v5995 = vpack.c.b16 %v4101, %v4099
        %v5996 = vpack.c.b16 %v4104, %v4102
        %v5997 = vpack.c.b16 %v4105, %v4103
        %v5998 = vpack.c.b16 %v4108, %v4106
        %v5999 = vpack.c.b16 %v4109, %v4107
        %v6000 = vpack.c.b16 %v4112, %v4110
        %v6001 = vpack.c.b16 %v4113, %v4111
        %v6002 = vpack.c.b16 %v4116, %v4114
        %v6003 = vpack.c.b16 %v4117, %v4115
        %v6004 = vpack.c.b16 %v4120, %v4118
        %v6005 = vpack.c.b16 %v4121, %v4119
        %v6006 = vpack.c.b16 %v4124, %v4122
        %v6007 = vpack.c.b16 %v4125, %v4123
        %v6008 = vpack.c.b16 %v4128, %v4126
        %v6009 = vpack.c.b16 %v4129, %v4127
        %v6010 = vpack.c.b16 %v4132, %v4130
        %v6011 = vpack.c.b16 %v4133, %v4131
        %v6012 = vpack.c.b16 %v4136, %v4134
        %v6013 = vpack.c.b16 %v4137, %v4135
        %v6014 = vpack.c.b16 %v4140, %v4138
        %v6015 = vpack.c.b16 %v4141, %v4139
        %v6016 = vpack.c.b16 %v4144, %v4142
        %v6017 = vpack.c.b16 %v4145, %v4143
        %v6018 = vpack.c.b16 %v4148, %v4146
        %v6019 = vpack.c.b16 %v4149, %v4147
        %v6020 = vpack.c.b16 %v4152, %v4150
        %v6021 = vpack.c.b16 %v4153, %v4151
        %v6022 = vpack.c.b16 %v4156, %v4154
        %v6023 = vpack.c.b16 %v4157, %v4155
        %v6024 = vpack.c.b16 %v4160, %v4158
        %v6025 = vpack.c.b16 %v4161, %v4159
        %v6026 = vpack.c.b16 %v4164, %v4162
        %v6027 = vpack.c.b16 %v4165, %v4163
        %v6028 = vpack.c.b16 %v4168, %v4166
        %v6029 = vpack.c.b16 %v4169, %v4167
        %v6030 = vpack.c.b16 %v4172, %v4170
        %v6031 = vpack.c.b16 %v4173, %v4171
        %v6032 = vpack.c.b16 %v4176, %v4174
        %v6033 = vpack.c.b16 %v4177, %v4175
        %v6034 = vpack.c.b16 %v4180, %v4178
        %v6035 = vpack.c.b16 %v4181, %v4179
        %v6036 = vpack.c.b16 %v4184, %v4182
        %v6037 = vpack.c.b16 %v4185, %v4183
        %v6038 = vpack.c.b16 %v4188, %v4186
        %v6039 = vpack.c.b16 %v4189, %v4187
        %v6040 = vpack.c.b16 %v4192, %v4190
        %v6041 = vpack.c.b16 %v4193, %v4191
        %v6042 = vpack.c.b16 %v4196, %v4194
        %v6043 = vpack.c.b16 %v4197, %v4195
        %v6044 = vpack.c.b16 %v4200, %v4198
        %v6045 = vpack.c.b16 %v4201, %v4199
        %v6046 = vpack.c.b16 %v4204, %v4202
        %v6047 = vpack.c.b16 %v4205, %v4203
        %v6048 = vpack.c.b16 %v4208, %v4206
        %v6049 = vpack.c.b16 %v4209, %v4207
        %v6050 = vpack.c.b16 %v4212, %v4210
        %v6051 = vpack.c.b16 %v4213, %v4211
        %v6052 = vpack.c.b16 %v4216, %v4214
        %v6053 = vpack.c.b16 %v4217, %v4215
        %v6054 = vpack.c.b16 %v4220, %v4218
        %v6055 = vpack.c.b16 %v4221, %v4219
        %v6056 = vpack.c.b16 %v4224, %v4222
        %v6057 = vpack.c.b16 %v4225, %v4223
        %v6058 = vpack.c.b16 %v4228, %v4226
        %v6059 = vpack.c.b16 %v4229, %v4227
        %v6060 = vpack.c.b16 %v4232, %v4230
        %v6061 = vpack.c.b16 %v4233, %v4231
        %v6062 = vpack.c.b16 %v4236, %v4234
        %v6063 = vpack.c.b16 %v4237, %v4235
        %v6064 = vpack.c.b16 %v4240, %v4238
        %v6065 = vpack.c.b16 %v4241, %v4239
        %v6066 = vpack.c.b16 %v4244, %v4242
        %v6067 = vpack.c.b16 %v4245, %v4243
        %v6068 = vpack.c.b16 %v4248, %v4246
        %v6069 = vpack.c.b16 %v4249, %v4247
        %v6070 = vpack.c.b16 %v4252, %v4250
        %v6071 = vpack.c.b16 %v4253, %v4251
        %v6072 = vpack.c.b16 %v4256, %v4254
        %v6073 = vpack.c.b16 %v4257, %v4255
        %v6074 = vpack.c.b16 %v4260, %v4258
        %v6075 = vpack.c.b16 %v4261, %v4259
        %v6076 = vpack.c.b16 %v4264, %v4262
        %v6077 = vpack.c.b16 %v4265, %v4263
        %v6078 = vpack.c.b16 %v4268, %v4266
        %v6079 = vpack.c.b16 %v4269, %v4267
        %v6080 = vpack.c.b16 %v4272, %v4270
        %v6081 = vpack.c.b16 %v4273, %v4271
        %v6082 = vpack.c.b16 %v4276, %v4274
        %v6083 = vpack.c.b16 %v4277, %v4275
        %v6084 = vpack.c.b16 %v4280, %v4278
        %v6085 = vpack.c.b16 %v4281, %v4279
        %v6086 = vpack.c.b16 %v4284, %v4282
        %v6087 = vpack.c.b16 %v4285, %v4283
        %v6088 = vpack.c.b16 %v4288, %v4286
        %v6089 = vpack.c.b16 %v4289, %v4287
        %v6090 = vpack.c.b16 %v4292, %v4290
        %v6091 = vpack.c.b16 %v4293, %v4291
        %v6092 = vpack.c.b16 %v4296, %v4294
        %v6093 = vpack.c.b16 %v4297, %v4295
        %v6094 = vpack.c.b16 %v4300, %v4298
        %v6095 = vpack.c.b16 %v4301, %v4299
        %v6096 = vpack.c.b16 %v4304, %v4302
        %v6097 = vpack.c.b16 %v4305, %v4303
        %v6098 = vpack.c.b16 %v4308, %v4306
        %v6099 = vpack.c.b16 %v4309, %v4307
        %v6100 = vpack.c.b16 %v4312, %v4310
        %v6101 = vpack.c.b16 %v4313, %v4311
        %v6102 = vpack.c.b16 %v4316, %v4314
        %v6103 = vpack.c.b16 %v4317, %v4315
        %v6104 = vpack.c.b16 %v4320, %v4318
        %v6105 = vpack.c.b16 %v4321, %v4319
        %v6106 = vpack.c.b16 %v4324, %v4322
        %v6107 = vpack.c.b16 %v4325, %v4323
        %v6108 = vpack.c.b16 %v4328, %v4326
        %v6109 = vpack.c.b16 %v4329, %v4327
        %v6110 = vpack.c.b16 %v4332, %v4330
        %v6111 = vpack.c.b16 %v4333, %v4331
        %v6112 = vpack.c.b16 %v4336, %v4334
        %v6113 = vpack.c.b16 %v4337, %v4335
        %v6114 = vpack.c.b16 %v4340, %v4338
        %v6115 = vpack.c.b16 %v4341, %v4339
        %v6116 = vpack.c.b16 %v4344, %v4342
        %v6117 = vpack.c.b16 %v4345, %v4343
        %v6118 = vpack.c.b16 %v4348, %v4346
        %v6119 = vpack.c.b16 %v4349, %v4347
        %v6120 = vpack.c.b16 %v4352, %v4350
        %v6121 = vpack.c.b16 %v4353, %v4351
        %v6122 = vpack.c.b16 %v4356, %v4354
        %v6123 = vpack.c.b16 %v4357, %v4355
        %v6124 = vpack.c.b16 %v4360, %v4358
        %v6125 = vpack.c.b16 %v4361, %v4359
        %v6126 = vpack.c.b16 %v4364, %v4362
        %v6127 = vpack.c.b16 %v4365, %v4363
        %v6128 = vpack.c.b16 %v4368, %v4366
        %v6129 = vpack.c.b16 %v4369, %v4367
        %v6130 = vpack.c.b16 %v4372, %v4370
        %v6131 = vpack.c.b16 %v4373, %v4371
        %v6132 = vpack.c.b16 %v4376, %v4374
        %v6133 = vpack.c.b16 %v4377, %v4375
        %v6134 = vpack.c.b16 %v4380, %v4378
        %v6135 = vpack.c.b16 %v4381, %v4379
        %v6136 = vpack.c.b16 %v4384, %v4382
        %v6137 = vpack.c.b16 %v4385, %v4383
        %v6138 = vpack.c.b16 %v4388, %v4386
        %v6139 = vpack.c.b16 %v4389, %v4387
        %v6140 = vpack.c.b16 %v4392, %v4390
        %v6141 = vpack.c.b16 %v4393, %v4391
        %v6142 = vpack.c.b16 %v4396, %v4394
        %v6143 = vpack.c.b16 %v4397, %v4395
        %v6144 = vpack.c.b16 %v4400, %v4398
        %v6145 = vpack.c.b16 %v4401, %v4399
        %v6146 = vpack.c.b16 %v4404, %v4402
        %v6147 = vpack.c.b16 %v4405, %v4403
        %v6148 = vpack.c.b16 %v4408, %v4406
        %v6149 = vpack.c.b16 %v4409, %v4407
        %v6150 = vpack.c.b16 %v4412, %v4410
        %v6151 = vpack.c.b16 %v4413, %v4411
        %v6152 = vpack.c.b16 %v4416, %v4414
        %v6153 = vpack.c.b16 %v4417, %v4415
        %v6154 = vpack.c.b16 %v4420, %v4418
        %v6155 = vpack.c.b16 %v4421, %v4419
        %v6156 = vpack.c.b16 %v4424, %v4422
        %v6157 = vpack.c.b16 %v4425, %v4423
        %v6158 = vpack.c.b16 %v4428, %v4426
        %v6159 = vpack.c.b16 %v4429, %v4427
        %v6160 = vpack.c.b16 %v4432, %v4430
        %v6161 = vpack.c.b16 %v4433, %v4431
        %v6162 = vpack.c.b16 %v4436, %v4434
        %v6163 = vpack.c.b16 %v4437, %v4435
        %v6164 = vpack.c.b16 %v4440, %v4438
        %v6165 = vpack.c.b16 %v4441, %v4439
        %v6166 = vpack.c.b16 %v4444, %v4442
        %v6167 = vpack.c.b16 %v4445, %v4443
        %v6168 = vpack.c.b16 %v4448, %v4446
        %v6169 = vpack.c.b16 %v4449, %v4447
        %v6170 = vpack.c.b16 %v4452, %v4450
        %v6171 = vpack.c.b16 %v4453, %v4451
        %v6172 = vpack.c.b16 %v4456, %v4454
        %v6173 = vpack.c.b16 %v4457, %v4455
        %v6174 = vpack.c.b16 %v4460, %v4458
        %v6175 = vpack.c.b16 %v4461, %v4459
        %v6176 = vpack.c.b16 %v4464, %v4462
        %v6177 = vpack.c.b16 %v4465, %v4463
        %v6178 = vpack.c.b16 %v4468, %v4466
        %v6179 = vpack.c.b16 %v4469, %v4467
        %v6180 = vpack.c.b16 %v4472, %v4470
        %v6181 = vpack.c.b16 %v4473, %v4471
        %v6182 = vpack.c.b16 %v4476, %v4474
        %v6183 = vpack.c.b16 %v4477, %v4475
        %v6184 = vpack.c.b16 %v4480, %v4478
        %v6185 = vpack.c.b16 %v4481, %v4479
        %v6186 = vpack.c.b16 %v4484, %v4482
        %v6187 = vpack.c.b16 %v4485, %v4483
        %v6188 = vpack.c.b16 %v4488, %v4486
        %v6189 = vpack.c.b16 %v4489, %v4487
        %v6190 = vpack.c.b16 %v4492, %v4490
        %v6191 = vpack.c.b16 %v4493, %v4491
        %v6192 = vpack.c.b16 %v4496, %v4494
        %v6193 = vpack.c.b16 %v4497, %v4495
        %v6194 = vpack.c.b16 %v4500, %v4498
        %v6195 = vpack.c.b16 %v4501, %v4499
        %v6196 = vpack.c.b16 %v4504, %v4502
        %v6197 = vpack.c.b16 %v4505, %v4503
        %v6198 = vpack.c.b16 %v4508, %v4506
        %v6199 = vpack.c.b16 %v4509, %v4507
        %v6200 = vpack.c.b16 %v4512, %v4510
        %v6201 = vpack.c.b16 %v4513, %v4511
        %v6202 = vpack.c.b16 %v4516, %v4514
        %v6203 = vpack.c.b16 %v4517, %v4515
        %v6204 = vpack.c.b16 %v4520, %v4518
        %v6205 = vpack.c.b16 %v4521, %v4519
        %v6206 = vpack.c.b16 %v4524, %v4522
        %v6207 = vpack.c.b16 %v4525, %v4523
        %v6208 = vpack.c.b16 %v4528, %v4526
        %v6209 = vpack.c.b16 %v4529, %v4527
        %v6210 = vpack.c.b16 %v4532, %v4530
        %v6211 = vpack.c.b16 %v4533, %v4531
        %v6212 = vpack.c.b16 %v4536, %v4534
        %v6213 = vpack.c.b16 %v4537, %v4535
        %v6214 = vpack.c.b16 %v4540, %v4538
        %v6215 = vpack.c.b16 %v4541, %v4539
        %v6216 = vpack.c.b16 %v4544, %v4542
        %v6217 = vpack.c.b16 %v4545, %v4543
        %v6218 = vpack.c.b16 %v4548, %v4546
        %v6219 = vpack.c.b16 %v4549, %v4547
        %v6220 = vpack.c.b16 %v4552, %v4550
        %v6221 = vpack.c.b16 %v4553, %v4551
        %v6222 = vpack.c.b16 %v4556, %v4554
        %v6223 = vpack.c.b16 %v4557, %v4555
        %v6224 = vpack.c.b16 %v4560, %v4558
        %v6225 = vpack.c.b16 %v4561, %v4559
        %v6226 = vpack.c.b16 %v4564, %v4562
        %v6227 = vpack.c.b16 %v4565, %v4563
        %v6228 = vpack.c.b16 %v4568, %v4566
        %v6229 = vpack.c.b16 %v4569, %v4567
        %v6230 = vpack.c.b16 %v4572, %v4570
        %v6231 = vpack.c.b16 %v4573, %v4571
        %v6232 = vpack.c.b16 %v4576, %v4574
        %v6233 = vpack.c.b16 %v4577, %v4575
        %v6234 = vpack.c.b16 %v4580, %v4578
        %v6235 = vpack.c.b16 %v4581, %v4579
        %v6236 = vpack.c.b16 %v4584, %v4582
        %v6237 = vpack.c.b16 %v4585, %v4583
        %v6238 = vpack.c.b16 %v4588, %v4586
        %v6239 = vpack.c.b16 %v4589, %v4587
        %v6240 = vpack.c.b16 %v4592, %v4590
        %v6241 = vpack.c.b16 %v4593, %v4591
        %v6242 = vpack.c.b16 %v4596, %v4594
        %v6243 = vpack.c.b16 %v4597, %v4595
        %v6244 = vpack.c.b16 %v4600, %v4598
        %v6245 = vpack.c.b16 %v4601, %v4599
        %v6246 = vpack.c.b16 %v4604, %v4602
        %v6247 = vpack.c.b16 %v4605, %v4603
        %v6248 = vpack.c.b16 %v4608, %v4606
        %v6249 = vpack.c.b16 %v4609, %v4607
        %v6250 = vpack.c.b16 %v4612, %v4610
        %v6251 = vpack.c.b16 %v4613, %v4611
        %v6252 = vpack.c.b16 %v4616, %v4614
        %v6253 = vpack.c.b16 %v4617, %v4615
        %v6254 = vpack.c.b16 %v4620, %v4618
        %v6255 = vpack.c.b16 %v4621, %v4619
        %v6256 = vpack.c.b16 %v4624, %v4622
        %v6257 = vpack.c.b16 %v4625, %v4623
        %v6258 = vpack.c.b16 %v4628, %v4626
        %v6259 = vpack.c.b16 %v4629, %v4627
        %v6260 = vpack.c.b16 %v4632, %v4630
        %v6261 = vpack.c.b16 %v4633, %v4631
        %v6262 = vpack.c.b16 %v4636, %v4634
        %v6263 = vpack.c.b16 %v4637, %v4635
        %v6264 = vpack.c.b16 %v4640, %v4638
        %v6265 = vpack.c.b16 %v4641, %v4639
        %v6266 = vpack.c.b16 %v4644, %v4642
        %v6267 = vpack.c.b16 %v4645, %v4643
        %v6268 = vpack.c.b16 %v4648, %v4646
        %v6269 = vpack.c.b16 %v4649, %v4647
        %v6270 = vpack.c.b16 %v4652, %v4650
        %v6271 = vpack.c.b16 %v4653, %v4651
        %v6272 = vpack.c.b16 %v4656, %v4654
        %v6273 = vpack.c.b16 %v4657, %v4655
        %v6274 = vpack.c.b16 %v4660, %v4658
        %v6275 = vpack.c.b16 %v4661, %v4659
        %v6276 = vpack.c.b16 %v4664, %v4662
        %v6277 = vpack.c.b16 %v4665, %v4663
        %v6278 = vpack.c.b16 %v4668, %v4666
        %v6279 = vpack.c.b16 %v4669, %v4667
        %v6280 = vpack.c.b16 %v4672, %v4670
        %v6281 = vpack.c.b16 %v4673, %v4671
        %v6282 = vpack.c.b16 %v4676, %v4674
        %v6283 = vpack.c.b16 %v4677, %v4675
        %v6284 = vpack.c.b16 %v4680, %v4678
        %v6285 = vpack.c.b16 %v4681, %v4679
        %v6286 = vpack.c.b16 %v4684, %v4682
        %v6287 = vpack.c.b16 %v4685, %v4683
        %v6288 = vpack.c.b16 %v4688, %v4686
        %v6289 = vpack.c.b16 %v4689, %v4687
        %v6290 = vpack.c.b16 %v4692, %v4690
        %v6291 = vpack.c.b16 %v4693, %v4691
        %v6292 = vpack.c.b16 %v4696, %v4694
        %v6293 = vpack.c.b16 %v4697, %v4695
        %v6294 = vpack.c.b16 %v4700, %v4698
        %v6295 = vpack.c.b16 %v4701, %v4699
        %v6296 = vpack.c.b16 %v4704, %v4702
        %v6297 = vpack.c.b16 %v4705, %v4703
        %v6298 = vpack.c.b16 %v4708, %v4706
        %v6299 = vpack.c.b16 %v4709, %v4707
        %v6300 = vpack.c.b16 %v4712, %v4710
        %v6301 = vpack.c.b16 %v4713, %v4711
        %v6302 = vpack.c.b16 %v4716, %v4714
        %v6303 = vpack.c.b16 %v4717, %v4715
        %v6304 = vpack.c.b16 %v4720, %v4718
        %v6305 = vpack.c.b16 %v4721, %v4719
        %v6306 = vpack.c.b16 %v4724, %v4722
        %v6307 = vpack.c.b16 %v4725, %v4723
        %v6308 = vpack.c.b16 %v4728, %v4726
        %v6309 = vpack.c.b16 %v4729, %v4727
        %v6310 = vpack.c.b16 %v4732, %v4730
        %v6311 = vpack.c.b16 %v4733, %v4731
        %v6312 = vpack.c.b16 %v4736, %v4734
        %v6313 = vpack.c.b16 %v4737, %v4735
        %v6314 = vpack.c.b16 %v4740, %v4738
        %v6315 = vpack.c.b16 %v4741, %v4739
        %v6316 = vpack.c.b16 %v4744, %v4742
        %v6317 = vpack.c.b16 %v4745, %v4743
        %v6318 = vpack.c.b16 %v4748, %v4746
        %v6319 = vpack.c.b16 %v4749, %v4747
        %v6320 = vpack.c.b16 %v4752, %v4750
        %v6321 = vpack.c.b16 %v4753, %v4751
        %v6322 = vpack.c.b16 %v4756, %v4754
        %v6323 = vpack.c.b16 %v4757, %v4755
        %v6324 = vpack.c.b16 %v4760, %v4758
        %v6325 = vpack.c.b16 %v4761, %v4759
        %v6326 = vpack.c.b16 %v4764, %v4762
        %v6327 = vpack.c.b16 %v4765, %v4763
        %v6328 = vpack.c.b16 %v4768, %v4766
        %v6329 = vpack.c.b16 %v4769, %v4767
        %v6330 = vpack.c.b16 %v4772, %v4770
        %v6331 = vpack.c.b16 %v4773, %v4771
        %v6332 = vpack.c.b16 %v4776, %v4774
        %v6333 = vpack.c.b16 %v4777, %v4775
        %v6334 = vpack.c.b16 %v4780, %v4778
        %v6335 = vpack.c.b16 %v4781, %v4779
        %v6336 = vpack.c.b16 %v4784, %v4782
        %v6337 = vpack.c.b16 %v4785, %v4783
        %v6338 = vpack.c.b16 %v4788, %v4786
        %v6339 = vpack.c.b16 %v4789, %v4787
        %v6340 = vpack.c.b16 %v4792, %v4790
        %v6341 = vpack.c.b16 %v4793, %v4791
        %v6342 = vpack.c.b16 %v4796, %v4794
        %v6343 = vpack.c.b16 %v4797, %v4795
        %v6344 = vpack.c.b16 %v4800, %v4798
        %v6345 = vpack.c.b16 %v4801, %v4799
        %v6346 = vpack.c.b16 %v4804, %v4802
        %v6347 = vpack.c.b16 %v4805, %v4803
        %v6348 = vpack.c.b16 %v4808, %v4806
        %v6349 = vpack.c.b16 %v4809, %v4807
        %v6350 = vpack.c.b16 %v4812, %v4810
        %v6351 = vpack.c.b16 %v4813, %v4811
        %v6352 = vpack.c.b16 %v4816, %v4814
        %v6353 = vpack.c.b16 %v4817, %v4815
        %v6354 = vpack.c.b16 %v4820, %v4818
        %v6355 = vpack.c.b16 %v4821, %v4819
        %v6356 = vpack.c.b16 %v4824, %v4822
        %v6357 = vpack.c.b16 %v4825, %v4823
        %v6358 = vpack.c.b16 %v4828, %v4826
        %v6359 = vpack.c.b16 %v4829, %v4827
        %v6360 = vpack.c.b16 %v4832, %v4830
        %v6361 = vpack.c.b16 %v4833, %v4831
        %v6362 = vpack.c.b16 %v4836, %v4834
        %v6363 = vpack.c.b16 %v4837, %v4835
        %v6364 = vpack.c.b16 %v4840, %v4838
        %v6365 = vpack.c.b16 %v4841, %v4839
        %v6366 = vpack.c.b16 %v4844, %v4842
        %v6367 = vpack.c.b16 %v4845, %v4843
        %v6368 = vpack.c.b16 %v4848, %v4846
        %v6369 = vpack.c.b16 %v4849, %v4847
        %v6370 = vpack.c.b16 %v4852, %v4850
        %v6371 = vpack.c.b16 %v4853, %v4851
        %v6372 = vpack.c.b16 %v4856, %v4854
        %v6373 = vpack.c.b16 %v4857, %v4855
        %v6374 = vpack.c.b16 %v4860, %v4858
        %v6375 = vpack.c.b16 %v4861, %v4859
        %v6376 = vpack.c.b16 %v4864, %v4862
        %v6377 = vpack.c.b16 %v4865, %v4863
        %v6378 = vpack.c.b16 %v4868, %v4866
        %v6379 = vpack.c.b16 %v4869, %v4867
        %v6380 = vpack.c.b16 %v4872, %v4870
        %v6381 = vpack.c.b16 %v4873, %v4871
        %v6382 = vpack.c.b16 %v4876, %v4874
        %v6383 = vpack.c.b16 %v4877, %v4875
        %v6384 = vpack.c.b16 %v4880, %v4878
        %v6385 = vpack.c.b16 %v4881, %v4879
        %v6386 = vpack.c.b16 %v4884, %v4882
        %v6387 = vpack.c.b16 %v4885, %v4883
        %v6388 = vpack.c.b16 %v4888, %v4886
        %v6389 = vpack.c.b16 %v4889, %v4887
        %v6390 = vpack.c.b16 %v4892, %v4890
        %v6391 = vpack.c.b16 %v4893, %v4891
        %v6392 = vpack.c.b16 %v4896, %v4894
        %v6393 = vpack.c.b16 %v4897, %v4895
        %v6394 = vpack.c.b16 %v4900, %v4898
        %v6395 = vpack.c.b16 %v4901, %v4899
        %v6396 = vpack.c.b16 %v4904, %v4902
        %v6397 = vpack.c.b16 %v4905, %v4903
        %v6398 = vpack.c.b16 %v4908, %v4906
        %v6399 = vpack.c.b16 %v4909, %v4907
        %v6400 = vpack.c.b16 %v4912, %v4910
        %v6401 = vpack.c.b16 %v4913, %v4911
        %v6402 = vpack.c.b16 %v4916, %v4914
        %v6403 = vpack.c.b16 %v4917, %v4915
        %v6404 = vpack.c.b16 %v4920, %v4918
        %v6405 = vpack.c.b16 %v4921, %v4919
        %v6406 = vpack.c.b16 %v4924, %v4922
        %v6407 = vpack.c.b16 %v4925, %v4923
        %v6408 = vpack.c.b16 %v4928, %v4926
        %v6409 = vpack.c.b16 %v4929, %v4927
        %v6410 = vpack.c.b16 %v4932, %v4930
        %v6411 = vpack.c.b16 %v4933, %v4931
        %v6412 = vpack.c.b16 %v4936, %v4934
        %v6413 = vpack.c.b16 %v4937, %v4935
        %v6414 = vpack.c.b16 %v4940, %v4938
        %v6415 = vpack.c.b16 %v4941, %v4939
        %v6416 = vpack.c.b16 %v4944, %v4942
        %v6417 = vpack.c.b16 %v4945, %v4943
        %v6418 = vpack.c.b16 %v4948, %v4946
        %v6419 = vpack.c.b16 %v4949, %v4947
        %v6420 = vpack.c.b16 %v4952, %v4950
        %v6421 = vpack.c.b16 %v4953, %v4951
        %v6422 = vpack.c.b16 %v4956, %v4954
        %v6423 = vpack.c.b16 %v4957, %v4955
        %v6424 = vpack.c.b16 %v4960, %v4958
        %v6425 = vpack.c.b16 %v4961, %v4959
        %v6426 = vpack.c.b16 %v4964, %v4962
        %v6427 = vpack.c.b16 %v4965, %v4963
        %v6428 = vpack.c.b16 %v4968, %v4966
        %v6429 = vpack.c.b16 %v4969, %v4967
        %v6430 = vpack.c.b16 %v4972, %v4970
        %v6431 = vpack.c.b16 %v4973, %v4971
        %v6432 = vpack.c.b16 %v4976, %v4974
        %v6433 = vpack.c.b16 %v4977, %v4975
        %v6434 = vpack.c.b16 %v4980, %v4978
        %v6435 = vpack.c.b16 %v4981, %v4979
        %v6436 = vpack.c.b16 %v4984, %v4982
        %v6437 = vpack.c.b16 %v4985, %v4983
        %v6438 = vpack.c.b16 %v4988, %v4986
        %v6439 = vpack.c.b16 %v4989, %v4987
        %v6440 = vpack.c.b16 %v4992, %v4990
        %v6441 = vpack.c.b16 %v4993, %v4991
        %v6442 = vpack.c.b16 %v4996, %v4994
        %v6443 = vpack.c.b16 %v4997, %v4995
        %v6444 = vpack.c.b16 %v5000, %v4998
        %v6445 = vpack.c.b16 %v5001, %v4999
        %v6446 = vpack.c.b16 %v5004, %v5002
        %v6447 = vpack.c.b16 %v5005, %v5003
        %v6448 = vpack.c.b16 %v5008, %v5006
        %v6449 = vpack.c.b16 %v5009, %v5007
        %v6450 = vpack.c.b16 %v5012, %v5010
        %v6451 = vpack.c.b16 %v5013, %v5011
        %v6452 = vpack.c.b16 %v5016, %v5014
        %v6453 = vpack.c.b16 %v5017, %v5015
        %v6454 = vpack.c.b16 %v5020, %v5018
        %v6455 = vpack.c.b16 %v5021, %v5019
        %v6456 = vpack.c.b16 %v5024, %v5022
        %v6457 = vpack.c.b16 %v5025, %v5023
        %v6458 = vpack.c.b16 %v5028, %v5026
        %v6459 = vpack.c.b16 %v5029, %v5027
        %v6460 = vpack.c.b16 %v5032, %v5030
        %v6461 = vpack.c.b16 %v5033, %v5031
        %v6462 = vpack.c.b16 %v5036, %v5034
        %v6463 = vpack.c.b16 %v5037, %v5035
        %v6464 = vpack.c.b16 %v5040, %v5038
        %v6465 = vpack.c.b16 %v5041, %v5039
        %v6466 = vpack.c.b16 %v5044, %v5042
        %v6467 = vpack.c.b16 %v5045, %v5043
        %v6468 = vpack.c.b16 %v5048, %v5046
        %v6469 = vpack.c.b16 %v5049, %v5047
        %v6470 = vpack.c.b16 %v5052, %v5050
        %v6471 = vpack.c.b16 %v5053, %v5051
        %v6472 = vpack.c.b16 %v5056, %v5054
        %v6473 = vpack.c.b16 %v5057, %v5055
        %v6474 = vpack.c.b16 %v5060, %v5058
        %v6475 = vpack.c.b16 %v5061, %v5059
        %v6476 = vpack.c.b16 %v5064, %v5062
        %v6477 = vpack.c.b16 %v5065, %v5063
        %v6478 = vpack.c.b16 %v5068, %v5066
        %v6479 = vpack.c.b16 %v5069, %v5067
        %v6480 = vpack.c.b16 %v5072, %v5070
        %v6481 = vpack.c.b16 %v5073, %v5071
        %v6482 = vpack.c.b16 %v5076, %v5074
        %v6483 = vpack.c.b16 %v5077, %v5075
        %v6484 = vpack.c.b16 %v5080, %v5078
        %v6485 = vpack.c.b16 %v5081, %v5079
        %v6486 = vpack.c.b16 %v5084, %v5082
        %v6487 = vpack.c.b16 %v5085, %v5083
        %v6488 = vpack.c.b16 %v5088, %v5086
        %v6489 = vpack.c.b16 %v5089, %v5087
        %v6490 = vpack.c.b16 %v5092, %v5090
        %v6491 = vpack.c.b16 %v5093, %v5091
        %v6492 = vpack.c.b16 %v5096, %v5094
        %v6493 = vpack.c.b16 %v5097, %v5095
        %v6494 = vpack.c.b16 %v5100, %v5098
        %v6495 = vpack.c.b16 %v5101, %v5099
        %v6496 = vpack.c.b16 %v5104, %v5102
        %v6497 = vpack.c.b16 %v5105, %v5103
        %v6498 = vpack.c.b16 %v5108, %v5106
        %v6499 = vpack.c.b16 %v5109, %v5107
        %v6500 = vpack.c.b16 %v5112, %v5110
        %v6501 = vpack.c.b16 %v5113, %v5111
        %v6502 = vpack.c.b16 %v5116, %v5114
        %v6503 = vpack.c.b16 %v5117, %v5115
        %v6504 = vpack.c.b16 %v5120, %v5118
        %v6505 = vpack.c.b16 %v5121, %v5119
        %v6506 = vpack.c.b16 %v5124, %v5122
        %v6507 = vpack.c.b16 %v5125, %v5123
        %v6508 = vpack.c.b16 %v5128, %v5126
        %v6509 = vpack.c.b16 %v5129, %v5127
        %v6510 = vpack.c.b16 %v5132, %v5130
        %v6511 = vpack.c.b16 %v5133, %v5131
        %v6512 = vpack.c.b16 %v5136, %v5134
        %v6513 = vpack.c.b16 %v5137, %v5135
        %v6514 = vpack.c.b16 %v5140, %v5138
        %v6515 = vpack.c.b16 %v5141, %v5139
        %v6516 = vpack.c.b16 %v5144, %v5142
        %v6517 = vpack.c.b16 %v5145, %v5143
        %v6518 = vpack.c.b16 %v5148, %v5146
        %v6519 = vpack.c.b16 %v5149, %v5147
        %v6520 = vpack.c.b16 %v5152, %v5150
        %v6521 = vpack.c.b16 %v5153, %v5151
        %v6522 = vpack.c.b16 %v5156, %v5154
        %v6523 = vpack.c.b16 %v5157, %v5155
        %v6524 = vpack.c.b16 %v5160, %v5158
        %v6525 = vpack.c.b16 %v5161, %v5159
        %v6526 = vpack.c.b16 %v5164, %v5162
        %v6527 = vpack.c.b16 %v5165, %v5163
        %v6528 = vpack.c.b16 %v5168, %v5166
        %v6529 = vpack.c.b16 %v5169, %v5167
        %v6530 = vpack.c.b16 %v5172, %v5170
        %v6531 = vpack.c.b16 %v5173, %v5171
        %v6532 = vpack.c.b16 %v5176, %v5174
        %v6533 = vpack.c.b16 %v5177, %v5175
        %v6534 = vpack.c.b16 %v5180, %v5178
        %v6535 = vpack.c.b16 %v5181, %v5179
        %v6536 = vpack.c.b16 %v5184, %v5182
        %v6537 = vpack.c.b16 %v5185, %v5183
        %v6538 = vpack.c.b16 %v5188, %v5186
        %v6539 = vpack.c.b16 %v5189, %v5187
        %v6540 = vpack.c.b16 %v5192, %v5190
        %v6541 = vpack.c.b16 %v5193, %v5191
        %v6542 = vpack.c.b16 %v5196, %v5194
        %v6543 = vpack.c.b16 %v5197, %v5195
        %v6544 = vpack.c.b16 %v5200, %v5198
        %v6545 = vpack.c.b16 %v5201, %v5199
        %v6546 = vpack.c.b16 %v5204, %v5202
        %v6547 = vpack.c.b16 %v5205, %v5203
        %v6548 = vpack.c.b16 %v5208, %v5206
        %v6549 = vpack.c.b16 %v5209, %v5207
        %v6550 = vpack.c.b16 %v5212, %v5210
        %v6551 = vpack.c.b16 %v5213, %v5211
        %v6552 = vpack.c.b16 %v5216, %v5214
        %v6553 = vpack.c.b16 %v5217, %v5215
        %v6554 = vpack.c.b16 %v5220, %v5218
        %v6555 = vpack.c.b16 %v5221, %v5219
        %v6556 = vpack.c.b16 %v5224, %v5222
        %v6557 = vpack.c.b16 %v5225, %v5223
        %v6558 = vpack.c.b16 %v5228, %v5226
        %v6559 = vpack.c.b16 %v5229, %v5227
        %v6560 = vpack.c.b16 %v5232, %v5230
        %v6561 = vpack.c.b16 %v5233, %v5231
        %v6562 = vpack.c.b16 %v5236, %v5234
        %v6563 = vpack.c.b16 %v5237, %v5235
        %v6564 = vpack.c.b16 %v5240, %v5238
        %v6565 = vpack.c.b16 %v5241, %v5239
        %v6566 = vpack.c.b16 %v5244, %v5242
        %v6567 = vpack.c.b16 %v5245, %v5243
        %v6568 = vpack.c.b16 %v5248, %v5246
        %v6569 = vpack.c.b16 %v5249, %v5247
        %v6570 = vpack.c.b16 %v5252, %v5250
        %v6571 = vpack.c.b16 %v5253, %v5251
        %v6572 = vpack.c.b16 %v5256, %v5254
        %v6573 = vpack.c.b16 %v5257, %v5255
        %v6574 = vpack.c.b16 %v5260, %v5258
        %v6575 = vpack.c.b16 %v5261, %v5259
        %v6576 = vpack.c.b16 %v5264, %v5262
        %v6577 = vpack.c.b16 %v5265, %v5263
        %v6578 = vpack.c.b16 %v5268, %v5266
        %v6579 = vpack.c.b16 %v5269, %v5267
        %v6580 = vpack.c.b16 %v5272, %v5270
        %v6581 = vpack.c.b16 %v5273, %v5271
        %v6582 = vpack.c.b16 %v5276, %v5274
        %v6583 = vpack.c.b16 %v5277, %v5275
        %v6584 = vpack.c.b16 %v5280, %v5278
        %v6585 = vpack.c.b16 %v5281, %v5279
        %v6586 = vpack.c.b16 %v5284, %v5282
        %v6587 = vpack.c.b16 %v5285, %v5283
        %v6588 = vpack.c.b16 %v5288, %v5286
        %v6589 = vpack.c.b16 %v5289, %v5287
        %v6590 = vpack.c.b16 %v5292, %v5290
        %v6591 = vpack.c.b16 %v5293, %v5291
        %v6592 = vpack.c.b16 %v5296, %v5294
        %v6593 = vpack.c.b16 %v5297, %v5295
        %v6594 = vpack.c.b16 %v5300, %v5298
        %v6595 = vpack.c.b16 %v5301, %v5299
        %v6596 = vpack.c.b16 %v5304, %v5302
        %v6597 = vpack.c.b16 %v5305, %v5303
        %v6598 = vpack.c.b16 %v5308, %v5306
        %v6599 = vpack.c.b16 %v5309, %v5307
        %v6600 = vpack.c.b16 %v5312, %v5310
        %v6601 = vpack.c.b16 %v5313, %v5311
        %v6602 = vpack.c.b16 %v5316, %v5314
        %v6603 = vpack.c.b16 %v5317, %v5315
        %v6604 = vpack.c.b16 %v5320, %v5318
        %v6605 = vpack.c.b16 %v5321, %v5319
        %v6606 = vpack.c.b16 %v5324, %v5322
        %v6607 = vpack.c.b16 %v5325, %v5323
        %v6608 = vpack.c.b16 %v5328, %v5326
        %v6609 = vpack.c.b16 %v5329, %v5327
        %v6610 = vpack.c.b16 %v5332, %v5330
        %v6611 = vpack.c.b16 %v5333, %v5331
        %v6612 = vpack.c.b16 %v5336, %v5334
        %v6613 = vpack.c.b16 %v5337, %v5335
        %v6614 = vpack.c.b16 %v5340, %v5338
        %v6615 = vpack.c.b16 %v5341, %v5339
        %v6616 = vpack.c.b16 %v5344, %v5342
        %v6617 = vpack.c.b16 %v5345, %v5343
        %v6618 = vpack.c.b16 %v5348, %v5346
        %v6619 = vpack.c.b16 %v5349, %v5347
        %v6620 = vpack.c.b16 %v5352, %v5350
        %v6621 = vpack.c.b16 %v5353, %v5351
        %v6622 = vpack.c.b16 %v5356, %v5354
        %v6623 = vpack.c.b16 %v5357, %v5355
        %v6624 = vpack.c.b16 %v5360, %v5358
        %v6625 = vpack.c.b16 %v5361, %v5359
        %v6626 = vpack.c.b16 %v5364, %v5362
        %v6627 = vpack.c.b16 %v5365, %v5363
        %v6628 = vpack.c.b16 %v5368, %v5366
        %v6629 = vpack.c.b16 %v5369, %v5367
        %v6630 = vpack.c.b16 %v5372, %v5370
        %v6631 = vpack.c.b16 %v5373, %v5371
        %v6632 = vpack.c.b16 %v5376, %v5374
        %v6633 = vpack.c.b16 %v5377, %v5375
        %v6634 = vpack.c.b16 %v5380, %v5378
        %v6635 = vpack.c.b16 %v5381, %v5379
        %v6636 = vpack.c.b16 %v5384, %v5382
        %v6637 = vpack.c.b16 %v5385, %v5383
        %v6638 = vpack.c.b16 %v5388, %v5386
        %v6639 = vpack.c.b16 %v5389, %v5387
        %v6640 = vpack.c.b16 %v5392, %v5390
        %v6641 = vpack.c.b16 %v5393, %v5391
        %v6642 = vpack.c.b16 %v5396, %v5394
        %v6643 = vpack.c.b16 %v5397, %v5395
        %v6644 = vpack.c.b16 %v5400, %v5398
        %v6645 = vpack.c.b16 %v5401, %v5399
        %v6646 = vpack.c.b16 %v5404, %v5402
        %v6647 = vpack.c.b16 %v5405, %v5403
        %v6648 = vpack.c.b16 %v5408, %v5406
        %v6649 = vpack.c.b16 %v5409, %v5407
        %v6650 = vpack.c.b16 %v5412, %v5410
        %v6651 = vpack.c.b16 %v5413, %v5411
        %v6652 = vpack.c.b16 %v5416, %v5414
        %v6653 = vpack.c.b16 %v5417, %v5415
        %v6654 = vpack.c.b16 %v5420, %v5418
        %v6655 = vpack.c.b16 %v5421, %v5419
        %v6656 = vpack.c.b16 %v5424, %v5422
        %v6657 = vpack.c.b16 %v5425, %v5423
        %v6658 = vpack.c.b16 %v5428, %v5426
        %v6659 = vpack.c.b16 %v5429, %v5427
        %v6660 = vpack.c.b16 %v5432, %v5430
        %v6661 = vpack.c.b16 %v5433, %v5431
        %v6662 = vpack.c.b16 %v5436, %v5434
        %v6663 = vpack.c.b16 %v5437, %v5435
        %v6664 = vpack.c.b16 %v5440, %v5438
        %v6665 = vpack.c.b16 %v5441, %v5439
        %v6666 = vpack.c.b16 %v5444, %v5442
        %v6667 = vpack.c.b16 %v5445, %v5443
        %v6668 = vpack.c.b16 %v5448, %v5446
        %v6669 = vpack.c.b16 %v5449, %v5447
        %v6670 = vpack.c.b16 %v5452, %v5450
        %v6671 = vpack.c.b16 %v5453, %v5451
        %v6672 = vpack.c.b16 %v5456, %v5454
        %v6673 = vpack.c.b16 %v5457, %v5455
        %v6674 = vpack.c.b16 %v5460, %v5458
        %v6675 = vpack.c.b16 %v5461, %v5459
        %v6676 = vpack.c.b16 %v5464, %v5462
        %v6677 = vpack.c.b16 %v5465, %v5463
        %v6678 = vpack.c.b16 %v5468, %v5466
        %v6679 = vpack.c.b16 %v5469, %v5467
        %v6680 = vpack.c.b16 %v5472, %v5470
        %v6681 = vpack.c.b16 %v5473, %v5471
        %v6682 = vpack.c.b16 %v5476, %v5474
        %v6683 = vpack.c.b16 %v5477, %v5475
        %v6684 = vpack.c.b16 %v5480, %v5478
        %v6685 = vpack.c.b16 %v5481, %v5479
        %v6686 = vpack.c.b16 %v5484, %v5482
        %v6687 = vpack.c.b16 %v5485, %v5483
        %v6688 = vpack.c.b16 %v5488, %v5486
        %v6689 = vpack.c.b16 %v5489, %v5487
        %v6690 = vpack.c.b16 %v5492, %v5490
        %v6691 = vpack.c.b16 %v5493, %v5491
        %v6692 = vpack.c.b16 %v5496, %v5494
        %v6693 = vpack.c.b16 %v5497, %v5495
        %v6694 = vpack.c.b16 %v5500, %v5498
        %v6695 = vpack.c.b16 %v5501, %v5499
        %v6696 = vpack.c.b16 %v5504, %v5502
        %v6697 = vpack.c.b16 %v5505, %v5503
        %v6698 = vpack.c.b16 %v5508, %v5506
        %v6699 = vpack.c.b16 %v5509, %v5507
        %v6700 = vpack.c.b16 %v5512, %v5510
        %v6701 = vpack.c.b16 %v5513, %v5511
        %v6702 = vpack.c.b16 %v5516, %v5514
        %v6703 = vpack.c.b16 %v5517, %v5515
        %v6704 = vpack.c.b16 %v5520, %v5518
        %v6705 = vpack.c.b16 %v5521, %v5519
        %7890 = vmatprep.subr.bf16.mxu0 %v5523
        %7891 = vmatpush1.bf16.msra.mxu0 %v5522
        %7892 = vmatprep.subr.bf16.mxu0 %v5525
        %7893 = vmatpush1.bf16.msra.mxu0 %v5524
        %7894 = vmatprep.subr.bf16.mxu0 %v5527
        %7895 = vmatpush1.bf16.msra.mxu0 %v5526
        %7896 = vmatprep.subr.bf16.mxu0 %v5529
        %7897 = vmatpush1.bf16.msra.mxu0 %v5528
        %7898 = vmatprep.subr.bf16.mxu0 %v5531
        %7899 = vmatpush1.bf16.msra.mxu0 %v5530
        %7900 = vmatprep.subr.bf16.mxu0 %v5533
        %7901 = vmatpush1.bf16.msra.mxu0 %v5532
        %7902 = vmatprep.subr.bf16.mxu0 %v5535
        %7903 = vmatpush1.bf16.msra.mxu0 %v5534
        %7904 = vmatprep.subr.bf16.mxu0 %v5537
        %7905 = vmatpush1.bf16.msra.mxu0 %v5536
        %7906 = vmatprep.subr.bf16.mxu0 %v5539
        %7907 = vmatpush1.bf16.msra.mxu0 %v5538
        %7908 = vmatprep.subr.bf16.mxu0 %v5541
        %7909 = vmatpush1.bf16.msra.mxu0 %v5540
        %7910 = vmatprep.subr.bf16.mxu0 %v5543
        %7911 = vmatpush1.bf16.msra.mxu0 %v5542
        %7912 = vmatprep.subr.bf16.mxu0 %v5545
        %7913 = vmatpush1.bf16.msra.mxu0 %v5544
        %7914 = vmatprep.subr.bf16.mxu0 %v5547
        %7915 = vmatpush1.bf16.msra.mxu0 %v5546
        %7916 = vmatprep.subr.bf16.mxu0 %v5549
        %7917 = vmatpush1.bf16.msra.mxu0 %v5548
        %7918 = vmatprep.subr.bf16.mxu0 %v5551
        %7919 = vmatpush1.bf16.msra.mxu0 %v5550
        %7920 = vmatprep.subr.bf16.mxu0 %v5553
        %7921 = vmatpush1.bf16.msra.mxu0 %v5552
        %7922 = vmatprep.mubr.bf16.mxu0 %v1470
        %7923 = vmatmul.mubr.bf16.gmra.mrb[0].mxu0 %v1456
        %v7924 = vpop.f32.mrb[0].mxu0
        %v7925 = vadd.f32 0.0, %v7924
        %v7926 = vpop.f32.mrb[0].mxu0
        %v7927 = vadd.f32 0.0, %v7926
        %v7928 = vpop.f32.mrb[0].mxu0
        %v7929 = vpop.f32.mrb[0].mxu0
        %7930 = vdwg.mxu0
        %7931 = vmatprep.subr.bf16.mxu0 %v5555
        %7932 = vmatpush1.bf16.msra.mxu0 %v5554
        %7933 = vmatprep.subr.bf16.mxu0 %v5557
        %7934 = vmatpush1.bf16.msra.mxu0 %v5556
        %7935 = vmatprep.subr.bf16.mxu0 %v5559
        %7936 = vmatpush1.bf16.msra.mxu0 %v5558
        %7937 = vmatprep.subr.bf16.mxu0 %v5561
        %7938 = vmatpush1.bf16.msra.mxu0 %v5560
        %7939 = vmatprep.subr.bf16.mxu0 %v5563
        %7940 = vmatpush1.bf16.msra.mxu0 %v5562
        %7941 = vmatprep.subr.bf16.mxu0 %v5565
        %7942 = vmatpush1.bf16.msra.mxu0 %v5564
        %7943 = vmatprep.subr.bf16.mxu0 %v5567
        %7944 = vmatpush1.bf16.msra.mxu0 %v5566
        %7945 = vmatprep.subr.bf16.mxu0 %v5569
        %7946 = vmatpush1.bf16.msra.mxu0 %v5568
        %7947 = vmatprep.subr.bf16.mxu0 %v5571
        %7948 = vmatpush1.bf16.msra.mxu0 %v5570
        %7949 = vmatprep.subr.bf16.mxu0 %v5573
        %7950 = vmatpush1.bf16.msra.mxu0 %v5572
        %7951 = vmatprep.subr.bf16.mxu0 %v5575
        %7952 = vmatpush1.bf16.msra.mxu0 %v5574
        %7953 = vmatprep.subr.bf16.mxu0 %v5577
        %7954 = vmatpush1.bf16.msra.mxu0 %v5576
        %7955 = vmatprep.subr.bf16.mxu0 %v5579
        %7956 = vmatpush1.bf16.msra.mxu0 %v5578
        %7957 = vmatprep.subr.bf16.mxu0 %v5581
        %7958 = vmatpush1.bf16.msra.mxu0 %v5580
        %7959 = vmatprep.subr.bf16.mxu0 %v5583
        %7960 = vmatpush1.bf16.msra.mxu0 %v5582
        %7961 = vmatprep.subr.bf16.mxu0 %v5585
        %7962 = vmatpush1.bf16.msra.mxu0 %v5584
        %7963 = vmatprep.mubr.bf16.mxu0 %v1480
        %7964 = vmatmul.mubr.bf16.gmra.mrb[0].mxu0 %v1478
        %v7965 = vpop.f32.mrb[0].mxu0
        %v7966 = vadd.f32 %v7925, %v7965
        %v7967 = vpop.f32.mrb[0].mxu0
        %v7968 = vadd.f32 %v7927, %v7967
        %v7969 = vpop.f32.mrb[0].mxu0
        %v7970 = vpop.f32.mrb[0].mxu0
        %7971 = vdwg.mxu0
        %7972 = vmatprep.subr.bf16.mxu0 %v5587
        %7973 = vmatpush1.bf16.msra.mxu0 %v5586
        %7974 = vmatprep.subr.bf16.mxu0 %v5589
        %7975 = vmatpush1.bf16.msra.mxu0 %v5588
        %7976 = vmatprep.subr.bf16.mxu0 %v5591
        %7977 = vmatpush1.bf16.msra.mxu0 %v5590
        %7978 = vmatprep.subr.bf16.mxu0 %v5593
        %7979 = vmatpush1.bf16.msra.mxu0 %v5592
        %7980 = vmatprep.subr.bf16.mxu0 %v5595
        %7981 = vmatpush1.bf16.msra.mxu0 %v5594
        %7982 = vmatprep.subr.bf16.mxu0 %v5597
        %7983 = vmatpush1.bf16.msra.mxu0 %v5596
        %7984 = vmatprep.subr.bf16.mxu0 %v5599
        %7985 = vmatpush1.bf16.msra.mxu0 %v5598
        %7986 = vmatprep.subr.bf16.mxu0 %v5601
        %7987 = vmatpush1.bf16.msra.mxu0 %v5600
        %7988 = vmatprep.subr.bf16.mxu0 %v5603
        %7989 = vmatpush1.bf16.msra.mxu0 %v5602
        %7990 = vmatprep.subr.bf16.mxu0 %v5605
        %7991 = vmatpush1.bf16.msra.mxu0 %v5604
        %7992 = vmatprep.subr.bf16.mxu0 %v5607
        %7993 = vmatpush1.bf16.msra.mxu0 %v5606
        %7994 = vmatprep.subr.bf16.mxu0 %v5609
        %7995 = vmatpush1.bf16.msra.mxu0 %v5608
        %7996 = vmatprep.subr.bf16.mxu0 %v5611
        %7997 = vmatpush1.bf16.msra.mxu0 %v5610
        %7998 = vmatprep.subr.bf16.mxu0 %v5613
        %7999 = vmatpush1.bf16.msra.mxu0 %v5612
        %8000 = vmatprep.subr.bf16.mxu0 %v5615
        %8001 = vmatpush1.bf16.msra.mxu0 %v5614
        %8002 = vmatprep.subr.bf16.mxu0 %v5617
        %8003 = vmatpush1.bf16.msra.mxu0 %v5616
        %8004 = vmatprep.mubr.bf16.mxu0 %v1477
        %8005 = vmatmul.mubr.bf16.gmra.mrb[0].mxu0 %v1463
        %v8006 = vpop.f32.mrb[0].mxu0
        %v8007 = vadd.f32 %v7966, %v8006
        %v8008 = vpop.f32.mrb[0].mxu0
        %v8009 = vadd.f32 %v7968, %v8008
        %v8010 = vpop.f32.mrb[0].mxu0
        %v8011 = vpop.f32.mrb[0].mxu0
        %8012 = vdwg.mxu0
        %8013 = vmatprep.subr.bf16.mxu0 %v5619
        %8014 = vmatpush1.bf16.msra.mxu0 %v5618
        %8015 = vmatprep.subr.bf16.mxu0 %v5621
        %8016 = vmatpush1.bf16.msra.mxu0 %v5620
        %8017 = vmatprep.subr.bf16.mxu0 %v5623
        %8018 = vmatpush1.bf16.msra.mxu0 %v5622
        %8019 = vmatprep.subr.bf16.mxu0 %v5625
        %8020 = vmatpush1.bf16.msra.mxu0 %v5624
        %8021 = vmatprep.subr.bf16.mxu0 %v5627
        %8022 = vmatpush1.bf16.msra.mxu0 %v5626
        %8023 = vmatprep.subr.bf16.mxu0 %v5629
        %8024 = vmatpush1.bf16.msra.mxu0 %v5628
        %8025 = vmatprep.subr.bf16.mxu0 %v5631
        %8026 = vmatpush1.bf16.msra.mxu0 %v5630
        %8027 = vmatprep.subr.bf16.mxu0 %v5633
        %8028 = vmatpush1.bf16.msra.mxu0 %v5632
        %8029 = vmatprep.subr.bf16.mxu0 %v5635
        %8030 = vmatpush1.bf16.msra.mxu0 %v5634
        %8031 = vmatprep.subr.bf16.mxu0 %v5637
        %8032 = vmatpush1.bf16.msra.mxu0 %v5636
        %8033 = vmatprep.subr.bf16.mxu0 %v5639
        %8034 = vmatpush1.bf16.msra.mxu0 %v5638
        %8035 = vmatprep.subr.bf16.mxu0 %v5641
        %8036 = vmatpush1.bf16.msra.mxu0 %v5640
        %8037 = vmatprep.subr.bf16.mxu0 %v5643
        %8038 = vmatpush1.bf16.msra.mxu0 %v5642
        %8039 = vmatprep.subr.bf16.mxu0 %v5645
        %8040 = vmatpush1.bf16.msra.mxu0 %v5644
        %8041 = vmatprep.subr.bf16.mxu0 %v5647
        %8042 = vmatpush1.bf16.msra.mxu0 %v5646
        %8043 = vmatprep.subr.bf16.mxu0 %v5649
        %8044 = vmatpush1.bf16.msra.mxu0 %v5648
        %8045 = vmatprep.mubr.bf16.mxu0 %v1481
        %8046 = vmatmul.mubr.bf16.gmra.mrb[0].mxu0 %v1479
        %v8047 = vpop.f32.mrb[0].mxu0
        %v8048 = vadd.f32 %v8007, %v8047
        %v8049 = vpop.f32.mrb[0].mxu0
        %v8050 = vadd.f32 %v8009, %v8049
        %v8051 = vpop.f32.mrb[0].mxu0
        %v8052 = vpop.f32.mrb[0].mxu0
        %8053 = vdwg.mxu0
        %8054 = vmatprep.subr.bf16.mxu0 %v5651
        %8055 = vmatpush1.bf16.msra.mxu0 %v5650
        %8056 = vmatprep.subr.bf16.mxu0 %v5653
        %8057 = vmatpush1.bf16.msra.mxu0 %v5652
        %8058 = vmatprep.subr.bf16.mxu0 %v5655
        %8059 = vmatpush1.bf16.msra.mxu0 %v5654
        %8060 = vmatprep.subr.bf16.mxu0 %v5657
        %8061 = vmatpush1.bf16.msra.mxu0 %v5656
        %8062 = vmatprep.subr.bf16.mxu0 %v5659
        %8063 = vmatpush1.bf16.msra.mxu0 %v5658
        %8064 = vmatprep.subr.bf16.mxu0 %v5661
        %8065 = vmatpush1.bf16.msra.mxu0 %v5660
        %8066 = vmatprep.subr.bf16.mxu0 %v5663
        %8067 = vmatpush1.bf16.msra.mxu0 %v5662
        %8068 = vmatprep.subr.bf16.mxu0 %v5665
        %8069 = vmatpush1.bf16.msra.mxu0 %v5664
        %8070 = vmatprep.subr.bf16.mxu0 %v5667
        %8071 = vmatpush1.bf16.msra.mxu0 %v5666
        %8072 = vmatprep.subr.bf16.mxu0 %v5669
        %8073 = vmatpush1.bf16.msra.mxu0 %v5668
        %8074 = vmatprep.subr.bf16.mxu0 %v5671
        %8075 = vmatpush1.bf16.msra.mxu0 %v5670
        %8076 = vmatprep.subr.bf16.mxu0 %v5673
        %8077 = vmatpush1.bf16.msra.mxu0 %v5672
        %8078 = vmatprep.subr.bf16.mxu0 %v5675
        %8079 = vmatpush1.bf16.msra.mxu0 %v5674
        %8080 = vmatprep.subr.bf16.mxu0 %v5677
        %8081 = vmatpush1.bf16.msra.mxu0 %v5676
        %8082 = vmatprep.subr.bf16.mxu0 %v5679
        %8083 = vmatpush1.bf16.msra.mxu0 %v5678
        %8084 = vmatprep.subr.bf16.mxu0 %v5681
        %8085 = vmatpush1.bf16.msra.mxu0 %v5680
        %8086 = vmatprep.mubr.bf16.mxu0 %v1519
        %8087 = vmatmul.mubr.bf16.gmra.mrb[0].mxu0 %v1505
        %v8088 = vpop.f32.mrb[0].mxu0
        %v8089 = vadd.f32 %v8048, %v8088
        %v8090 = vpop.f32.mrb[0].mxu0
        %v8091 = vadd.f32 %v8050, %v8090
        %v8092 = vpop.f32.mrb[0].mxu0
        %v8093 = vpop.f32.mrb[0].mxu0
        %8094 = vdwg.mxu0
        %8095 = vmatprep.subr.bf16.mxu0 %v5683
        %8096 = vmatpush1.bf16.msra.mxu0 %v5682
        %8097 = vmatprep.subr.bf16.mxu0 %v5685
        %8098 = vmatpush1.bf16.msra.mxu0 %v5684
        %8099 = vmatprep.subr.bf16.mxu0 %v5687
        %8100 = vmatpush1.bf16.msra.mxu0 %v5686
        %8101 = vmatprep.subr.bf16.mxu0 %v5689
        %8102 = vmatpush1.bf16.msra.mxu0 %v5688
        %8103 = vmatprep.subr.bf16.mxu0 %v5691
        %8104 = vmatpush1.bf16.msra.mxu0 %v5690
        %8105 = vmatprep.subr.bf16.mxu0 %v5693
        %8106 = vmatpush1.bf16.msra.mxu0 %v5692
        %8107 = vmatprep.subr.bf16.mxu0 %v5695
        %8108 = vmatpush1.bf16.msra.mxu0 %v5694
        %8109 = vmatprep.subr.bf16.mxu0 %v5697
        %8110 = vmatpush1.bf16.msra.mxu0 %v5696
        %8111 = vmatprep.subr.bf16.mxu0 %v5699
        %8112 = vmatpush1.bf16.msra.mxu0 %v5698
        %8113 = vmatprep.subr.bf16.mxu0 %v5701
        %8114 = vmatpush1.bf16.msra.mxu0 %v5700
        %8115 = vmatprep.subr.bf16.mxu0 %v5703
        %8116 = vmatpush1.bf16.msra.mxu0 %v5702
        %8117 = vmatprep.subr.bf16.mxu0 %v5705
        %8118 = vmatpush1.bf16.msra.mxu0 %v5704
        %8119 = vmatprep.subr.bf16.mxu0 %v5707
        %8120 = vmatpush1.bf16.msra.mxu0 %v5706
        %8121 = vmatprep.subr.bf16.mxu0 %v5709
        %8122 = vmatpush1.bf16.msra.mxu0 %v5708
        %8123 = vmatprep.subr.bf16.mxu0 %v5711
        %8124 = vmatpush1.bf16.msra.mxu0 %v5710
        %8125 = vmatprep.subr.bf16.mxu0 %v5713
        %8126 = vmatpush1.bf16.msra.mxu0 %v5712
        %8127 = vmatprep.mubr.bf16.mxu0 %v1529
        %8128 = vmatmul.mubr.bf16.gmra.mrb[0].mxu0 %v1527
        %v8129 = vpop.f32.mrb[0].mxu0
        %v8130 = vadd.f32 %v8089, %v8129
        %v8131 = vpop.f32.mrb[0].mxu0
        %v8132 = vadd.f32 %v8091, %v8131
        %v8133 = vpop.f32.mrb[0].mxu0
        %v8134 = vpop.f32.mrb[0].mxu0
        %8135 = vdwg.mxu0
        %8136 = vmatprep.subr.bf16.mxu0 %v5715
        %8137 = vmatpush1.bf16.msra.mxu0 %v5714
        %8138 = vmatprep.subr.bf16.mxu0 %v5717
        %8139 = vmatpush1.bf16.msra.mxu0 %v5716
        %8140 = vmatprep.subr.bf16.mxu0 %v5719
        %8141 = vmatpush1.bf16.msra.mxu0 %v5718
        %8142 = vmatprep.subr.bf16.mxu0 %v5721
        %8143 = vmatpush1.bf16.msra.mxu0 %v5720
        %8144 = vmatprep.subr.bf16.mxu0 %v5723
        %8145 = vmatpush1.bf16.msra.mxu0 %v5722
        %8146 = vmatprep.subr.bf16.mxu0 %v5725
        %8147 = vmatpush1.bf16.msra.mxu0 %v5724
        %8148 = vmatprep.subr.bf16.mxu0 %v5727
        %8149 = vmatpush1.bf16.msra.mxu0 %v5726
        %8150 = vmatprep.subr.bf16.mxu0 %v5729
        %8151 = vmatpush1.bf16.msra.mxu0 %v5728
        %8152 = vmatprep.subr.bf16.mxu0 %v5731
        %8153 = vmatpush1.bf16.msra.mxu0 %v5730
        %8154 = vmatprep.subr.bf16.mxu0 %v5733
        %8155 = vmatpush1.bf16.msra.mxu0 %v5732
        %8156 = vmatprep.subr.bf16.mxu0 %v5735
        %8157 = vmatpush1.bf16.msra.mxu0 %v5734
        %8158 = vmatprep.subr.bf16.mxu0 %v5737
        %8159 = vmatpush1.bf16.msra.mxu0 %v5736
        %8160 = vmatprep.subr.bf16.mxu0 %v5739
        %8161 = vmatpush1.bf16.msra.mxu0 %v5738
        %8162 = vmatprep.subr.bf16.mxu0 %v5741
        %8163 = vmatpush1.bf16.msra.mxu0 %v5740
        %8164 = vmatprep.subr.bf16.mxu0 %v5743
        %8165 = vmatpush1.bf16.msra.mxu0 %v5742
        %8166 = vmatprep.subr.bf16.mxu0 %v5745
        %8167 = vmatpush1.bf16.msra.mxu0 %v5744
        %8168 = vmatprep.mubr.bf16.mxu0 %v1526
        %8169 = vmatmul.mubr.bf16.gmra.mrb[0].mxu0 %v1512
        %v8170 = vpop.f32.mrb[0].mxu0
        %v8171 = vadd.f32 %v8130, %v8170
        %v8172 = vpop.f32.mrb[0].mxu0
        %v8173 = vadd.f32 %v8132, %v8172
        %v8174 = vpop.f32.mrb[0].mxu0
        %v8175 = vpop.f32.mrb[0].mxu0
        %8176 = vdwg.mxu0
        %8177 = vmatprep.subr.bf16.mxu0 %v5747
        %8178 = vmatpush1.bf16.msra.mxu0 %v5746
        %8179 = vmatprep.subr.bf16.mxu0 %v5749
        %8180 = vmatpush1.bf16.msra.mxu0 %v5748
        %8181 = vmatprep.subr.bf16.mxu0 %v5751
        %8182 = vmatpush1.bf16.msra.mxu0 %v5750
        %8183 = vmatprep.subr.bf16.mxu0 %v5753
        %8184 = vmatpush1.bf16.msra.mxu0 %v5752
        %8185 = vmatprep.subr.bf16.mxu0 %v5755
        %8186 = vmatpush1.bf16.msra.mxu0 %v5754
        %8187 = vmatprep.subr.bf16.mxu0 %v5757
        %8188 = vmatpush1.bf16.msra.mxu0 %v5756
        %8189 = vmatprep.subr.bf16.mxu0 %v5759
        %8190 = vmatpush1.bf16.msra.mxu0 %v5758
        %8191 = vmatprep.subr.bf16.mxu0 %v5761
        %8192 = vmatpush1.bf16.msra.mxu0 %v5760
        %8193 = vmatprep.subr.bf16.mxu0 %v5763
        %8194 = vmatpush1.bf16.msra.mxu0 %v5762
        %8195 = vmatprep.subr.bf16.mxu0 %v5765
        %8196 = vmatpush1.bf16.msra.mxu0 %v5764
        %8197 = vmatprep.subr.bf16.mxu0 %v5767
        %8198 = vmatpush1.bf16.msra.mxu0 %v5766
        %8199 = vmatprep.subr.bf16.mxu0 %v5769
        %8200 = vmatpush1.bf16.msra.mxu0 %v5768
        %8201 = vmatprep.subr.bf16.mxu0 %v5771
        %8202 = vmatpush1.bf16.msra.mxu0 %v5770
        %8203 = vmatprep.subr.bf16.mxu0 %v5773
        %8204 = vmatpush1.bf16.msra.mxu0 %v5772
        %8205 = vmatprep.subr.bf16.mxu0 %v5775
        %8206 = vmatpush1.bf16.msra.mxu0 %v5774
        %8207 = vmatprep.subr.bf16.mxu0 %v5777
        %8208 = vmatpush1.bf16.msra.mxu0 %v5776
        %8209 = vmatprep.mubr.bf16.mxu0 %v1530
        %8210 = vmatmul.mubr.bf16.gmra.mrb[0].mxu0 %v1528
        %v8211 = vpop.f32.mrb[0].mxu0
        %v8212 = vadd.f32 %v8171, %v8211
        %v8213 = vpop.f32.mrb[0].mxu0
        %v8214 = vadd.f32 %v8173, %v8213
        %v8215 = vpop.f32.mrb[0].mxu0
        %v8216 = vpop.f32.mrb[0].mxu0
        %8217 = vdwg.mxu0
        %8218 = vmatprep.subr.bf16.mxu0 %v5779
        %8219 = vmatpush1.bf16.msra.mxu0 %v5778
        %8220 = vmatprep.subr.bf16.mxu0 %v5781
        %8221 = vmatpush1.bf16.msra.mxu0 %v5780
        %8222 = vmatprep.subr.bf16.mxu0 %v5783
        %8223 = vmatpush1.bf16.msra.mxu0 %v5782
        %8224 = vmatprep.subr.bf16.mxu0 %v5785
        %8225 = vmatpush1.bf16.msra.mxu0 %v5784
        %8226 = vmatprep.subr.bf16.mxu0 %v5787
        %8227 = vmatpush1.bf16.msra.mxu0 %v5786
        %8228 = vmatprep.subr.bf16.mxu0 %v5789
        %8229 = vmatpush1.bf16.msra.mxu0 %v5788
        %8230 = vmatprep.subr.bf16.mxu0 %v5791
        %8231 = vmatpush1.bf16.msra.mxu0 %v5790
        %8232 = vmatprep.subr.bf16.mxu0 %v5793
        %8233 = vmatpush1.bf16.msra.mxu0 %v5792
        %8234 = vmatprep.subr.bf16.mxu0 %v5795
        %8235 = vmatpush1.bf16.msra.mxu0 %v5794
        %8236 = vmatprep.subr.bf16.mxu0 %v5797
        %8237 = vmatpush1.bf16.msra.mxu0 %v5796
        %8238 = vmatprep.subr.bf16.mxu0 %v5799
        %8239 = vmatpush1.bf16.msra.mxu0 %v5798
        %8240 = vmatprep.subr.bf16.mxu0 %v5801
        %8241 = vmatpush1.bf16.msra.mxu0 %v5800
        %8242 = vmatprep.subr.bf16.mxu0 %v5803
        %8243 = vmatpush1.bf16.msra.mxu0 %v5802
        %8244 = vmatprep.subr.bf16.mxu0 %v5805
        %8245 = vmatpush1.bf16.msra.mxu0 %v5804
        %8246 = vmatprep.subr.bf16.mxu0 %v5807
        %8247 = vmatpush1.bf16.msra.mxu0 %v5806
        %8248 = vmatprep.subr.bf16.mxu0 %v5809
        %8249 = vmatpush1.bf16.msra.mxu0 %v5808
        %8250 = vmatprep.mubr.bf16.mxu0 %v1568
        %8251 = vmatmul.mubr.bf16.gmra.mrb[0].mxu0 %v1554
        %v8252 = vpop.f32.mrb[0].mxu0
        %v8253 = vadd.f32 %v8212, %v8252
        %v8254 = vpop.f32.mrb[0].mxu0
        %v8255 = vadd.f32 %v8214, %v8254
        %v8256 = vpop.f32.mrb[0].mxu0
        %v8257 = vpop.f32.mrb[0].mxu0
        %8258 = vdwg.mxu0
        %8259 = vmatprep.subr.bf16.mxu0 %v5811
        %8260 = vmatpush1.bf16.msra.mxu0 %v5810
        %8261 = vmatprep.subr.bf16.mxu0 %v5813
        %8262 = vmatpush1.bf16.msra.mxu0 %v5812
        %8263 = vmatprep.subr.bf16.mxu0 %v5815
        %8264 = vmatpush1.bf16.msra.mxu0 %v5814
        %8265 = vmatprep.subr.bf16.mxu0 %v5817
        %8266 = vmatpush1.bf16.msra.mxu0 %v5816
        %8267 = vmatprep.subr.bf16.mxu0 %v5819
        %8268 = vmatpush1.bf16.msra.mxu0 %v5818
        %8269 = vmatprep.subr.bf16.mxu0 %v5821
        %8270 = vmatpush1.bf16.msra.mxu0 %v5820
        %8271 = vmatprep.subr.bf16.mxu0 %v5823
        %8272 = vmatpush1.bf16.msra.mxu0 %v5822
        %8273 = vmatprep.subr.bf16.mxu0 %v5825
        %8274 = vmatpush1.bf16.msra.mxu0 %v5824
        %8275 = vmatprep.subr.bf16.mxu0 %v5827
        %8276 = vmatpush1.bf16.msra.mxu0 %v5826
        %8277 = vmatprep.subr.bf16.mxu0 %v5829
        %8278 = vmatpush1.bf16.msra.mxu0 %v5828
        %8279 = vmatprep.subr.bf16.mxu0 %v5831
        %8280 = vmatpush1.bf16.msra.mxu0 %v5830
        %8281 = vmatprep.subr.bf16.mxu0 %v5833
        %8282 = vmatpush1.bf16.msra.mxu0 %v5832
        %8283 = vmatprep.subr.bf16.mxu0 %v5835
        %8284 = vmatpush1.bf16.msra.mxu0 %v5834
        %8285 = vmatprep.subr.bf16.mxu0 %v5837
        %8286 = vmatpush1.bf16.msra.mxu0 %v5836
        %8287 = vmatprep.subr.bf16.mxu0 %v5839
        %8288 = vmatpush1.bf16.msra.mxu0 %v5838
        %8289 = vmatprep.subr.bf16.mxu0 %v5841
        %8290 = vmatpush1.bf16.msra.mxu0 %v5840
        %8291 = vmatprep.mubr.bf16.mxu0 %v1578
        %8292 = vmatmul.mubr.bf16.gmra.mrb[0].mxu0 %v1576
        %v8293 = vpop.f32.mrb[0].mxu0
        %v8294 = vadd.f32 %v8253, %v8293
        %v8295 = vpop.f32.mrb[0].mxu0
        %v8296 = vadd.f32 %v8255, %v8295
        %v8297 = vpop.f32.mrb[0].mxu0
        %v8298 = vpop.f32.mrb[0].mxu0
        %8299 = vdwg.mxu0
        %8300 = vmatprep.subr.bf16.mxu0 %v5843
        %8301 = vmatpush1.bf16.msra.mxu0 %v5842
        %8302 = vmatprep.subr.bf16.mxu0 %v5845
        %8303 = vmatpush1.bf16.msra.mxu0 %v5844
        %8304 = vmatprep.subr.bf16.mxu0 %v5847
        %8305 = vmatpush1.bf16.msra.mxu0 %v5846
        %8306 = vmatprep.subr.bf16.mxu0 %v5849
        %8307 = vmatpush1.bf16.msra.mxu0 %v5848
        %8308 = vmatprep.subr.bf16.mxu0 %v5851
        %8309 = vmatpush1.bf16.msra.mxu0 %v5850
        %8310 = vmatprep.subr.bf16.mxu0 %v5853
        %8311 = vmatpush1.bf16.msra.mxu0 %v5852
        %8312 = vmatprep.subr.bf16.mxu0 %v5855
        %8313 = vmatpush1.bf16.msra.mxu0 %v5854
        %8314 = vmatprep.subr.bf16.mxu0 %v5857
        %8315 = vmatpush1.bf16.msra.mxu0 %v5856
        %8316 = vmatprep.subr.bf16.mxu0 %v5859
        %8317 = vmatpush1.bf16.msra.mxu0 %v5858
        %8318 = vmatprep.subr.bf16.mxu0 %v5861
        %8319 = vmatpush1.bf16.msra.mxu0 %v5860
        %8320 = vmatprep.subr.bf16.mxu0 %v5863
        %8321 = vmatpush1.bf16.msra.mxu0 %v5862
        %8322 = vmatprep.subr.bf16.mxu0 %v5865
        %8323 = vmatpush1.bf16.msra.mxu0 %v5864
        %8324 = vmatprep.subr.bf16.mxu0 %v5867
        %8325 = vmatpush1.bf16.msra.mxu0 %v5866
        %8326 = vmatprep.subr.bf16.mxu0 %v5869
        %8327 = vmatpush1.bf16.msra.mxu0 %v5868
        %8328 = vmatprep.subr.bf16.mxu0 %v5871
        %8329 = vmatpush1.bf16.msra.mxu0 %v5870
        %8330 = vmatprep.subr.bf16.mxu0 %v5873
        %8331 = vmatpush1.bf16.msra.mxu0 %v5872
        %8332 = vmatprep.mubr.bf16.mxu0 %v1575
        %8333 = vmatmul.mubr.bf16.gmra.mrb[0].mxu0 %v1561
        %v8334 = vpop.f32.mrb[0].mxu0
        %v8335 = vadd.f32 %v8294, %v8334
        %v8336 = vpop.f32.mrb[0].mxu0
        %v8337 = vadd.f32 %v8296, %v8336
        %v8338 = vpop.f32.mrb[0].mxu0
        %v8339 = vpop.f32.mrb[0].mxu0
        %8340 = vdwg.mxu0
        %8341 = vmatprep.subr.bf16.mxu0 %v5875
        %8342 = vmatpush1.bf16.msra.mxu0 %v5874
        %8343 = vmatprep.subr.bf16.mxu0 %v5877
        %8344 = vmatpush1.bf16.msra.mxu0 %v5876
        %8345 = vmatprep.subr.bf16.mxu0 %v5879
        %8346 = vmatpush1.bf16.msra.mxu0 %v5878
        %8347 = vmatprep.subr.bf16.mxu0 %v5881
        %8348 = vmatpush1.bf16.msra.mxu0 %v5880
        %8349 = vmatprep.subr.bf16.mxu0 %v5883
        %8350 = vmatpush1.bf16.msra.mxu0 %v5882
        %8351 = vmatprep.subr.bf16.mxu0 %v5885
        %8352 = vmatpush1.bf16.msra.mxu0 %v5884
        %8353 = vmatprep.subr.bf16.mxu0 %v5887
        %8354 = vmatpush1.bf16.msra.mxu0 %v5886
        %8355 = vmatprep.subr.bf16.mxu0 %v5889
        %8356 = vmatpush1.bf16.msra.mxu0 %v5888
        %8357 = vmatprep.subr.bf16.mxu0 %v5891
        %8358 = vmatpush1.bf16.msra.mxu0 %v5890
        %8359 = vmatprep.subr.bf16.mxu0 %v5893
        %8360 = vmatpush1.bf16.msra.mxu0 %v5892
        %8361 = vmatprep.subr.bf16.mxu0 %v5895
        %8362 = vmatpush1.bf16.msra.mxu0 %v5894
        %8363 = vmatprep.subr.bf16.mxu0 %v5897
        %8364 = vmatpush1.bf16.msra.mxu0 %v5896
        %8365 = vmatprep.subr.bf16.mxu0 %v5899
        %8366 = vmatpush1.bf16.msra.mxu0 %v5898
        %8367 = vmatprep.subr.bf16.mxu0 %v5901
        %8368 = vmatpush1.bf16.msra.mxu0 %v5900
        %8369 = vmatprep.subr.bf16.mxu0 %v5903
        %8370 = vmatpush1.bf16.msra.mxu0 %v5902
        %8371 = vmatprep.subr.bf16.mxu0 %v5905
        %8372 = vmatpush1.bf16.msra.mxu0 %v5904
        %8373 = vmatprep.mubr.bf16.mxu0 %v1579
        %8374 = vmatmul.mubr.bf16.gmra.mrb[0].mxu0 %v1577
        %v8375 = vpop.f32.mrb[0].mxu0
        %v8376 = vadd.f32 %v8335, %v8375
        %v8377 = vpop.f32.mrb[0].mxu0
        %v8378 = vadd.f32 %v8337, %v8377
        %v8379 = vpop.f32.mrb[0].mxu0
        %v8380 = vpop.f32.mrb[0].mxu0
        %8381 = vdwg.mxu0
        %8382 = vmatprep.subr.bf16.mxu0 %v5907
        %8383 = vmatpush1.bf16.msra.mxu0 %v5906
        %8384 = vmatprep.subr.bf16.mxu0 %v5909
        %8385 = vmatpush1.bf16.msra.mxu0 %v5908
        %8386 = vmatprep.subr.bf16.mxu0 %v5911
        %8387 = vmatpush1.bf16.msra.mxu0 %v5910
        %8388 = vmatprep.subr.bf16.mxu0 %v5913
        %8389 = vmatpush1.bf16.msra.mxu0 %v5912
        %8390 = vmatprep.subr.bf16.mxu0 %v5915
        %8391 = vmatpush1.bf16.msra.mxu0 %v5914
        %8392 = vmatprep.subr.bf16.mxu0 %v5917
        %8393 = vmatpush1.bf16.msra.mxu0 %v5916
        %8394 = vmatprep.subr.bf16.mxu0 %v5919
        %8395 = vmatpush1.bf16.msra.mxu0 %v5918
        %8396 = vmatprep.subr.bf16.mxu0 %v5921
        %8397 = vmatpush1.bf16.msra.mxu0 %v5920
        %8398 = vmatprep.subr.bf16.mxu0 %v5923
        %8399 = vmatpush1.bf16.msra.mxu0 %v5922
        %8400 = vmatprep.subr.bf16.mxu0 %v5925
        %8401 = vmatpush1.bf16.msra.mxu0 %v5924
        %8402 = vmatprep.subr.bf16.mxu0 %v5927
        %8403 = vmatpush1.bf16.msra.mxu0 %v5926
        %8404 = vmatprep.subr.bf16.mxu0 %v5929
        %8405 = vmatpush1.bf16.msra.mxu0 %v5928
        %8406 = vmatprep.subr.bf16.mxu0 %v5931
        %8407 = vmatpush1.bf16.msra.mxu0 %v5930
        %8408 = vmatprep.subr.bf16.mxu0 %v5933
        %8409 = vmatpush1.bf16.msra.mxu0 %v5932
        %8410 = vmatprep.subr.bf16.mxu0 %v5935
        %8411 = vmatpush1.bf16.msra.mxu0 %v5934
        %8412 = vmatprep.subr.bf16.mxu0 %v5937
        %8413 = vmatpush1.bf16.msra.mxu0 %v5936
        %8414 = vmatprep.mubr.bf16.mxu0 %v1617
        %8415 = vmatmul.mubr.bf16.gmra.mrb[0].mxu0 %v1603
        %v8416 = vpop.f32.mrb[0].mxu0
        %v8417 = vadd.f32 %v8376, %v8416
        %v8418 = vpop.f32.mrb[0].mxu0
        %v8419 = vadd.f32 %v8378, %v8418
        %v8420 = vpop.f32.mrb[0].mxu0
        %v8421 = vpop.f32.mrb[0].mxu0
        %8422 = vdwg.mxu0
        %8423 = vmatprep.subr.bf16.mxu0 %v5939
        %8424 = vmatpush1.bf16.msra.mxu0 %v5938
        %8425 = vmatprep.subr.bf16.mxu0 %v5941
        %8426 = vmatpush1.bf16.msra.mxu0 %v5940
        %8427 = vmatprep.subr.bf16.mxu0 %v5943
        %8428 = vmatpush1.bf16.msra.mxu0 %v5942
        %8429 = vmatprep.subr.bf16.mxu0 %v5945
        %8430 = vmatpush1.bf16.msra.mxu0 %v5944
        %8431 = vmatprep.subr.bf16.mxu0 %v5947
        %8432 = vmatpush1.bf16.msra.mxu0 %v5946
        %8433 = vmatprep.subr.bf16.mxu0 %v5949
        %8434 = vmatpush1.bf16.msra.mxu0 %v5948
        %8435 = vmatprep.subr.bf16.mxu0 %v5951
        %8436 = vmatpush1.bf16.msra.mxu0 %v5950
        %8437 = vmatprep.subr.bf16.mxu0 %v5953
        %8438 = vmatpush1.bf16.msra.mxu0 %v5952
        %8439 = vmatprep.subr.bf16.mxu0 %v5955
        %8440 = vmatpush1.bf16.msra.mxu0 %v5954
        %8441 = vmatprep.subr.bf16.mxu0 %v5957
        %8442 = vmatpush1.bf16.msra.mxu0 %v5956
        %8443 = vmatprep.subr.bf16.mxu0 %v5959
        %8444 = vmatpush1.bf16.msra.mxu0 %v5958
        %8445 = vmatprep.subr.bf16.mxu0 %v5961
        %8446 = vmatpush1.bf16.msra.mxu0 %v5960
        %8447 = vmatprep.subr.bf16.mxu0 %v5963
        %8448 = vmatpush1.bf16.msra.mxu0 %v5962
        %8449 = vmatprep.subr.bf16.mxu0 %v5965
        %8450 = vmatpush1.bf16.msra.mxu0 %v5964
        %8451 = vmatprep.subr.bf16.mxu0 %v5967
        %8452 = vmatpush1.bf16.msra.mxu0 %v5966
        %8453 = vmatprep.subr.bf16.mxu0 %v5969
        %8454 = vmatpush1.bf16.msra.mxu0 %v5968
        %8455 = vmatprep.mubr.bf16.mxu0 %v1627
        %8456 = vmatmul.mubr.bf16.gmra.mrb[0].mxu0 %v1625
        %v8457 = vpop.f32.mrb[0].mxu0
        %v8458 = vadd.f32 %v8417, %v8457
        %v8459 = vpop.f32.mrb[0].mxu0
        %v8460 = vadd.f32 %v8419, %v8459
        %v8461 = vpop.f32.mrb[0].mxu0
        %v8462 = vpop.f32.mrb[0].mxu0
        %8463 = vdwg.mxu0
        %8464 = vmatprep.subr.bf16.mxu0 %v5971
        %8465 = vmatpush1.bf16.msra.mxu0 %v5970
        %8466 = vmatprep.subr.bf16.mxu0 %v5973
        %8467 = vmatpush1.bf16.msra.mxu0 %v5972
        %8468 = vmatprep.subr.bf16.mxu0 %v5975
        %8469 = vmatpush1.bf16.msra.mxu0 %v5974
        %8470 = vmatprep.subr.bf16.mxu0 %v5977
        %8471 = vmatpush1.bf16.msra.mxu0 %v5976
        %8472 = vmatprep.subr.bf16.mxu0 %v5979
        %8473 = vmatpush1.bf16.msra.mxu0 %v5978
        %8474 = vmatprep.subr.bf16.mxu0 %v5981
        %8475 = vmatpush1.bf16.msra.mxu0 %v5980
        %8476 = vmatprep.subr.bf16.mxu0 %v5983
        %8477 = vmatpush1.bf16.msra.mxu0 %v5982
        %8478 = vmatprep.subr.bf16.mxu0 %v5985
        %8479 = vmatpush1.bf16.msra.mxu0 %v5984
        %8480 = vmatprep.subr.bf16.mxu0 %v5987
        %8481 = vmatpush1.bf16.msra.mxu0 %v5986
        %8482 = vmatprep.subr.bf16.mxu0 %v5989
        %8483 = vmatpush1.bf16.msra.mxu0 %v5988
        %8484 = vmatprep.subr.bf16.mxu0 %v5991
        %8485 = vmatpush1.bf16.msra.mxu0 %v5990
        %8486 = vmatprep.subr.bf16.mxu0 %v5993
        %8487 = vmatpush1.bf16.msra.mxu0 %v5992
        %8488 = vmatprep.subr.bf16.mxu0 %v5995
        %8489 = vmatpush1.bf16.msra.mxu0 %v5994
        %8490 = vmatprep.subr.bf16.mxu0 %v5997
        %8491 = vmatpush1.bf16.msra.mxu0 %v5996
        %8492 = vmatprep.subr.bf16.mxu0 %v5999
        %8493 = vmatpush1.bf16.msra.mxu0 %v5998
        %8494 = vmatprep.subr.bf16.mxu0 %v6001
        %8495 = vmatpush1.bf16.msra.mxu0 %v6000
        %8496 = vmatprep.mubr.bf16.mxu0 %v1624
        %8497 = vmatmul.mubr.bf16.gmra.mrb[0].mxu0 %v1610
        %v8498 = vpop.f32.mrb[0].mxu0
        %v8499 = vadd.f32 %v8458, %v8498
        %v8500 = vpop.f32.mrb[0].mxu0
        %v8501 = vadd.f32 %v8460, %v8500
        %v8502 = vpop.f32.mrb[0].mxu0
        %v8503 = vpop.f32.mrb[0].mxu0
        %8504 = vdwg.mxu0
        %8505 = vmatprep.subr.bf16.mxu0 %v6003
        %8506 = vmatpush1.bf16.msra.mxu0 %v6002
        %8507 = vmatprep.subr.bf16.mxu0 %v6005
        %8508 = vmatpush1.bf16.msra.mxu0 %v6004
        %8509 = vmatprep.subr.bf16.mxu0 %v6007
        %8510 = vmatpush1.bf16.msra.mxu0 %v6006
        %8511 = vmatprep.subr.bf16.mxu0 %v6009
        %8512 = vmatpush1.bf16.msra.mxu0 %v6008
        %8513 = vmatprep.subr.bf16.mxu0 %v6011
        %8514 = vmatpush1.bf16.msra.mxu0 %v6010
        %8515 = vmatprep.subr.bf16.mxu0 %v6013
        %8516 = vmatpush1.bf16.msra.mxu0 %v6012
        %8517 = vmatprep.subr.bf16.mxu0 %v6015
        %8518 = vmatpush1.bf16.msra.mxu0 %v6014
        %8519 = vmatprep.subr.bf16.mxu0 %v6017
        %8520 = vmatpush1.bf16.msra.mxu0 %v6016
        %8521 = vmatprep.subr.bf16.mxu0 %v6019
        %8522 = vmatpush1.bf16.msra.mxu0 %v6018
        %8523 = vmatprep.subr.bf16.mxu0 %v6021
        %8524 = vmatpush1.bf16.msra.mxu0 %v6020
        %8525 = vmatprep.subr.bf16.mxu0 %v6023
        %8526 = vmatpush1.bf16.msra.mxu0 %v6022
        %8527 = vmatprep.subr.bf16.mxu0 %v6025
        %8528 = vmatpush1.bf16.msra.mxu0 %v6024
        %8529 = vmatprep.subr.bf16.mxu0 %v6027
        %8530 = vmatpush1.bf16.msra.mxu0 %v6026
        %8531 = vmatprep.subr.bf16.mxu0 %v6029
        %8532 = vmatpush1.bf16.msra.mxu0 %v6028
        %8533 = vmatprep.subr.bf16.mxu0 %v6031
        %8534 = vmatpush1.bf16.msra.mxu0 %v6030
        %8535 = vmatprep.subr.bf16.mxu0 %v6033
        %8536 = vmatpush1.bf16.msra.mxu0 %v6032
        %8537 = vmatprep.mubr.bf16.mxu0 %v1628
        %8538 = vmatmul.mubr.bf16.gmra.mrb[0].mxu0 %v1626
        %v8539 = vpop.f32.mrb[0].mxu0
        %v8540 = vadd.f32 %v8499, %v8539
        %v8541 = vpop.f32.mrb[0].mxu0
        %v8542 = vadd.f32 %v8501, %v8541
        %v8543 = vpop.f32.mrb[0].mxu0
        %v8544 = vpop.f32.mrb[0].mxu0
        %8545 = vdwg.mxu0
        %8546 = vmatprep.subr.bf16.mxu0 %v6035
        %8547 = vmatpush1.bf16.msra.mxu0 %v6034
        %8548 = vmatprep.subr.bf16.mxu0 %v6037
        %8549 = vmatpush1.bf16.msra.mxu0 %v6036
        %8550 = vmatprep.subr.bf16.mxu0 %v6039
        %8551 = vmatpush1.bf16.msra.mxu0 %v6038
        %8552 = vmatprep.subr.bf16.mxu0 %v6041
        %8553 = vmatpush1.bf16.msra.mxu0 %v6040
        %8554 = vmatprep.subr.bf16.mxu0 %v6043
        %8555 = vmatpush1.bf16.msra.mxu0 %v6042
        %8556 = vmatprep.subr.bf16.mxu0 %v6045
        %8557 = vmatpush1.bf16.msra.mxu0 %v6044
        %8558 = vmatprep.subr.bf16.mxu0 %v6047
        %8559 = vmatpush1.bf16.msra.mxu0 %v6046
        %8560 = vmatprep.subr.bf16.mxu0 %v6049
        %8561 = vmatpush1.bf16.msra.mxu0 %v6048
        %8562 = vmatprep.subr.bf16.mxu0 %v6051
        %8563 = vmatpush1.bf16.msra.mxu0 %v6050
        %8564 = vmatprep.subr.bf16.mxu0 %v6053
        %8565 = vmatpush1.bf16.msra.mxu0 %v6052
        %8566 = vmatprep.subr.bf16.mxu0 %v6055
        %8567 = vmatpush1.bf16.msra.mxu0 %v6054
        %8568 = vmatprep.subr.bf16.mxu0 %v6057
        %8569 = vmatpush1.bf16.msra.mxu0 %v6056
        %8570 = vmatprep.subr.bf16.mxu0 %v6059
        %8571 = vmatpush1.bf16.msra.mxu0 %v6058
        %8572 = vmatprep.subr.bf16.mxu0 %v6061
        %8573 = vmatpush1.bf16.msra.mxu0 %v6060
        %8574 = vmatprep.subr.bf16.mxu0 %v6063
        %8575 = vmatpush1.bf16.msra.mxu0 %v6062
        %8576 = vmatprep.subr.bf16.mxu0 %v6065
        %8577 = vmatpush1.bf16.msra.mxu0 %v6064
        %8578 = vmatprep.mubr.bf16.mxu0 %v1666
        %8579 = vmatmul.mubr.bf16.gmra.mrb[0].mxu0 %v1652
        %v8580 = vpop.f32.mrb[0].mxu0
        %v8581 = vadd.f32 %v8540, %v8580
        %v8582 = vpop.f32.mrb[0].mxu0
        %v8583 = vadd.f32 %v8542, %v8582
        %v8584 = vpop.f32.mrb[0].mxu0
        %v8585 = vpop.f32.mrb[0].mxu0
        %8586 = vdwg.mxu0
        %8587 = vmatprep.subr.bf16.mxu0 %v6067
        %8588 = vmatpush1.bf16.msra.mxu0 %v6066
        %8589 = vmatprep.subr.bf16.mxu0 %v6069
        %8590 = vmatpush1.bf16.msra.mxu0 %v6068
        %8591 = vmatprep.subr.bf16.mxu0 %v6071
        %8592 = vmatpush1.bf16.msra.mxu0 %v6070
        %8593 = vmatprep.subr.bf16.mxu0 %v6073
        %8594 = vmatpush1.bf16.msra.mxu0 %v6072
        %8595 = vmatprep.subr.bf16.mxu0 %v6075
        %8596 = vmatpush1.bf16.msra.mxu0 %v6074
        %8597 = vmatprep.subr.bf16.mxu0 %v6077
        %8598 = vmatpush1.bf16.msra.mxu0 %v6076
        %8599 = vmatprep.subr.bf16.mxu0 %v6079
        %8600 = vmatpush1.bf16.msra.mxu0 %v6078
        %8601 = vmatprep.subr.bf16.mxu0 %v6081
        %8602 = vmatpush1.bf16.msra.mxu0 %v6080
        %8603 = vmatprep.subr.bf16.mxu0 %v6083
        %8604 = vmatpush1.bf16.msra.mxu0 %v6082
        %8605 = vmatprep.subr.bf16.mxu0 %v6085
        %8606 = vmatpush1.bf16.msra.mxu0 %v6084
        %8607 = vmatprep.subr.bf16.mxu0 %v6087
        %8608 = vmatpush1.bf16.msra.mxu0 %v6086
        %8609 = vmatprep.subr.bf16.mxu0 %v6089
        %8610 = vmatpush1.bf16.msra.mxu0 %v6088
        %8611 = vmatprep.subr.bf16.mxu0 %v6091
        %8612 = vmatpush1.bf16.msra.mxu0 %v6090
        %8613 = vmatprep.subr.bf16.mxu0 %v6093
        %8614 = vmatpush1.bf16.msra.mxu0 %v6092
        %8615 = vmatprep.subr.bf16.mxu0 %v6095
        %8616 = vmatpush1.bf16.msra.mxu0 %v6094
        %8617 = vmatprep.subr.bf16.mxu0 %v6097
        %8618 = vmatpush1.bf16.msra.mxu0 %v6096
        %8619 = vmatprep.mubr.bf16.mxu0 %v1676
        %8620 = vmatmul.mubr.bf16.gmra.mrb[0].mxu0 %v1674
        %v8621 = vpop.f32.mrb[0].mxu0
        %v8622 = vadd.f32 %v8581, %v8621
        %v8623 = vpop.f32.mrb[0].mxu0
        %v8624 = vadd.f32 %v8583, %v8623
        %v8625 = vpop.f32.mrb[0].mxu0
        %v8626 = vpop.f32.mrb[0].mxu0
        %8627 = vdwg.mxu0
        %8628 = vmatprep.subr.bf16.mxu0 %v6099
        %8629 = vmatpush1.bf16.msra.mxu0 %v6098
        %8630 = vmatprep.subr.bf16.mxu0 %v6101
        %8631 = vmatpush1.bf16.msra.mxu0 %v6100
        %8632 = vmatprep.subr.bf16.mxu0 %v6103
        %8633 = vmatpush1.bf16.msra.mxu0 %v6102
        %8634 = vmatprep.subr.bf16.mxu0 %v6105
        %8635 = vmatpush1.bf16.msra.mxu0 %v6104
        %8636 = vmatprep.subr.bf16.mxu0 %v6107
        %8637 = vmatpush1.bf16.msra.mxu0 %v6106
        %8638 = vmatprep.subr.bf16.mxu0 %v6109
        %8639 = vmatpush1.bf16.msra.mxu0 %v6108
        %8640 = vmatprep.subr.bf16.mxu0 %v6111
        %8641 = vmatpush1.bf16.msra.mxu0 %v6110
        %8642 = vmatprep.subr.bf16.mxu0 %v6113
        %8643 = vmatpush1.bf16.msra.mxu0 %v6112
        %8644 = vmatprep.subr.bf16.mxu0 %v6115
        %8645 = vmatpush1.bf16.msra.mxu0 %v6114
        %8646 = vmatprep.subr.bf16.mxu0 %v6117
        %8647 = vmatpush1.bf16.msra.mxu0 %v6116
        %8648 = vmatprep.subr.bf16.mxu0 %v6119
        %8649 = vmatpush1.bf16.msra.mxu0 %v6118
        %8650 = vmatprep.subr.bf16.mxu0 %v6121
        %8651 = vmatpush1.bf16.msra.mxu0 %v6120
        %8652 = vmatprep.subr.bf16.mxu0 %v6123
        %8653 = vmatpush1.bf16.msra.mxu0 %v6122
        %8654 = vmatprep.subr.bf16.mxu0 %v6125
        %8655 = vmatpush1.bf16.msra.mxu0 %v6124
        %8656 = vmatprep.subr.bf16.mxu0 %v6127
        %8657 = vmatpush1.bf16.msra.mxu0 %v6126
        %8658 = vmatprep.subr.bf16.mxu0 %v6129
        %8659 = vmatpush1.bf16.msra.mxu0 %v6128
        %8660 = vmatprep.mubr.bf16.mxu0 %v1673
        %8661 = vmatmul.mubr.bf16.gmra.mrb[0].mxu0 %v1659
        %v8662 = vpop.f32.mrb[0].mxu0
        %v8663 = vadd.f32 %v8622, %v8662
        %v8664 = vpop.f32.mrb[0].mxu0
        %v8665 = vadd.f32 %v8624, %v8664
        %v8666 = vpop.f32.mrb[0].mxu0
        %v8667 = vpop.f32.mrb[0].mxu0
        %8668 = vdwg.mxu0
        %8669 = vmatprep.subr.bf16.mxu0 %v6131
        %8670 = vmatpush1.bf16.msra.mxu0 %v6130
        %8671 = vmatprep.subr.bf16.mxu0 %v6133
        %8672 = vmatpush1.bf16.msra.mxu0 %v6132
        %8673 = vmatprep.subr.bf16.mxu0 %v6135
        %8674 = vmatpush1.bf16.msra.mxu0 %v6134
        %8675 = vmatprep.subr.bf16.mxu0 %v6137
        %8676 = vmatpush1.bf16.msra.mxu0 %v6136
        %8677 = vmatprep.subr.bf16.mxu0 %v6139
        %8678 = vmatpush1.bf16.msra.mxu0 %v6138
        %8679 = vmatprep.subr.bf16.mxu0 %v6141
        %8680 = vmatpush1.bf16.msra.mxu0 %v6140
        %8681 = vmatprep.subr.bf16.mxu0 %v6143
        %8682 = vmatpush1.bf16.msra.mxu0 %v6142
        %8683 = vmatprep.subr.bf16.mxu0 %v6145
        %8684 = vmatpush1.bf16.msra.mxu0 %v6144
        %8685 = vmatprep.subr.bf16.mxu0 %v6147
        %8686 = vmatpush1.bf16.msra.mxu0 %v6146
        %8687 = vmatprep.subr.bf16.mxu0 %v6149
        %8688 = vmatpush1.bf16.msra.mxu0 %v6148
        %8689 = vmatprep.subr.bf16.mxu0 %v6151
        %8690 = vmatpush1.bf16.msra.mxu0 %v6150
        %8691 = vmatprep.subr.bf16.mxu0 %v6153
        %8692 = vmatpush1.bf16.msra.mxu0 %v6152
        %8693 = vmatprep.subr.bf16.mxu0 %v6155
        %8694 = vmatpush1.bf16.msra.mxu0 %v6154
        %8695 = vmatprep.subr.bf16.mxu0 %v6157
        %8696 = vmatpush1.bf16.msra.mxu0 %v6156
        %8697 = vmatprep.subr.bf16.mxu0 %v6159
        %8698 = vmatpush1.bf16.msra.mxu0 %v6158
        %8699 = vmatprep.subr.bf16.mxu0 %v6161
        %8700 = vmatpush1.bf16.msra.mxu0 %v6160
        %8701 = vmatprep.mubr.bf16.mxu0 %v1677
        %8702 = vmatmul.mubr.bf16.gmra.mrb[0].mxu0 %v1675
        %v8703 = vpop.f32.mrb[0].mxu0
        %v8704 = vadd.f32 %v8663, %v8703
        %v8705 = vpop.f32.mrb[0].mxu0
        %v8706 = vadd.f32 %v8665, %v8705
        %v8707 = vpop.f32.mrb[0].mxu0
        %v8708 = vpop.f32.mrb[0].mxu0
        %8709 = vdwg.mxu0
        %8710 = vmatprep.subr.bf16.mxu0 %v6163
        %8711 = vmatpush1.bf16.msra.mxu0 %v6162
        %8712 = vmatprep.subr.bf16.mxu0 %v6165
        %8713 = vmatpush1.bf16.msra.mxu0 %v6164
        %8714 = vmatprep.subr.bf16.mxu0 %v6167
        %8715 = vmatpush1.bf16.msra.mxu0 %v6166
        %8716 = vmatprep.subr.bf16.mxu0 %v6169
        %8717 = vmatpush1.bf16.msra.mxu0 %v6168
        %8718 = vmatprep.subr.bf16.mxu0 %v6171
        %8719 = vmatpush1.bf16.msra.mxu0 %v6170
        %8720 = vmatprep.subr.bf16.mxu0 %v6173
        %8721 = vmatpush1.bf16.msra.mxu0 %v6172
        %8722 = vmatprep.subr.bf16.mxu0 %v6175
        %8723 = vmatpush1.bf16.msra.mxu0 %v6174
        %8724 = vmatprep.subr.bf16.mxu0 %v6177
        %8725 = vmatpush1.bf16.msra.mxu0 %v6176
        %8726 = vmatprep.subr.bf16.mxu0 %v6179
        %8727 = vmatpush1.bf16.msra.mxu0 %v6178
        %8728 = vmatprep.subr.bf16.mxu0 %v6181
        %8729 = vmatpush1.bf16.msra.mxu0 %v6180
        %8730 = vmatprep.subr.bf16.mxu0 %v6183
        %8731 = vmatpush1.bf16.msra.mxu0 %v6182
        %8732 = vmatprep.subr.bf16.mxu0 %v6185
        %8733 = vmatpush1.bf16.msra.mxu0 %v6184
        %8734 = vmatprep.subr.bf16.mxu0 %v6187
        %8735 = vmatpush1.bf16.msra.mxu0 %v6186
        %8736 = vmatprep.subr.bf16.mxu0 %v6189
        %8737 = vmatpush1.bf16.msra.mxu0 %v6188
        %8738 = vmatprep.subr.bf16.mxu0 %v6191
        %8739 = vmatpush1.bf16.msra.mxu0 %v6190
        %8740 = vmatprep.subr.bf16.mxu0 %v6193
        %8741 = vmatpush1.bf16.msra.mxu0 %v6192
        %8742 = vmatprep.mubr.bf16.mxu0 %v1715
        %8743 = vmatmul.mubr.bf16.gmra.mrb[0].mxu0 %v1701
        %v8744 = vpop.f32.mrb[0].mxu0
        %v8745 = vadd.f32 %v8704, %v8744
        %v8746 = vpop.f32.mrb[0].mxu0
        %v8747 = vadd.f32 %v8706, %v8746
        %v8748 = vpop.f32.mrb[0].mxu0
        %v8749 = vpop.f32.mrb[0].mxu0
        %8750 = vdwg.mxu0
        %8751 = vmatprep.subr.bf16.mxu0 %v6195
        %8752 = vmatpush1.bf16.msra.mxu0 %v6194
        %8753 = vmatprep.subr.bf16.mxu0 %v6197
        %8754 = vmatpush1.bf16.msra.mxu0 %v6196
        %8755 = vmatprep.subr.bf16.mxu0 %v6199
        %8756 = vmatpush1.bf16.msra.mxu0 %v6198
        %8757 = vmatprep.subr.bf16.mxu0 %v6201
        %8758 = vmatpush1.bf16.msra.mxu0 %v6200
        %8759 = vmatprep.subr.bf16.mxu0 %v6203
        %8760 = vmatpush1.bf16.msra.mxu0 %v6202
        %8761 = vmatprep.subr.bf16.mxu0 %v6205
        %8762 = vmatpush1.bf16.msra.mxu0 %v6204
        %8763 = vmatprep.subr.bf16.mxu0 %v6207
        %8764 = vmatpush1.bf16.msra.mxu0 %v6206
        %8765 = vmatprep.subr.bf16.mxu0 %v6209
        %8766 = vmatpush1.bf16.msra.mxu0 %v6208
        %8767 = vmatprep.subr.bf16.mxu0 %v6211
        %8768 = vmatpush1.bf16.msra.mxu0 %v6210
        %8769 = vmatprep.subr.bf16.mxu0 %v6213
        %8770 = vmatpush1.bf16.msra.mxu0 %v6212
        %8771 = vmatprep.subr.bf16.mxu0 %v6215
        %8772 = vmatpush1.bf16.msra.mxu0 %v6214
        %8773 = vmatprep.subr.bf16.mxu0 %v6217
        %8774 = vmatpush1.bf16.msra.mxu0 %v6216
        %8775 = vmatprep.subr.bf16.mxu0 %v6219
        %8776 = vmatpush1.bf16.msra.mxu0 %v6218
        %8777 = vmatprep.subr.bf16.mxu0 %v6221
        %8778 = vmatpush1.bf16.msra.mxu0 %v6220
        %8779 = vmatprep.subr.bf16.mxu0 %v6223
        %8780 = vmatpush1.bf16.msra.mxu0 %v6222
        %8781 = vmatprep.subr.bf16.mxu0 %v6225
        %8782 = vmatpush1.bf16.msra.mxu0 %v6224
        %8783 = vmatprep.mubr.bf16.mxu0 %v1725
        %8784 = vmatmul.mubr.bf16.gmra.mrb[0].mxu0 %v1723
        %v8785 = vpop.f32.mrb[0].mxu0
        %v8786 = vadd.f32 %v8745, %v8785
        %v8787 = vpop.f32.mrb[0].mxu0
        %v8788 = vadd.f32 %v8747, %v8787
        %v8789 = vpop.f32.mrb[0].mxu0
        %v8790 = vpop.f32.mrb[0].mxu0
        %8791 = vdwg.mxu0
        %8792 = vmatprep.subr.bf16.mxu0 %v6227
        %8793 = vmatpush1.bf16.msra.mxu0 %v6226
        %8794 = vmatprep.subr.bf16.mxu0 %v6229
        %8795 = vmatpush1.bf16.msra.mxu0 %v6228
        %8796 = vmatprep.subr.bf16.mxu0 %v6231
        %8797 = vmatpush1.bf16.msra.mxu0 %v6230
        %8798 = vmatprep.subr.bf16.mxu0 %v6233
        %8799 = vmatpush1.bf16.msra.mxu0 %v6232
        %8800 = vmatprep.subr.bf16.mxu0 %v6235
        %8801 = vmatpush1.bf16.msra.mxu0 %v6234
        %8802 = vmatprep.subr.bf16.mxu0 %v6237
        %8803 = vmatpush1.bf16.msra.mxu0 %v6236
        %8804 = vmatprep.subr.bf16.mxu0 %v6239
        %8805 = vmatpush1.bf16.msra.mxu0 %v6238
        %8806 = vmatprep.subr.bf16.mxu0 %v6241
        %8807 = vmatpush1.bf16.msra.mxu0 %v6240
        %8808 = vmatprep.subr.bf16.mxu0 %v6243
        %8809 = vmatpush1.bf16.msra.mxu0 %v6242
        %8810 = vmatprep.subr.bf16.mxu0 %v6245
        %8811 = vmatpush1.bf16.msra.mxu0 %v6244
        %8812 = vmatprep.subr.bf16.mxu0 %v6247
        %8813 = vmatpush1.bf16.msra.mxu0 %v6246
        %8814 = vmatprep.subr.bf16.mxu0 %v6249
        %8815 = vmatpush1.bf16.msra.mxu0 %v6248
        %8816 = vmatprep.subr.bf16.mxu0 %v6251
        %8817 = vmatpush1.bf16.msra.mxu0 %v6250
        %8818 = vmatprep.subr.bf16.mxu0 %v6253
        %8819 = vmatpush1.bf16.msra.mxu0 %v6252
        %8820 = vmatprep.subr.bf16.mxu0 %v6255
        %8821 = vmatpush1.bf16.msra.mxu0 %v6254
        %8822 = vmatprep.subr.bf16.mxu0 %v6257
        %8823 = vmatpush1.bf16.msra.mxu0 %v6256
        %8824 = vmatprep.mubr.bf16.mxu0 %v1722
        %8825 = vmatmul.mubr.bf16.gmra.mrb[0].mxu0 %v1708
        %v8826 = vpop.f32.mrb[0].mxu0
        %v8827 = vadd.f32 %v8786, %v8826
        %v8828 = vpop.f32.mrb[0].mxu0
        %v8829 = vadd.f32 %v8788, %v8828
        %v8830 = vpop.f32.mrb[0].mxu0
        %v8831 = vpop.f32.mrb[0].mxu0
        %8832 = vdwg.mxu0
        %8833 = vmatprep.subr.bf16.mxu0 %v6259
        %8834 = vmatpush1.bf16.msra.mxu0 %v6258
        %8835 = vmatprep.subr.bf16.mxu0 %v6261
        %8836 = vmatpush1.bf16.msra.mxu0 %v6260
        %8837 = vmatprep.subr.bf16.mxu0 %v6263
        %8838 = vmatpush1.bf16.msra.mxu0 %v6262
        %8839 = vmatprep.subr.bf16.mxu0 %v6265
        %8840 = vmatpush1.bf16.msra.mxu0 %v6264
        %8841 = vmatprep.subr.bf16.mxu0 %v6267
        %8842 = vmatpush1.bf16.msra.mxu0 %v6266
        %8843 = vmatprep.subr.bf16.mxu0 %v6269
        %8844 = vmatpush1.bf16.msra.mxu0 %v6268
        %8845 = vmatprep.subr.bf16.mxu0 %v6271
        %8846 = vmatpush1.bf16.msra.mxu0 %v6270
        %8847 = vmatprep.subr.bf16.mxu0 %v6273
        %8848 = vmatpush1.bf16.msra.mxu0 %v6272
        %8849 = vmatprep.subr.bf16.mxu0 %v6275
        %8850 = vmatpush1.bf16.msra.mxu0 %v6274
        %8851 = vmatprep.subr.bf16.mxu0 %v6277
        %8852 = vmatpush1.bf16.msra.mxu0 %v6276
        %8853 = vmatprep.subr.bf16.mxu0 %v6279
        %8854 = vmatpush1.bf16.msra.mxu0 %v6278
        %8855 = vmatprep.subr.bf16.mxu0 %v6281
        %8856 = vmatpush1.bf16.msra.mxu0 %v6280
        %8857 = vmatprep.subr.bf16.mxu0 %v6283
        %8858 = vmatpush1.bf16.msra.mxu0 %v6282
        %8859 = vmatprep.subr.bf16.mxu0 %v6285
        %8860 = vmatpush1.bf16.msra.mxu0 %v6284
        %8861 = vmatprep.subr.bf16.mxu0 %v6287
        %8862 = vmatpush1.bf16.msra.mxu0 %v6286
        %8863 = vmatprep.subr.bf16.mxu0 %v6289
        %8864 = vmatpush1.bf16.msra.mxu0 %v6288
        %8865 = vmatprep.mubr.bf16.mxu0 %v1726
        %8866 = vmatmul.mubr.bf16.gmra.mrb[0].mxu0 %v1724
        %v8867 = vpop.f32.mrb[0].mxu0
        %v8868 = vadd.f32 %v8827, %v8867
        %v8869 = vpop.f32.mrb[0].mxu0
        %v8870 = vadd.f32 %v8829, %v8869
        %v8871 = vpop.f32.mrb[0].mxu0
        %v8872 = vpop.f32.mrb[0].mxu0
        %8873 = vdwg.mxu0
        %8874 = vmatprep.subr.bf16.mxu0 %v6291
        %8875 = vmatpush1.bf16.msra.mxu0 %v6290
        %8876 = vmatprep.subr.bf16.mxu0 %v6293
        %8877 = vmatpush1.bf16.msra.mxu0 %v6292
        %8878 = vmatprep.subr.bf16.mxu0 %v6295
        %8879 = vmatpush1.bf16.msra.mxu0 %v6294
        %8880 = vmatprep.subr.bf16.mxu0 %v6297
        %8881 = vmatpush1.bf16.msra.mxu0 %v6296
        %8882 = vmatprep.subr.bf16.mxu0 %v6299
        %8883 = vmatpush1.bf16.msra.mxu0 %v6298
        %8884 = vmatprep.subr.bf16.mxu0 %v6301
        %8885 = vmatpush1.bf16.msra.mxu0 %v6300
        %8886 = vmatprep.subr.bf16.mxu0 %v6303
        %8887 = vmatpush1.bf16.msra.mxu0 %v6302
        %8888 = vmatprep.subr.bf16.mxu0 %v6305
        %8889 = vmatpush1.bf16.msra.mxu0 %v6304
        %8890 = vmatprep.subr.bf16.mxu0 %v6307
        %8891 = vmatpush1.bf16.msra.mxu0 %v6306
        %8892 = vmatprep.subr.bf16.mxu0 %v6309
        %8893 = vmatpush1.bf16.msra.mxu0 %v6308
        %8894 = vmatprep.subr.bf16.mxu0 %v6311
        %8895 = vmatpush1.bf16.msra.mxu0 %v6310
        %8896 = vmatprep.subr.bf16.mxu0 %v6313
        %8897 = vmatpush1.bf16.msra.mxu0 %v6312
        %8898 = vmatprep.subr.bf16.mxu0 %v6315
        %8899 = vmatpush1.bf16.msra.mxu0 %v6314
        %8900 = vmatprep.subr.bf16.mxu0 %v6317
        %8901 = vmatpush1.bf16.msra.mxu0 %v6316
        %8902 = vmatprep.subr.bf16.mxu0 %v6319
        %8903 = vmatpush1.bf16.msra.mxu0 %v6318
        %8904 = vmatprep.subr.bf16.mxu0 %v6321
        %8905 = vmatpush1.bf16.msra.mxu0 %v6320
        %8906 = vmatprep.mubr.bf16.mxu0 %v1764
        %8907 = vmatmul.mubr.bf16.gmra.mrb[0].mxu0 %v1750
        %v8908 = vpop.f32.mrb[0].mxu0
        %v8909 = vadd.f32 %v8868, %v8908
        %v8910 = vpop.f32.mrb[0].mxu0
        %v8911 = vadd.f32 %v8870, %v8910
        %v8912 = vpop.f32.mrb[0].mxu0
        %v8913 = vpop.f32.mrb[0].mxu0
        %8914 = vdwg.mxu0
        %8915 = vmatprep.subr.bf16.mxu0 %v6323
        %8916 = vmatpush1.bf16.msra.mxu0 %v6322
        %8917 = vmatprep.subr.bf16.mxu0 %v6325
        %8918 = vmatpush1.bf16.msra.mxu0 %v6324
        %8919 = vmatprep.subr.bf16.mxu0 %v6327
        %8920 = vmatpush1.bf16.msra.mxu0 %v6326
        %8921 = vmatprep.subr.bf16.mxu0 %v6329
        %8922 = vmatpush1.bf16.msra.mxu0 %v6328
        %8923 = vmatprep.subr.bf16.mxu0 %v6331
        %8924 = vmatpush1.bf16.msra.mxu0 %v6330
        %8925 = vmatprep.subr.bf16.mxu0 %v6333
        %8926 = vmatpush1.bf16.msra.mxu0 %v6332
        %8927 = vmatprep.subr.bf16.mxu0 %v6335
        %8928 = vmatpush1.bf16.msra.mxu0 %v6334
        %8929 = vmatprep.subr.bf16.mxu0 %v6337
        %8930 = vmatpush1.bf16.msra.mxu0 %v6336
        %8931 = vmatprep.subr.bf16.mxu0 %v6339
        %8932 = vmatpush1.bf16.msra.mxu0 %v6338
        %8933 = vmatprep.subr.bf16.mxu0 %v6341
        %8934 = vmatpush1.bf16.msra.mxu0 %v6340
        %8935 = vmatprep.subr.bf16.mxu0 %v6343
        %8936 = vmatpush1.bf16.msra.mxu0 %v6342
        %8937 = vmatprep.subr.bf16.mxu0 %v6345
        %8938 = vmatpush1.bf16.msra.mxu0 %v6344
        %8939 = vmatprep.subr.bf16.mxu0 %v6347
        %8940 = vmatpush1.bf16.msra.mxu0 %v6346
        %8941 = vmatprep.subr.bf16.mxu0 %v6349
        %8942 = vmatpush1.bf16.msra.mxu0 %v6348
        %8943 = vmatprep.subr.bf16.mxu0 %v6351
        %8944 = vmatpush1.bf16.msra.mxu0 %v6350
        %8945 = vmatprep.subr.bf16.mxu0 %v6353
        %8946 = vmatpush1.bf16.msra.mxu0 %v6352
        %8947 = vmatprep.mubr.bf16.mxu0 %v1774
        %8948 = vmatmul.mubr.bf16.gmra.mrb[0].mxu0 %v1772
        %v8949 = vpop.f32.mrb[0].mxu0
        %v8950 = vadd.f32 %v8909, %v8949
        %v8951 = vpop.f32.mrb[0].mxu0
        %v8952 = vadd.f32 %v8911, %v8951
        %v8953 = vpop.f32.mrb[0].mxu0
        %v8954 = vpop.f32.mrb[0].mxu0
        %8955 = vdwg.mxu0
        %8956 = vmatprep.subr.bf16.mxu0 %v6355
        %8957 = vmatpush1.bf16.msra.mxu0 %v6354
        %8958 = vmatprep.subr.bf16.mxu0 %v6357
        %8959 = vmatpush1.bf16.msra.mxu0 %v6356
        %8960 = vmatprep.subr.bf16.mxu0 %v6359
        %8961 = vmatpush1.bf16.msra.mxu0 %v6358
        %8962 = vmatprep.subr.bf16.mxu0 %v6361
        %8963 = vmatpush1.bf16.msra.mxu0 %v6360
        %8964 = vmatprep.subr.bf16.mxu0 %v6363
        %8965 = vmatpush1.bf16.msra.mxu0 %v6362
        %8966 = vmatprep.subr.bf16.mxu0 %v6365
        %8967 = vmatpush1.bf16.msra.mxu0 %v6364
        %8968 = vmatprep.subr.bf16.mxu0 %v6367
        %8969 = vmatpush1.bf16.msra.mxu0 %v6366
        %8970 = vmatprep.subr.bf16.mxu0 %v6369
        %8971 = vmatpush1.bf16.msra.mxu0 %v6368
        %8972 = vmatprep.subr.bf16.mxu0 %v6371
        %8973 = vmatpush1.bf16.msra.mxu0 %v6370
        %8974 = vmatprep.subr.bf16.mxu0 %v6373
        %8975 = vmatpush1.bf16.msra.mxu0 %v6372
        %8976 = vmatprep.subr.bf16.mxu0 %v6375
        %8977 = vmatpush1.bf16.msra.mxu0 %v6374
        %8978 = vmatprep.subr.bf16.mxu0 %v6377
        %8979 = vmatpush1.bf16.msra.mxu0 %v6376
        %8980 = vmatprep.subr.bf16.mxu0 %v6379
        %8981 = vmatpush1.bf16.msra.mxu0 %v6378
        %8982 = vmatprep.subr.bf16.mxu0 %v6381
        %8983 = vmatpush1.bf16.msra.mxu0 %v6380
        %8984 = vmatprep.subr.bf16.mxu0 %v6383
        %8985 = vmatpush1.bf16.msra.mxu0 %v6382
        %8986 = vmatprep.subr.bf16.mxu0 %v6385
        %8987 = vmatpush1.bf16.msra.mxu0 %v6384
        %8988 = vmatprep.mubr.bf16.mxu0 %v1771
        %8989 = vmatmul.mubr.bf16.gmra.mrb[0].mxu0 %v1757
        %v8990 = vpop.f32.mrb[0].mxu0
        %v8991 = vadd.f32 %v8950, %v8990
        %v8992 = vpop.f32.mrb[0].mxu0
        %v8993 = vadd.f32 %v8952, %v8992
        %v8994 = vpop.f32.mrb[0].mxu0
        %v8995 = vpop.f32.mrb[0].mxu0
        %8996 = vdwg.mxu0
        %8997 = vmatprep.subr.bf16.mxu0 %v6387
        %8998 = vmatpush1.bf16.msra.mxu0 %v6386
        %8999 = vmatprep.subr.bf16.mxu0 %v6389
        %9000 = vmatpush1.bf16.msra.mxu0 %v6388
        %9001 = vmatprep.subr.bf16.mxu0 %v6391
        %9002 = vmatpush1.bf16.msra.mxu0 %v6390
        %9003 = vmatprep.subr.bf16.mxu0 %v6393
        %9004 = vmatpush1.bf16.msra.mxu0 %v6392
        %9005 = vmatprep.subr.bf16.mxu0 %v6395
        %9006 = vmatpush1.bf16.msra.mxu0 %v6394
        %9007 = vmatprep.subr.bf16.mxu0 %v6397
        %9008 = vmatpush1.bf16.msra.mxu0 %v6396
        %9009 = vmatprep.subr.bf16.mxu0 %v6399
        %9010 = vmatpush1.bf16.msra.mxu0 %v6398
        %9011 = vmatprep.subr.bf16.mxu0 %v6401
        %9012 = vmatpush1.bf16.msra.mxu0 %v6400
        %9013 = vmatprep.subr.bf16.mxu0 %v6403
        %9014 = vmatpush1.bf16.msra.mxu0 %v6402
        %9015 = vmatprep.subr.bf16.mxu0 %v6405
        %9016 = vmatpush1.bf16.msra.mxu0 %v6404
        %9017 = vmatprep.subr.bf16.mxu0 %v6407
        %9018 = vmatpush1.bf16.msra.mxu0 %v6406
        %9019 = vmatprep.subr.bf16.mxu0 %v6409
        %9020 = vmatpush1.bf16.msra.mxu0 %v6408
        %9021 = vmatprep.subr.bf16.mxu0 %v6411
        %9022 = vmatpush1.bf16.msra.mxu0 %v6410
        %9023 = vmatprep.subr.bf16.mxu0 %v6413
        %9024 = vmatpush1.bf16.msra.mxu0 %v6412
        %9025 = vmatprep.subr.bf16.mxu0 %v6415
        %9026 = vmatpush1.bf16.msra.mxu0 %v6414
        %9027 = vmatprep.subr.bf16.mxu0 %v6417
        %9028 = vmatpush1.bf16.msra.mxu0 %v6416
        %9029 = vmatprep.mubr.bf16.mxu0 %v1775
        %9030 = vmatmul.mubr.bf16.gmra.mrb[0].mxu0 %v1773
        %v9031 = vpop.f32.mrb[0].mxu0
        %v9032 = vadd.f32 %v8991, %v9031
        %v9033 = vpop.f32.mrb[0].mxu0
        %v9034 = vadd.f32 %v8993, %v9033
        %v9035 = vpop.f32.mrb[0].mxu0
        %v9036 = vpop.f32.mrb[0].mxu0
        %9037 = vdwg.mxu0
        %9038 = vmatprep.subr.bf16.mxu0 %v6419
        %9039 = vmatpush1.bf16.msra.mxu0 %v6418
        %9040 = vmatprep.subr.bf16.mxu0 %v6421
        %9041 = vmatpush1.bf16.msra.mxu0 %v6420
        %9042 = vmatprep.subr.bf16.mxu0 %v6423
        %9043 = vmatpush1.bf16.msra.mxu0 %v6422
        %9044 = vmatprep.subr.bf16.mxu0 %v6425
        %9045 = vmatpush1.bf16.msra.mxu0 %v6424
        %9046 = vmatprep.subr.bf16.mxu0 %v6427
        %9047 = vmatpush1.bf16.msra.mxu0 %v6426
        %9048 = vmatprep.subr.bf16.mxu0 %v6429
        %9049 = vmatpush1.bf16.msra.mxu0 %v6428
        %9050 = vmatprep.subr.bf16.mxu0 %v6431
        %9051 = vmatpush1.bf16.msra.mxu0 %v6430
        %9052 = vmatprep.subr.bf16.mxu0 %v6433
        %9053 = vmatpush1.bf16.msra.mxu0 %v6432
        %9054 = vmatprep.subr.bf16.mxu0 %v6435
        %9055 = vmatpush1.bf16.msra.mxu0 %v6434
        %9056 = vmatprep.subr.bf16.mxu0 %v6437
        %9057 = vmatpush1.bf16.msra.mxu0 %v6436
        %9058 = vmatprep.subr.bf16.mxu0 %v6439
        %9059 = vmatpush1.bf16.msra.mxu0 %v6438
        %9060 = vmatprep.subr.bf16.mxu0 %v6441
        %9061 = vmatpush1.bf16.msra.mxu0 %v6440
        %9062 = vmatprep.subr.bf16.mxu0 %v6443
        %9063 = vmatpush1.bf16.msra.mxu0 %v6442
        %9064 = vmatprep.subr.bf16.mxu0 %v6445
        %9065 = vmatpush1.bf16.msra.mxu0 %v6444
        %9066 = vmatprep.subr.bf16.mxu0 %v6447
        %9067 = vmatpush1.bf16.msra.mxu0 %v6446
        %9068 = vmatprep.subr.bf16.mxu0 %v6449
        %9069 = vmatpush1.bf16.msra.mxu0 %v6448
        %9070 = vmatprep.mubr.bf16.mxu0 %v1813
        %9071 = vmatmul.mubr.bf16.gmra.mrb[0].mxu0 %v1799
        %v9072 = vpop.f32.mrb[0].mxu0
        %v9073 = vadd.f32 %v9032, %v9072
        %v9074 = vpop.f32.mrb[0].mxu0
        %v9075 = vadd.f32 %v9034, %v9074
        %v9076 = vpop.f32.mrb[0].mxu0
        %v9077 = vpop.f32.mrb[0].mxu0
        %9078 = vdwg.mxu0
        %9079 = vmatprep.subr.bf16.mxu0 %v6451
        %9080 = vmatpush1.bf16.msra.mxu0 %v6450
        %9081 = vmatprep.subr.bf16.mxu0 %v6453
        %9082 = vmatpush1.bf16.msra.mxu0 %v6452
        %9083 = vmatprep.subr.bf16.mxu0 %v6455
        %9084 = vmatpush1.bf16.msra.mxu0 %v6454
        %9085 = vmatprep.subr.bf16.mxu0 %v6457
        %9086 = vmatpush1.bf16.msra.mxu0 %v6456
        %9087 = vmatprep.subr.bf16.mxu0 %v6459
        %9088 = vmatpush1.bf16.msra.mxu0 %v6458
        %9089 = vmatprep.subr.bf16.mxu0 %v6461
        %9090 = vmatpush1.bf16.msra.mxu0 %v6460
        %9091 = vmatprep.subr.bf16.mxu0 %v6463
        %9092 = vmatpush1.bf16.msra.mxu0 %v6462
        %9093 = vmatprep.subr.bf16.mxu0 %v6465
        %9094 = vmatpush1.bf16.msra.mxu0 %v6464
        %9095 = vmatprep.subr.bf16.mxu0 %v6467
        %9096 = vmatpush1.bf16.msra.mxu0 %v6466
        %9097 = vmatprep.subr.bf16.mxu0 %v6469
        %9098 = vmatpush1.bf16.msra.mxu0 %v6468
        %9099 = vmatprep.subr.bf16.mxu0 %v6471
        %9100 = vmatpush1.bf16.msra.mxu0 %v6470
        %9101 = vmatprep.subr.bf16.mxu0 %v6473
        %9102 = vmatpush1.bf16.msra.mxu0 %v6472
        %9103 = vmatprep.subr.bf16.mxu0 %v6475
        %9104 = vmatpush1.bf16.msra.mxu0 %v6474
        %9105 = vmatprep.subr.bf16.mxu0 %v6477
        %9106 = vmatpush1.bf16.msra.mxu0 %v6476
        %9107 = vmatprep.subr.bf16.mxu0 %v6479
        %9108 = vmatpush1.bf16.msra.mxu0 %v6478
        %9109 = vmatprep.subr.bf16.mxu0 %v6481
        %9110 = vmatpush1.bf16.msra.mxu0 %v6480
        %9111 = vmatprep.mubr.bf16.mxu0 %v1823
        %9112 = vmatmul.mubr.bf16.gmra.mrb[0].mxu0 %v1821
        %v9113 = vpop.f32.mrb[0].mxu0
        %v9114 = vadd.f32 %v9073, %v9113
        %v9115 = vpop.f32.mrb[0].mxu0
        %v9116 = vadd.f32 %v9075, %v9115
        %v9117 = vpop.f32.mrb[0].mxu0
        %v9118 = vpop.f32.mrb[0].mxu0
        %9119 = vdwg.mxu0
        %9120 = vmatprep.subr.bf16.mxu0 %v6483
        %9121 = vmatpush1.bf16.msra.mxu0 %v6482
        %9122 = vmatprep.subr.bf16.mxu0 %v6485
        %9123 = vmatpush1.bf16.msra.mxu0 %v6484
        %9124 = vmatprep.subr.bf16.mxu0 %v6487
        %9125 = vmatpush1.bf16.msra.mxu0 %v6486
        %9126 = vmatprep.subr.bf16.mxu0 %v6489
        %9127 = vmatpush1.bf16.msra.mxu0 %v6488
        %9128 = vmatprep.subr.bf16.mxu0 %v6491
        %9129 = vmatpush1.bf16.msra.mxu0 %v6490
        %9130 = vmatprep.subr.bf16.mxu0 %v6493
        %9131 = vmatpush1.bf16.msra.mxu0 %v6492
        %9132 = vmatprep.subr.bf16.mxu0 %v6495
        %9133 = vmatpush1.bf16.msra.mxu0 %v6494
        %9134 = vmatprep.subr.bf16.mxu0 %v6497
        %9135 = vmatpush1.bf16.msra.mxu0 %v6496
        %9136 = vmatprep.subr.bf16.mxu0 %v6499
        %9137 = vmatpush1.bf16.msra.mxu0 %v6498
        %9138 = vmatprep.subr.bf16.mxu0 %v6501
        %9139 = vmatpush1.bf16.msra.mxu0 %v6500
        %9140 = vmatprep.subr.bf16.mxu0 %v6503
        %9141 = vmatpush1.bf16.msra.mxu0 %v6502
        %9142 = vmatprep.subr.bf16.mxu0 %v6505
        %9143 = vmatpush1.bf16.msra.mxu0 %v6504
        %9144 = vmatprep.subr.bf16.mxu0 %v6507
        %9145 = vmatpush1.bf16.msra.mxu0 %v6506
        %9146 = vmatprep.subr.bf16.mxu0 %v6509
        %9147 = vmatpush1.bf16.msra.mxu0 %v6508
        %9148 = vmatprep.subr.bf16.mxu0 %v6511
        %9149 = vmatpush1.bf16.msra.mxu0 %v6510
        %9150 = vmatprep.subr.bf16.mxu0 %v6513
        %9151 = vmatpush1.bf16.msra.mxu0 %v6512
        %9152 = vmatprep.mubr.bf16.mxu0 %v1820
        %9153 = vmatmul.mubr.bf16.gmra.mrb[0].mxu0 %v1806
        %v9154 = vpop.f32.mrb[0].mxu0
        %v9155 = vadd.f32 %v9114, %v9154
        %v9156 = vpop.f32.mrb[0].mxu0
        %v9157 = vadd.f32 %v9116, %v9156
        %v9158 = vpop.f32.mrb[0].mxu0
        %v9159 = vpop.f32.mrb[0].mxu0
        %9160 = vdwg.mxu0
        %9161 = vmatprep.subr.bf16.mxu0 %v6515
        %9162 = vmatpush1.bf16.msra.mxu0 %v6514
        %9163 = vmatprep.subr.bf16.mxu0 %v6517
        %9164 = vmatpush1.bf16.msra.mxu0 %v6516
        %9165 = vmatprep.subr.bf16.mxu0 %v6519
        %9166 = vmatpush1.bf16.msra.mxu0 %v6518
        %9167 = vmatprep.subr.bf16.mxu0 %v6521
        %9168 = vmatpush1.bf16.msra.mxu0 %v6520
        %9169 = vmatprep.subr.bf16.mxu0 %v6523
        %9170 = vmatpush1.bf16.msra.mxu0 %v6522
        %9171 = vmatprep.subr.bf16.mxu0 %v6525
        %9172 = vmatpush1.bf16.msra.mxu0 %v6524
        %9173 = vmatprep.subr.bf16.mxu0 %v6527
        %9174 = vmatpush1.bf16.msra.mxu0 %v6526
        %9175 = vmatprep.subr.bf16.mxu0 %v6529
        %9176 = vmatpush1.bf16.msra.mxu0 %v6528
        %9177 = vmatprep.subr.bf16.mxu0 %v6531
        %9178 = vmatpush1.bf16.msra.mxu0 %v6530
        %9179 = vmatprep.subr.bf16.mxu0 %v6533
        %9180 = vmatpush1.bf16.msra.mxu0 %v6532
        %9181 = vmatprep.subr.bf16.mxu0 %v6535
        %9182 = vmatpush1.bf16.msra.mxu0 %v6534
        %9183 = vmatprep.subr.bf16.mxu0 %v6537
        %9184 = vmatpush1.bf16.msra.mxu0 %v6536
        %9185 = vmatprep.subr.bf16.mxu0 %v6539
        %9186 = vmatpush1.bf16.msra.mxu0 %v6538
        %9187 = vmatprep.subr.bf16.mxu0 %v6541
        %9188 = vmatpush1.bf16.msra.mxu0 %v6540
        %9189 = vmatprep.subr.bf16.mxu0 %v6543
        %9190 = vmatpush1.bf16.msra.mxu0 %v6542
        %9191 = vmatprep.subr.bf16.mxu0 %v6545
        %9192 = vmatpush1.bf16.msra.mxu0 %v6544
        %9193 = vmatprep.mubr.bf16.mxu0 %v1824
        %9194 = vmatmul.mubr.bf16.gmra.mrb[0].mxu0 %v1822
        %v9195 = vpop.f32.mrb[0].mxu0
        %v9196 = vadd.f32 %v9155, %v9195
        %v9197 = vpop.f32.mrb[0].mxu0
        %v9198 = vadd.f32 %v9157, %v9197
        %v9199 = vpop.f32.mrb[0].mxu0
        %v9200 = vpop.f32.mrb[0].mxu0
        %9201 = vdwg.mxu0
        %9202 = vmatprep.subr.bf16.mxu0 %v6547
        %9203 = vmatpush1.bf16.msra.mxu0 %v6546
        %9204 = vmatprep.subr.bf16.mxu0 %v6549
        %9205 = vmatpush1.bf16.msra.mxu0 %v6548
        %9206 = vmatprep.subr.bf16.mxu0 %v6551
        %9207 = vmatpush1.bf16.msra.mxu0 %v6550
        %9208 = vmatprep.subr.bf16.mxu0 %v6553
        %9209 = vmatpush1.bf16.msra.mxu0 %v6552
        %9210 = vmatprep.subr.bf16.mxu0 %v6555
        %9211 = vmatpush1.bf16.msra.mxu0 %v6554
        %9212 = vmatprep.subr.bf16.mxu0 %v6557
        %9213 = vmatpush1.bf16.msra.mxu0 %v6556
        %9214 = vmatprep.subr.bf16.mxu0 %v6559
        %9215 = vmatpush1.bf16.msra.mxu0 %v6558
        %9216 = vmatprep.subr.bf16.mxu0 %v6561
        %9217 = vmatpush1.bf16.msra.mxu0 %v6560
        %9218 = vmatprep.subr.bf16.mxu0 %v6563
        %9219 = vmatpush1.bf16.msra.mxu0 %v6562
        %9220 = vmatprep.subr.bf16.mxu0 %v6565
        %9221 = vmatpush1.bf16.msra.mxu0 %v6564
        %9222 = vmatprep.subr.bf16.mxu0 %v6567
        %9223 = vmatpush1.bf16.msra.mxu0 %v6566
        %9224 = vmatprep.subr.bf16.mxu0 %v6569
        %9225 = vmatpush1.bf16.msra.mxu0 %v6568
        %9226 = vmatprep.subr.bf16.mxu0 %v6571
        %9227 = vmatpush1.bf16.msra.mxu0 %v6570
        %9228 = vmatprep.subr.bf16.mxu0 %v6573
        %9229 = vmatpush1.bf16.msra.mxu0 %v6572
        %9230 = vmatprep.subr.bf16.mxu0 %v6575
        %9231 = vmatpush1.bf16.msra.mxu0 %v6574
        %9232 = vmatprep.subr.bf16.mxu0 %v6577
        %9233 = vmatpush1.bf16.msra.mxu0 %v6576
        %9234 = vmatprep.mubr.bf16.mxu0 %v1862
        %9235 = vmatmul.mubr.bf16.gmra.mrb[0].mxu0 %v1848
        %v9236 = vpop.f32.mrb[0].mxu0
        %v9237 = vadd.f32 %v9196, %v9236
        %v9238 = vpop.f32.mrb[0].mxu0
        %v9239 = vadd.f32 %v9198, %v9238
        %v9240 = vpop.f32.mrb[0].mxu0
        %v9241 = vpop.f32.mrb[0].mxu0
        %9242 = vdwg.mxu0
        %9243 = vmatprep.subr.bf16.mxu0 %v6579
        %9244 = vmatpush1.bf16.msra.mxu0 %v6578
        %9245 = vmatprep.subr.bf16.mxu0 %v6581
        %9246 = vmatpush1.bf16.msra.mxu0 %v6580
        %9247 = vmatprep.subr.bf16.mxu0 %v6583
        %9248 = vmatpush1.bf16.msra.mxu0 %v6582
        %9249 = vmatprep.subr.bf16.mxu0 %v6585
        %9250 = vmatpush1.bf16.msra.mxu0 %v6584
        %9251 = vmatprep.subr.bf16.mxu0 %v6587
        %9252 = vmatpush1.bf16.msra.mxu0 %v6586
        %9253 = vmatprep.subr.bf16.mxu0 %v6589
        %9254 = vmatpush1.bf16.msra.mxu0 %v6588
        %9255 = vmatprep.subr.bf16.mxu0 %v6591
        %9256 = vmatpush1.bf16.msra.mxu0 %v6590
        %9257 = vmatprep.subr.bf16.mxu0 %v6593
        %9258 = vmatpush1.bf16.msra.mxu0 %v6592
        %9259 = vmatprep.subr.bf16.mxu0 %v6595
        %9260 = vmatpush1.bf16.msra.mxu0 %v6594
        %9261 = vmatprep.subr.bf16.mxu0 %v6597
        %9262 = vmatpush1.bf16.msra.mxu0 %v6596
        %9263 = vmatprep.subr.bf16.mxu0 %v6599
        %9264 = vmatpush1.bf16.msra.mxu0 %v6598
        %9265 = vmatprep.subr.bf16.mxu0 %v6601
        %9266 = vmatpush1.bf16.msra.mxu0 %v6600
        %9267 = vmatprep.subr.bf16.mxu0 %v6603
        %9268 = vmatpush1.bf16.msra.mxu0 %v6602
        %9269 = vmatprep.subr.bf16.mxu0 %v6605
        %9270 = vmatpush1.bf16.msra.mxu0 %v6604
        %9271 = vmatprep.subr.bf16.mxu0 %v6607
        %9272 = vmatpush1.bf16.msra.mxu0 %v6606
        %9273 = vmatprep.subr.bf16.mxu0 %v6609
        %9274 = vmatpush1.bf16.msra.mxu0 %v6608
        %9275 = vmatprep.mubr.bf16.mxu0 %v1872
        %9276 = vmatmul.mubr.bf16.gmra.mrb[0].mxu0 %v1870
        %v9277 = vpop.f32.mrb[0].mxu0
        %v9278 = vadd.f32 %v9237, %v9277
        %v9279 = vpop.f32.mrb[0].mxu0
        %v9280 = vadd.f32 %v9239, %v9279
        %v9281 = vpop.f32.mrb[0].mxu0
        %v9282 = vpop.f32.mrb[0].mxu0
        %9283 = vdwg.mxu0
        %9284 = vmatprep.subr.bf16.mxu0 %v6611
        %9285 = vmatpush1.bf16.msra.mxu0 %v6610
        %9286 = vmatprep.subr.bf16.mxu0 %v6613
        %9287 = vmatpush1.bf16.msra.mxu0 %v6612
        %9288 = vmatprep.subr.bf16.mxu0 %v6615
        %9289 = vmatpush1.bf16.msra.mxu0 %v6614
        %9290 = vmatprep.subr.bf16.mxu0 %v6617
        %9291 = vmatpush1.bf16.msra.mxu0 %v6616
        %9292 = vmatprep.subr.bf16.mxu0 %v6619
        %9293 = vmatpush1.bf16.msra.mxu0 %v6618
        %9294 = vmatprep.subr.bf16.mxu0 %v6621
        %9295 = vmatpush1.bf16.msra.mxu0 %v6620
        %9296 = vmatprep.subr.bf16.mxu0 %v6623
        %9297 = vmatpush1.bf16.msra.mxu0 %v6622
        %9298 = vmatprep.subr.bf16.mxu0 %v6625
        %9299 = vmatpush1.bf16.msra.mxu0 %v6624
        %9300 = vmatprep.subr.bf16.mxu0 %v6627
        %9301 = vmatpush1.bf16.msra.mxu0 %v6626
        %9302 = vmatprep.subr.bf16.mxu0 %v6629
        %9303 = vmatpush1.bf16.msra.mxu0 %v6628
        %9304 = vmatprep.subr.bf16.mxu0 %v6631
        %9305 = vmatpush1.bf16.msra.mxu0 %v6630
        %9306 = vmatprep.subr.bf16.mxu0 %v6633
        %9307 = vmatpush1.bf16.msra.mxu0 %v6632
        %9308 = vmatprep.subr.bf16.mxu0 %v6635
        %9309 = vmatpush1.bf16.msra.mxu0 %v6634
        %9310 = vmatprep.subr.bf16.mxu0 %v6637
        %9311 = vmatpush1.bf16.msra.mxu0 %v6636
        %9312 = vmatprep.subr.bf16.mxu0 %v6639
        %9313 = vmatpush1.bf16.msra.mxu0 %v6638
        %9314 = vmatprep.subr.bf16.mxu0 %v6641
        %9315 = vmatpush1.bf16.msra.mxu0 %v6640
        %9316 = vmatprep.mubr.bf16.mxu0 %v1869
        %9317 = vmatmul.mubr.bf16.gmra.mrb[0].mxu0 %v1855
        %v9318 = vpop.f32.mrb[0].mxu0
        %v9319 = vadd.f32 %v9278, %v9318
        %v9320 = vpop.f32.mrb[0].mxu0
        %v9321 = vadd.f32 %v9280, %v9320
        %v9322 = vpop.f32.mrb[0].mxu0
        %v9323 = vpop.f32.mrb[0].mxu0
        %9324 = vdwg.mxu0
        %9325 = vmatprep.subr.bf16.mxu0 %v6643
        %9326 = vmatpush1.bf16.msra.mxu0 %v6642
        %9327 = vmatprep.subr.bf16.mxu0 %v6645
        %9328 = vmatpush1.bf16.msra.mxu0 %v6644
        %9329 = vmatprep.subr.bf16.mxu0 %v6647
        %9330 = vmatpush1.bf16.msra.mxu0 %v6646
        %9331 = vmatprep.subr.bf16.mxu0 %v6649
        %9332 = vmatpush1.bf16.msra.mxu0 %v6648
        %9333 = vmatprep.subr.bf16.mxu0 %v6651
        %9334 = vmatpush1.bf16.msra.mxu0 %v6650
        %9335 = vmatprep.subr.bf16.mxu0 %v6653
        %9336 = vmatpush1.bf16.msra.mxu0 %v6652
        %9337 = vmatprep.subr.bf16.mxu0 %v6655
        %9338 = vmatpush1.bf16.msra.mxu0 %v6654
        %9339 = vmatprep.subr.bf16.mxu0 %v6657
        %9340 = vmatpush1.bf16.msra.mxu0 %v6656
        %9341 = vmatprep.subr.bf16.mxu0 %v6659
        %9342 = vmatpush1.bf16.msra.mxu0 %v6658
        %9343 = vmatprep.subr.bf16.mxu0 %v6661
        %9344 = vmatpush1.bf16.msra.mxu0 %v6660
        %9345 = vmatprep.subr.bf16.mxu0 %v6663
        %9346 = vmatpush1.bf16.msra.mxu0 %v6662
        %9347 = vmatprep.subr.bf16.mxu0 %v6665
        %9348 = vmatpush1.bf16.msra.mxu0 %v6664
        %9349 = vmatprep.subr.bf16.mxu0 %v6667
        %9350 = vmatpush1.bf16.msra.mxu0 %v6666
        %9351 = vmatprep.subr.bf16.mxu0 %v6669
        %9352 = vmatpush1.bf16.msra.mxu0 %v6668
        %9353 = vmatprep.subr.bf16.mxu0 %v6671
        %9354 = vmatpush1.bf16.msra.mxu0 %v6670
        %9355 = vmatprep.subr.bf16.mxu0 %v6673
        %9356 = vmatpush1.bf16.msra.mxu0 %v6672
        %9357 = vmatprep.mubr.bf16.mxu0 %v1873
        %9358 = vmatmul.mubr.bf16.gmra.mrb[0].mxu0 %v1871
        %v9359 = vpop.f32.mrb[0].mxu0
        %v9360 = vadd.f32 %v9319, %v9359
        %v9361 = vpop.f32.mrb[0].mxu0
        %v9362 = vadd.f32 %v9321, %v9361
        %v9363 = vpop.f32.mrb[0].mxu0
        %v9364 = vpop.f32.mrb[0].mxu0
        %9365 = vdwg.mxu0
        %9366 = vmatprep.subr.bf16.mxu0 %v6675
        %9367 = vmatpush1.bf16.msra.mxu0 %v6674
        %9368 = vmatprep.subr.bf16.mxu0 %v6677
        %9369 = vmatpush1.bf16.msra.mxu0 %v6676
        %9370 = vmatprep.subr.bf16.mxu0 %v6679
        %9371 = vmatpush1.bf16.msra.mxu0 %v6678
        %9372 = vmatprep.subr.bf16.mxu0 %v6681
        %9373 = vmatpush1.bf16.msra.mxu0 %v6680
        %9374 = vmatprep.subr.bf16.mxu0 %v6683
        %9375 = vmatpush1.bf16.msra.mxu0 %v6682
        %9376 = vmatprep.subr.bf16.mxu0 %v6685
        %9377 = vmatpush1.bf16.msra.mxu0 %v6684
        %9378 = vmatprep.subr.bf16.mxu0 %v6687
        %9379 = vmatpush1.bf16.msra.mxu0 %v6686
        %9380 = vmatprep.subr.bf16.mxu0 %v6689
        %9381 = vmatpush1.bf16.msra.mxu0 %v6688
        %9382 = vmatprep.subr.bf16.mxu0 %v6691
        %9383 = vmatpush1.bf16.msra.mxu0 %v6690
        %9384 = vmatprep.subr.bf16.mxu0 %v6693
        %9385 = vmatpush1.bf16.msra.mxu0 %v6692
        %9386 = vmatprep.subr.bf16.mxu0 %v6695
        %9387 = vmatpush1.bf16.msra.mxu0 %v6694
        %9388 = vmatprep.subr.bf16.mxu0 %v6697
        %9389 = vmatpush1.bf16.msra.mxu0 %v6696
        %9390 = vmatprep.subr.bf16.mxu0 %v6699
        %9391 = vmatpush1.bf16.msra.mxu0 %v6698
        %9392 = vmatprep.subr.bf16.mxu0 %v6701
        %9393 = vmatpush1.bf16.msra.mxu0 %v6700
        %9394 = vmatprep.subr.bf16.mxu0 %v6703
        %9395 = vmatpush1.bf16.msra.mxu0 %v6702
        %9396 = vmatprep.subr.bf16.mxu0 %v6705
        %9397 = vmatpush1.bf16.msra.mxu0 %v6704
        %9398 = vmatprep.mubr.bf16.mxu0 %v1895
        %9399 = vmatmul.mubr.bf16.gmra.mrb[0].mxu0 %v1888
        %v9400 = vpop.f32.mrb[0].mxu0
        %v9401 = vadd.f32 %v9360, %v9400
        %v9402 = vpop.f32.mrb[0].mxu0
        %v9403 = vadd.f32 %v9362, %v9402
        %v9404 = vpop.f32.mrb[0].mxu0
        %v9405 = vpop.f32.mrb[0].mxu0
        %9406 = vdwg.mxu0
        %v9409 = vcombine.low %v9401, %v9403
        %v9411 = vunpack.c.l.s4 1966171168
        %v9412 = vunpack.c.0.s8 %v9411
        %v9413 = vlaneseq
        %v9414 = vshrl.u32 %v9413, 7
        %v9415 = vsub.s32 %v9412, %v9414
        %v9416 = vrot.slane %v9409, %v9415
        %v9418 = vunpack.c.l.s4 1966171168
        %v9419 = vunpack.c.0.s8 %v9418
        %v9420 = vlaneseq
        %v9421 = vshrl.u32 %v9420, 7
        %v9422 = vsub.s32 %v9419, %v9421
        %v9423 = vrot.slane %v9416, %v9422
        %v9425 = vadd.f32 %v228, %v9423
        %v9426 = vlaneseq
        %vm9427 = vcmp.ge.s32.totalorder %v9426, 0
        %vm9428 = vcmp.lt.s32.totalorder %v9426, 256
        %vm9429 = vmand %vm9427, %vm9428
        %9430 = vst.msk [vmem:[#allocation2] sm:$0x3] %vm9429, %v9425
        %p9431 = scmp.eq.s32.totalorder %s21, 3
        // Predicated region
        $region37: #{finetune_forward.1} parent=27 // pred_check
          %p9432 = pneg %p9431
        $region38: #{finetune_forward.1} parent=27 // pred_check_branch
          %9434 = sbr.rel (%p9432) target = $region40
        $region39: #{finetune_forward.1} parent=27 // pred_region
          %v9435 = vld [vmem:[#allocation2] sm:$0x3]
          %v9437 = vlaneseq
          %v9438 = vshrl.u32 %v9437, 7
          %v9439 = vsub.s32 0, %v9438
          %v9440 = vrot.slane %v9435, %v9439
          %v9441 = vlaneseq
          %v9442 = vshrl.u32 %v9441, 7
          %v9443 = vsub.s32 1, %v9442
          %v9444 = vrot.slane %v9435, %v9443
          %9447 = vst [vmem:[%s218] sm:$0xff] %v9440
          %9448 = vst [vmem:[%s218 + $0x8] sm:$0xff] %v9444
        $region40: #{finetune_forward.1} parent=27 // pred_fallthru
          _
        %p9449 = scmp.lt.s32.totalorder %s20, 1
        %s9450 = scalar_select %p9449, %s20, 1
        %s9451 = smul.addr %s9450, 2
        %s9452 = smul.addr %s9451, 8
        %s9453 = scalar_lea.vmem %s2, %s9452
        // Predicated region
        $region41: #{finetune_forward.1} parent=27 // pred_check
          %p9454 = pneg %p106
        $region42: #{finetune_forward.1} parent=27 // pred_check_branch
          %9456 = sbr.rel (%p9454) target = $region44
        $region43: #{finetune_forward.1} parent=27 // pred_region
          _
        $region44: #{finetune_forward.1} parent=27 // pred_fallthru
          _
      $region28: #{finetune_forward.1} parent=5 // pred_fallthru
        _
      %p9457 = scmp.le.s32.totalorder 2, %s11
      // Predicated region
      $region45: #{finetune_forward.1} parent=5 // pred_check
        %p9458 = pneg %p9457
      $region46: #{finetune_forward.1} parent=5 // pred_check_branch
        %9460 = sbr.rel (%p9458) target = $region48
      $region47: #{finetune_forward.1} parent=5 // pred_region
        %s9461 = ssub.s32 %s11, 2
        // Predicated region
        $region49: #{finetune_forward.1} parent=47 // pred_check
          %p9462 = pneg %p112
        $region50: #{finetune_forward.1} parent=47 // pred_check_branch
          %9464 = sbr.rel (%p9462) target = $region52
        $region51: #{finetune_forward.1} parent=47 // pred_region
          %p9465 = scmp.lt.s32.totalorder %s22, 1
          %s9466 = scalar_select %p9465, %s22, 1
          %s9467 = smul.addr %s9466, 2
          %s9468 = smul.addr %s9467, 8
          %s9469 = scalar_lea.vmem %s2, %s9468
        $region52: #{finetune_forward.1} parent=47 // pred_fallthru
          _
      $region48: #{finetune_forward.1} parent=5 // pred_fallthru
        _
    $region6: #{finetune_forward.1} parent=1 // loop_footer
      %s15 = sadd.s32 1, %s11
    $region7: #{finetune_forward.1} parent=1 // loop_footer_branch
      %10 = sbr.rel target = $region3
    $region8: #{finetune_forward.1} parent=1 // loop_exit
      _
    %9470 = vsyncpa [#allocation4], 1
    %s9471 = scalar_lea.sflag [#allocation4], 1
    %9472 = vsyncpa %s9471, 1

</llo_original>
